<compile_context>
chip_gen: v7x
topology: tpu7x:2x2x1
jax: 0.10.0
libtpu: 0.0.40
codegen_flags: <defaults>
</compile_context>

<pallas_src>
import functools

import jax
import jax.numpy as jnp
import numpy as np
from jax.experimental import pallas as pl
from jax.experimental.pallas import tpu as pltpu


def _gcn_kernel(x_ref, as_ref, al_ref, ald_ref, w_ref, b_ref, o_ref, *, order):
    # x_ref  : (1, C, N, TP)        input tile, native NCHW (patches on lanes), f32
    # as_ref : (1, N*N, TP)         per-patch adjacency, pre-transposed so that
    #                               as_ref[0, w*N + v, p] == AS[p, v, w]   (streamed)
    # al_ref : (N, N)               AL               (f32, grid-resident)
    # ald_ref: (N, N)               AL^smooth_depth  (f32, grid-resident)
    # w_ref  : (order+1, c_out, C)  1x1-conv weight, pre-split per concat branch
    # b_ref  : (c_out, 1)           1x1-conv bias
    # o_ref  : (1, c_out, N, TP)    output tile, native NCHW
    _, C, N, TP = x_ref.shape
    c_out = o_ref.shape[1]

    x = x_ref[0]                                            # (C, N, TP)
    al = al_ref[...]                                        # (N, N)
    ald = ald_ref[...]                                      # (N, N)
    w = w_ref[...]                                          # (order+1, c_out, C)

    # Branch 0 of the fused 1x1 conv (incremental accumulation: no outs/concat).
    y = jnp.dot(w[0], x.reshape(C, N * TP),
                preferred_element_type=jnp.float32)         # (c_out, N*TP)

    # Per-patch adjacency planes, already lane-dense: coeff[w][v, p] = AS[p, v, w].
    a_s = as_ref[0].astype(jnp.float32)                     # (N*N, TP)
    coeff = [a_s[wi * N:(wi + 1) * N, :] for wi in range(N)]  # N x (N, TP)

    # Node-major working layout (N, C, TP) for the graph mixing (patches on lanes).
    h3 = jnp.transpose(x, (1, 0, 2))                        # (N, C, TP)
    h_long = jnp.dot(ald, h3.reshape(N, C * TP),
                     preferred_element_type=jnp.float32)    # (N, C*TP) MXU
    h_short = h3 - h_long.reshape(N, C, TP)                 # (N, C, TP)

    for k in range(order):
        # Long branch: shared adjacency -> single MXU matmul over channels*patches.
        h_long = jnp.dot(al, h_long, preferred_element_type=jnp.float32)
        # Short branch: per-patch adjacency -> VPU broadcast-MAC over the node axis:
        #   h_short'[v, c, p] = sum_w AS[p, v, w] * h_short[w, c, p]
        # TODO(synk): if N grows past ~16, replace the unrolled Python loop with
        # lax.fori_loop(..., unroll=4) over w to bound vreg live ranges.
        acc = coeff[0][:, None, :] * h_short[0][None, :, :]
        for wi in range(1, N):
            acc = acc + coeff[wi][:, None, :] * h_short[wi][None, :, :]
        h_short = acc
        branch = h_long.reshape(N, C, TP) + h_short          # (N, C, TP)
        branch_c = jnp.transpose(branch, (1, 0, 2)).reshape(C, N * TP)
        y = y + jnp.dot(w[k + 1], branch_c, preferred_element_type=jnp.float32)

    y = y + b_ref[...]                                       # (c_out, 1) broadcast
    # F.dropout is identity in eval mode.
    # TODO(synk): training-mode dropout is not implemented.
    o_ref[0] = y.reshape(c_out, N, TP).astype(o_ref.dtype)


def _pick_tile(p_pad, cap):
    """Largest multiple of 128 that divides p_pad and is <= cap (p_pad % 128 == 0)."""
    best, t = 128, 128
    while t <= min(cap, p_pad):
        if p_pad % t == 0:
            best = t
        t += 128
    return best


def gcn_forward(x, AL, AS, W, b, *, order=2, smooth_depth=1, as_dtype=jnp.bfloat16):
    """gcn_module.forward(x, AL, AS, short_bool=True, smooth_depth) in eval mode.

    x : (B, C, N, P) float32 (PyTorch NCHW);  AL: (N, N);  AS: (B, PA, N, N)
    W : (c_out, (order+1)*C) squeezed 1x1-conv weight;  b: (c_out,)
    as_dtype: dtype AS is streamed in (bf16 by default — it is the dominant HBM
      stream and is softmax-normalized; pass jnp.float32 for exact adjacency).
    """
    B, C, N, P = x.shape
    PA = AS.shape[1]

    rest_fea = None
    if P > PA:
        rest_fea = x[..., : P - PA]            # pass-through patches
        x_used = x[..., P - PA:]
        AS_used = AS
        P_used = PA
    else:
        x_used = x
        AS_used = AS[:, -P:, :, :]
        P_used = P

    c_out = W.shape[0]
    c_cat = (order + 1) * C
    assert W.shape[1] == c_cat, "mlp weight must have (order+1)*C input channels"
    if rest_fea is not None:
        assert c_out == C, (
            "P > AS.shape[1]: rest_fea pass-through concatenates C input channels "
            "with c_out conv channels on the patch axis; requires c_out == C")

    # Pad the patch axis to a multiple of 128 so x / AS / output blocks stay
    # lane-dense (unmasked vst) for any P.  Patches are never mixed across the
    # lane axis, so padded lanes are independent and sliced off afterwards.
    P_pad = ((P_used + 127) // 128) * 128
    TP = _pick_tile(P_pad, 512)
    if B == 1 and P_pad // TP < 2:
        TP = _pick_tile(P_pad, max(P_pad // 2, 128))   # >=2 steps for v7x's 2 TCs
    n_pt = P_pad // TP
    pad = P_pad - P_used

    x_k = x_used if pad == 0 else jnp.pad(x_used, ((0, 0),) * 3 + ((0, pad),))

    # AS: put patches on lanes and flatten (w, v) -> w*N + v; stream in as_dtype.
    # The transpose/reshape fuses with the dtype cast in the wrapper pass.
    AS_t = jnp.transpose(AS_used, (0, 3, 2, 1)).reshape(B, N * N, P_used)
    AS_t = AS_t.astype(as_dtype)
    if pad:
        AS_t = jnp.pad(AS_t, ((0, 0), (0, 0), (0, pad)))

    ALd = jnp.linalg.matrix_power(AL.astype(jnp.float32), smooth_depth)
    ALf = AL.astype(jnp.float32)
    Wf = W.astype(jnp.float32).reshape(c_out, order + 1, C).transpose(1, 0, 2)
    b2 = b.astype(jnp.float32).reshape(c_out, 1)

    flops = B * P_pad * (2 * N * N * C * (2 * order + 1) + 2 * N * c_cat * c_out)
    bytes_accessed = (x_k.size * x_k.dtype.itemsize
                      + AS_t.size * AS_t.dtype.itemsize
                      + B * c_out * N * P_pad * 4
                      + 2 * N * N * 4 + Wf.size * 4 + b2.size * 4)

    kernel = functools.partial(_gcn_kernel, order=order)
    y = pl.pallas_call(
        kernel,
        out_shape=jax.ShapeDtypeStruct((B, c_out, N, P_pad), x.dtype),
        grid=(B, n_pt),
        in_specs=[
            pl.BlockSpec((1, C, N, TP), lambda bi, pi: (bi, 0, 0, pi)),
            pl.BlockSpec((1, N * N, TP), lambda bi, pi: (bi, 0, pi)),
            pl.BlockSpec((N, N), lambda bi, pi: (0, 0)),
            pl.BlockSpec((N, N), lambda bi, pi: (0, 0)),
            pl.BlockSpec((order + 1, c_out, C), lambda bi, pi: (0, 0, 0)),
            pl.BlockSpec((c_out, 1), lambda bi, pi: (0, 0)),
        ],
        out_specs=pl.BlockSpec((1, c_out, N, TP), lambda bi, pi: (bi, 0, 0, pi)),
        compiler_params=pltpu.CompilerParams(
            dimension_semantics=("parallel", "parallel"),
            vmem_limit_bytes=32 * 1024 * 1024),
        cost_estimate=pl.CostEstimate(flops=int(flops), transcendentals=0,
                                      bytes_accessed=int(bytes_accessed)),
    )(x_k, AS_t, ALf, ALd, Wf, b2)

    if pad:
        y = y[..., :P_used]
    if rest_fea is not None:
        y = jnp.concatenate([rest_fea.astype(y.dtype), y], axis=-1)
    return y


def gcn_ref(x, AL, AS, W, b, *, order=2, smooth_depth=1):
    """Pure-JAX f32 reference mirroring the PyTorch forward (eval mode)."""
    B, C, N, P = x.shape
    PA = AS.shape[1]
    rest_fea = None
    if P > PA:
        rest_fea = x[..., : P - PA]
        h = x[..., P - PA:]
        AS_u = AS
    else:
        AS_u = AS[:, -P:, :, :]
        h = x
    out = [h]
    ALd = jnp.linalg.matrix_power(AL, smooth_depth)
    h_long = jnp.einsum('ik,bckj->bcij', ALd, h)
    h_short = h - h_long
    for _ in range(order):
        h_long = jnp.einsum('vw,bcwl->bcvl', AL, h_long)
        h_short = jnp.einsum('bcwp,bpvw->bcvp', h_short, AS_u)
        out.append(h_long + h_short)
    ho = jnp.concatenate(out, axis=1)
    y = jnp.einsum('oi,binp->bonp', W, ho) + b[None, :, None, None]
    if rest_fea is not None:
        y = jnp.concatenate([rest_fea, y], axis=-1)
    return y


if __name__ == "__main__":
    order = 2

    def run_case(B, C, N, P, PA, c_out, key):
        c_cat = (order + 1) * C
        k1, k2, k3, k4, k5 = jax.random.split(key, 5)
        x = jax.random.normal(k1, (B, C, N, P), jnp.float32)
        AL = jax.nn.softmax(jax.random.normal(k2, (N, N), jnp.float32), axis=-1)
        AS = jax.nn.softmax(jax.random.normal(k3, (B, PA, N, N), jnp.float32), axis=-1)
        W = 0.1 * jax.random.normal(k4, (c_out, c_cat), jnp.float32)
        b = 0.1 * jax.random.normal(k5, (c_out,), jnp.float32)

        y = gcn_forward(x, AL, AS, W, b, order=order, smooth_depth=1)
        y = jax.block_until_ready(y)

        # Tight check vs f32 reference evaluated on the identically bf16-rounded AS
        # (isolates the kernel's f32 math from the documented AS streaming dtype).
        AS_q = AS.astype(jnp.bfloat16).astype(jnp.float32)
        y_ref_q = gcn_ref(x, AL, AS_q, W, b, order=order, smooth_depth=1)
        np.testing.assert_allclose(np.asarray(y), np.asarray(y_ref_q),
                                   rtol=1e-3, atol=1e-3)
        # Loose check vs the unrounded f32 module (bounds AS bf16 streaming error).
        y_ref = gcn_ref(x, AL, AS, W, b, order=order, smooth_depth=1)
        np.testing.assert_allclose(np.asarray(y), np.asarray(y_ref),
                                   rtol=5e-2, atol=5e-2)

    keys = jax.random.split(jax.random.PRNGKey(0), 3)
    # main path: TP = 512 tile, grid (2, 1)
    run_case(B=2, C=4, N=8, P=512, PA=512, c_out=8, key=keys[0])
    # padding path (P not a multiple of 128) + B == 1 tile split for 2 TCs
    run_case(B=1, C=4, N=8, P=200, PA=200, c_out=8, key=keys[1])
    # rest_fea pass-through path (P > AS patches, c_out == C)
    run_case(B=2, C=4, N=8, P=160, PA=128, c_out=4, key=keys[2])
    print("KERNEL_OK")
</pallas_src>

<mosaic_0001>
module attributes {stable_mosaic.version = 11 : i64} {
  func.func @_gcn_kernel(%arg0: i32, %arg1: i32, %arg2: memref<1x4x8x512xf32, #tpu.memory_space<vmem>>, %arg3: memref<1x64x512xbf16, #tpu.memory_space<vmem>>, %arg4: memref<8x8xf32, #tpu.memory_space<vmem>>, %arg5: memref<8x8xf32, #tpu.memory_space<vmem>>, %arg6: memref<3x8x4xf32, #tpu.memory_space<vmem>>, %arg7: memref<8x1xf32, #tpu.memory_space<vmem>>, %arg8: memref<1x8x8x512xf32, #tpu.memory_space<vmem>>) attributes {dimension_semantics = [#tpu.dimension_semantics<parallel>, #tpu.dimension_semantics<parallel>], iteration_bounds = array<i64: 2, 1>, scalar_prefetch = 0 : i64, scratch_operands = 0 : i64, tpu.core_type = #tpu.core_type<tc>, window_params = [{transform_indices = @transform_0, window_bounds = array<i64: 1, 4, 8, 512>}, {transform_indices = @transform_1, window_bounds = array<i64: 1, 64, 512>}, {pipeline_mode = #tpu.pipeline_mode<synchronous>, transform_indices = @transform_2, window_bounds = array<i64: 8, 8>}, {pipeline_mode = #tpu.pipeline_mode<synchronous>, transform_indices = @transform_3, window_bounds = array<i64: 8, 8>}, {pipeline_mode = #tpu.pipeline_mode<synchronous>, transform_indices = @transform_4, window_bounds = array<i64: 3, 8, 4>}, {pipeline_mode = #tpu.pipeline_mode<synchronous>, transform_indices = @transform_5, window_bounds = array<i64: 8, 1>}, {transform_indices = @transform_6, window_bounds = array<i64: 1, 8, 8, 512>}]} {
    %c0 = arith.constant 0 : index
    %c0_0 = arith.constant 0 : index
    %c0_1 = arith.constant 0 : index
    %c0_2 = arith.constant 0 : index
    %0 = vector.load %arg2[%c0, %c0_0, %c0_1, %c0_2] : memref<1x4x8x512xf32, #tpu.memory_space<vmem>>, vector<1x4x8x512xf32>
    %1 = vector.shape_cast %0 : vector<1x4x8x512xf32> to vector<4x8x512xf32>
    %c0_3 = arith.constant 0 : index
    %c0_4 = arith.constant 0 : index
    %2 = vector.load %arg4[%c0_3, %c0_4] : memref<8x8xf32, #tpu.memory_space<vmem>>, vector<8x8xf32>
    %c0_5 = arith.constant 0 : index
    %c0_6 = arith.constant 0 : index
    %3 = vector.load %arg5[%c0_5, %c0_6] : memref<8x8xf32, #tpu.memory_space<vmem>>, vector<8x8xf32>
    %c0_7 = arith.constant 0 : index
    %c0_8 = arith.constant 0 : index
    %c0_9 = arith.constant 0 : index
    %4 = vector.load %arg6[%c0_7, %c0_8, %c0_9] : memref<3x8x4xf32, #tpu.memory_space<vmem>>, vector<3x8x4xf32>
    %5 = vector.extract_strided_slice %4 {offsets = [0, 0, 0], sizes = [1, 8, 4], strides = [1, 1, 1]} : vector<3x8x4xf32> to vector<1x8x4xf32>
    %6 = vector.shape_cast %5 : vector<1x8x4xf32> to vector<8x4xf32>
    %7 = vector.shape_cast %1 : vector<4x8x512xf32> to vector<4x4096xf32>
    %cst = arith.constant dense<0.000000e+00> : vector<8x4096xf32>
    %8 = tpu.matmul %6, %7, %cst {dimension_numbers = #tpu.dot_dimension_numbers<[1], [0], [0], [1], [0, 0, 1, 1], [], []>} : vector<8x4xf32>, vector<4x4096xf32>, vector<8x4096xf32> -> vector<8x4096xf32>
    %c0_10 = arith.constant 0 : index
    %c0_11 = arith.constant 0 : index
    %c0_12 = arith.constant 0 : index
    %9 = vector.load %arg3[%c0_10, %c0_11, %c0_12] : memref<1x64x512xbf16, #tpu.memory_space<vmem>>, vector<1x64x512xbf16>
    %10 = vector.shape_cast %9 : vector<1x64x512xbf16> to vector<64x512xbf16>
    %11 = arith.extf %10 : vector<64x512xbf16> to vector<64x512xf32>
    %12 = vector.extract_strided_slice %11 {offsets = [0, 0], sizes = [8, 512], strides = [1, 1]} : vector<64x512xf32> to vector<8x512xf32>
    %13 = vector.extract_strided_slice %11 {offsets = [8, 0], sizes = [8, 512], strides = [1, 1]} : vector<64x512xf32> to vector<8x512xf32>
    %14 = vector.extract_strided_slice %11 {offsets = [16, 0], sizes = [8, 512], strides = [1, 1]} : vector<64x512xf32> to vector<8x512xf32>
    %15 = vector.extract_strided_slice %11 {offsets = [24, 0], sizes = [8, 512], strides = [1, 1]} : vector<64x512xf32> to vector<8x512xf32>
    %16 = vector.extract_strided_slice %11 {offsets = [32, 0], sizes = [8, 512], strides = [1, 1]} : vector<64x512xf32> to vector<8x512xf32>
    %17 = vector.extract_strided_slice %11 {offsets = [40, 0], sizes = [8, 512], strides = [1, 1]} : vector<64x512xf32> to vector<8x512xf32>
    %18 = vector.extract_strided_slice %11 {offsets = [48, 0], sizes = [8, 512], strides = [1, 1]} : vector<64x512xf32> to vector<8x512xf32>
    %19 = vector.extract_strided_slice %11 {offsets = [56, 0], sizes = [8, 512], strides = [1, 1]} : vector<64x512xf32> to vector<8x512xf32>
    %20 = tpu.transpose %1, [1, 0, 2] : vector<4x8x512xf32> -> vector<8x4x512xf32>
    %21 = vector.shape_cast %20 : vector<8x4x512xf32> to vector<8x2048xf32>
    %cst_13 = arith.constant dense<0.000000e+00> : vector<8x2048xf32>
    %22 = tpu.matmul %3, %21, %cst_13 {dimension_numbers = #tpu.dot_dimension_numbers<[1], [0], [0], [1], [0, 0, 1, 1], [], []>} : vector<8x8xf32>, vector<8x2048xf32>, vector<8x2048xf32> -> vector<8x2048xf32>
    %23 = vector.shape_cast %22 : vector<8x2048xf32> to vector<8x4x512xf32>
    %24 = arith.subf %20, %23 : vector<8x4x512xf32>
    %cst_14 = arith.constant dense<0.000000e+00> : vector<8x2048xf32>
    %25 = tpu.matmul %2, %22, %cst_14 {dimension_numbers = #tpu.dot_dimension_numbers<[1], [0], [0], [1], [0, 0, 1, 1], [], []>} : vector<8x8xf32>, vector<8x2048xf32>, vector<8x2048xf32> -> vector<8x2048xf32>
    %26 = vector.shape_cast %12 : vector<8x512xf32> to vector<8x1x512xf32>
    %27 = vector.extract_strided_slice %24 {offsets = [0, 0, 0], sizes = [1, 4, 512], strides = [1, 1, 1]} : vector<8x4x512xf32> to vector<1x4x512xf32>
    %28 = vector.shape_cast %27 : vector<1x4x512xf32> to vector<4x512xf32>
    %29 = vector.shape_cast %28 : vector<4x512xf32> to vector<1x4x512xf32>
    %30 = vector.broadcast %26 : vector<8x1x512xf32> to vector<8x4x512xf32>
    %31 = vector.broadcast %29 : vector<1x4x512xf32> to vector<8x4x512xf32>
    %32 = arith.mulf %30, %31 : vector<8x4x512xf32>
    %33 = vector.shape_cast %13 : vector<8x512xf32> to vector<8x1x512xf32>
    %34 = vector.extract_strided_slice %24 {offsets = [1, 0, 0], sizes = [1, 4, 512], strides = [1, 1, 1]} : vector<8x4x512xf32> to vector<1x4x512xf32>
    %35 = vector.shape_cast %34 : vector<1x4x512xf32> to vector<4x512xf32>
    %36 = vector.shape_cast %35 : vector<4x512xf32> to vector<1x4x512xf32>
    %37 = vector.broadcast %33 : vector<8x1x512xf32> to vector<8x4x512xf32>
    %38 = vector.broadcast %36 : vector<1x4x512xf32> to vector<8x4x512xf32>
    %39 = arith.mulf %37, %38 : vector<8x4x512xf32>
    %40 = arith.addf %32, %39 : vector<8x4x512xf32>
    %41 = vector.shape_cast %14 : vector<8x512xf32> to vector<8x1x512xf32>
    %42 = vector.extract_strided_slice %24 {offsets = [2, 0, 0], sizes = [1, 4, 512], strides = [1, 1, 1]} : vector<8x4x512xf32> to vector<1x4x512xf32>
    %43 = vector.shape_cast %42 : vector<1x4x512xf32> to vector<4x512xf32>
    %44 = vector.shape_cast %43 : vector<4x512xf32> to vector<1x4x512xf32>
    %45 = vector.broadcast %41 : vector<8x1x512xf32> to vector<8x4x512xf32>
    %46 = vector.broadcast %44 : vector<1x4x512xf32> to vector<8x4x512xf32>
    %47 = arith.mulf %45, %46 : vector<8x4x512xf32>
    %48 = arith.addf %40, %47 : vector<8x4x512xf32>
    %49 = vector.shape_cast %15 : vector<8x512xf32> to vector<8x1x512xf32>
    %50 = vector.extract_strided_slice %24 {offsets = [3, 0, 0], sizes = [1, 4, 512], strides = [1, 1, 1]} : vector<8x4x512xf32> to vector<1x4x512xf32>
    %51 = vector.shape_cast %50 : vector<1x4x512xf32> to vector<4x512xf32>
    %52 = vector.shape_cast %51 : vector<4x512xf32> to vector<1x4x512xf32>
    %53 = vector.broadcast %49 : vector<8x1x512xf32> to vector<8x4x512xf32>
    %54 = vector.broadcast %52 : vector<1x4x512xf32> to vector<8x4x512xf32>
    %55 = arith.mulf %53, %54 : vector<8x4x512xf32>
    %56 = arith.addf %48, %55 : vector<8x4x512xf32>
    %57 = vector.shape_cast %16 : vector<8x512xf32> to vector<8x1x512xf32>
    %58 = vector.extract_strided_slice %24 {offsets = [4, 0, 0], sizes = [1, 4, 512], strides = [1, 1, 1]} : vector<8x4x512xf32> to vector<1x4x512xf32>
    %59 = vector.shape_cast %58 : vector<1x4x512xf32> to vector<4x512xf32>
    %60 = vector.shape_cast %59 : vector<4x512xf32> to vector<1x4x512xf32>
    %61 = vector.broadcast %57 : vector<8x1x512xf32> to vector<8x4x512xf32>
    %62 = vector.broadcast %60 : vector<1x4x512xf32> to vector<8x4x512xf32>
    %63 = arith.mulf %61, %62 : vector<8x4x512xf32>
    %64 = arith.addf %56, %63 : vector<8x4x512xf32>
    %65 = vector.shape_cast %17 : vector<8x512xf32> to vector<8x1x512xf32>
    %66 = vector.extract_strided_slice %24 {offsets = [5, 0, 0], sizes = [1, 4, 512], strides = [1, 1, 1]} : vector<8x4x512xf32> to vector<1x4x512xf32>
    %67 = vector.shape_cast %66 : vector<1x4x512xf32> to vector<4x512xf32>
    %68 = vector.shape_cast %67 : vector<4x512xf32> to vector<1x4x512xf32>
    %69 = vector.broadcast %65 : vector<8x1x512xf32> to vector<8x4x512xf32>
    %70 = vector.broadcast %68 : vector<1x4x512xf32> to vector<8x4x512xf32>
    %71 = arith.mulf %69, %70 : vector<8x4x512xf32>
    %72 = arith.addf %64, %71 : vector<8x4x512xf32>
    %73 = vector.shape_cast %18 : vector<8x512xf32> to vector<8x1x512xf32>
    %74 = vector.extract_strided_slice %24 {offsets = [6, 0, 0], sizes = [1, 4, 512], strides = [1, 1, 1]} : vector<8x4x512xf32> to vector<1x4x512xf32>
    %75 = vector.shape_cast %74 : vector<1x4x512xf32> to vector<4x512xf32>
    %76 = vector.shape_cast %75 : vector<4x512xf32> to vector<1x4x512xf32>
    %77 = vector.broadcast %73 : vector<8x1x512xf32> to vector<8x4x512xf32>
    %78 = vector.broadcast %76 : vector<1x4x512xf32> to vector<8x4x512xf32>
    %79 = arith.mulf %77, %78 : vector<8x4x512xf32>
    %80 = arith.addf %72, %79 : vector<8x4x512xf32>
    %81 = vector.shape_cast %19 : vector<8x512xf32> to vector<8x1x512xf32>
    %82 = vector.extract_strided_slice %24 {offsets = [7, 0, 0], sizes = [1, 4, 512], strides = [1, 1, 1]} : vector<8x4x512xf32> to vector<1x4x512xf32>
    %83 = vector.shape_cast %82 : vector<1x4x512xf32> to vector<4x512xf32>
    %84 = vector.shape_cast %83 : vector<4x512xf32> to vector<1x4x512xf32>
    %85 = vector.broadcast %81 : vector<8x1x512xf32> to vector<8x4x512xf32>
    %86 = vector.broadcast %84 : vector<1x4x512xf32> to vector<8x4x512xf32>
    %87 = arith.mulf %85, %86 : vector<8x4x512xf32>
    %88 = arith.addf %80, %87 : vector<8x4x512xf32>
    %89 = vector.shape_cast %25 : vector<8x2048xf32> to vector<8x4x512xf32>
    %90 = arith.addf %89, %88 : vector<8x4x512xf32>
    %91 = tpu.transpose %90, [1, 0, 2] : vector<8x4x512xf32> -> vector<4x8x512xf32>
    %92 = vector.shape_cast %91 : vector<4x8x512xf32> to vector<4x4096xf32>
    %93 = vector.extract_strided_slice %4 {offsets = [1, 0, 0], sizes = [1, 8, 4], strides = [1, 1, 1]} : vector<3x8x4xf32> to vector<1x8x4xf32>
    %94 = vector.shape_cast %93 : vector<1x8x4xf32> to vector<8x4xf32>
    %cst_15 = arith.constant dense<0.000000e+00> : vector<8x4096xf32>
    %95 = tpu.matmul %94, %92, %cst_15 {dimension_numbers = #tpu.dot_dimension_numbers<[1], [0], [0], [1], [0, 0, 1, 1], [], []>} : vector<8x4xf32>, vector<4x4096xf32>, vector<8x4096xf32> -> vector<8x4096xf32>
    %96 = arith.addf %8, %95 : vector<8x4096xf32>
    %cst_16 = arith.constant dense<0.000000e+00> : vector<8x2048xf32>
    %97 = tpu.matmul %2, %25, %cst_16 {dimension_numbers = #tpu.dot_dimension_numbers<[1], [0], [0], [1], [0, 0, 1, 1], [], []>} : vector<8x8xf32>, vector<8x2048xf32>, vector<8x2048xf32> -> vector<8x2048xf32>
    %98 = vector.shape_cast %12 : vector<8x512xf32> to vector<8x1x512xf32>
    %99 = vector.extract_strided_slice %88 {offsets = [0, 0, 0], sizes = [1, 4, 512], strides = [1, 1, 1]} : vector<8x4x512xf32> to vector<1x4x512xf32>
    %100 = vector.shape_cast %99 : vector<1x4x512xf32> to vector<4x512xf32>
    %101 = vector.shape_cast %100 : vector<4x512xf32> to vector<1x4x512xf32>
    %102 = vector.broadcast %98 : vector<8x1x512xf32> to vector<8x4x512xf32>
    %103 = vector.broadcast %101 : vector<1x4x512xf32> to vector<8x4x512xf32>
    %104 = arith.mulf %102, %103 : vector<8x4x512xf32>
    %105 = vector.shape_cast %13 : vector<8x512xf32> to vector<8x1x512xf32>
    %106 = vector.extract_strided_slice %88 {offsets = [1, 0, 0], sizes = [1, 4, 512], strides = [1, 1, 1]} : vector<8x4x512xf32> to vector<1x4x512xf32>
    %107 = vector.shape_cast %106 : vector<1x4x512xf32> to vector<4x512xf32>
    %108 = vector.shape_cast %107 : vector<4x512xf32> to vector<1x4x512xf32>
    %109 = vector.broadcast %105 : vector<8x1x512xf32> to vector<8x4x512xf32>
    %110 = vector.broadcast %108 : vector<1x4x512xf32> to vector<8x4x512xf32>
    %111 = arith.mulf %109, %110 : vector<8x4x512xf32>
    %112 = arith.addf %104, %111 : vector<8x4x512xf32>
    %113 = vector.shape_cast %14 : vector<8x512xf32> to vector<8x1x512xf32>
    %114 = vector.extract_strided_slice %88 {offsets = [2, 0, 0], sizes = [1, 4, 512], strides = [1, 1, 1]} : vector<8x4x512xf32> to vector<1x4x512xf32>
    %115 = vector.shape_cast %114 : vector<1x4x512xf32> to vector<4x512xf32>
    %116 = vector.shape_cast %115 : vector<4x512xf32> to vector<1x4x512xf32>
    %117 = vector.broadcast %113 : vector<8x1x512xf32> to vector<8x4x512xf32>
    %118 = vector.broadcast %116 : vector<1x4x512xf32> to vector<8x4x512xf32>
    %119 = arith.mulf %117, %118 : vector<8x4x512xf32>
    %120 = arith.addf %112, %119 : vector<8x4x512xf32>
    %121 = vector.shape_cast %15 : vector<8x512xf32> to vector<8x1x512xf32>
    %122 = vector.extract_strided_slice %88 {offsets = [3, 0, 0], sizes = [1, 4, 512], strides = [1, 1, 1]} : vector<8x4x512xf32> to vector<1x4x512xf32>
    %123 = vector.shape_cast %122 : vector<1x4x512xf32> to vector<4x512xf32>
    %124 = vector.shape_cast %123 : vector<4x512xf32> to vector<1x4x512xf32>
    %125 = vector.broadcast %121 : vector<8x1x512xf32> to vector<8x4x512xf32>
    %126 = vector.broadcast %124 : vector<1x4x512xf32> to vector<8x4x512xf32>
    %127 = arith.mulf %125, %126 : vector<8x4x512xf32>
    %128 = arith.addf %120, %127 : vector<8x4x512xf32>
    %129 = vector.shape_cast %16 : vector<8x512xf32> to vector<8x1x512xf32>
    %130 = vector.extract_strided_slice %88 {offsets = [4, 0, 0], sizes = [1, 4, 512], strides = [1, 1, 1]} : vector<8x4x512xf32> to vector<1x4x512xf32>
    %131 = vector.shape_cast %130 : vector<1x4x512xf32> to vector<4x512xf32>
    %132 = vector.shape_cast %131 : vector<4x512xf32> to vector<1x4x512xf32>
    %133 = vector.broadcast %129 : vector<8x1x512xf32> to vector<8x4x512xf32>
    %134 = vector.broadcast %132 : vector<1x4x512xf32> to vector<8x4x512xf32>
    %135 = arith.mulf %133, %134 : vector<8x4x512xf32>
    %136 = arith.addf %128, %135 : vector<8x4x512xf32>
    %137 = vector.shape_cast %17 : vector<8x512xf32> to vector<8x1x512xf32>
    %138 = vector.extract_strided_slice %88 {offsets = [5, 0, 0], sizes = [1, 4, 512], strides = [1, 1, 1]} : vector<8x4x512xf32> to vector<1x4x512xf32>
    %139 = vector.shape_cast %138 : vector<1x4x512xf32> to vector<4x512xf32>
    %140 = vector.shape_cast %139 : vector<4x512xf32> to vector<1x4x512xf32>
    %141 = vector.broadcast %137 : vector<8x1x512xf32> to vector<8x4x512xf32>
    %142 = vector.broadcast %140 : vector<1x4x512xf32> to vector<8x4x512xf32>
    %143 = arith.mulf %141, %142 : vector<8x4x512xf32>
    %144 = arith.addf %136, %143 : vector<8x4x512xf32>
    %145 = vector.shape_cast %18 : vector<8x512xf32> to vector<8x1x512xf32>
    %146 = vector.extract_strided_slice %88 {offsets = [6, 0, 0], sizes = [1, 4, 512], strides = [1, 1, 1]} : vector<8x4x512xf32> to vector<1x4x512xf32>
    %147 = vector.shape_cast %146 : vector<1x4x512xf32> to vector<4x512xf32>
    %148 = vector.shape_cast %147 : vector<4x512xf32> to vector<1x4x512xf32>
    %149 = vector.broadcast %145 : vector<8x1x512xf32> to vector<8x4x512xf32>
    %150 = vector.broadcast %148 : vector<1x4x512xf32> to vector<8x4x512xf32>
    %151 = arith.mulf %149, %150 : vector<8x4x512xf32>
    %152 = arith.addf %144, %151 : vector<8x4x512xf32>
    %153 = vector.shape_cast %19 : vector<8x512xf32> to vector<8x1x512xf32>
    %154 = vector.extract_strided_slice %88 {offsets = [7, 0, 0], sizes = [1, 4, 512], strides = [1, 1, 1]} : vector<8x4x512xf32> to vector<1x4x512xf32>
    %155 = vector.shape_cast %154 : vector<1x4x512xf32> to vector<4x512xf32>
    %156 = vector.shape_cast %155 : vector<4x512xf32> to vector<1x4x512xf32>
    %157 = vector.broadcast %153 : vector<8x1x512xf32> to vector<8x4x512xf32>
    %158 = vector.broadcast %156 : vector<1x4x512xf32> to vector<8x4x512xf32>
    %159 = arith.mulf %157, %158 : vector<8x4x512xf32>
    %160 = arith.addf %152, %159 : vector<8x4x512xf32>
    %161 = vector.shape_cast %97 : vector<8x2048xf32> to vector<8x4x512xf32>
    %162 = arith.addf %161, %160 : vector<8x4x512xf32>
    %163 = tpu.transpose %162, [1, 0, 2] : vector<8x4x512xf32> -> vector<4x8x512xf32>
    %164 = vector.shape_cast %163 : vector<4x8x512xf32> to vector<4x4096xf32>
    %165 = vector.extract_strided_slice %4 {offsets = [2, 0, 0], sizes = [1, 8, 4], strides = [1, 1, 1]} : vector<3x8x4xf32> to vector<1x8x4xf32>
    %166 = vector.shape_cast %165 : vector<1x8x4xf32> to vector<8x4xf32>
    %cst_17 = arith.constant dense<0.000000e+00> : vector<8x4096xf32>
    %167 = tpu.matmul %166, %164, %cst_17 {dimension_numbers = #tpu.dot_dimension_numbers<[1], [0], [0], [1], [0, 0, 1, 1], [], []>} : vector<8x4xf32>, vector<4x4096xf32>, vector<8x4096xf32> -> vector<8x4096xf32>
    %168 = arith.addf %96, %167 : vector<8x4096xf32>
    %c0_18 = arith.constant 0 : index
    %c0_19 = arith.constant 0 : index
    %169 = vector.load %arg7[%c0_18, %c0_19] : memref<8x1xf32, #tpu.memory_space<vmem>>, vector<8x1xf32>
    %170 = vector.broadcast %169 : vector<8x1xf32> to vector<8x4096xf32>
    %171 = arith.addf %168, %170 : vector<8x4096xf32>
    %172 = vector.shape_cast %171 : vector<8x4096xf32> to vector<8x8x512xf32>
    %c0_20 = arith.constant 0 : index
    %c0_21 = arith.constant 0 : index
    %c0_22 = arith.constant 0 : index
    %c0_23 = arith.constant 0 : index
    %173 = vector.load %arg8[%c0_20, %c0_21, %c0_22, %c0_23] : memref<1x8x8x512xf32, #tpu.memory_space<vmem>>, vector<1x8x8x512xf32>
    %174 = vector.shape_cast %173 : vector<1x8x8x512xf32> to vector<8x8x512xf32>
    %175 = vector.shape_cast %172 : vector<8x8x512xf32> to vector<1x8x8x512xf32>
    tpu.vector_store %arg8[%c0_20, %c0_21, %c0_22, %c0_23], %175 {strides = array<i32>} : memref<1x8x8x512xf32, #tpu.memory_space<vmem>>, vector<1x8x8x512xf32>,
    return
  }
  func.func @transform_0(%arg0: i32, %arg1: i32) -> (i32, i32, i32, i32) {
    %c0_i32 = arith.constant 0 : i32
    %c0_i32_0 = arith.constant 0 : i32
    %c0_i32_1 = arith.constant 0 : i32
    return %arg0, %c0_i32, %c0_i32_0, %arg1 : i32, i32, i32, i32
  }
  func.func @transform_1(%arg0: i32, %arg1: i32) -> (i32, i32, i32) {
    %c0_i32 = arith.constant 0 : i32
    %c0_i32_0 = arith.constant 0 : i32
    return %arg0, %c0_i32, %arg1 : i32, i32, i32
  }
  func.func @transform_2(%arg0: i32, %arg1: i32) -> (i32, i32) {
    %c0_i32 = arith.constant 0 : i32
    %c0_i32_0 = arith.constant 0 : i32
    %c0_i32_1 = arith.constant 0 : i32
    return %c0_i32, %c0_i32_0 : i32, i32
  }
  func.func @transform_3(%arg0: i32, %arg1: i32) -> (i32, i32) {
    %c0_i32 = arith.constant 0 : i32
    %c0_i32_0 = arith.constant 0 : i32
    %c0_i32_1 = arith.constant 0 : i32
    return %c0_i32, %c0_i32_0 : i32, i32
  }
  func.func @transform_4(%arg0: i32, %arg1: i32) -> (i32, i32, i32) {
    %c0_i32 = arith.constant 0 : i32
    %c0_i32_0 = arith.constant 0 : i32
    %c0_i32_1 = arith.constant 0 : i32
    %c0_i32_2 = arith.constant 0 : i32
    return %c0_i32, %c0_i32_0, %c0_i32_1 : i32, i32, i32
  }
  func.func @transform_5(%arg0: i32, %arg1: i32) -> (i32, i32) {
    %c0_i32 = arith.constant 0 : i32
    %c0_i32_0 = arith.constant 0 : i32
    %c0_i32_1 = arith.constant 0 : i32
    return %c0_i32, %c0_i32_0 : i32, i32
  }
  func.func @transform_6(%arg0: i32, %arg1: i32) -> (i32, i32, i32, i32) {
    %c0_i32 = arith.constant 0 : i32
    %c0_i32_0 = arith.constant 0 : i32
    %c0_i32_1 = arith.constant 0 : i32
    return %arg0, %c0_i32, %c0_i32_0, %arg1 : i32, i32, i32, i32
  }
}

</mosaic_0001>

<llo_original>
// kernel: tpu_custom_call.1
$region0: #{tpu_custom_call.1}
  #allocation0 [shape = 'u32[]', space=smem, size = 0x4, offset = 0x4, fixed_abs, tag = 'smem constant byte address 0x4 - core index']
  #allocation1 [shape = 'u32[144,128]{1,0:T(1,128)}', space=vmem, size = 0x12000, scoped, tag = 'internal scratch']
  %s0 = inlined_call_operand.hbm [shape: f32[2,4,8,512], index: 0, kind: input, shape index: {}]
  %s1 = inlined_call_operand.hbm [shape: bf16[2,64,512], index: 1, kind: input, shape index: {}]
  %s2 = inlined_call_operand.vmem [shape: f32[8,8], index: 2, kind: input, shape index: {}]
  %s3 = inlined_call_operand.vmem [shape: f32[8,8], index: 3, kind: input, shape index: {}]
  %s4 = inlined_call_operand.vmem [shape: f32[3,8,4], index: 4, kind: input, shape index: {}]
  %s5 = inlined_call_operand.vmem [shape: f32[8,1], index: 5, kind: input, shape index: {}]
  %s6 = inlined_call_operand.hbm [shape: f32[2,8,8,512], index: 6, kind: output, shape index: {}]
  %s7 = sld [smem:[#allocation0]]
  $region65: #{tpu_custom_call.1} parent=0
    _
  %s9 = ssub.s32 1, %s7
  %s10 = scalar_select 0, %s9, %s7
  $region1: #{tpu_custom_call.1} parent=0
    #allocation2 [shape = 'u8[131072]{0}', space=vmem, size = 0x20000, scoped, tag = 'input window, operand 0']
    #allocation3 [shape = 's32[2]{0}', space=sflag, size = 0x8, scoped, tag = 'scoped memory for tpu_custom_call.1']
    #allocation4 [shape = 's32[2]{0}', space=sflag, size = 0x8, scoped, tag = 'scoped memory for tpu_custom_call.1']
    #allocation5 [shape = 'u8[131072]{0}', space=vmem, size = 0x20000, scoped, tag = 'input window, operand 1']
    #allocation6 [shape = 's32[2]{0}', space=sflag, size = 0x8, scoped, tag = 'scoped memory for tpu_custom_call.1']
    #allocation7 [shape = 'u8[262144]{0}', space=vmem, size = 0x40000, scoped, tag = 'output window, operand 0']
    %11 = vsyncpa [#allocation3], 0
    %s12 = scalar_lea.sflag [#allocation3], 1
    %13 = vsyncpa %s12, 0
    %14 = vsyncpa [#allocation6], 0
    %s15 = scalar_lea.sflag [#allocation6], 1
    %16 = vsyncpa %s15, 0
    %17 = vsyncpa [#allocation4], 0
    %s18 = scalar_lea.sflag [#allocation4], 1
    %19 = vsyncpa %s18, 0
    loop: start=0, step=1, limit=4
    $region2: #{tpu_custom_call.1} parent=1 // loop_pre_header
      _
    $region3: #{tpu_custom_call.1} parent=1 // loop_header
      %s21 = sphi 0, %s25
      %p22 = scmp.ge.s32.totalorder %s21, 4
      %s28 = sphi 0, %s40
      %s29 = sphi 0, %s36
      %s30 = sphi 0, %s28
      %s31 = sphi 0, %s29
      %s32 = sphi 0, %s30
      %s33 = sphi 0, %s31
      %s45 = sphi 0, %s47
      %s48 = sphi 0, %s45
      %s49 = sphi 0, %s48
      %s65 = sphi 0, %s49
      %s73 = sphi 0, %s75
      %s76 = sphi 0, %s73
      %s77 = sphi 0, %s76
      %s93 = sphi 0, %s77
      %s97 = sphi 0, %s97
      %s99 = sphi 0, %s97
      %s100 = sphi 0, %s99
      %s114 = sphi 0, %s100
      %s118 = sphi 0, %s118
      %s120 = sphi 0, %s118
      %s121 = sphi 0, %s120
      %s135 = sphi 0, %s121
      %s139 = sphi 0, %s139
      %s141 = sphi 0, %s139
      %s142 = sphi 0, %s141
      %s156 = sphi 0, %s142
      %s160 = sphi 0, %s160
      %s162 = sphi 0, %s160
      %s163 = sphi 0, %s162
      %s177 = sphi 0, %s163
      %s185 = sphi 0, %s187
      %s188 = sphi 0, %s185
      %s189 = sphi 0, %s188
      %s205 = sphi 0, %s189
    $region4: #{tpu_custom_call.1} parent=1 // loop_header_branch
      %24 = sbr.rel (%p22) target = $region8
    $region5: #{tpu_custom_call.1} parent=1 // loop_body
      %s26 = ssub.s32 %s21, 1
      %s27 = ssub.s32 %s21, 2
      %s34 = sadd.s32 1, %s29
      %p35 = scmp.ge.s32.totalorder %s34, 1
      %s36 = scalar_select %p35, 0, %s34
      %s37 = sadd.s32 1, %s28
      %s38 = scalar_select %p35, %s37, %s28
      %p39 = scmp.ge.s32.totalorder %s38, 2
      %s40 = scalar_select %p39, 0, %s38
      %s41 = ssub.s32 %s28, %s40
      %s42 = ssub.s32 %s29, %s36
      %s43 = sor.u32 %s41, %s42
      %p44 = scmp.eq.s32.totalorder %s43, 0
      %s46 = sadd.s32 %s45, 1
      %s47 = scalar_select %p44, %s45, %s46
      %p50 = pneg %p44
      %p51 = scmp.eq.s32.totalorder %s21, 1
      %p52 = por %p50, %p51
      %p53 = scmp.ne.s32.totalorder %s45, %s48
      %p54 = scmp.eq.s32.totalorder %s21, 0
      %p55 = por %p53, %p54
      %p56 = scmp.ne.s32.totalorder %s45, %s48
      %p57 = scmp.eq.s32.totalorder %s26, 1
      %p58 = por %p56, %p57
      %p59 = scmp.ne.s32.totalorder %s48, %s49
      %p60 = scmp.eq.s32.totalorder %s26, 0
      %p61 = por %p59, %p60
      %p62 = scmp.ne.s32.totalorder %s48, %s49
      %p63 = scmp.eq.s32.totalorder %s27, 1
      %p64 = por %p62, %p63
      %p66 = scmp.ne.s32.totalorder %s49, %s65
      %p67 = scmp.eq.s32.totalorder %s27, 0
      %p68 = por %p66, %p67
      %s69 = ssub.s32 %s28, %s40
      %s70 = ssub.s32 %s29, %s36
      %s71 = sor.u32 %s69, %s70
      %p72 = scmp.eq.s32.totalorder %s71, 0
      %s74 = sadd.s32 %s73, 1
      %s75 = scalar_select %p72, %s73, %s74
      %p78 = pneg %p72
      %p79 = scmp.eq.s32.totalorder %s21, 1
      %p80 = por %p78, %p79
      %p81 = scmp.ne.s32.totalorder %s73, %s76
      %p82 = scmp.eq.s32.totalorder %s21, 0
      %p83 = por %p81, %p82
      %p84 = scmp.ne.s32.totalorder %s73, %s76
      %p85 = scmp.eq.s32.totalorder %s26, 1
      %p86 = por %p84, %p85
      %p87 = scmp.ne.s32.totalorder %s76, %s77
      %p88 = scmp.eq.s32.totalorder %s26, 0
      %p89 = por %p87, %p88
      %p90 = scmp.ne.s32.totalorder %s76, %s77
      %p91 = scmp.eq.s32.totalorder %s27, 1
      %p92 = por %p90, %p91
      %p94 = scmp.ne.s32.totalorder %s77, %s93
      %p95 = scmp.eq.s32.totalorder %s27, 0
      %p96 = por %p94, %p95
      %s98 = sadd.s32 %s97, 1
      %p101 = scmp.eq.s32.totalorder %s21, 1
      %p102 = scmp.ne.s32.totalorder %s97, %s99
      %p103 = scmp.eq.s32.totalorder %s21, 0
      %p104 = por %p102, %p103
      %p105 = scmp.ne.s32.totalorder %s97, %s99
      %p106 = scmp.eq.s32.totalorder %s26, 1
      %p107 = por %p105, %p106
      %p108 = scmp.ne.s32.totalorder %s99, %s100
      %p109 = scmp.eq.s32.totalorder %s26, 0
      %p110 = por %p108, %p109
      %p111 = scmp.ne.s32.totalorder %s99, %s100
      %p112 = scmp.eq.s32.totalorder %s27, 1
      %p113 = por %p111, %p112
      %p115 = scmp.ne.s32.totalorder %s100, %s114
      %p116 = scmp.eq.s32.totalorder %s27, 0
      %p117 = por %p115, %p116
      %s119 = sadd.s32 %s118, 1
      %p122 = scmp.eq.s32.totalorder %s21, 1
      %p123 = scmp.ne.s32.totalorder %s118, %s120
      %p124 = scmp.eq.s32.totalorder %s21, 0
      %p125 = por %p123, %p124
      %p126 = scmp.ne.s32.totalorder %s118, %s120
      %p127 = scmp.eq.s32.totalorder %s26, 1
      %p128 = por %p126, %p127
      %p129 = scmp.ne.s32.totalorder %s120, %s121
      %p130 = scmp.eq.s32.totalorder %s26, 0
      %p131 = por %p129, %p130
      %p132 = scmp.ne.s32.totalorder %s120, %s121
      %p133 = scmp.eq.s32.totalorder %s27, 1
      %p134 = por %p132, %p133
      %p136 = scmp.ne.s32.totalorder %s121, %s135
      %p137 = scmp.eq.s32.totalorder %s27, 0
      %p138 = por %p136, %p137
      %s140 = sadd.s32 %s139, 1
      %p143 = scmp.eq.s32.totalorder %s21, 1
      %p144 = scmp.ne.s32.totalorder %s139, %s141
      %p145 = scmp.eq.s32.totalorder %s21, 0
      %p146 = por %p144, %p145
      %p147 = scmp.ne.s32.totalorder %s139, %s141
      %p148 = scmp.eq.s32.totalorder %s26, 1
      %p149 = por %p147, %p148
      %p150 = scmp.ne.s32.totalorder %s141, %s142
      %p151 = scmp.eq.s32.totalorder %s26, 0
      %p152 = por %p150, %p151
      %p153 = scmp.ne.s32.totalorder %s141, %s142
      %p154 = scmp.eq.s32.totalorder %s27, 1
      %p155 = por %p153, %p154
      %p157 = scmp.ne.s32.totalorder %s142, %s156
      %p158 = scmp.eq.s32.totalorder %s27, 0
      %p159 = por %p157, %p158
      %s161 = sadd.s32 %s160, 1
      %p164 = scmp.eq.s32.totalorder %s21, 1
      %p165 = scmp.ne.s32.totalorder %s160, %s162
      %p166 = scmp.eq.s32.totalorder %s21, 0
      %p167 = por %p165, %p166
      %p168 = scmp.ne.s32.totalorder %s160, %s162
      %p169 = scmp.eq.s32.totalorder %s26, 1
      %p170 = por %p168, %p169
      %p171 = scmp.ne.s32.totalorder %s162, %s163
      %p172 = scmp.eq.s32.totalorder %s26, 0
      %p173 = por %p171, %p172
      %p174 = scmp.ne.s32.totalorder %s162, %s163
      %p175 = scmp.eq.s32.totalorder %s27, 1
      %p176 = por %p174, %p175
      %p178 = scmp.ne.s32.totalorder %s163, %s177
      %p179 = scmp.eq.s32.totalorder %s27, 0
      %p180 = por %p178, %p179
      %s181 = ssub.s32 %s28, %s40
      %s182 = ssub.s32 %s29, %s36
      %s183 = sor.u32 %s181, %s182
      %p184 = scmp.eq.s32.totalorder %s183, 0
      %s186 = sadd.s32 %s185, 1
      %s187 = scalar_select %p184, %s185, %s186
      %p190 = pneg %p184
      %p191 = scmp.eq.s32.totalorder %s21, 1
      %p192 = por %p190, %p191
      %p193 = scmp.ne.s32.totalorder %s185, %s188
      %p194 = scmp.eq.s32.totalorder %s21, 0
      %p195 = por %p193, %p194
      %p196 = scmp.ne.s32.totalorder %s185, %s188
      %p197 = scmp.eq.s32.totalorder %s26, 1
      %p198 = por %p196, %p197
      %p199 = scmp.ne.s32.totalorder %s188, %s189
      %p200 = scmp.eq.s32.totalorder %s26, 0
      %p201 = por %p199, %p200
      %p202 = scmp.ne.s32.totalorder %s188, %s189
      %p203 = scmp.eq.s32.totalorder %s27, 1
      %p204 = por %p202, %p203
      %p206 = scmp.ne.s32.totalorder %s189, %s205
      %p207 = scmp.eq.s32.totalorder %s27, 0
      %p208 = por %p206, %p207
      %p209 = scmp.le.s32.totalorder 1, %s21
      %p210 = scmp.lt.s32.totalorder %s21, 3
      %p211 = pnand %p209, %p210
      %p212 = pneg %p211
      // Predicated region
      $region9: #{tpu_custom_call.1} parent=5 // pred_check
        _
      $region10: #{tpu_custom_call.1} parent=5 // pred_check_branch
        %214 = sbr.rel (%p211) target = $region12
      $region11: #{tpu_custom_call.1} parent=5 // pred_region
        %s215 = ssub.s32 %s21, 1
        // Predicated region
        $region13: #{tpu_custom_call.1} parent=11 // pred_check
          %p216 = pneg %p110
        $region14: #{tpu_custom_call.1} parent=11 // pred_check_branch
          %218 = sbr.rel (%p216) target = $region16
        $region15: #{tpu_custom_call.1} parent=11 // pred_region
          _
        $region16: #{tpu_custom_call.1} parent=11 // pred_fallthru
          _
        // Predicated region
        $region17: #{tpu_custom_call.1} parent=11 // pred_check
          %p219 = pneg %p131
        $region18: #{tpu_custom_call.1} parent=11 // pred_check_branch
          %221 = sbr.rel (%p219) target = $region20
        $region19: #{tpu_custom_call.1} parent=11 // pred_region
          _
        $region20: #{tpu_custom_call.1} parent=11 // pred_fallthru
          _
        // Predicated region
        $region21: #{tpu_custom_call.1} parent=11 // pred_check
          %p222 = pneg %p152
        $region22: #{tpu_custom_call.1} parent=11 // pred_check_branch
          %224 = sbr.rel (%p222) target = $region24
        $region23: #{tpu_custom_call.1} parent=11 // pred_region
          _
        $region24: #{tpu_custom_call.1} parent=11 // pred_fallthru
          _
        // Predicated region
        $region25: #{tpu_custom_call.1} parent=11 // pred_check
          %p225 = pneg %p173
        $region26: #{tpu_custom_call.1} parent=11 // pred_check_branch
          %227 = sbr.rel (%p225) target = $region28
        $region27: #{tpu_custom_call.1} parent=11 // pred_region
          _
        $region28: #{tpu_custom_call.1} parent=11 // pred_fallthru
          _
      $region12: #{tpu_custom_call.1} parent=5 // pred_fallthru
        _
      %p228 = scmp.lt.s32.totalorder %s21, 2
      // Predicated region
      $region29: #{tpu_custom_call.1} parent=5 // pred_check
        %p229 = pneg %p228
      $region30: #{tpu_custom_call.1} parent=5 // pred_check_branch
        %231 = sbr.rel (%p229) target = $region32
      $region31: #{tpu_custom_call.1} parent=5 // pred_region
        // Predicated region
        $region33: #{tpu_custom_call.1} parent=31 // pred_check
          %p232 = pneg %p55
        $region34: #{tpu_custom_call.1} parent=31 // pred_check_branch
          %234 = sbr.rel (%p232) target = $region36
        $region35: #{tpu_custom_call.1} parent=31 // pred_region
          %s235 = sand.u32 %s45, 1
          %s236 = scalar_lea.sflag [#allocation3], %s235
          %s237 = sand.u32 %s45, 1
          %s238 = smul.addr %s237, 128
          %s239 = scalar_lea.vmem [#allocation2], %s238
          %s240 = smul.u32 4, %s29
          %s242 = ssub.s32 2048, 2048
          %243 = vsyncadd %s236, %s242
          %s244 = smul.addr %s28, 16
          %s245 = sadd.s32 %s240, %s244
          %s246 = smul.addr %s245, 128
          %s247 = scalar_lea.hbm %s0, %s246
          %s248 = sshll.u32 %s239, 4
          %s249 = int_to_ptr.vmem [resolvable:$true] %s248
          %254 = dma.hbm_to_vmem [thread:$0]  %s247, 2048, %s249, %s236, 512, 512, 32
        $region36: #{tpu_custom_call.1} parent=31 // pred_fallthru
          _
        // Predicated region
        $region37: #{tpu_custom_call.1} parent=31 // pred_check
          %p255 = pneg %p83
        $region38: #{tpu_custom_call.1} parent=31 // pred_check_branch
          %257 = sbr.rel (%p255) target = $region40
        $region39: #{tpu_custom_call.1} parent=31 // pred_region
          %s258 = sand.u32 %s73, 1
          %s259 = scalar_lea.sflag [#allocation6], %s258
          %s260 = sand.u32 %s73, 1
          %s261 = smul.addr %s260, 128
          %s262 = scalar_lea.vmem [#allocation5], %s261
          %s263 = smul.u32 4, %s29
          %s265 = ssub.s32 2048, 2048
          %266 = vsyncadd %s259, %s265
          %s267 = smul.addr %s28, 32
          %s268 = sadd.s32 %s263, %s267
          %s269 = smul.addr %s268, 64
          %s270 = scalar_lea.hbm %s1, %s269
          %s271 = sshll.u32 %s262, 4
          %s272 = int_to_ptr.vmem [resolvable:$true] %s271
          %277 = dma.hbm_to_vmem [thread:$0]  %s270, 2048, %s272, %s259, 256, 256, 16
        $region40: #{tpu_custom_call.1} parent=31 // pred_fallthru
          _
      $region32: #{tpu_custom_call.1} parent=5 // pred_fallthru
        _
      %p278 = scmp.le.s32.totalorder 1, %s21
      %p279 = scmp.lt.s32.totalorder %s21, 3
      %p280 = pnand %p278, %p279
      %p281 = pneg %p280
      // Predicated region
      $region41: #{tpu_custom_call.1} parent=5 // pred_check
        _
      $region42: #{tpu_custom_call.1} parent=5 // pred_check_branch
        %283 = sbr.rel (%p280) target = $region44
      $region43: #{tpu_custom_call.1} parent=5 // pred_region
        %s284 = ssub.s32 %s21, 1
        %s285 = sand.u32 %s48, 1
        %s286 = scalar_lea.sflag [#allocation3], %s285
        %s287 = sand.u32 %s48, 1
        %s288 = smul.addr %s287, 128
        %s289 = scalar_lea.vmem [#allocation2], %s288
        // Predicated region
        $region45: #{tpu_custom_call.1} parent=43 // pred_check
          %p290 = pneg %p61
        $region46: #{tpu_custom_call.1} parent=43 // pred_check_branch
          %292 = sbr.rel (%p290) target = $region48
        $region47: #{tpu_custom_call.1} parent=43 // pred_region
          %293 = dma.done %s286, 2048
        $region48: #{tpu_custom_call.1} parent=43 // pred_fallthru
          _
        %s294 = sand.u32 %s76, 1
        %s295 = scalar_lea.sflag [#allocation6], %s294
        %s296 = sand.u32 %s76, 1
        %s297 = smul.addr %s296, 128
        %s298 = scalar_lea.vmem [#allocation5], %s297
        // Predicated region
        $region49: #{tpu_custom_call.1} parent=43 // pred_check
          %p299 = pneg %p89
        $region50: #{tpu_custom_call.1} parent=43 // pred_check_branch
          %301 = sbr.rel (%p299) target = $region52
        $region51: #{tpu_custom_call.1} parent=43 // pred_region
          %302 = dma.done %s295, 2048
        $region52: #{tpu_custom_call.1} parent=43 // pred_fallthru
          _
        %s303 = sand.u32 %s48, 1
        %s304 = scalar_lea.sflag [#allocation3], %s303
        %s305 = sand.u32 %s48, 1
        %s306 = smul.addr %s305, 128
        %s307 = scalar_lea.vmem [#allocation2], %s306
        %p308 = pneg %p61
        %p309 = pneg %p58
        %s310 = sand.u32 %s76, 1
        %s311 = scalar_lea.sflag [#allocation6], %s310
        %s312 = sand.u32 %s76, 1
        %s313 = smul.addr %s312, 128
        %s314 = scalar_lea.vmem [#allocation5], %s313
        %p315 = pneg %p89
        %p316 = pneg %p86
        %p317 = pneg %p110
        %p318 = pneg %p107
        %p319 = pneg %p131
        %p320 = pneg %p128
        %p321 = pneg %p152
        %p322 = pneg %p149
        %p323 = pneg %p173
        %p324 = pneg %p170
        %p325 = pneg %p201
        %p326 = pneg %p198
        %s327 = sand.u32 %s188, 1
        %s328 = scalar_lea.sflag [#allocation4], %s327
        %s329 = sand.u32 %s188, 1
        %s330 = smul.addr %s329, 256
        %s331 = scalar_lea.vmem [#allocation7], %s330
        %s332 = smul.u32 4, %s31
        %s333 = smul.u32 4, %s31
        %s334 = smul.u32 4, %s31
        %v335 = vld [vmem:[%s289] sm:$0xff]
        %v336 = vld [vmem:[%s289 + $0x8] sm:$0xff]
        %v337 = vld [vmem:[%s289 + $0x10] sm:$0xff]
        %v338 = vld [vmem:[%s289 + $0x18] sm:$0xff]
        %v339 = vld [vmem:[%s289 + $0x20] sm:$0xff]
        %v340 = vld [vmem:[%s289 + $0x28] sm:$0xff]
        %v341 = vld [vmem:[%s289 + $0x30] sm:$0xff]
        %v342 = vld [vmem:[%s289 + $0x38] sm:$0xff]
        %v343 = vld [vmem:[%s289 + $0x40] sm:$0xff]
        %v344 = vld [vmem:[%s289 + $0x48] sm:$0xff]
        %v345 = vld [vmem:[%s289 + $0x50] sm:$0xff]
        %v346 = vld [vmem:[%s289 + $0x58] sm:$0xff]
        %v347 = vld [vmem:[%s289 + $0x60] sm:$0xff]
        %v348 = vld [vmem:[%s289 + $0x68] sm:$0xff]
        %v349 = vld [vmem:[%s289 + $0x70] sm:$0xff]
        %v350 = vld [vmem:[%s289 + $0x78] sm:$0xff]
        %v351 = vld [vmem:[%s2] sm:$0xff]
        %v352 = vld [vmem:[%s3] sm:$0xff]
        %v353 = vld [vmem:[%s4] sm:$0xff]
        %v354 = vld [vmem:[%s4 + $0x8] sm:$0xff]
        %v355 = vld [vmem:[%s4 + $0x10] sm:$0xff]
        %v372 = vcombine.low %v335, %v336
        %v373 = vcombine.high %v335, %v336
        %v374 = vcombine.low %v337, %v338
        %v375 = vcombine.high %v337, %v338
        %v376 = vcombine.low %v339, %v340
        %v377 = vcombine.high %v339, %v340
        %v378 = vcombine.low %v341, %v342
        %v379 = vcombine.high %v341, %v342
        %v380 = vcombine.low %v343, %v344
        %v381 = vcombine.high %v343, %v344
        %v382 = vcombine.low %v345, %v346
        %v383 = vcombine.high %v345, %v346
        %v384 = vcombine.low %v347, %v348
        %v385 = vcombine.high %v347, %v348
        %v386 = vcombine.low %v349, %v350
        %v387 = vcombine.high %v349, %v350
        %v404 = vcombine.low %v372, %v380
        %v405 = vcombine.high %v372, %v380
        %v407 = vunpack.c.l.s4 1983009808
        %v408 = vunpack.c.0.s8 %v407
        %v409 = vlaneseq
        %v410 = vshrl.u32 %v409, 7
        %v411 = vsub.s32 %v408, %v410
        %v412 = vrot.slane %v404, %v411
        %v414 = vunpack.c.l.s4 1983009808
        %v415 = vunpack.c.0.s8 %v414
        %v416 = vlaneseq
        %v417 = vshrl.u32 %v416, 7
        %v418 = vsub.s32 %v415, %v417
        %v419 = vrot.slane %v405, %v418
        %v420 = vcombine.low %v376, %v384
        %v421 = vcombine.high %v376, %v384
        %v423 = vunpack.c.l.s4 1983009808
        %v424 = vunpack.c.0.s8 %v423
        %v425 = vlaneseq
        %v426 = vshrl.u32 %v425, 7
        %v427 = vsub.s32 %v424, %v426
        %v428 = vrot.slane %v420, %v427
        %v430 = vunpack.c.l.s4 1983009808
        %v431 = vunpack.c.0.s8 %v430
        %v432 = vlaneseq
        %v433 = vshrl.u32 %v432, 7
        %v434 = vsub.s32 %v431, %v433
        %v435 = vrot.slane %v421, %v434
        %v436 = vcombine.low %v412, %v428
        %v437 = vcombine.high %v412, %v428
        %v439 = vunpack.c.l.s4 1934713408
        %v440 = vunpack.c.0.s8 %v439
        %v441 = vlaneseq
        %v442 = vshrl.u32 %v441, 7
        %v443 = vsub.s32 %v440, %v442
        %v444 = vrot.slane %v436, %v443
        %v446 = vunpack.c.l.s4 1934713408
        %v447 = vunpack.c.0.s8 %v446
        %v448 = vlaneseq
        %v449 = vshrl.u32 %v448, 7
        %v450 = vsub.s32 %v447, %v449
        %v451 = vrot.slane %v437, %v450
        %v452 = vcombine.low %v419, %v435
        %v453 = vcombine.high %v419, %v435
        %v455 = vunpack.c.l.s4 1934713408
        %v456 = vunpack.c.0.s8 %v455
        %v457 = vlaneseq
        %v458 = vshrl.u32 %v457, 7
        %v459 = vsub.s32 %v456, %v458
        %v460 = vrot.slane %v452, %v459
        %v462 = vunpack.c.l.s4 1934713408
        %v463 = vunpack.c.0.s8 %v462
        %v464 = vlaneseq
        %v465 = vshrl.u32 %v464, 7
        %v466 = vsub.s32 %v463, %v465
        %v467 = vrot.slane %v453, %v466
        %v468 = vcombine.low %v444, %v460
        %v469 = vcombine.high %v444, %v460
        %v470 = vcombine.low %v451, %v467
        %v471 = vcombine.high %v451, %v467
        %v472 = vcombine.low %v373, %v381
        %v473 = vcombine.high %v373, %v381
        %v475 = vunpack.c.l.s4 1983009808
        %v476 = vunpack.c.0.s8 %v475
        %v477 = vlaneseq
        %v478 = vshrl.u32 %v477, 7
        %v479 = vsub.s32 %v476, %v478
        %v480 = vrot.slane %v472, %v479
        %v482 = vunpack.c.l.s4 1983009808
        %v483 = vunpack.c.0.s8 %v482
        %v484 = vlaneseq
        %v485 = vshrl.u32 %v484, 7
        %v486 = vsub.s32 %v483, %v485
        %v487 = vrot.slane %v473, %v486
        %v488 = vcombine.low %v377, %v385
        %v489 = vcombine.high %v377, %v385
        %v491 = vunpack.c.l.s4 1983009808
        %v492 = vunpack.c.0.s8 %v491
        %v493 = vlaneseq
        %v494 = vshrl.u32 %v493, 7
        %v495 = vsub.s32 %v492, %v494
        %v496 = vrot.slane %v488, %v495
        %v498 = vunpack.c.l.s4 1983009808
        %v499 = vunpack.c.0.s8 %v498
        %v500 = vlaneseq
        %v501 = vshrl.u32 %v500, 7
        %v502 = vsub.s32 %v499, %v501
        %v503 = vrot.slane %v489, %v502
        %v504 = vcombine.low %v480, %v496
        %v505 = vcombine.high %v480, %v496
        %v507 = vunpack.c.l.s4 1934713408
        %v508 = vunpack.c.0.s8 %v507
        %v509 = vlaneseq
        %v510 = vshrl.u32 %v509, 7
        %v511 = vsub.s32 %v508, %v510
        %v512 = vrot.slane %v504, %v511
        %v514 = vunpack.c.l.s4 1934713408
        %v515 = vunpack.c.0.s8 %v514
        %v516 = vlaneseq
        %v517 = vshrl.u32 %v516, 7
        %v518 = vsub.s32 %v515, %v517
        %v519 = vrot.slane %v505, %v518
        %v520 = vcombine.low %v487, %v503
        %v521 = vcombine.high %v487, %v503
        %v523 = vunpack.c.l.s4 1934713408
        %v524 = vunpack.c.0.s8 %v523
        %v525 = vlaneseq
        %v526 = vshrl.u32 %v525, 7
        %v527 = vsub.s32 %v524, %v526
        %v528 = vrot.slane %v520, %v527
        %v530 = vunpack.c.l.s4 1934713408
        %v531 = vunpack.c.0.s8 %v530
        %v532 = vlaneseq
        %v533 = vshrl.u32 %v532, 7
        %v534 = vsub.s32 %v531, %v533
        %v535 = vrot.slane %v521, %v534
        %v536 = vcombine.low %v512, %v528
        %v537 = vcombine.high %v512, %v528
        %v538 = vcombine.low %v519, %v535
        %v539 = vcombine.high %v519, %v535
        %v540 = vcombine.low %v374, %v382
        %v541 = vcombine.high %v374, %v382
        %v543 = vunpack.c.l.s4 1983009808
        %v544 = vunpack.c.0.s8 %v543
        %v545 = vlaneseq
        %v546 = vshrl.u32 %v545, 7
        %v547 = vsub.s32 %v544, %v546
        %v548 = vrot.slane %v540, %v547
        %v550 = vunpack.c.l.s4 1983009808
        %v551 = vunpack.c.0.s8 %v550
        %v552 = vlaneseq
        %v553 = vshrl.u32 %v552, 7
        %v554 = vsub.s32 %v551, %v553
        %v555 = vrot.slane %v541, %v554
        %v556 = vcombine.low %v378, %v386
        %v557 = vcombine.high %v378, %v386
        %v559 = vunpack.c.l.s4 1983009808
        %v560 = vunpack.c.0.s8 %v559
        %v561 = vlaneseq
        %v562 = vshrl.u32 %v561, 7
        %v563 = vsub.s32 %v560, %v562
        %v564 = vrot.slane %v556, %v563
        %v566 = vunpack.c.l.s4 1983009808
        %v567 = vunpack.c.0.s8 %v566
        %v568 = vlaneseq
        %v569 = vshrl.u32 %v568, 7
        %v570 = vsub.s32 %v567, %v569
        %v571 = vrot.slane %v557, %v570
        %v572 = vcombine.low %v548, %v564
        %v573 = vcombine.high %v548, %v564
        %v575 = vunpack.c.l.s4 1934713408
        %v576 = vunpack.c.0.s8 %v575
        %v577 = vlaneseq
        %v578 = vshrl.u32 %v577, 7
        %v579 = vsub.s32 %v576, %v578
        %v580 = vrot.slane %v572, %v579
        %v582 = vunpack.c.l.s4 1934713408
        %v583 = vunpack.c.0.s8 %v582
        %v584 = vlaneseq
        %v585 = vshrl.u32 %v584, 7
        %v586 = vsub.s32 %v583, %v585
        %v587 = vrot.slane %v573, %v586
        %v588 = vcombine.low %v555, %v571
        %v589 = vcombine.high %v555, %v571
        %v591 = vunpack.c.l.s4 1934713408
        %v592 = vunpack.c.0.s8 %v591
        %v593 = vlaneseq
        %v594 = vshrl.u32 %v593, 7
        %v595 = vsub.s32 %v592, %v594
        %v596 = vrot.slane %v588, %v595
        %v598 = vunpack.c.l.s4 1934713408
        %v599 = vunpack.c.0.s8 %v598
        %v600 = vlaneseq
        %v601 = vshrl.u32 %v600, 7
        %v602 = vsub.s32 %v599, %v601
        %v603 = vrot.slane %v589, %v602
        %v604 = vcombine.low %v580, %v596
        %v605 = vcombine.high %v580, %v596
        %v606 = vcombine.low %v587, %v603
        %v607 = vcombine.high %v587, %v603
        %v608 = vcombine.low %v375, %v383
        %v609 = vcombine.high %v375, %v383
        %v611 = vunpack.c.l.s4 1983009808
        %v612 = vunpack.c.0.s8 %v611
        %v613 = vlaneseq
        %v614 = vshrl.u32 %v613, 7
        %v615 = vsub.s32 %v612, %v614
        %v616 = vrot.slane %v608, %v615
        %v618 = vunpack.c.l.s4 1983009808
        %v619 = vunpack.c.0.s8 %v618
        %v620 = vlaneseq
        %v621 = vshrl.u32 %v620, 7
        %v622 = vsub.s32 %v619, %v621
        %v623 = vrot.slane %v609, %v622
        %v624 = vcombine.low %v379, %v387
        %v625 = vcombine.high %v379, %v387
        %v627 = vunpack.c.l.s4 1983009808
        %v628 = vunpack.c.0.s8 %v627
        %v629 = vlaneseq
        %v630 = vshrl.u32 %v629, 7
        %v631 = vsub.s32 %v628, %v630
        %v632 = vrot.slane %v624, %v631
        %v634 = vunpack.c.l.s4 1983009808
        %v635 = vunpack.c.0.s8 %v634
        %v636 = vlaneseq
        %v637 = vshrl.u32 %v636, 7
        %v638 = vsub.s32 %v635, %v637
        %v639 = vrot.slane %v625, %v638
        %v640 = vcombine.low %v616, %v632
        %v641 = vcombine.high %v616, %v632
        %v643 = vunpack.c.l.s4 1934713408
        %v644 = vunpack.c.0.s8 %v643
        %v645 = vlaneseq
        %v646 = vshrl.u32 %v645, 7
        %v647 = vsub.s32 %v644, %v646
        %v648 = vrot.slane %v640, %v647
        %v650 = vunpack.c.l.s4 1934713408
        %v651 = vunpack.c.0.s8 %v650
        %v652 = vlaneseq
        %v653 = vshrl.u32 %v652, 7
        %v654 = vsub.s32 %v651, %v653
        %v655 = vrot.slane %v641, %v654
        %v656 = vcombine.low %v623, %v639
        %v657 = vcombine.high %v623, %v639
        %v659 = vunpack.c.l.s4 1934713408
        %v660 = vunpack.c.0.s8 %v659
        %v661 = vlaneseq
        %v662 = vshrl.u32 %v661, 7
        %v663 = vsub.s32 %v660, %v662
        %v664 = vrot.slane %v656, %v663
        %v666 = vunpack.c.l.s4 1934713408
        %v667 = vunpack.c.0.s8 %v666
        %v668 = vlaneseq
        %v669 = vshrl.u32 %v668, 7
        %v670 = vsub.s32 %v667, %v669
        %v671 = vrot.slane %v657, %v670
        %v672 = vcombine.low %v648, %v664
        %v673 = vcombine.high %v648, %v664
        %v674 = vcombine.low %v655, %v671
        %v675 = vcombine.high %v655, %v671
        %v678 = vcombine.high %v468, %v468
        %v679 = vcombine.high %v604, %v604
        %v682 = vcombine.high %v469, %v469
        %v683 = vcombine.high %v605, %v605
        %v686 = vcombine.high %v470, %v470
        %v687 = vcombine.high %v606, %v606
        %v690 = vcombine.high %v471, %v471
        %v691 = vcombine.high %v607, %v607
        %v694 = vcombine.high %v536, %v536
        %v695 = vcombine.high %v672, %v672
        %v698 = vcombine.high %v537, %v537
        %v699 = vcombine.high %v673, %v673
        %v702 = vcombine.high %v538, %v538
        %v703 = vcombine.high %v674, %v674
        %v706 = vcombine.high %v539, %v539
        %v707 = vcombine.high %v675, %v675
        %v708 = vld [vmem:[%s298] sm:$0xff]
        %v709 = vld [vmem:[%s298 + $0x8] sm:$0xff]
        %v710 = vld [vmem:[%s298 + $0x10] sm:$0xff]
        %v711 = vld [vmem:[%s298 + $0x18] sm:$0xff]
        %v712 = vld [vmem:[%s298 + $0x20] sm:$0xff]
        %v713 = vld [vmem:[%s298 + $0x28] sm:$0xff]
        %v714 = vld [vmem:[%s298 + $0x30] sm:$0xff]
        %v715 = vld [vmem:[%s298 + $0x38] sm:$0xff]
        %v716 = vld [vmem:[%s298 + $0x40] sm:$0xff]
        %v717 = vld [vmem:[%s298 + $0x48] sm:$0xff]
        %v718 = vld [vmem:[%s298 + $0x50] sm:$0xff]
        %v719 = vld [vmem:[%s298 + $0x58] sm:$0xff]
        %v720 = vld [vmem:[%s298 + $0x60] sm:$0xff]
        %v721 = vld [vmem:[%s298 + $0x68] sm:$0xff]
        %v722 = vld [vmem:[%s298 + $0x70] sm:$0xff]
        %v723 = vld [vmem:[%s298 + $0x78] sm:$0xff]
        %v724 = vunpack.c.l.bf16 %v708
        %v725 = vunpack.c.h.bf16 %v708
        %v726 = vunpack.c.l.bf16 %v709
        %v727 = vunpack.c.h.bf16 %v709
        %v728 = vunpack.c.l.bf16 %v710
        %v729 = vunpack.c.h.bf16 %v710
        %v730 = vunpack.c.l.bf16 %v711
        %v731 = vunpack.c.h.bf16 %v711
        %v732 = vunpack.c.l.bf16 %v712
        %v733 = vunpack.c.h.bf16 %v712
        %v734 = vunpack.c.l.bf16 %v713
        %v735 = vunpack.c.h.bf16 %v713
        %v736 = vunpack.c.l.bf16 %v714
        %v737 = vunpack.c.h.bf16 %v714
        %v738 = vunpack.c.l.bf16 %v715
        %v739 = vunpack.c.h.bf16 %v715
        %v740 = vunpack.c.l.bf16 %v716
        %v741 = vunpack.c.h.bf16 %v716
        %v742 = vunpack.c.l.bf16 %v717
        %v743 = vunpack.c.h.bf16 %v717
        %v744 = vunpack.c.l.bf16 %v718
        %v745 = vunpack.c.h.bf16 %v718
        %v746 = vunpack.c.l.bf16 %v719
        %v747 = vunpack.c.h.bf16 %v719
        %v748 = vunpack.c.l.bf16 %v720
        %v749 = vunpack.c.h.bf16 %v720
        %v750 = vunpack.c.l.bf16 %v721
        %v751 = vunpack.c.h.bf16 %v721
        %v752 = vunpack.c.l.bf16 %v722
        %v753 = vunpack.c.h.bf16 %v722
        %v754 = vunpack.c.l.bf16 %v723
        %v755 = vunpack.c.h.bf16 %v723
        %v756 = vcombine.low %v468, %v470
        %v757 = vcombine.high %v468, %v470
        %v759 = vunpack.c.l.s4 1983009808
        %v760 = vunpack.c.0.s8 %v759
        %v761 = vlaneseq
        %v762 = vshrl.u32 %v761, 7
        %v763 = vsub.s32 %v760, %v762
        %v764 = vrot.slane %v756, %v763
        %v766 = vunpack.c.l.s4 1983009808
        %v767 = vunpack.c.0.s8 %v766
        %v768 = vlaneseq
        %v769 = vshrl.u32 %v768, 7
        %v770 = vsub.s32 %v767, %v769
        %v771 = vrot.slane %v757, %v770
        %v772 = vcombine.low %v469, %v471
        %v773 = vcombine.high %v469, %v471
        %v775 = vunpack.c.l.s4 1983009808
        %v776 = vunpack.c.0.s8 %v775
        %v777 = vlaneseq
        %v778 = vshrl.u32 %v777, 7
        %v779 = vsub.s32 %v776, %v778
        %v780 = vrot.slane %v772, %v779
        %v782 = vunpack.c.l.s4 1983009808
        %v783 = vunpack.c.0.s8 %v782
        %v784 = vlaneseq
        %v785 = vshrl.u32 %v784, 7
        %v786 = vsub.s32 %v783, %v785
        %v787 = vrot.slane %v773, %v786
        %v788 = vcombine.low %v764, %v780
        %v789 = vcombine.high %v764, %v780
        %v791 = vunpack.c.l.s4 1934713408
        %v792 = vunpack.c.0.s8 %v791
        %v793 = vlaneseq
        %v794 = vshrl.u32 %v793, 7
        %v795 = vsub.s32 %v792, %v794
        %v796 = vrot.slane %v788, %v795
        %v798 = vunpack.c.l.s4 1934713408
        %v799 = vunpack.c.0.s8 %v798
        %v800 = vlaneseq
        %v801 = vshrl.u32 %v800, 7
        %v802 = vsub.s32 %v799, %v801
        %v803 = vrot.slane %v789, %v802
        %v804 = vcombine.low %v771, %v787
        %v805 = vcombine.high %v771, %v787
        %v807 = vunpack.c.l.s4 1934713408
        %v808 = vunpack.c.0.s8 %v807
        %v809 = vlaneseq
        %v810 = vshrl.u32 %v809, 7
        %v811 = vsub.s32 %v808, %v810
        %v812 = vrot.slane %v804, %v811
        %v814 = vunpack.c.l.s4 1934713408
        %v815 = vunpack.c.0.s8 %v814
        %v816 = vlaneseq
        %v817 = vshrl.u32 %v816, 7
        %v818 = vsub.s32 %v815, %v817
        %v819 = vrot.slane %v805, %v818
        %v820 = vcombine.low %v796, %v812
        %v821 = vcombine.high %v796, %v812
        %v822 = vcombine.low %v803, %v819
        %v823 = vcombine.high %v803, %v819
        %v824 = vcombine.low %v536, %v538
        %v825 = vcombine.high %v536, %v538
        %v827 = vunpack.c.l.s4 1983009808
        %v828 = vunpack.c.0.s8 %v827
        %v829 = vlaneseq
        %v830 = vshrl.u32 %v829, 7
        %v831 = vsub.s32 %v828, %v830
        %v832 = vrot.slane %v824, %v831
        %v834 = vunpack.c.l.s4 1983009808
        %v835 = vunpack.c.0.s8 %v834
        %v836 = vlaneseq
        %v837 = vshrl.u32 %v836, 7
        %v838 = vsub.s32 %v835, %v837
        %v839 = vrot.slane %v825, %v838
        %v840 = vcombine.low %v537, %v539
        %v841 = vcombine.high %v537, %v539
        %v843 = vunpack.c.l.s4 1983009808
        %v844 = vunpack.c.0.s8 %v843
        %v845 = vlaneseq
        %v846 = vshrl.u32 %v845, 7
        %v847 = vsub.s32 %v844, %v846
        %v848 = vrot.slane %v840, %v847
        %v850 = vunpack.c.l.s4 1983009808
        %v851 = vunpack.c.0.s8 %v850
        %v852 = vlaneseq
        %v853 = vshrl.u32 %v852, 7
        %v854 = vsub.s32 %v851, %v853
        %v855 = vrot.slane %v841, %v854
        %v856 = vcombine.low %v832, %v848
        %v857 = vcombine.high %v832, %v848
        %v859 = vunpack.c.l.s4 1934713408
        %v860 = vunpack.c.0.s8 %v859
        %v861 = vlaneseq
        %v862 = vshrl.u32 %v861, 7
        %v863 = vsub.s32 %v860, %v862
        %v864 = vrot.slane %v856, %v863
        %v866 = vunpack.c.l.s4 1934713408
        %v867 = vunpack.c.0.s8 %v866
        %v868 = vlaneseq
        %v869 = vshrl.u32 %v868, 7
        %v870 = vsub.s32 %v867, %v869
        %v871 = vrot.slane %v857, %v870
        %v872 = vcombine.low %v839, %v855
        %v873 = vcombine.high %v839, %v855
        %v875 = vunpack.c.l.s4 1934713408
        %v876 = vunpack.c.0.s8 %v875
        %v877 = vlaneseq
        %v878 = vshrl.u32 %v877, 7
        %v879 = vsub.s32 %v876, %v878
        %v880 = vrot.slane %v872, %v879
        %v882 = vunpack.c.l.s4 1934713408
        %v883 = vunpack.c.0.s8 %v882
        %v884 = vlaneseq
        %v885 = vshrl.u32 %v884, 7
        %v886 = vsub.s32 %v883, %v885
        %v887 = vrot.slane %v873, %v886
        %v888 = vcombine.low %v864, %v880
        %v889 = vcombine.high %v864, %v880
        %v890 = vcombine.low %v871, %v887
        %v891 = vcombine.high %v871, %v887
        %v892 = vcombine.low %v604, %v606
        %v893 = vcombine.high %v604, %v606
        %v895 = vunpack.c.l.s4 1983009808
        %v896 = vunpack.c.0.s8 %v895
        %v897 = vlaneseq
        %v898 = vshrl.u32 %v897, 7
        %v899 = vsub.s32 %v896, %v898
        %v900 = vrot.slane %v892, %v899
        %v902 = vunpack.c.l.s4 1983009808
        %v903 = vunpack.c.0.s8 %v902
        %v904 = vlaneseq
        %v905 = vshrl.u32 %v904, 7
        %v906 = vsub.s32 %v903, %v905
        %v907 = vrot.slane %v893, %v906
        %v908 = vcombine.low %v605, %v607
        %v909 = vcombine.high %v605, %v607
        %v911 = vunpack.c.l.s4 1983009808
        %v912 = vunpack.c.0.s8 %v911
        %v913 = vlaneseq
        %v914 = vshrl.u32 %v913, 7
        %v915 = vsub.s32 %v912, %v914
        %v916 = vrot.slane %v908, %v915
        %v918 = vunpack.c.l.s4 1983009808
        %v919 = vunpack.c.0.s8 %v918
        %v920 = vlaneseq
        %v921 = vshrl.u32 %v920, 7
        %v922 = vsub.s32 %v919, %v921
        %v923 = vrot.slane %v909, %v922
        %v924 = vcombine.low %v900, %v916
        %v925 = vcombine.high %v900, %v916
        %v927 = vunpack.c.l.s4 1934713408
        %v928 = vunpack.c.0.s8 %v927
        %v929 = vlaneseq
        %v930 = vshrl.u32 %v929, 7
        %v931 = vsub.s32 %v928, %v930
        %v932 = vrot.slane %v924, %v931
        %v934 = vunpack.c.l.s4 1934713408
        %v935 = vunpack.c.0.s8 %v934
        %v936 = vlaneseq
        %v937 = vshrl.u32 %v936, 7
        %v938 = vsub.s32 %v935, %v937
        %v939 = vrot.slane %v925, %v938
        %v940 = vcombine.low %v907, %v923
        %v941 = vcombine.high %v907, %v923
        %v943 = vunpack.c.l.s4 1934713408
        %v944 = vunpack.c.0.s8 %v943
        %v945 = vlaneseq
        %v946 = vshrl.u32 %v945, 7
        %v947 = vsub.s32 %v944, %v946
        %v948 = vrot.slane %v940, %v947
        %v950 = vunpack.c.l.s4 1934713408
        %v951 = vunpack.c.0.s8 %v950
        %v952 = vlaneseq
        %v953 = vshrl.u32 %v952, 7
        %v954 = vsub.s32 %v951, %v953
        %v955 = vrot.slane %v941, %v954
        %v956 = vcombine.low %v932, %v948
        %v957 = vcombine.high %v932, %v948
        %v958 = vcombine.low %v939, %v955
        %v959 = vcombine.high %v939, %v955
        %v960 = vcombine.low %v672, %v674
        %v961 = vcombine.high %v672, %v674
        %v963 = vunpack.c.l.s4 1983009808
        %v964 = vunpack.c.0.s8 %v963
        %v965 = vlaneseq
        %v966 = vshrl.u32 %v965, 7
        %v967 = vsub.s32 %v964, %v966
        %v968 = vrot.slane %v960, %v967
        %v970 = vunpack.c.l.s4 1983009808
        %v971 = vunpack.c.0.s8 %v970
        %v972 = vlaneseq
        %v973 = vshrl.u32 %v972, 7
        %v974 = vsub.s32 %v971, %v973
        %v975 = vrot.slane %v961, %v974
        %v976 = vcombine.low %v673, %v675
        %v977 = vcombine.high %v673, %v675
        %v979 = vunpack.c.l.s4 1983009808
        %v980 = vunpack.c.0.s8 %v979
        %v981 = vlaneseq
        %v982 = vshrl.u32 %v981, 7
        %v983 = vsub.s32 %v980, %v982
        %v984 = vrot.slane %v976, %v983
        %v986 = vunpack.c.l.s4 1983009808
        %v987 = vunpack.c.0.s8 %v986
        %v988 = vlaneseq
        %v989 = vshrl.u32 %v988, 7
        %v990 = vsub.s32 %v987, %v989
        %v991 = vrot.slane %v977, %v990
        %v992 = vcombine.low %v968, %v984
        %v993 = vcombine.high %v968, %v984
        %v995 = vunpack.c.l.s4 1934713408
        %v996 = vunpack.c.0.s8 %v995
        %v997 = vlaneseq
        %v998 = vshrl.u32 %v997, 7
        %v999 = vsub.s32 %v996, %v998
        %v1000 = vrot.slane %v992, %v999
        %v1002 = vunpack.c.l.s4 1934713408
        %v1003 = vunpack.c.0.s8 %v1002
        %v1004 = vlaneseq
        %v1005 = vshrl.u32 %v1004, 7
        %v1006 = vsub.s32 %v1003, %v1005
        %v1007 = vrot.slane %v993, %v1006
        %v1008 = vcombine.low %v975, %v991
        %v1009 = vcombine.high %v975, %v991
        %v1011 = vunpack.c.l.s4 1934713408
        %v1012 = vunpack.c.0.s8 %v1011
        %v1013 = vlaneseq
        %v1014 = vshrl.u32 %v1013, 7
        %v1015 = vsub.s32 %v1012, %v1014
        %v1016 = vrot.slane %v1008, %v1015
        %v1018 = vunpack.c.l.s4 1934713408
        %v1019 = vunpack.c.0.s8 %v1018
        %v1020 = vlaneseq
        %v1021 = vshrl.u32 %v1020, 7
        %v1022 = vsub.s32 %v1019, %v1021
        %v1023 = vrot.slane %v1009, %v1022
        %v1024 = vcombine.low %v1000, %v1016
        %v1025 = vcombine.high %v1000, %v1016
        %v1026 = vcombine.low %v1007, %v1023
        %v1027 = vcombine.high %v1007, %v1023
        %v1032 = vcombine.low %v820, %v888
        %v1033 = vcombine.high %v820, %v888
        %v1034 = vcombine.low %v956, %v1024
        %v1035 = vcombine.high %v956, %v1024
        %v1044 = vcombine.low %v821, %v889
        %v1045 = vcombine.high %v821, %v889
        %v1046 = vcombine.low %v957, %v1025
        %v1047 = vcombine.high %v957, %v1025
        %v1056 = vcombine.low %v822, %v890
        %v1057 = vcombine.high %v822, %v890
        %v1058 = vcombine.low %v958, %v1026
        %v1059 = vcombine.high %v958, %v1026
        %v1068 = vcombine.low %v823, %v891
        %v1069 = vcombine.high %v823, %v891
        %v1070 = vcombine.low %v959, %v1027
        %v1071 = vcombine.high %v959, %v1027
        %vm1076 = vcmask 64512
        %v1078 = vsel %vm1076, %v352, 0
        %1080 = vmatprep.subr.mxu0 %v1033
        %1081 = vmatpush1.msra.mxu0 %v1032
        %1082 = vmatprep.subr.mxu0 0.0
        %1083 = vmatpush1.msra.mxu0 0.0
        %1084 = vmatprep.subr.mxu0 0.0
        %1085 = vmatpush1.msra.mxu0 0.0
        %1086 = vmatprep.subr.mxu0 0.0
        %1087 = vmatpush1.msra.mxu0 0.0
        %1088 = vmatprep.subr.mxu0 0.0
        %1089 = vmatpush1.msra.mxu0 0.0
        %1090 = vmatprep.subr.mxu0 0.0
        %1091 = vmatpush1.msra.mxu0 0.0
        %1092 = vmatprep.subr.mxu0 0.0
        %1093 = vmatpush1.msra.mxu0 0.0
        %1094 = vmatprep.subr.mxu0 0.0
        %1095 = vmatpush1.msra.mxu0 0.0
        %1096 = vmatprep.subr.mxu0 0.0
        %1097 = vmatpush1.msra.mxu0 0.0
        %1098 = vmatprep.subr.mxu0 0.0
        %1099 = vmatpush1.msra.mxu0 0.0
        %1100 = vmatprep.subr.mxu0 0.0
        %1101 = vmatpush1.msra.mxu0 0.0
        %1102 = vmatprep.subr.mxu0 0.0
        %1103 = vmatpush1.msra.mxu0 0.0
        %1104 = vmatprep.subr.mxu0 0.0
        %1105 = vmatpush1.msra.mxu0 0.0
        %1106 = vmatprep.subr.mxu0 0.0
        %1107 = vmatpush1.msra.mxu0 0.0
        %1108 = vmatprep.subr.mxu0 0.0
        %1109 = vmatpush1.msra.mxu0 0.0
        %1110 = vmatprep.subr.mxu0 0.0
        %1111 = vmatpush1.msra.mxu0 0.0
        %1112 = vmatprep.subr.mxu0 0.0
        %1113 = vmatpush1.msra.mxu0 0.0
        %1114 = vmatprep.subr.mxu0 0.0
        %1115 = vmatpush1.msra.mxu0 0.0
        %1116 = vmatprep.subr.mxu0 0.0
        %1117 = vmatpush1.msra.mxu0 0.0
        %1118 = vmatprep.subr.mxu0 0.0
        %1119 = vmatpush1.msra.mxu0 0.0
        %1120 = vmatprep.subr.mxu0 0.0
        %1121 = vmatpush1.msra.mxu0 0.0
        %1122 = vmatprep.subr.mxu0 0.0
        %1123 = vmatpush1.msra.mxu0 0.0
        %1124 = vmatprep.subr.mxu0 0.0
        %1125 = vmatpush1.msra.mxu0 0.0
        %1126 = vmatprep.subr.mxu0 0.0
        %1127 = vmatpush1.msra.mxu0 0.0
        %1128 = vmatprep.subr.mxu0 0.0
        %1129 = vmatpush1.msra.mxu0 0.0
        %1130 = vmatprep.subr.mxu0 0.0
        %1131 = vmatpush1.msra.mxu0 0.0
        %1132 = vmatprep.subr.mxu0 0.0
        %1133 = vmatpush1.msra.mxu0 0.0
        %1134 = vmatprep.subr.mxu0 0.0
        %1135 = vmatpush1.msra.mxu0 0.0
        %1136 = vmatprep.subr.mxu0 0.0
        %1137 = vmatpush1.msra.mxu0 0.0
        %1138 = vmatprep.subr.mxu0 0.0
        %1139 = vmatpush1.msra.mxu0 0.0
        %1140 = vmatprep.subr.mxu0 0.0
        %1141 = vmatpush1.msra.mxu0 0.0
        %1142 = vmatprep.subr.mxu0 0.0
        %1143 = vmatpush1.msra.mxu0 0.0
        %1144 = vmatprep.mubr.f32.mxu0 0.0
        %1145 = vmatmul.mubr.f32.gmra.mrb[0].mxu0 %v1078
        %v1146 = vpop.f32.mrb[0].mxu0
        %v1147 = vadd.f32 0.0, %v1146
        %v1148 = vpop.f32.mrb[0].mxu0
        %v1149 = vadd.f32 0.0, %v1148
        %1150 = vdwg.mxu0
        %1151 = vmatprep.subr.mxu0 %v1035
        %1152 = vmatpush1.msra.mxu0 %v1034
        %1153 = vmatprep.subr.mxu0 0.0
        %1154 = vmatpush1.msra.mxu0 0.0
        %1155 = vmatprep.subr.mxu0 0.0
        %1156 = vmatpush1.msra.mxu0 0.0
        %1157 = vmatprep.subr.mxu0 0.0
        %1158 = vmatpush1.msra.mxu0 0.0
        %1159 = vmatprep.subr.mxu0 0.0
        %1160 = vmatpush1.msra.mxu0 0.0
        %1161 = vmatprep.subr.mxu0 0.0
        %1162 = vmatpush1.msra.mxu0 0.0
        %1163 = vmatprep.subr.mxu0 0.0
        %1164 = vmatpush1.msra.mxu0 0.0
        %1165 = vmatprep.subr.mxu0 0.0
        %1166 = vmatpush1.msra.mxu0 0.0
        %1167 = vmatprep.subr.mxu0 0.0
        %1168 = vmatpush1.msra.mxu0 0.0
        %1169 = vmatprep.subr.mxu0 0.0
        %1170 = vmatpush1.msra.mxu0 0.0
        %1171 = vmatprep.subr.mxu0 0.0
        %1172 = vmatpush1.msra.mxu0 0.0
        %1173 = vmatprep.subr.mxu0 0.0
        %1174 = vmatpush1.msra.mxu0 0.0
        %1175 = vmatprep.subr.mxu0 0.0
        %1176 = vmatpush1.msra.mxu0 0.0
        %1177 = vmatprep.subr.mxu0 0.0
        %1178 = vmatpush1.msra.mxu0 0.0
        %1179 = vmatprep.subr.mxu0 0.0
        %1180 = vmatpush1.msra.mxu0 0.0
        %1181 = vmatprep.subr.mxu0 0.0
        %1182 = vmatpush1.msra.mxu0 0.0
        %1183 = vmatprep.subr.mxu0 0.0
        %1184 = vmatpush1.msra.mxu0 0.0
        %1185 = vmatprep.subr.mxu0 0.0
        %1186 = vmatpush1.msra.mxu0 0.0
        %1187 = vmatprep.subr.mxu0 0.0
        %1188 = vmatpush1.msra.mxu0 0.0
        %1189 = vmatprep.subr.mxu0 0.0
        %1190 = vmatpush1.msra.mxu0 0.0
        %1191 = vmatprep.subr.mxu0 0.0
        %1192 = vmatpush1.msra.mxu0 0.0
        %1193 = vmatprep.subr.mxu0 0.0
        %1194 = vmatpush1.msra.mxu0 0.0
        %1195 = vmatprep.subr.mxu0 0.0
        %1196 = vmatpush1.msra.mxu0 0.0
        %1197 = vmatprep.subr.mxu0 0.0
        %1198 = vmatpush1.msra.mxu0 0.0
        %1199 = vmatprep.subr.mxu0 0.0
        %1200 = vmatpush1.msra.mxu0 0.0
        %1201 = vmatprep.subr.mxu0 0.0
        %1202 = vmatpush1.msra.mxu0 0.0
        %1203 = vmatprep.subr.mxu0 0.0
        %1204 = vmatpush1.msra.mxu0 0.0
        %1205 = vmatprep.subr.mxu0 0.0
        %1206 = vmatpush1.msra.mxu0 0.0
        %1207 = vmatprep.subr.mxu0 0.0
        %1208 = vmatpush1.msra.mxu0 0.0
        %1209 = vmatprep.subr.mxu0 0.0
        %1210 = vmatpush1.msra.mxu0 0.0
        %1211 = vmatprep.subr.mxu0 0.0
        %1212 = vmatpush1.msra.mxu0 0.0
        %1213 = vmatprep.subr.mxu0 0.0
        %1214 = vmatpush1.msra.mxu0 0.0
        %1215 = vmatprep.mubr.f32.mxu0 0.0
        %1216 = vmatmul.mubr.f32.gmra.mrb[0].mxu0 %v1078
        %v1217 = vpop.f32.mrb[0].mxu0
        %v1218 = vadd.f32 0.0, %v1217
        %v1219 = vpop.f32.mrb[0].mxu0
        %v1220 = vadd.f32 0.0, %v1219
        %1221 = vdwg.mxu0
        %1222 = vmatprep.subr.mxu0 %v1045
        %1223 = vmatpush1.msra.mxu0 %v1044
        %1224 = vmatprep.subr.mxu0 0.0
        %1225 = vmatpush1.msra.mxu0 0.0
        %1226 = vmatprep.subr.mxu0 0.0
        %1227 = vmatpush1.msra.mxu0 0.0
        %1228 = vmatprep.subr.mxu0 0.0
        %1229 = vmatpush1.msra.mxu0 0.0
        %1230 = vmatprep.subr.mxu0 0.0
        %1231 = vmatpush1.msra.mxu0 0.0
        %1232 = vmatprep.subr.mxu0 0.0
        %1233 = vmatpush1.msra.mxu0 0.0
        %1234 = vmatprep.subr.mxu0 0.0
        %1235 = vmatpush1.msra.mxu0 0.0
        %1236 = vmatprep.subr.mxu0 0.0
        %1237 = vmatpush1.msra.mxu0 0.0
        %1238 = vmatprep.subr.mxu0 0.0
        %1239 = vmatpush1.msra.mxu0 0.0
        %1240 = vmatprep.subr.mxu0 0.0
        %1241 = vmatpush1.msra.mxu0 0.0
        %1242 = vmatprep.subr.mxu0 0.0
        %1243 = vmatpush1.msra.mxu0 0.0
        %1244 = vmatprep.subr.mxu0 0.0
        %1245 = vmatpush1.msra.mxu0 0.0
        %1246 = vmatprep.subr.mxu0 0.0
        %1247 = vmatpush1.msra.mxu0 0.0
        %1248 = vmatprep.subr.mxu0 0.0
        %1249 = vmatpush1.msra.mxu0 0.0
        %1250 = vmatprep.subr.mxu0 0.0
        %1251 = vmatpush1.msra.mxu0 0.0
        %1252 = vmatprep.subr.mxu0 0.0
        %1253 = vmatpush1.msra.mxu0 0.0
        %1254 = vmatprep.subr.mxu0 0.0
        %1255 = vmatpush1.msra.mxu0 0.0
        %1256 = vmatprep.subr.mxu0 0.0
        %1257 = vmatpush1.msra.mxu0 0.0
        %1258 = vmatprep.subr.mxu0 0.0
        %1259 = vmatpush1.msra.mxu0 0.0
        %1260 = vmatprep.subr.mxu0 0.0
        %1261 = vmatpush1.msra.mxu0 0.0
        %1262 = vmatprep.subr.mxu0 0.0
        %1263 = vmatpush1.msra.mxu0 0.0
        %1264 = vmatprep.subr.mxu0 0.0
        %1265 = vmatpush1.msra.mxu0 0.0
        %1266 = vmatprep.subr.mxu0 0.0
        %1267 = vmatpush1.msra.mxu0 0.0
        %1268 = vmatprep.subr.mxu0 0.0
        %1269 = vmatpush1.msra.mxu0 0.0
        %1270 = vmatprep.subr.mxu0 0.0
        %1271 = vmatpush1.msra.mxu0 0.0
        %1272 = vmatprep.subr.mxu0 0.0
        %1273 = vmatpush1.msra.mxu0 0.0
        %1274 = vmatprep.subr.mxu0 0.0
        %1275 = vmatpush1.msra.mxu0 0.0
        %1276 = vmatprep.subr.mxu0 0.0
        %1277 = vmatpush1.msra.mxu0 0.0
        %1278 = vmatprep.subr.mxu0 0.0
        %1279 = vmatpush1.msra.mxu0 0.0
        %1280 = vmatprep.subr.mxu0 0.0
        %1281 = vmatpush1.msra.mxu0 0.0
        %1282 = vmatprep.subr.mxu0 0.0
        %1283 = vmatpush1.msra.mxu0 0.0
        %1284 = vmatprep.subr.mxu0 0.0
        %1285 = vmatpush1.msra.mxu0 0.0
        %1286 = vmatprep.mubr.f32.mxu0 0.0
        %1287 = vmatmul.mubr.f32.gmra.mrb[0].mxu0 %v1078
        %v1288 = vpop.f32.mrb[0].mxu0
        %v1289 = vadd.f32 0.0, %v1288
        %v1290 = vpop.f32.mrb[0].mxu0
        %v1291 = vadd.f32 0.0, %v1290
        %1292 = vdwg.mxu0
        %1293 = vmatprep.subr.mxu0 %v1047
        %1294 = vmatpush1.msra.mxu0 %v1046
        %1295 = vmatprep.subr.mxu0 0.0
        %1296 = vmatpush1.msra.mxu0 0.0
        %1297 = vmatprep.subr.mxu0 0.0
        %1298 = vmatpush1.msra.mxu0 0.0
        %1299 = vmatprep.subr.mxu0 0.0
        %1300 = vmatpush1.msra.mxu0 0.0
        %1301 = vmatprep.subr.mxu0 0.0
        %1302 = vmatpush1.msra.mxu0 0.0
        %1303 = vmatprep.subr.mxu0 0.0
        %1304 = vmatpush1.msra.mxu0 0.0
        %1305 = vmatprep.subr.mxu0 0.0
        %1306 = vmatpush1.msra.mxu0 0.0
        %1307 = vmatprep.subr.mxu0 0.0
        %1308 = vmatpush1.msra.mxu0 0.0
        %1309 = vmatprep.subr.mxu0 0.0
        %1310 = vmatpush1.msra.mxu0 0.0
        %1311 = vmatprep.subr.mxu0 0.0
        %1312 = vmatpush1.msra.mxu0 0.0
        %1313 = vmatprep.subr.mxu0 0.0
        %1314 = vmatpush1.msra.mxu0 0.0
        %1315 = vmatprep.subr.mxu0 0.0
        %1316 = vmatpush1.msra.mxu0 0.0
        %1317 = vmatprep.subr.mxu0 0.0
        %1318 = vmatpush1.msra.mxu0 0.0
        %1319 = vmatprep.subr.mxu0 0.0
        %1320 = vmatpush1.msra.mxu0 0.0
        %1321 = vmatprep.subr.mxu0 0.0
        %1322 = vmatpush1.msra.mxu0 0.0
        %1323 = vmatprep.subr.mxu0 0.0
        %1324 = vmatpush1.msra.mxu0 0.0
        %1325 = vmatprep.subr.mxu0 0.0
        %1326 = vmatpush1.msra.mxu0 0.0
        %1327 = vmatprep.subr.mxu0 0.0
        %1328 = vmatpush1.msra.mxu0 0.0
        %1329 = vmatprep.subr.mxu0 0.0
        %1330 = vmatpush1.msra.mxu0 0.0
        %1331 = vmatprep.subr.mxu0 0.0
        %1332 = vmatpush1.msra.mxu0 0.0
        %1333 = vmatprep.subr.mxu0 0.0
        %1334 = vmatpush1.msra.mxu0 0.0
        %1335 = vmatprep.subr.mxu0 0.0
        %1336 = vmatpush1.msra.mxu0 0.0
        %1337 = vmatprep.subr.mxu0 0.0
        %1338 = vmatpush1.msra.mxu0 0.0
        %1339 = vmatprep.subr.mxu0 0.0
        %1340 = vmatpush1.msra.mxu0 0.0
        %1341 = vmatprep.subr.mxu0 0.0
        %1342 = vmatpush1.msra.mxu0 0.0
        %1343 = vmatprep.subr.mxu0 0.0
        %1344 = vmatpush1.msra.mxu0 0.0
        %1345 = vmatprep.subr.mxu0 0.0
        %1346 = vmatpush1.msra.mxu0 0.0
        %1347 = vmatprep.subr.mxu0 0.0
        %1348 = vmatpush1.msra.mxu0 0.0
        %1349 = vmatprep.subr.mxu0 0.0
        %1350 = vmatpush1.msra.mxu0 0.0
        %1351 = vmatprep.subr.mxu0 0.0
        %1352 = vmatpush1.msra.mxu0 0.0
        %1353 = vmatprep.subr.mxu0 0.0
        %1354 = vmatpush1.msra.mxu0 0.0
        %1355 = vmatprep.subr.mxu0 0.0
        %1356 = vmatpush1.msra.mxu0 0.0
        %1357 = vmatprep.mubr.f32.mxu0 0.0
        %1358 = vmatmul.mubr.f32.gmra.mrb[0].mxu0 %v1078
        %v1359 = vpop.f32.mrb[0].mxu0
        %v1360 = vadd.f32 0.0, %v1359
        %v1361 = vpop.f32.mrb[0].mxu0
        %v1362 = vadd.f32 0.0, %v1361
        %1363 = vdwg.mxu0
        %1364 = vmatprep.subr.mxu0 %v1057
        %1365 = vmatpush1.msra.mxu0 %v1056
        %1366 = vmatprep.subr.mxu0 0.0
        %1367 = vmatpush1.msra.mxu0 0.0
        %1368 = vmatprep.subr.mxu0 0.0
        %1369 = vmatpush1.msra.mxu0 0.0
        %1370 = vmatprep.subr.mxu0 0.0
        %1371 = vmatpush1.msra.mxu0 0.0
        %1372 = vmatprep.subr.mxu0 0.0
        %1373 = vmatpush1.msra.mxu0 0.0
        %1374 = vmatprep.subr.mxu0 0.0
        %1375 = vmatpush1.msra.mxu0 0.0
        %1376 = vmatprep.subr.mxu0 0.0
        %1377 = vmatpush1.msra.mxu0 0.0
        %1378 = vmatprep.subr.mxu0 0.0
        %1379 = vmatpush1.msra.mxu0 0.0
        %1380 = vmatprep.subr.mxu0 0.0
        %1381 = vmatpush1.msra.mxu0 0.0
        %1382 = vmatprep.subr.mxu0 0.0
        %1383 = vmatpush1.msra.mxu0 0.0
        %1384 = vmatprep.subr.mxu0 0.0
        %1385 = vmatpush1.msra.mxu0 0.0
        %1386 = vmatprep.subr.mxu0 0.0
        %1387 = vmatpush1.msra.mxu0 0.0
        %1388 = vmatprep.subr.mxu0 0.0
        %1389 = vmatpush1.msra.mxu0 0.0
        %1390 = vmatprep.subr.mxu0 0.0
        %1391 = vmatpush1.msra.mxu0 0.0
        %1392 = vmatprep.subr.mxu0 0.0
        %1393 = vmatpush1.msra.mxu0 0.0
        %1394 = vmatprep.subr.mxu0 0.0
        %1395 = vmatpush1.msra.mxu0 0.0
        %1396 = vmatprep.subr.mxu0 0.0
        %1397 = vmatpush1.msra.mxu0 0.0
        %1398 = vmatprep.subr.mxu0 0.0
        %1399 = vmatpush1.msra.mxu0 0.0
        %1400 = vmatprep.subr.mxu0 0.0
        %1401 = vmatpush1.msra.mxu0 0.0
        %1402 = vmatprep.subr.mxu0 0.0
        %1403 = vmatpush1.msra.mxu0 0.0
        %1404 = vmatprep.subr.mxu0 0.0
        %1405 = vmatpush1.msra.mxu0 0.0
        %1406 = vmatprep.subr.mxu0 0.0
        %1407 = vmatpush1.msra.mxu0 0.0
        %1408 = vmatprep.subr.mxu0 0.0
        %1409 = vmatpush1.msra.mxu0 0.0
        %1410 = vmatprep.subr.mxu0 0.0
        %1411 = vmatpush1.msra.mxu0 0.0
        %1412 = vmatprep.subr.mxu0 0.0
        %1413 = vmatpush1.msra.mxu0 0.0
        %1414 = vmatprep.subr.mxu0 0.0
        %1415 = vmatpush1.msra.mxu0 0.0
        %1416 = vmatprep.subr.mxu0 0.0
        %1417 = vmatpush1.msra.mxu0 0.0
        %1418 = vmatprep.subr.mxu0 0.0
        %1419 = vmatpush1.msra.mxu0 0.0
        %1420 = vmatprep.subr.mxu0 0.0
        %1421 = vmatpush1.msra.mxu0 0.0
        %1422 = vmatprep.subr.mxu0 0.0
        %1423 = vmatpush1.msra.mxu0 0.0
        %1424 = vmatprep.subr.mxu0 0.0
        %1425 = vmatpush1.msra.mxu0 0.0
        %1426 = vmatprep.subr.mxu0 0.0
        %1427 = vmatpush1.msra.mxu0 0.0
        %1428 = vmatprep.mubr.f32.mxu0 0.0
        %1429 = vmatmul.mubr.f32.gmra.mrb[0].mxu0 %v1078
        %v1430 = vpop.f32.mrb[0].mxu0
        %v1431 = vadd.f32 0.0, %v1430
        %v1432 = vpop.f32.mrb[0].mxu0
        %v1433 = vadd.f32 0.0, %v1432
        %1434 = vdwg.mxu0
        %1435 = vmatprep.subr.mxu0 %v1059
        %1436 = vmatpush1.msra.mxu0 %v1058
        %1437 = vmatprep.subr.mxu0 0.0
        %1438 = vmatpush1.msra.mxu0 0.0
        %1439 = vmatprep.subr.mxu0 0.0
        %1440 = vmatpush1.msra.mxu0 0.0
        %1441 = vmatprep.subr.mxu0 0.0
        %1442 = vmatpush1.msra.mxu0 0.0
        %1443 = vmatprep.subr.mxu0 0.0
        %1444 = vmatpush1.msra.mxu0 0.0
        %1445 = vmatprep.subr.mxu0 0.0
        %1446 = vmatpush1.msra.mxu0 0.0
        %1447 = vmatprep.subr.mxu0 0.0
        %1448 = vmatpush1.msra.mxu0 0.0
        %1449 = vmatprep.subr.mxu0 0.0
        %1450 = vmatpush1.msra.mxu0 0.0
        %1451 = vmatprep.subr.mxu0 0.0
        %1452 = vmatpush1.msra.mxu0 0.0
        %1453 = vmatprep.subr.mxu0 0.0
        %1454 = vmatpush1.msra.mxu0 0.0
        %1455 = vmatprep.subr.mxu0 0.0
        %1456 = vmatpush1.msra.mxu0 0.0
        %1457 = vmatprep.subr.mxu0 0.0
        %1458 = vmatpush1.msra.mxu0 0.0
        %1459 = vmatprep.subr.mxu0 0.0
        %1460 = vmatpush1.msra.mxu0 0.0
        %1461 = vmatprep.subr.mxu0 0.0
        %1462 = vmatpush1.msra.mxu0 0.0
        %1463 = vmatprep.subr.mxu0 0.0
        %1464 = vmatpush1.msra.mxu0 0.0
        %1465 = vmatprep.subr.mxu0 0.0
        %1466 = vmatpush1.msra.mxu0 0.0
        %1467 = vmatprep.subr.mxu0 0.0
        %1468 = vmatpush1.msra.mxu0 0.0
        %1469 = vmatprep.subr.mxu0 0.0
        %1470 = vmatpush1.msra.mxu0 0.0
        %1471 = vmatprep.subr.mxu0 0.0
        %1472 = vmatpush1.msra.mxu0 0.0
        %1473 = vmatprep.subr.mxu0 0.0
        %1474 = vmatpush1.msra.mxu0 0.0
        %1475 = vmatprep.subr.mxu0 0.0
        %1476 = vmatpush1.msra.mxu0 0.0
        %1477 = vmatprep.subr.mxu0 0.0
        %1478 = vmatpush1.msra.mxu0 0.0
        %1479 = vmatprep.subr.mxu0 0.0
        %1480 = vmatpush1.msra.mxu0 0.0
        %1481 = vmatprep.subr.mxu0 0.0
        %1482 = vmatpush1.msra.mxu0 0.0
        %1483 = vmatprep.subr.mxu0 0.0
        %1484 = vmatpush1.msra.mxu0 0.0
        %1485 = vmatprep.subr.mxu0 0.0
        %1486 = vmatpush1.msra.mxu0 0.0
        %1487 = vmatprep.subr.mxu0 0.0
        %1488 = vmatpush1.msra.mxu0 0.0
        %1489 = vmatprep.subr.mxu0 0.0
        %1490 = vmatpush1.msra.mxu0 0.0
        %1491 = vmatprep.subr.mxu0 0.0
        %1492 = vmatpush1.msra.mxu0 0.0
        %1493 = vmatprep.subr.mxu0 0.0
        %1494 = vmatpush1.msra.mxu0 0.0
        %1495 = vmatprep.subr.mxu0 0.0
        %1496 = vmatpush1.msra.mxu0 0.0
        %1497 = vmatprep.subr.mxu0 0.0
        %1498 = vmatpush1.msra.mxu0 0.0
        %1499 = vmatprep.mubr.f32.mxu0 0.0
        %1500 = vmatmul.mubr.f32.gmra.mrb[0].mxu0 %v1078
        %v1501 = vpop.f32.mrb[0].mxu0
        %v1502 = vadd.f32 0.0, %v1501
        %v1503 = vpop.f32.mrb[0].mxu0
        %v1504 = vadd.f32 0.0, %v1503
        %1505 = vdwg.mxu0
        %1506 = vmatprep.subr.mxu0 %v1069
        %1507 = vmatpush1.msra.mxu0 %v1068
        %1508 = vmatprep.subr.mxu0 0.0
        %1509 = vmatpush1.msra.mxu0 0.0
        %1510 = vmatprep.subr.mxu0 0.0
        %1511 = vmatpush1.msra.mxu0 0.0
        %1512 = vmatprep.subr.mxu0 0.0
        %1513 = vmatpush1.msra.mxu0 0.0
        %1514 = vmatprep.subr.mxu0 0.0
        %1515 = vmatpush1.msra.mxu0 0.0
        %1516 = vmatprep.subr.mxu0 0.0
        %1517 = vmatpush1.msra.mxu0 0.0
        %1518 = vmatprep.subr.mxu0 0.0
        %1519 = vmatpush1.msra.mxu0 0.0
        %1520 = vmatprep.subr.mxu0 0.0
        %1521 = vmatpush1.msra.mxu0 0.0
        %1522 = vmatprep.subr.mxu0 0.0
        %1523 = vmatpush1.msra.mxu0 0.0
        %1524 = vmatprep.subr.mxu0 0.0
        %1525 = vmatpush1.msra.mxu0 0.0
        %1526 = vmatprep.subr.mxu0 0.0
        %1527 = vmatpush1.msra.mxu0 0.0
        %1528 = vmatprep.subr.mxu0 0.0
        %1529 = vmatpush1.msra.mxu0 0.0
        %1530 = vmatprep.subr.mxu0 0.0
        %1531 = vmatpush1.msra.mxu0 0.0
        %1532 = vmatprep.subr.mxu0 0.0
        %1533 = vmatpush1.msra.mxu0 0.0
        %1534 = vmatprep.subr.mxu0 0.0
        %1535 = vmatpush1.msra.mxu0 0.0
        %1536 = vmatprep.subr.mxu0 0.0
        %1537 = vmatpush1.msra.mxu0 0.0
        %1538 = vmatprep.subr.mxu0 0.0
        %1539 = vmatpush1.msra.mxu0 0.0
        %1540 = vmatprep.subr.mxu0 0.0
        %1541 = vmatpush1.msra.mxu0 0.0
        %1542 = vmatprep.subr.mxu0 0.0
        %1543 = vmatpush1.msra.mxu0 0.0
        %1544 = vmatprep.subr.mxu0 0.0
        %1545 = vmatpush1.msra.mxu0 0.0
        %1546 = vmatprep.subr.mxu0 0.0
        %1547 = vmatpush1.msra.mxu0 0.0
        %1548 = vmatprep.subr.mxu0 0.0
        %1549 = vmatpush1.msra.mxu0 0.0
        %1550 = vmatprep.subr.mxu0 0.0
        %1551 = vmatpush1.msra.mxu0 0.0
        %1552 = vmatprep.subr.mxu0 0.0
        %1553 = vmatpush1.msra.mxu0 0.0
        %1554 = vmatprep.subr.mxu0 0.0
        %1555 = vmatpush1.msra.mxu0 0.0
        %1556 = vmatprep.subr.mxu0 0.0
        %1557 = vmatpush1.msra.mxu0 0.0
        %1558 = vmatprep.subr.mxu0 0.0
        %1559 = vmatpush1.msra.mxu0 0.0
        %1560 = vmatprep.subr.mxu0 0.0
        %1561 = vmatpush1.msra.mxu0 0.0
        %1562 = vmatprep.subr.mxu0 0.0
        %1563 = vmatpush1.msra.mxu0 0.0
        %1564 = vmatprep.subr.mxu0 0.0
        %1565 = vmatpush1.msra.mxu0 0.0
        %1566 = vmatprep.subr.mxu0 0.0
        %1567 = vmatpush1.msra.mxu0 0.0
        %1568 = vmatprep.subr.mxu0 0.0
        %1569 = vmatpush1.msra.mxu0 0.0
        %1570 = vmatprep.mubr.f32.mxu0 0.0
        %1571 = vmatmul.mubr.f32.gmra.mrb[0].mxu0 %v1078
        %v1572 = vpop.f32.mrb[0].mxu0
        %v1573 = vadd.f32 0.0, %v1572
        %v1574 = vpop.f32.mrb[0].mxu0
        %v1575 = vadd.f32 0.0, %v1574
        %1576 = vdwg.mxu0
        %1577 = vmatprep.subr.mxu0 %v1071
        %1578 = vmatpush1.msra.mxu0 %v1070
        %1579 = vmatprep.subr.mxu0 0.0
        %1580 = vmatpush1.msra.mxu0 0.0
        %1581 = vmatprep.subr.mxu0 0.0
        %1582 = vmatpush1.msra.mxu0 0.0
        %1583 = vmatprep.subr.mxu0 0.0
        %1584 = vmatpush1.msra.mxu0 0.0
        %1585 = vmatprep.subr.mxu0 0.0
        %1586 = vmatpush1.msra.mxu0 0.0
        %1587 = vmatprep.subr.mxu0 0.0
        %1588 = vmatpush1.msra.mxu0 0.0
        %1589 = vmatprep.subr.mxu0 0.0
        %1590 = vmatpush1.msra.mxu0 0.0
        %1591 = vmatprep.subr.mxu0 0.0
        %1592 = vmatpush1.msra.mxu0 0.0
        %1593 = vmatprep.subr.mxu0 0.0
        %1594 = vmatpush1.msra.mxu0 0.0
        %1595 = vmatprep.subr.mxu0 0.0
        %1596 = vmatpush1.msra.mxu0 0.0
        %1597 = vmatprep.subr.mxu0 0.0
        %1598 = vmatpush1.msra.mxu0 0.0
        %1599 = vmatprep.subr.mxu0 0.0
        %1600 = vmatpush1.msra.mxu0 0.0
        %1601 = vmatprep.subr.mxu0 0.0
        %1602 = vmatpush1.msra.mxu0 0.0
        %1603 = vmatprep.subr.mxu0 0.0
        %1604 = vmatpush1.msra.mxu0 0.0
        %1605 = vmatprep.subr.mxu0 0.0
        %1606 = vmatpush1.msra.mxu0 0.0
        %1607 = vmatprep.subr.mxu0 0.0
        %1608 = vmatpush1.msra.mxu0 0.0
        %1609 = vmatprep.subr.mxu0 0.0
        %1610 = vmatpush1.msra.mxu0 0.0
        %1611 = vmatprep.subr.mxu0 0.0
        %1612 = vmatpush1.msra.mxu0 0.0
        %1613 = vmatprep.subr.mxu0 0.0
        %1614 = vmatpush1.msra.mxu0 0.0
        %1615 = vmatprep.subr.mxu0 0.0
        %1616 = vmatpush1.msra.mxu0 0.0
        %1617 = vmatprep.subr.mxu0 0.0
        %1618 = vmatpush1.msra.mxu0 0.0
        %1619 = vmatprep.subr.mxu0 0.0
        %1620 = vmatpush1.msra.mxu0 0.0
        %1621 = vmatprep.subr.mxu0 0.0
        %1622 = vmatpush1.msra.mxu0 0.0
        %1623 = vmatprep.subr.mxu0 0.0
        %1624 = vmatpush1.msra.mxu0 0.0
        %1625 = vmatprep.subr.mxu0 0.0
        %1626 = vmatpush1.msra.mxu0 0.0
        %1627 = vmatprep.subr.mxu0 0.0
        %1628 = vmatpush1.msra.mxu0 0.0
        %1629 = vmatprep.subr.mxu0 0.0
        %1630 = vmatpush1.msra.mxu0 0.0
        %1631 = vmatprep.subr.mxu0 0.0
        %1632 = vmatpush1.msra.mxu0 0.0
        %1633 = vmatprep.subr.mxu0 0.0
        %1634 = vmatpush1.msra.mxu0 0.0
        %1635 = vmatprep.subr.mxu0 0.0
        %1636 = vmatpush1.msra.mxu0 0.0
        %1637 = vmatprep.subr.mxu0 0.0
        %1638 = vmatpush1.msra.mxu0 0.0
        %1639 = vmatprep.subr.mxu0 0.0
        %1640 = vmatpush1.msra.mxu0 0.0
        %1641 = vmatprep.mubr.f32.mxu0 0.0
        %1642 = vmatmul.mubr.f32.gmra.mrb[0].mxu0 %v1078
        %v1643 = vpop.f32.mrb[0].mxu0
        %v1644 = vadd.f32 0.0, %v1643
        %v1645 = vpop.f32.mrb[0].mxu0
        %v1646 = vadd.f32 0.0, %v1645
        %1647 = vdwg.mxu0
        %v1664 = vcombine.low %v1147, %v1149
        %v1665 = vcombine.high %v1147, %v1149
        %v1666 = vcombine.low %v1218, %v1220
        %v1667 = vcombine.high %v1218, %v1220
        %v1668 = vcombine.low %v1289, %v1291
        %v1669 = vcombine.high %v1289, %v1291
        %v1670 = vcombine.low %v1360, %v1362
        %v1671 = vcombine.high %v1360, %v1362
        %v1672 = vcombine.low %v1431, %v1433
        %v1673 = vcombine.high %v1431, %v1433
        %v1674 = vcombine.low %v1502, %v1504
        %v1675 = vcombine.high %v1502, %v1504
        %v1676 = vcombine.low %v1573, %v1575
        %v1677 = vcombine.high %v1573, %v1575
        %v1678 = vcombine.low %v1644, %v1646
        %v1679 = vcombine.high %v1644, %v1646
        %v1696 = vcombine.low %v1664, %v1672
        %v1697 = vcombine.high %v1664, %v1672
        %v1699 = vunpack.c.l.s4 1983009808
        %v1700 = vunpack.c.0.s8 %v1699
        %v1701 = vlaneseq
        %v1702 = vshrl.u32 %v1701, 7
        %v1703 = vsub.s32 %v1700, %v1702
        %v1704 = vrot.slane %v1696, %v1703
        %v1706 = vunpack.c.l.s4 1983009808
        %v1707 = vunpack.c.0.s8 %v1706
        %v1708 = vlaneseq
        %v1709 = vshrl.u32 %v1708, 7
        %v1710 = vsub.s32 %v1707, %v1709
        %v1711 = vrot.slane %v1697, %v1710
        %v1712 = vcombine.low %v1668, %v1676
        %v1713 = vcombine.high %v1668, %v1676
        %v1715 = vunpack.c.l.s4 1983009808
        %v1716 = vunpack.c.0.s8 %v1715
        %v1717 = vlaneseq
        %v1718 = vshrl.u32 %v1717, 7
        %v1719 = vsub.s32 %v1716, %v1718
        %v1720 = vrot.slane %v1712, %v1719
        %v1722 = vunpack.c.l.s4 1983009808
        %v1723 = vunpack.c.0.s8 %v1722
        %v1724 = vlaneseq
        %v1725 = vshrl.u32 %v1724, 7
        %v1726 = vsub.s32 %v1723, %v1725
        %v1727 = vrot.slane %v1713, %v1726
        %v1728 = vcombine.low %v1704, %v1720
        %v1729 = vcombine.high %v1704, %v1720
        %v1731 = vunpack.c.l.s4 1934713408
        %v1732 = vunpack.c.0.s8 %v1731
        %v1733 = vlaneseq
        %v1734 = vshrl.u32 %v1733, 7
        %v1735 = vsub.s32 %v1732, %v1734
        %v1736 = vrot.slane %v1728, %v1735
        %v1738 = vunpack.c.l.s4 1934713408
        %v1739 = vunpack.c.0.s8 %v1738
        %v1740 = vlaneseq
        %v1741 = vshrl.u32 %v1740, 7
        %v1742 = vsub.s32 %v1739, %v1741
        %v1743 = vrot.slane %v1729, %v1742
        %v1744 = vcombine.low %v1711, %v1727
        %v1745 = vcombine.high %v1711, %v1727
        %v1747 = vunpack.c.l.s4 1934713408
        %v1748 = vunpack.c.0.s8 %v1747
        %v1749 = vlaneseq
        %v1750 = vshrl.u32 %v1749, 7
        %v1751 = vsub.s32 %v1748, %v1750
        %v1752 = vrot.slane %v1744, %v1751
        %v1754 = vunpack.c.l.s4 1934713408
        %v1755 = vunpack.c.0.s8 %v1754
        %v1756 = vlaneseq
        %v1757 = vshrl.u32 %v1756, 7
        %v1758 = vsub.s32 %v1755, %v1757
        %v1759 = vrot.slane %v1745, %v1758
        %v1760 = vcombine.low %v1736, %v1752
        %v1761 = vcombine.high %v1736, %v1752
        %v1762 = vcombine.low %v1743, %v1759
        %v1763 = vcombine.high %v1743, %v1759
        %v1764 = vcombine.low %v1665, %v1673
        %v1765 = vcombine.high %v1665, %v1673
        %v1767 = vunpack.c.l.s4 1983009808
        %v1768 = vunpack.c.0.s8 %v1767
        %v1769 = vlaneseq
        %v1770 = vshrl.u32 %v1769, 7
        %v1771 = vsub.s32 %v1768, %v1770
        %v1772 = vrot.slane %v1764, %v1771
        %v1774 = vunpack.c.l.s4 1983009808
        %v1775 = vunpack.c.0.s8 %v1774
        %v1776 = vlaneseq
        %v1777 = vshrl.u32 %v1776, 7
        %v1778 = vsub.s32 %v1775, %v1777
        %v1779 = vrot.slane %v1765, %v1778
        %v1780 = vcombine.low %v1669, %v1677
        %v1781 = vcombine.high %v1669, %v1677
        %v1783 = vunpack.c.l.s4 1983009808
        %v1784 = vunpack.c.0.s8 %v1783
        %v1785 = vlaneseq
        %v1786 = vshrl.u32 %v1785, 7
        %v1787 = vsub.s32 %v1784, %v1786
        %v1788 = vrot.slane %v1780, %v1787
        %v1790 = vunpack.c.l.s4 1983009808
        %v1791 = vunpack.c.0.s8 %v1790
        %v1792 = vlaneseq
        %v1793 = vshrl.u32 %v1792, 7
        %v1794 = vsub.s32 %v1791, %v1793
        %v1795 = vrot.slane %v1781, %v1794
        %v1796 = vcombine.low %v1772, %v1788
        %v1797 = vcombine.high %v1772, %v1788
        %v1799 = vunpack.c.l.s4 1934713408
        %v1800 = vunpack.c.0.s8 %v1799
        %v1801 = vlaneseq
        %v1802 = vshrl.u32 %v1801, 7
        %v1803 = vsub.s32 %v1800, %v1802
        %v1804 = vrot.slane %v1796, %v1803
        %v1806 = vunpack.c.l.s4 1934713408
        %v1807 = vunpack.c.0.s8 %v1806
        %v1808 = vlaneseq
        %v1809 = vshrl.u32 %v1808, 7
        %v1810 = vsub.s32 %v1807, %v1809
        %v1811 = vrot.slane %v1797, %v1810
        %v1812 = vcombine.low %v1779, %v1795
        %v1813 = vcombine.high %v1779, %v1795
        %v1815 = vunpack.c.l.s4 1934713408
        %v1816 = vunpack.c.0.s8 %v1815
        %v1817 = vlaneseq
        %v1818 = vshrl.u32 %v1817, 7
        %v1819 = vsub.s32 %v1816, %v1818
        %v1820 = vrot.slane %v1812, %v1819
        %v1822 = vunpack.c.l.s4 1934713408
        %v1823 = vunpack.c.0.s8 %v1822
        %v1824 = vlaneseq
        %v1825 = vshrl.u32 %v1824, 7
        %v1826 = vsub.s32 %v1823, %v1825
        %v1827 = vrot.slane %v1813, %v1826
        %v1828 = vcombine.low %v1804, %v1820
        %v1829 = vcombine.high %v1804, %v1820
        %v1830 = vcombine.low %v1811, %v1827
        %v1831 = vcombine.high %v1811, %v1827
        %v1832 = vcombine.low %v1666, %v1674
        %v1833 = vcombine.high %v1666, %v1674
        %v1835 = vunpack.c.l.s4 1983009808
        %v1836 = vunpack.c.0.s8 %v1835
        %v1837 = vlaneseq
        %v1838 = vshrl.u32 %v1837, 7
        %v1839 = vsub.s32 %v1836, %v1838
        %v1840 = vrot.slane %v1832, %v1839
        %v1842 = vunpack.c.l.s4 1983009808
        %v1843 = vunpack.c.0.s8 %v1842
        %v1844 = vlaneseq
        %v1845 = vshrl.u32 %v1844, 7
        %v1846 = vsub.s32 %v1843, %v1845
        %v1847 = vrot.slane %v1833, %v1846
        %v1848 = vcombine.low %v1670, %v1678
        %v1849 = vcombine.high %v1670, %v1678
        %v1851 = vunpack.c.l.s4 1983009808
        %v1852 = vunpack.c.0.s8 %v1851
        %v1853 = vlaneseq
        %v1854 = vshrl.u32 %v1853, 7
        %v1855 = vsub.s32 %v1852, %v1854
        %v1856 = vrot.slane %v1848, %v1855
        %v1858 = vunpack.c.l.s4 1983009808
        %v1859 = vunpack.c.0.s8 %v1858
        %v1860 = vlaneseq
        %v1861 = vshrl.u32 %v1860, 7
        %v1862 = vsub.s32 %v1859, %v1861
        %v1863 = vrot.slane %v1849, %v1862
        %v1864 = vcombine.low %v1840, %v1856
        %v1865 = vcombine.high %v1840, %v1856
        %v1867 = vunpack.c.l.s4 1934713408
        %v1868 = vunpack.c.0.s8 %v1867
        %v1869 = vlaneseq
        %v1870 = vshrl.u32 %v1869, 7
        %v1871 = vsub.s32 %v1868, %v1870
        %v1872 = vrot.slane %v1864, %v1871
        %v1874 = vunpack.c.l.s4 1934713408
        %v1875 = vunpack.c.0.s8 %v1874
        %v1876 = vlaneseq
        %v1877 = vshrl.u32 %v1876, 7
        %v1878 = vsub.s32 %v1875, %v1877
        %v1879 = vrot.slane %v1865, %v1878
        %v1880 = vcombine.low %v1847, %v1863
        %v1881 = vcombine.high %v1847, %v1863
        %v1883 = vunpack.c.l.s4 1934713408
        %v1884 = vunpack.c.0.s8 %v1883
        %v1885 = vlaneseq
        %v1886 = vshrl.u32 %v1885, 7
        %v1887 = vsub.s32 %v1884, %v1886
        %v1888 = vrot.slane %v1880, %v1887
        %v1890 = vunpack.c.l.s4 1934713408
        %v1891 = vunpack.c.0.s8 %v1890
        %v1892 = vlaneseq
        %v1893 = vshrl.u32 %v1892, 7
        %v1894 = vsub.s32 %v1891, %v1893
        %v1895 = vrot.slane %v1881, %v1894
        %v1896 = vcombine.low %v1872, %v1888
        %v1897 = vcombine.high %v1872, %v1888
        %v1898 = vcombine.low %v1879, %v1895
        %v1899 = vcombine.high %v1879, %v1895
        %v1900 = vcombine.low %v1667, %v1675
        %v1901 = vcombine.high %v1667, %v1675
        %v1903 = vunpack.c.l.s4 1983009808
        %v1904 = vunpack.c.0.s8 %v1903
        %v1905 = vlaneseq
        %v1906 = vshrl.u32 %v1905, 7
        %v1907 = vsub.s32 %v1904, %v1906
        %v1908 = vrot.slane %v1900, %v1907
        %v1910 = vunpack.c.l.s4 1983009808
        %v1911 = vunpack.c.0.s8 %v1910
        %v1912 = vlaneseq
        %v1913 = vshrl.u32 %v1912, 7
        %v1914 = vsub.s32 %v1911, %v1913
        %v1915 = vrot.slane %v1901, %v1914
        %v1916 = vcombine.low %v1671, %v1679
        %v1917 = vcombine.high %v1671, %v1679
        %v1919 = vunpack.c.l.s4 1983009808
        %v1920 = vunpack.c.0.s8 %v1919
        %v1921 = vlaneseq
        %v1922 = vshrl.u32 %v1921, 7
        %v1923 = vsub.s32 %v1920, %v1922
        %v1924 = vrot.slane %v1916, %v1923
        %v1926 = vunpack.c.l.s4 1983009808
        %v1927 = vunpack.c.0.s8 %v1926
        %v1928 = vlaneseq
        %v1929 = vshrl.u32 %v1928, 7
        %v1930 = vsub.s32 %v1927, %v1929
        %v1931 = vrot.slane %v1917, %v1930
        %v1932 = vcombine.low %v1908, %v1924
        %v1933 = vcombine.high %v1908, %v1924
        %v1935 = vunpack.c.l.s4 1934713408
        %v1936 = vunpack.c.0.s8 %v1935
        %v1937 = vlaneseq
        %v1938 = vshrl.u32 %v1937, 7
        %v1939 = vsub.s32 %v1936, %v1938
        %v1940 = vrot.slane %v1932, %v1939
        %v1942 = vunpack.c.l.s4 1934713408
        %v1943 = vunpack.c.0.s8 %v1942
        %v1944 = vlaneseq
        %v1945 = vshrl.u32 %v1944, 7
        %v1946 = vsub.s32 %v1943, %v1945
        %v1947 = vrot.slane %v1933, %v1946
        %v1948 = vcombine.low %v1915, %v1931
        %v1949 = vcombine.high %v1915, %v1931
        %v1951 = vunpack.c.l.s4 1934713408
        %v1952 = vunpack.c.0.s8 %v1951
        %v1953 = vlaneseq
        %v1954 = vshrl.u32 %v1953, 7
        %v1955 = vsub.s32 %v1952, %v1954
        %v1956 = vrot.slane %v1948, %v1955
        %v1958 = vunpack.c.l.s4 1934713408
        %v1959 = vunpack.c.0.s8 %v1958
        %v1960 = vlaneseq
        %v1961 = vshrl.u32 %v1960, 7
        %v1962 = vsub.s32 %v1959, %v1961
        %v1963 = vrot.slane %v1949, %v1962
        %v1964 = vcombine.low %v1940, %v1956
        %v1965 = vcombine.high %v1940, %v1956
        %v1966 = vcombine.low %v1947, %v1963
        %v1967 = vcombine.high %v1947, %v1963
        %v1968 = vsub.f32 %v468, %v1760
        %v1969 = vsub.f32 %v604, %v1896
        %v1970 = vsub.f32 %v469, %v1761
        %v1971 = vsub.f32 %v605, %v1897
        %v1972 = vsub.f32 %v470, %v1762
        %v1973 = vsub.f32 %v606, %v1898
        %v1974 = vsub.f32 %v471, %v1763
        %v1975 = vsub.f32 %v607, %v1899
        %v1976 = vsub.f32 %v536, %v1828
        %v1977 = vsub.f32 %v672, %v1964
        %v1978 = vsub.f32 %v537, %v1829
        %v1979 = vsub.f32 %v673, %v1965
        %v1980 = vsub.f32 %v538, %v1830
        %v1981 = vsub.f32 %v674, %v1966
        %v1982 = vsub.f32 %v539, %v1831
        %v1983 = vsub.f32 %v675, %v1967
        %v1985 = vsel %vm1076, %v351, 0
        %1987 = vmatprep.subr.mxu0 %v1149
        %1988 = vmatpush1.msra.mxu0 %v1147
        %1989 = vmatprep.subr.mxu0 0.0
        %1990 = vmatpush1.msra.mxu0 0.0
        %1991 = vmatprep.subr.mxu0 0.0
        %1992 = vmatpush1.msra.mxu0 0.0
        %1993 = vmatprep.subr.mxu0 0.0
        %1994 = vmatpush1.msra.mxu0 0.0
        %1995 = vmatprep.subr.mxu0 0.0
        %1996 = vmatpush1.msra.mxu0 0.0
        %1997 = vmatprep.subr.mxu0 0.0
        %1998 = vmatpush1.msra.mxu0 0.0
        %1999 = vmatprep.subr.mxu0 0.0
        %2000 = vmatpush1.msra.mxu0 0.0
        %2001 = vmatprep.subr.mxu0 0.0
        %2002 = vmatpush1.msra.mxu0 0.0
        %2003 = vmatprep.subr.mxu0 0.0
        %2004 = vmatpush1.msra.mxu0 0.0
        %2005 = vmatprep.subr.mxu0 0.0
        %2006 = vmatpush1.msra.mxu0 0.0
        %2007 = vmatprep.subr.mxu0 0.0
        %2008 = vmatpush1.msra.mxu0 0.0
        %2009 = vmatprep.subr.mxu0 0.0
        %2010 = vmatpush1.msra.mxu0 0.0
        %2011 = vmatprep.subr.mxu0 0.0
        %2012 = vmatpush1.msra.mxu0 0.0
        %2013 = vmatprep.subr.mxu0 0.0
        %2014 = vmatpush1.msra.mxu0 0.0
        %2015 = vmatprep.subr.mxu0 0.0
        %2016 = vmatpush1.msra.mxu0 0.0
        %2017 = vmatprep.subr.mxu0 0.0
        %2018 = vmatpush1.msra.mxu0 0.0
        %2019 = vmatprep.subr.mxu0 0.0
        %2020 = vmatpush1.msra.mxu0 0.0
        %2021 = vmatprep.subr.mxu0 0.0
        %2022 = vmatpush1.msra.mxu0 0.0
        %2023 = vmatprep.subr.mxu0 0.0
        %2024 = vmatpush1.msra.mxu0 0.0
        %2025 = vmatprep.subr.mxu0 0.0
        %2026 = vmatpush1.msra.mxu0 0.0
        %2027 = vmatprep.subr.mxu0 0.0
        %2028 = vmatpush1.msra.mxu0 0.0
        %2029 = vmatprep.subr.mxu0 0.0
        %2030 = vmatpush1.msra.mxu0 0.0
        %2031 = vmatprep.subr.mxu0 0.0
        %2032 = vmatpush1.msra.mxu0 0.0
        %2033 = vmatprep.subr.mxu0 0.0
        %2034 = vmatpush1.msra.mxu0 0.0
        %2035 = vmatprep.subr.mxu0 0.0
        %2036 = vmatpush1.msra.mxu0 0.0
        %2037 = vmatprep.subr.mxu0 0.0
        %2038 = vmatpush1.msra.mxu0 0.0
        %2039 = vmatprep.subr.mxu0 0.0
        %2040 = vmatpush1.msra.mxu0 0.0
        %2041 = vmatprep.subr.mxu0 0.0
        %2042 = vmatpush1.msra.mxu0 0.0
        %2043 = vmatprep.subr.mxu0 0.0
        %2044 = vmatpush1.msra.mxu0 0.0
        %2045 = vmatprep.subr.mxu0 0.0
        %2046 = vmatpush1.msra.mxu0 0.0
        %2047 = vmatprep.subr.mxu0 0.0
        %2048 = vmatpush1.msra.mxu0 0.0
        %2049 = vmatprep.subr.mxu0 0.0
        %2050 = vmatpush1.msra.mxu0 0.0
        %2051 = vmatprep.mubr.f32.mxu0 0.0
        %2052 = vmatmul.mubr.f32.gmra.mrb[0].mxu0 %v1985
        %v2053 = vpop.f32.mrb[0].mxu0
        %v2054 = vadd.f32 0.0, %v2053
        %v2055 = vpop.f32.mrb[0].mxu0
        %v2056 = vadd.f32 0.0, %v2055
        %2057 = vdwg.mxu0
        %2058 = vmatprep.subr.mxu0 %v1220
        %2059 = vmatpush1.msra.mxu0 %v1218
        %2060 = vmatprep.subr.mxu0 0.0
        %2061 = vmatpush1.msra.mxu0 0.0
        %2062 = vmatprep.subr.mxu0 0.0
        %2063 = vmatpush1.msra.mxu0 0.0
        %2064 = vmatprep.subr.mxu0 0.0
        %2065 = vmatpush1.msra.mxu0 0.0
        %2066 = vmatprep.subr.mxu0 0.0
        %2067 = vmatpush1.msra.mxu0 0.0
        %2068 = vmatprep.subr.mxu0 0.0
        %2069 = vmatpush1.msra.mxu0 0.0
        %2070 = vmatprep.subr.mxu0 0.0
        %2071 = vmatpush1.msra.mxu0 0.0
        %2072 = vmatprep.subr.mxu0 0.0
        %2073 = vmatpush1.msra.mxu0 0.0
        %2074 = vmatprep.subr.mxu0 0.0
        %2075 = vmatpush1.msra.mxu0 0.0
        %2076 = vmatprep.subr.mxu0 0.0
        %2077 = vmatpush1.msra.mxu0 0.0
        %2078 = vmatprep.subr.mxu0 0.0
        %2079 = vmatpush1.msra.mxu0 0.0
        %2080 = vmatprep.subr.mxu0 0.0
        %2081 = vmatpush1.msra.mxu0 0.0
        %2082 = vmatprep.subr.mxu0 0.0
        %2083 = vmatpush1.msra.mxu0 0.0
        %2084 = vmatprep.subr.mxu0 0.0
        %2085 = vmatpush1.msra.mxu0 0.0
        %2086 = vmatprep.subr.mxu0 0.0
        %2087 = vmatpush1.msra.mxu0 0.0
        %2088 = vmatprep.subr.mxu0 0.0
        %2089 = vmatpush1.msra.mxu0 0.0
        %2090 = vmatprep.subr.mxu0 0.0
        %2091 = vmatpush1.msra.mxu0 0.0
        %2092 = vmatprep.subr.mxu0 0.0
        %2093 = vmatpush1.msra.mxu0 0.0
        %2094 = vmatprep.subr.mxu0 0.0
        %2095 = vmatpush1.msra.mxu0 0.0
        %2096 = vmatprep.subr.mxu0 0.0
        %2097 = vmatpush1.msra.mxu0 0.0
        %2098 = vmatprep.subr.mxu0 0.0
        %2099 = vmatpush1.msra.mxu0 0.0
        %2100 = vmatprep.subr.mxu0 0.0
        %2101 = vmatpush1.msra.mxu0 0.0
        %2102 = vmatprep.subr.mxu0 0.0
        %2103 = vmatpush1.msra.mxu0 0.0
        %2104 = vmatprep.subr.mxu0 0.0
        %2105 = vmatpush1.msra.mxu0 0.0
        %2106 = vmatprep.subr.mxu0 0.0
        %2107 = vmatpush1.msra.mxu0 0.0
        %2108 = vmatprep.subr.mxu0 0.0
        %2109 = vmatpush1.msra.mxu0 0.0
        %2110 = vmatprep.subr.mxu0 0.0
        %2111 = vmatpush1.msra.mxu0 0.0
        %2112 = vmatprep.subr.mxu0 0.0
        %2113 = vmatpush1.msra.mxu0 0.0
        %2114 = vmatprep.subr.mxu0 0.0
        %2115 = vmatpush1.msra.mxu0 0.0
        %2116 = vmatprep.subr.mxu0 0.0
        %2117 = vmatpush1.msra.mxu0 0.0
        %2118 = vmatprep.subr.mxu0 0.0
        %2119 = vmatpush1.msra.mxu0 0.0
        %2120 = vmatprep.subr.mxu0 0.0
        %2121 = vmatpush1.msra.mxu0 0.0
        %2122 = vmatprep.mubr.f32.mxu0 0.0
        %2123 = vmatmul.mubr.f32.gmra.mrb[0].mxu0 %v1985
        %v2124 = vpop.f32.mrb[0].mxu0
        %v2125 = vadd.f32 0.0, %v2124
        %v2126 = vpop.f32.mrb[0].mxu0
        %v2127 = vadd.f32 0.0, %v2126
        %2128 = vdwg.mxu0
        %2129 = vmatprep.subr.mxu0 %v1291
        %2130 = vmatpush1.msra.mxu0 %v1289
        %2131 = vmatprep.subr.mxu0 0.0
        %2132 = vmatpush1.msra.mxu0 0.0
        %2133 = vmatprep.subr.mxu0 0.0
        %2134 = vmatpush1.msra.mxu0 0.0
        %2135 = vmatprep.subr.mxu0 0.0
        %2136 = vmatpush1.msra.mxu0 0.0
        %2137 = vmatprep.subr.mxu0 0.0
        %2138 = vmatpush1.msra.mxu0 0.0
        %2139 = vmatprep.subr.mxu0 0.0
        %2140 = vmatpush1.msra.mxu0 0.0
        %2141 = vmatprep.subr.mxu0 0.0
        %2142 = vmatpush1.msra.mxu0 0.0
        %2143 = vmatprep.subr.mxu0 0.0
        %2144 = vmatpush1.msra.mxu0 0.0
        %2145 = vmatprep.subr.mxu0 0.0
        %2146 = vmatpush1.msra.mxu0 0.0
        %2147 = vmatprep.subr.mxu0 0.0
        %2148 = vmatpush1.msra.mxu0 0.0
        %2149 = vmatprep.subr.mxu0 0.0
        %2150 = vmatpush1.msra.mxu0 0.0
        %2151 = vmatprep.subr.mxu0 0.0
        %2152 = vmatpush1.msra.mxu0 0.0
        %2153 = vmatprep.subr.mxu0 0.0
        %2154 = vmatpush1.msra.mxu0 0.0
        %2155 = vmatprep.subr.mxu0 0.0
        %2156 = vmatpush1.msra.mxu0 0.0
        %2157 = vmatprep.subr.mxu0 0.0
        %2158 = vmatpush1.msra.mxu0 0.0
        %2159 = vmatprep.subr.mxu0 0.0
        %2160 = vmatpush1.msra.mxu0 0.0
        %2161 = vmatprep.subr.mxu0 0.0
        %2162 = vmatpush1.msra.mxu0 0.0
        %2163 = vmatprep.subr.mxu0 0.0
        %2164 = vmatpush1.msra.mxu0 0.0
        %2165 = vmatprep.subr.mxu0 0.0
        %2166 = vmatpush1.msra.mxu0 0.0
        %2167 = vmatprep.subr.mxu0 0.0
        %2168 = vmatpush1.msra.mxu0 0.0
        %2169 = vmatprep.subr.mxu0 0.0
        %2170 = vmatpush1.msra.mxu0 0.0
        %2171 = vmatprep.subr.mxu0 0.0
        %2172 = vmatpush1.msra.mxu0 0.0
        %2173 = vmatprep.subr.mxu0 0.0
        %2174 = vmatpush1.msra.mxu0 0.0
        %2175 = vmatprep.subr.mxu0 0.0
        %2176 = vmatpush1.msra.mxu0 0.0
        %2177 = vmatprep.subr.mxu0 0.0
        %2178 = vmatpush1.msra.mxu0 0.0
        %2179 = vmatprep.subr.mxu0 0.0
        %2180 = vmatpush1.msra.mxu0 0.0
        %2181 = vmatprep.subr.mxu0 0.0
        %2182 = vmatpush1.msra.mxu0 0.0
        %2183 = vmatprep.subr.mxu0 0.0
        %2184 = vmatpush1.msra.mxu0 0.0
        %2185 = vmatprep.subr.mxu0 0.0
        %2186 = vmatpush1.msra.mxu0 0.0
        %2187 = vmatprep.subr.mxu0 0.0
        %2188 = vmatpush1.msra.mxu0 0.0
        %2189 = vmatprep.subr.mxu0 0.0
        %2190 = vmatpush1.msra.mxu0 0.0
        %2191 = vmatprep.subr.mxu0 0.0
        %2192 = vmatpush1.msra.mxu0 0.0
        %2193 = vmatprep.mubr.f32.mxu0 0.0
        %2194 = vmatmul.mubr.f32.gmra.mrb[0].mxu0 %v1985
        %v2195 = vpop.f32.mrb[0].mxu0
        %v2196 = vadd.f32 0.0, %v2195
        %v2197 = vpop.f32.mrb[0].mxu0
        %v2198 = vadd.f32 0.0, %v2197
        %2199 = vdwg.mxu0
        %2200 = vmatprep.subr.mxu0 %v1362
        %2201 = vmatpush1.msra.mxu0 %v1360
        %2202 = vmatprep.subr.mxu0 0.0
        %2203 = vmatpush1.msra.mxu0 0.0
        %2204 = vmatprep.subr.mxu0 0.0
        %2205 = vmatpush1.msra.mxu0 0.0
        %2206 = vmatprep.subr.mxu0 0.0
        %2207 = vmatpush1.msra.mxu0 0.0
        %2208 = vmatprep.subr.mxu0 0.0
        %2209 = vmatpush1.msra.mxu0 0.0
        %2210 = vmatprep.subr.mxu0 0.0
        %2211 = vmatpush1.msra.mxu0 0.0
        %2212 = vmatprep.subr.mxu0 0.0
        %2213 = vmatpush1.msra.mxu0 0.0
        %2214 = vmatprep.subr.mxu0 0.0
        %2215 = vmatpush1.msra.mxu0 0.0
        %2216 = vmatprep.subr.mxu0 0.0
        %2217 = vmatpush1.msra.mxu0 0.0
        %2218 = vmatprep.subr.mxu0 0.0
        %2219 = vmatpush1.msra.mxu0 0.0
        %2220 = vmatprep.subr.mxu0 0.0
        %2221 = vmatpush1.msra.mxu0 0.0
        %2222 = vmatprep.subr.mxu0 0.0
        %2223 = vmatpush1.msra.mxu0 0.0
        %2224 = vmatprep.subr.mxu0 0.0
        %2225 = vmatpush1.msra.mxu0 0.0
        %2226 = vmatprep.subr.mxu0 0.0
        %2227 = vmatpush1.msra.mxu0 0.0
        %2228 = vmatprep.subr.mxu0 0.0
        %2229 = vmatpush1.msra.mxu0 0.0
        %2230 = vmatprep.subr.mxu0 0.0
        %2231 = vmatpush1.msra.mxu0 0.0
        %2232 = vmatprep.subr.mxu0 0.0
        %2233 = vmatpush1.msra.mxu0 0.0
        %2234 = vmatprep.subr.mxu0 0.0
        %2235 = vmatpush1.msra.mxu0 0.0
        %2236 = vmatprep.subr.mxu0 0.0
        %2237 = vmatpush1.msra.mxu0 0.0
        %2238 = vmatprep.subr.mxu0 0.0
        %2239 = vmatpush1.msra.mxu0 0.0
        %2240 = vmatprep.subr.mxu0 0.0
        %2241 = vmatpush1.msra.mxu0 0.0
        %2242 = vmatprep.subr.mxu0 0.0
        %2243 = vmatpush1.msra.mxu0 0.0
        %2244 = vmatprep.subr.mxu0 0.0
        %2245 = vmatpush1.msra.mxu0 0.0
        %2246 = vmatprep.subr.mxu0 0.0
        %2247 = vmatpush1.msra.mxu0 0.0
        %2248 = vmatprep.subr.mxu0 0.0
        %2249 = vmatpush1.msra.mxu0 0.0
        %2250 = vmatprep.subr.mxu0 0.0
        %2251 = vmatpush1.msra.mxu0 0.0
        %2252 = vmatprep.subr.mxu0 0.0
        %2253 = vmatpush1.msra.mxu0 0.0
        %2254 = vmatprep.subr.mxu0 0.0
        %2255 = vmatpush1.msra.mxu0 0.0
        %2256 = vmatprep.subr.mxu0 0.0
        %2257 = vmatpush1.msra.mxu0 0.0
        %2258 = vmatprep.subr.mxu0 0.0
        %2259 = vmatpush1.msra.mxu0 0.0
        %2260 = vmatprep.subr.mxu0 0.0
        %2261 = vmatpush1.msra.mxu0 0.0
        %2262 = vmatprep.subr.mxu0 0.0
        %2263 = vmatpush1.msra.mxu0 0.0
        %2264 = vmatprep.mubr.f32.mxu0 0.0
        %2265 = vmatmul.mubr.f32.gmra.mrb[0].mxu0 %v1985
        %v2266 = vpop.f32.mrb[0].mxu0
        %v2267 = vadd.f32 0.0, %v2266
        %v2268 = vpop.f32.mrb[0].mxu0
        %v2269 = vadd.f32 0.0, %v2268
        %2270 = vdwg.mxu0
        %2271 = vmatprep.subr.mxu0 %v1433
        %2272 = vmatpush1.msra.mxu0 %v1431
        %2273 = vmatprep.subr.mxu0 0.0
        %2274 = vmatpush1.msra.mxu0 0.0
        %2275 = vmatprep.subr.mxu0 0.0
        %2276 = vmatpush1.msra.mxu0 0.0
        %2277 = vmatprep.subr.mxu0 0.0
        %2278 = vmatpush1.msra.mxu0 0.0
        %2279 = vmatprep.subr.mxu0 0.0
        %2280 = vmatpush1.msra.mxu0 0.0
        %2281 = vmatprep.subr.mxu0 0.0
        %2282 = vmatpush1.msra.mxu0 0.0
        %2283 = vmatprep.subr.mxu0 0.0
        %2284 = vmatpush1.msra.mxu0 0.0
        %2285 = vmatprep.subr.mxu0 0.0
        %2286 = vmatpush1.msra.mxu0 0.0
        %2287 = vmatprep.subr.mxu0 0.0
        %2288 = vmatpush1.msra.mxu0 0.0
        %2289 = vmatprep.subr.mxu0 0.0
        %2290 = vmatpush1.msra.mxu0 0.0
        %2291 = vmatprep.subr.mxu0 0.0
        %2292 = vmatpush1.msra.mxu0 0.0
        %2293 = vmatprep.subr.mxu0 0.0
        %2294 = vmatpush1.msra.mxu0 0.0
        %2295 = vmatprep.subr.mxu0 0.0
        %2296 = vmatpush1.msra.mxu0 0.0
        %2297 = vmatprep.subr.mxu0 0.0
        %2298 = vmatpush1.msra.mxu0 0.0
        %2299 = vmatprep.subr.mxu0 0.0
        %2300 = vmatpush1.msra.mxu0 0.0
        %2301 = vmatprep.subr.mxu0 0.0
        %2302 = vmatpush1.msra.mxu0 0.0
        %2303 = vmatprep.subr.mxu0 0.0
        %2304 = vmatpush1.msra.mxu0 0.0
        %2305 = vmatprep.subr.mxu0 0.0
        %2306 = vmatpush1.msra.mxu0 0.0
        %2307 = vmatprep.subr.mxu0 0.0
        %2308 = vmatpush1.msra.mxu0 0.0
        %2309 = vmatprep.subr.mxu0 0.0
        %2310 = vmatpush1.msra.mxu0 0.0
        %2311 = vmatprep.subr.mxu0 0.0
        %2312 = vmatpush1.msra.mxu0 0.0
        %2313 = vmatprep.subr.mxu0 0.0
        %2314 = vmatpush1.msra.mxu0 0.0
        %2315 = vmatprep.subr.mxu0 0.0
        %2316 = vmatpush1.msra.mxu0 0.0
        %2317 = vmatprep.subr.mxu0 0.0
        %2318 = vmatpush1.msra.mxu0 0.0
        %2319 = vmatprep.subr.mxu0 0.0
        %2320 = vmatpush1.msra.mxu0 0.0
        %2321 = vmatprep.subr.mxu0 0.0
        %2322 = vmatpush1.msra.mxu0 0.0
        %2323 = vmatprep.subr.mxu0 0.0
        %2324 = vmatpush1.msra.mxu0 0.0
        %2325 = vmatprep.subr.mxu0 0.0
        %2326 = vmatpush1.msra.mxu0 0.0
        %2327 = vmatprep.subr.mxu0 0.0
        %2328 = vmatpush1.msra.mxu0 0.0
        %2329 = vmatprep.subr.mxu0 0.0
        %2330 = vmatpush1.msra.mxu0 0.0
        %2331 = vmatprep.subr.mxu0 0.0
        %2332 = vmatpush1.msra.mxu0 0.0
        %2333 = vmatprep.subr.mxu0 0.0
        %2334 = vmatpush1.msra.mxu0 0.0
        %2335 = vmatprep.mubr.f32.mxu0 0.0
        %2336 = vmatmul.mubr.f32.gmra.mrb[0].mxu0 %v1985
        %v2337 = vpop.f32.mrb[0].mxu0
        %v2338 = vadd.f32 0.0, %v2337
        %v2339 = vpop.f32.mrb[0].mxu0
        %v2340 = vadd.f32 0.0, %v2339
        %2341 = vdwg.mxu0
        %2342 = vmatprep.subr.mxu0 %v1504
        %2343 = vmatpush1.msra.mxu0 %v1502
        %2344 = vmatprep.subr.mxu0 0.0
        %2345 = vmatpush1.msra.mxu0 0.0
        %2346 = vmatprep.subr.mxu0 0.0
        %2347 = vmatpush1.msra.mxu0 0.0
        %2348 = vmatprep.subr.mxu0 0.0
        %2349 = vmatpush1.msra.mxu0 0.0
        %2350 = vmatprep.subr.mxu0 0.0
        %2351 = vmatpush1.msra.mxu0 0.0
        %2352 = vmatprep.subr.mxu0 0.0
        %2353 = vmatpush1.msra.mxu0 0.0
        %2354 = vmatprep.subr.mxu0 0.0
        %2355 = vmatpush1.msra.mxu0 0.0
        %2356 = vmatprep.subr.mxu0 0.0
        %2357 = vmatpush1.msra.mxu0 0.0
        %2358 = vmatprep.subr.mxu0 0.0
        %2359 = vmatpush1.msra.mxu0 0.0
        %2360 = vmatprep.subr.mxu0 0.0
        %2361 = vmatpush1.msra.mxu0 0.0
        %2362 = vmatprep.subr.mxu0 0.0
        %2363 = vmatpush1.msra.mxu0 0.0
        %2364 = vmatprep.subr.mxu0 0.0
        %2365 = vmatpush1.msra.mxu0 0.0
        %2366 = vmatprep.subr.mxu0 0.0
        %2367 = vmatpush1.msra.mxu0 0.0
        %2368 = vmatprep.subr.mxu0 0.0
        %2369 = vmatpush1.msra.mxu0 0.0
        %2370 = vmatprep.subr.mxu0 0.0
        %2371 = vmatpush1.msra.mxu0 0.0
        %2372 = vmatprep.subr.mxu0 0.0
        %2373 = vmatpush1.msra.mxu0 0.0
        %2374 = vmatprep.subr.mxu0 0.0
        %2375 = vmatpush1.msra.mxu0 0.0
        %2376 = vmatprep.subr.mxu0 0.0
        %2377 = vmatpush1.msra.mxu0 0.0
        %2378 = vmatprep.subr.mxu0 0.0
        %2379 = vmatpush1.msra.mxu0 0.0
        %2380 = vmatprep.subr.mxu0 0.0
        %2381 = vmatpush1.msra.mxu0 0.0
        %2382 = vmatprep.subr.mxu0 0.0
        %2383 = vmatpush1.msra.mxu0 0.0
        %2384 = vmatprep.subr.mxu0 0.0
        %2385 = vmatpush1.msra.mxu0 0.0
        %2386 = vmatprep.subr.mxu0 0.0
        %2387 = vmatpush1.msra.mxu0 0.0
        %2388 = vmatprep.subr.mxu0 0.0
        %2389 = vmatpush1.msra.mxu0 0.0
        %2390 = vmatprep.subr.mxu0 0.0
        %2391 = vmatpush1.msra.mxu0 0.0
        %2392 = vmatprep.subr.mxu0 0.0
        %2393 = vmatpush1.msra.mxu0 0.0
        %2394 = vmatprep.subr.mxu0 0.0
        %2395 = vmatpush1.msra.mxu0 0.0
        %2396 = vmatprep.subr.mxu0 0.0
        %2397 = vmatpush1.msra.mxu0 0.0
        %2398 = vmatprep.subr.mxu0 0.0
        %2399 = vmatpush1.msra.mxu0 0.0
        %2400 = vmatprep.subr.mxu0 0.0
        %2401 = vmatpush1.msra.mxu0 0.0
        %2402 = vmatprep.subr.mxu0 0.0
        %2403 = vmatpush1.msra.mxu0 0.0
        %2404 = vmatprep.subr.mxu0 0.0
        %2405 = vmatpush1.msra.mxu0 0.0
        %2406 = vmatprep.mubr.f32.mxu0 0.0
        %2407 = vmatmul.mubr.f32.gmra.mrb[0].mxu0 %v1985
        %v2408 = vpop.f32.mrb[0].mxu0
        %v2409 = vadd.f32 0.0, %v2408
        %v2410 = vpop.f32.mrb[0].mxu0
        %v2411 = vadd.f32 0.0, %v2410
        %2412 = vdwg.mxu0
        %2413 = vmatprep.subr.mxu0 %v1575
        %2414 = vmatpush1.msra.mxu0 %v1573
        %2415 = vmatprep.subr.mxu0 0.0
        %2416 = vmatpush1.msra.mxu0 0.0
        %2417 = vmatprep.subr.mxu0 0.0
        %2418 = vmatpush1.msra.mxu0 0.0
        %2419 = vmatprep.subr.mxu0 0.0
        %2420 = vmatpush1.msra.mxu0 0.0
        %2421 = vmatprep.subr.mxu0 0.0
        %2422 = vmatpush1.msra.mxu0 0.0
        %2423 = vmatprep.subr.mxu0 0.0
        %2424 = vmatpush1.msra.mxu0 0.0
        %2425 = vmatprep.subr.mxu0 0.0
        %2426 = vmatpush1.msra.mxu0 0.0
        %2427 = vmatprep.subr.mxu0 0.0
        %2428 = vmatpush1.msra.mxu0 0.0
        %2429 = vmatprep.subr.mxu0 0.0
        %2430 = vmatpush1.msra.mxu0 0.0
        %2431 = vmatprep.subr.mxu0 0.0
        %2432 = vmatpush1.msra.mxu0 0.0
        %2433 = vmatprep.subr.mxu0 0.0
        %2434 = vmatpush1.msra.mxu0 0.0
        %2435 = vmatprep.subr.mxu0 0.0
        %2436 = vmatpush1.msra.mxu0 0.0
        %2437 = vmatprep.subr.mxu0 0.0
        %2438 = vmatpush1.msra.mxu0 0.0
        %2439 = vmatprep.subr.mxu0 0.0
        %2440 = vmatpush1.msra.mxu0 0.0
        %2441 = vmatprep.subr.mxu0 0.0
        %2442 = vmatpush1.msra.mxu0 0.0
        %2443 = vmatprep.subr.mxu0 0.0
        %2444 = vmatpush1.msra.mxu0 0.0
        %2445 = vmatprep.subr.mxu0 0.0
        %2446 = vmatpush1.msra.mxu0 0.0
        %2447 = vmatprep.subr.mxu0 0.0
        %2448 = vmatpush1.msra.mxu0 0.0
        %2449 = vmatprep.subr.mxu0 0.0
        %2450 = vmatpush1.msra.mxu0 0.0
        %2451 = vmatprep.subr.mxu0 0.0
        %2452 = vmatpush1.msra.mxu0 0.0
        %2453 = vmatprep.subr.mxu0 0.0
        %2454 = vmatpush1.msra.mxu0 0.0
        %2455 = vmatprep.subr.mxu0 0.0
        %2456 = vmatpush1.msra.mxu0 0.0
        %2457 = vmatprep.subr.mxu0 0.0
        %2458 = vmatpush1.msra.mxu0 0.0
        %2459 = vmatprep.subr.mxu0 0.0
        %2460 = vmatpush1.msra.mxu0 0.0
        %2461 = vmatprep.subr.mxu0 0.0
        %2462 = vmatpush1.msra.mxu0 0.0
        %2463 = vmatprep.subr.mxu0 0.0
        %2464 = vmatpush1.msra.mxu0 0.0
        %2465 = vmatprep.subr.mxu0 0.0
        %2466 = vmatpush1.msra.mxu0 0.0
        %2467 = vmatprep.subr.mxu0 0.0
        %2468 = vmatpush1.msra.mxu0 0.0
        %2469 = vmatprep.subr.mxu0 0.0
        %2470 = vmatpush1.msra.mxu0 0.0
        %2471 = vmatprep.subr.mxu0 0.0
        %2472 = vmatpush1.msra.mxu0 0.0
        %2473 = vmatprep.subr.mxu0 0.0
        %2474 = vmatpush1.msra.mxu0 0.0
        %2475 = vmatprep.subr.mxu0 0.0
        %2476 = vmatpush1.msra.mxu0 0.0
        %2477 = vmatprep.mubr.f32.mxu0 0.0
        %2478 = vmatmul.mubr.f32.gmra.mrb[0].mxu0 %v1985
        %v2479 = vpop.f32.mrb[0].mxu0
        %v2480 = vadd.f32 0.0, %v2479
        %v2481 = vpop.f32.mrb[0].mxu0
        %v2482 = vadd.f32 0.0, %v2481
        %2483 = vdwg.mxu0
        %2484 = vmatprep.subr.mxu0 %v1646
        %2485 = vmatpush1.msra.mxu0 %v1644
        %2486 = vmatprep.subr.mxu0 0.0
        %2487 = vmatpush1.msra.mxu0 0.0
        %2488 = vmatprep.subr.mxu0 0.0
        %2489 = vmatpush1.msra.mxu0 0.0
        %2490 = vmatprep.subr.mxu0 0.0
        %2491 = vmatpush1.msra.mxu0 0.0
        %2492 = vmatprep.subr.mxu0 0.0
        %2493 = vmatpush1.msra.mxu0 0.0
        %2494 = vmatprep.subr.mxu0 0.0
        %2495 = vmatpush1.msra.mxu0 0.0
        %2496 = vmatprep.subr.mxu0 0.0
        %2497 = vmatpush1.msra.mxu0 0.0
        %2498 = vmatprep.subr.mxu0 0.0
        %2499 = vmatpush1.msra.mxu0 0.0
        %2500 = vmatprep.subr.mxu0 0.0
        %2501 = vmatpush1.msra.mxu0 0.0
        %2502 = vmatprep.subr.mxu0 0.0
        %2503 = vmatpush1.msra.mxu0 0.0
        %2504 = vmatprep.subr.mxu0 0.0
        %2505 = vmatpush1.msra.mxu0 0.0
        %2506 = vmatprep.subr.mxu0 0.0
        %2507 = vmatpush1.msra.mxu0 0.0
        %2508 = vmatprep.subr.mxu0 0.0
        %2509 = vmatpush1.msra.mxu0 0.0
        %2510 = vmatprep.subr.mxu0 0.0
        %2511 = vmatpush1.msra.mxu0 0.0
        %2512 = vmatprep.subr.mxu0 0.0
        %2513 = vmatpush1.msra.mxu0 0.0
        %2514 = vmatprep.subr.mxu0 0.0
        %2515 = vmatpush1.msra.mxu0 0.0
        %2516 = vmatprep.subr.mxu0 0.0
        %2517 = vmatpush1.msra.mxu0 0.0
        %2518 = vmatprep.subr.mxu0 0.0
        %2519 = vmatpush1.msra.mxu0 0.0
        %2520 = vmatprep.subr.mxu0 0.0
        %2521 = vmatpush1.msra.mxu0 0.0
        %2522 = vmatprep.subr.mxu0 0.0
        %2523 = vmatpush1.msra.mxu0 0.0
        %2524 = vmatprep.subr.mxu0 0.0
        %2525 = vmatpush1.msra.mxu0 0.0
        %2526 = vmatprep.subr.mxu0 0.0
        %2527 = vmatpush1.msra.mxu0 0.0
        %2528 = vmatprep.subr.mxu0 0.0
        %2529 = vmatpush1.msra.mxu0 0.0
        %2530 = vmatprep.subr.mxu0 0.0
        %2531 = vmatpush1.msra.mxu0 0.0
        %2532 = vmatprep.subr.mxu0 0.0
        %2533 = vmatpush1.msra.mxu0 0.0
        %2534 = vmatprep.subr.mxu0 0.0
        %2535 = vmatpush1.msra.mxu0 0.0
        %2536 = vmatprep.subr.mxu0 0.0
        %2537 = vmatpush1.msra.mxu0 0.0
        %2538 = vmatprep.subr.mxu0 0.0
        %2539 = vmatpush1.msra.mxu0 0.0
        %2540 = vmatprep.subr.mxu0 0.0
        %2541 = vmatpush1.msra.mxu0 0.0
        %2542 = vmatprep.subr.mxu0 0.0
        %2543 = vmatpush1.msra.mxu0 0.0
        %2544 = vmatprep.subr.mxu0 0.0
        %2545 = vmatpush1.msra.mxu0 0.0
        %2546 = vmatprep.subr.mxu0 0.0
        %2547 = vmatpush1.msra.mxu0 0.0
        %2548 = vmatprep.mubr.f32.mxu0 0.0
        %2549 = vmatmul.mubr.f32.gmra.mrb[0].mxu0 %v1985
        %v2550 = vpop.f32.mrb[0].mxu0
        %v2551 = vadd.f32 0.0, %v2550
        %v2552 = vpop.f32.mrb[0].mxu0
        %v2553 = vadd.f32 0.0, %v2552
        %2554 = vdwg.mxu0
        %v2559 = vcombine.low %v724, %v725
        %v2560 = vcombine.high %v724, %v725
        %v2561 = vcombine.low %v726, %v727
        %v2562 = vcombine.high %v726, %v727
        %v2564 = vunpack.c.l.s4 1966171168
        %v2565 = vunpack.c.0.s8 %v2564
        %v2566 = vlaneseq
        %v2567 = vshrl.u32 %v2566, 7
        %v2568 = vsub.s32 %v2565, %v2567
        %v2569 = vrot.slane %v2559, %v2568
        %v2571 = vunpack.c.l.s4 1966171168
        %v2572 = vunpack.c.0.s8 %v2571
        %v2573 = vlaneseq
        %v2574 = vshrl.u32 %v2573, 7
        %v2575 = vsub.s32 %v2572, %v2574
        %v2576 = vrot.slane %v2560, %v2575
        %v2578 = vunpack.c.l.s4 1966171168
        %v2579 = vunpack.c.0.s8 %v2578
        %v2580 = vlaneseq
        %v2581 = vshrl.u32 %v2580, 7
        %v2582 = vsub.s32 %v2579, %v2581
        %v2583 = vrot.slane %v2561, %v2582
        %v2585 = vunpack.c.l.s4 1966171168
        %v2586 = vunpack.c.0.s8 %v2585
        %v2587 = vlaneseq
        %v2588 = vshrl.u32 %v2587, 7
        %v2589 = vsub.s32 %v2586, %v2588
        %v2590 = vrot.slane %v2562, %v2589
        %v2591 = vcombine.low %v2569, %v2583
        %v2592 = vcombine.high %v2569, %v2583
        %v2593 = vcombine.low %v2576, %v2590
        %v2594 = vcombine.high %v2576, %v2590
        %v2596 = vunpack.c.l.s4 1966171168
        %v2597 = vunpack.c.0.s8 %v2596
        %v2598 = vlaneseq
        %v2599 = vshrl.u32 %v2598, 7
        %v2600 = vsub.s32 %v2597, %v2599
        %v2601 = vrot.slane %v2591, %v2600
        %v2603 = vunpack.c.l.s4 1966171168
        %v2604 = vunpack.c.0.s8 %v2603
        %v2605 = vlaneseq
        %v2606 = vshrl.u32 %v2605, 7
        %v2607 = vsub.s32 %v2604, %v2606
        %v2608 = vrot.slane %v2593, %v2607
        %v2610 = vunpack.c.l.s4 1966171168
        %v2611 = vunpack.c.0.s8 %v2610
        %v2612 = vlaneseq
        %v2613 = vshrl.u32 %v2612, 7
        %v2614 = vsub.s32 %v2611, %v2613
        %v2615 = vrot.slane %v2592, %v2614
        %v2617 = vunpack.c.l.s4 1966171168
        %v2618 = vunpack.c.0.s8 %v2617
        %v2619 = vlaneseq
        %v2620 = vshrl.u32 %v2619, 7
        %v2621 = vsub.s32 %v2618, %v2620
        %v2622 = vrot.slane %v2594, %v2621
        %v2623 = vcombine.high %v2601, %v2601
        %v2624 = vcombine.high %v2608, %v2608
        %v2625 = vcombine.high %v2615, %v2615
        %v2626 = vcombine.high %v2622, %v2622
        %v2627 = vlaneseq
        %v2628 = vshrl.u32 %v2627, 7
        %v2629 = vsub.s32 0, %v2628
        %v2630 = vrot.slane %v2601, %v2629
        %v2631 = vlaneseq
        %v2632 = vshrl.u32 %v2631, 7
        %v2633 = vsub.s32 1, %v2632
        %v2634 = vrot.slane %v2601, %v2633
        %v2635 = vlaneseq
        %v2636 = vshrl.u32 %v2635, 7
        %v2637 = vsub.s32 2, %v2636
        %v2638 = vrot.slane %v2601, %v2637
        %v2639 = vlaneseq
        %v2640 = vshrl.u32 %v2639, 7
        %v2641 = vsub.s32 3, %v2640
        %v2642 = vrot.slane %v2601, %v2641
        %v2643 = vlaneseq
        %v2644 = vshrl.u32 %v2643, 7
        %v2645 = vsub.s32 0, %v2644
        %v2646 = vrot.slane %v2615, %v2645
        %v2647 = vlaneseq
        %v2648 = vshrl.u32 %v2647, 7
        %v2649 = vsub.s32 1, %v2648
        %v2650 = vrot.slane %v2615, %v2649
        %v2651 = vlaneseq
        %v2652 = vshrl.u32 %v2651, 7
        %v2653 = vsub.s32 2, %v2652
        %v2654 = vrot.slane %v2615, %v2653
        %v2655 = vlaneseq
        %v2656 = vshrl.u32 %v2655, 7
        %v2657 = vsub.s32 3, %v2656
        %v2658 = vrot.slane %v2615, %v2657
        %v2659 = vlaneseq
        %v2660 = vshrl.u32 %v2659, 7
        %v2661 = vsub.s32 0, %v2660
        %v2662 = vrot.slane %v2623, %v2661
        %v2663 = vlaneseq
        %v2664 = vshrl.u32 %v2663, 7
        %v2665 = vsub.s32 1, %v2664
        %v2666 = vrot.slane %v2623, %v2665
        %v2667 = vlaneseq
        %v2668 = vshrl.u32 %v2667, 7
        %v2669 = vsub.s32 2, %v2668
        %v2670 = vrot.slane %v2623, %v2669
        %v2671 = vlaneseq
        %v2672 = vshrl.u32 %v2671, 7
        %v2673 = vsub.s32 3, %v2672
        %v2674 = vrot.slane %v2623, %v2673
        %v2675 = vlaneseq
        %v2676 = vshrl.u32 %v2675, 7
        %v2677 = vsub.s32 0, %v2676
        %v2678 = vrot.slane %v2625, %v2677
        %v2679 = vlaneseq
        %v2680 = vshrl.u32 %v2679, 7
        %v2681 = vsub.s32 1, %v2680
        %v2682 = vrot.slane %v2625, %v2681
        %v2683 = vlaneseq
        %v2684 = vshrl.u32 %v2683, 7
        %v2685 = vsub.s32 2, %v2684
        %v2686 = vrot.slane %v2625, %v2685
        %v2687 = vlaneseq
        %v2688 = vshrl.u32 %v2687, 7
        %v2689 = vsub.s32 3, %v2688
        %v2690 = vrot.slane %v2625, %v2689
        %v2691 = vlaneseq
        %v2692 = vshrl.u32 %v2691, 7
        %v2693 = vsub.s32 0, %v2692
        %v2694 = vrot.slane %v2608, %v2693
        %v2695 = vlaneseq
        %v2696 = vshrl.u32 %v2695, 7
        %v2697 = vsub.s32 1, %v2696
        %v2698 = vrot.slane %v2608, %v2697
        %v2699 = vlaneseq
        %v2700 = vshrl.u32 %v2699, 7
        %v2701 = vsub.s32 2, %v2700
        %v2702 = vrot.slane %v2608, %v2701
        %v2703 = vlaneseq
        %v2704 = vshrl.u32 %v2703, 7
        %v2705 = vsub.s32 3, %v2704
        %v2706 = vrot.slane %v2608, %v2705
        %v2707 = vlaneseq
        %v2708 = vshrl.u32 %v2707, 7
        %v2709 = vsub.s32 0, %v2708
        %v2710 = vrot.slane %v2622, %v2709
        %v2711 = vlaneseq
        %v2712 = vshrl.u32 %v2711, 7
        %v2713 = vsub.s32 1, %v2712
        %v2714 = vrot.slane %v2622, %v2713
        %v2715 = vlaneseq
        %v2716 = vshrl.u32 %v2715, 7
        %v2717 = vsub.s32 2, %v2716
        %v2718 = vrot.slane %v2622, %v2717
        %v2719 = vlaneseq
        %v2720 = vshrl.u32 %v2719, 7
        %v2721 = vsub.s32 3, %v2720
        %v2722 = vrot.slane %v2622, %v2721
        %v2723 = vlaneseq
        %v2724 = vshrl.u32 %v2723, 7
        %v2725 = vsub.s32 0, %v2724
        %v2726 = vrot.slane %v2624, %v2725
        %v2727 = vlaneseq
        %v2728 = vshrl.u32 %v2727, 7
        %v2729 = vsub.s32 1, %v2728
        %v2730 = vrot.slane %v2624, %v2729
        %v2731 = vlaneseq
        %v2732 = vshrl.u32 %v2731, 7
        %v2733 = vsub.s32 2, %v2732
        %v2734 = vrot.slane %v2624, %v2733
        %v2735 = vlaneseq
        %v2736 = vshrl.u32 %v2735, 7
        %v2737 = vsub.s32 3, %v2736
        %v2738 = vrot.slane %v2624, %v2737
        %v2739 = vlaneseq
        %v2740 = vshrl.u32 %v2739, 7
        %v2741 = vsub.s32 0, %v2740
        %v2742 = vrot.slane %v2626, %v2741
        %v2743 = vlaneseq
        %v2744 = vshrl.u32 %v2743, 7
        %v2745 = vsub.s32 1, %v2744
        %v2746 = vrot.slane %v2626, %v2745
        %v2747 = vlaneseq
        %v2748 = vshrl.u32 %v2747, 7
        %v2749 = vsub.s32 2, %v2748
        %v2750 = vrot.slane %v2626, %v2749
        %v2751 = vlaneseq
        %v2752 = vshrl.u32 %v2751, 7
        %v2753 = vsub.s32 3, %v2752
        %v2754 = vrot.slane %v2626, %v2753
        %v2789 = vcombine.high %v1968, %v1968
        %v2790 = vcombine.high %v1969, %v1969
        %v2793 = vmul.f32 %v2630, %v1968
        %v2794 = vmul.f32 %v2634, %v2789
        %v2795 = vmul.f32 %v2638, %v1969
        %v2796 = vmul.f32 %v2642, %v2790
        %v2797 = vmul.f32 %v2646, %v1968
        %v2798 = vmul.f32 %v2650, %v2789
        %v2799 = vmul.f32 %v2654, %v1969
        %v2800 = vmul.f32 %v2658, %v2790
        %v2801 = vmul.f32 %v2662, %v1968
        %v2802 = vmul.f32 %v2666, %v2789
        %v2803 = vmul.f32 %v2670, %v1969
        %v2804 = vmul.f32 %v2674, %v2790
        %v2805 = vmul.f32 %v2678, %v1968
        %v2806 = vmul.f32 %v2682, %v2789
        %v2807 = vmul.f32 %v2686, %v1969
        %v2808 = vmul.f32 %v2690, %v2790
        %v2809 = vmul.f32 %v2694, %v1968
        %v2810 = vmul.f32 %v2698, %v2789
        %v2811 = vmul.f32 %v2702, %v1969
        %v2812 = vmul.f32 %v2706, %v2790
        %v2813 = vmul.f32 %v2710, %v1968
        %v2814 = vmul.f32 %v2714, %v2789
        %v2815 = vmul.f32 %v2718, %v1969
        %v2816 = vmul.f32 %v2722, %v2790
        %v2817 = vmul.f32 %v2726, %v1968
        %v2818 = vmul.f32 %v2730, %v2789
        %v2819 = vmul.f32 %v2734, %v1969
        %v2820 = vmul.f32 %v2738, %v2790
        %v2821 = vmul.f32 %v2742, %v1968
        %v2822 = vmul.f32 %v2746, %v2789
        %v2823 = vmul.f32 %v2750, %v1969
        %v2824 = vmul.f32 %v2754, %v2790
        %v2829 = vcombine.low %v728, %v729
        %v2830 = vcombine.high %v728, %v729
        %v2831 = vcombine.low %v730, %v731
        %v2832 = vcombine.high %v730, %v731
        %v2834 = vunpack.c.l.s4 1966171168
        %v2835 = vunpack.c.0.s8 %v2834
        %v2836 = vlaneseq
        %v2837 = vshrl.u32 %v2836, 7
        %v2838 = vsub.s32 %v2835, %v2837
        %v2839 = vrot.slane %v2829, %v2838
        %v2841 = vunpack.c.l.s4 1966171168
        %v2842 = vunpack.c.0.s8 %v2841
        %v2843 = vlaneseq
        %v2844 = vshrl.u32 %v2843, 7
        %v2845 = vsub.s32 %v2842, %v2844
        %v2846 = vrot.slane %v2830, %v2845
        %v2848 = vunpack.c.l.s4 1966171168
        %v2849 = vunpack.c.0.s8 %v2848
        %v2850 = vlaneseq
        %v2851 = vshrl.u32 %v2850, 7
        %v2852 = vsub.s32 %v2849, %v2851
        %v2853 = vrot.slane %v2831, %v2852
        %v2855 = vunpack.c.l.s4 1966171168
        %v2856 = vunpack.c.0.s8 %v2855
        %v2857 = vlaneseq
        %v2858 = vshrl.u32 %v2857, 7
        %v2859 = vsub.s32 %v2856, %v2858
        %v2860 = vrot.slane %v2832, %v2859
        %v2861 = vcombine.low %v2839, %v2853
        %v2862 = vcombine.high %v2839, %v2853
        %v2863 = vcombine.low %v2846, %v2860
        %v2864 = vcombine.high %v2846, %v2860
        %v2866 = vunpack.c.l.s4 1966171168
        %v2867 = vunpack.c.0.s8 %v2866
        %v2868 = vlaneseq
        %v2869 = vshrl.u32 %v2868, 7
        %v2870 = vsub.s32 %v2867, %v2869
        %v2871 = vrot.slane %v2861, %v2870
        %v2873 = vunpack.c.l.s4 1966171168
        %v2874 = vunpack.c.0.s8 %v2873
        %v2875 = vlaneseq
        %v2876 = vshrl.u32 %v2875, 7
        %v2877 = vsub.s32 %v2874, %v2876
        %v2878 = vrot.slane %v2863, %v2877
        %v2880 = vunpack.c.l.s4 1966171168
        %v2881 = vunpack.c.0.s8 %v2880
        %v2882 = vlaneseq
        %v2883 = vshrl.u32 %v2882, 7
        %v2884 = vsub.s32 %v2881, %v2883
        %v2885 = vrot.slane %v2862, %v2884
        %v2887 = vunpack.c.l.s4 1966171168
        %v2888 = vunpack.c.0.s8 %v2887
        %v2889 = vlaneseq
        %v2890 = vshrl.u32 %v2889, 7
        %v2891 = vsub.s32 %v2888, %v2890
        %v2892 = vrot.slane %v2864, %v2891
        %v2893 = vcombine.high %v2871, %v2871
        %v2894 = vcombine.high %v2878, %v2878
        %v2895 = vcombine.high %v2885, %v2885
        %v2896 = vcombine.high %v2892, %v2892
        %v2897 = vlaneseq
        %v2898 = vshrl.u32 %v2897, 7
        %v2899 = vsub.s32 0, %v2898
        %v2900 = vrot.slane %v2871, %v2899
        %v2901 = vlaneseq
        %v2902 = vshrl.u32 %v2901, 7
        %v2903 = vsub.s32 1, %v2902
        %v2904 = vrot.slane %v2871, %v2903
        %v2905 = vlaneseq
        %v2906 = vshrl.u32 %v2905, 7
        %v2907 = vsub.s32 2, %v2906
        %v2908 = vrot.slane %v2871, %v2907
        %v2909 = vlaneseq
        %v2910 = vshrl.u32 %v2909, 7
        %v2911 = vsub.s32 3, %v2910
        %v2912 = vrot.slane %v2871, %v2911
        %v2913 = vlaneseq
        %v2914 = vshrl.u32 %v2913, 7
        %v2915 = vsub.s32 0, %v2914
        %v2916 = vrot.slane %v2885, %v2915
        %v2917 = vlaneseq
        %v2918 = vshrl.u32 %v2917, 7
        %v2919 = vsub.s32 1, %v2918
        %v2920 = vrot.slane %v2885, %v2919
        %v2921 = vlaneseq
        %v2922 = vshrl.u32 %v2921, 7
        %v2923 = vsub.s32 2, %v2922
        %v2924 = vrot.slane %v2885, %v2923
        %v2925 = vlaneseq
        %v2926 = vshrl.u32 %v2925, 7
        %v2927 = vsub.s32 3, %v2926
        %v2928 = vrot.slane %v2885, %v2927
        %v2929 = vlaneseq
        %v2930 = vshrl.u32 %v2929, 7
        %v2931 = vsub.s32 0, %v2930
        %v2932 = vrot.slane %v2893, %v2931
        %v2933 = vlaneseq
        %v2934 = vshrl.u32 %v2933, 7
        %v2935 = vsub.s32 1, %v2934
        %v2936 = vrot.slane %v2893, %v2935
        %v2937 = vlaneseq
        %v2938 = vshrl.u32 %v2937, 7
        %v2939 = vsub.s32 2, %v2938
        %v2940 = vrot.slane %v2893, %v2939
        %v2941 = vlaneseq
        %v2942 = vshrl.u32 %v2941, 7
        %v2943 = vsub.s32 3, %v2942
        %v2944 = vrot.slane %v2893, %v2943
        %v2945 = vlaneseq
        %v2946 = vshrl.u32 %v2945, 7
        %v2947 = vsub.s32 0, %v2946
        %v2948 = vrot.slane %v2895, %v2947
        %v2949 = vlaneseq
        %v2950 = vshrl.u32 %v2949, 7
        %v2951 = vsub.s32 1, %v2950
        %v2952 = vrot.slane %v2895, %v2951
        %v2953 = vlaneseq
        %v2954 = vshrl.u32 %v2953, 7
        %v2955 = vsub.s32 2, %v2954
        %v2956 = vrot.slane %v2895, %v2955
        %v2957 = vlaneseq
        %v2958 = vshrl.u32 %v2957, 7
        %v2959 = vsub.s32 3, %v2958
        %v2960 = vrot.slane %v2895, %v2959
        %v2961 = vlaneseq
        %v2962 = vshrl.u32 %v2961, 7
        %v2963 = vsub.s32 0, %v2962
        %v2964 = vrot.slane %v2878, %v2963
        %v2965 = vlaneseq
        %v2966 = vshrl.u32 %v2965, 7
        %v2967 = vsub.s32 1, %v2966
        %v2968 = vrot.slane %v2878, %v2967
        %v2969 = vlaneseq
        %v2970 = vshrl.u32 %v2969, 7
        %v2971 = vsub.s32 2, %v2970
        %v2972 = vrot.slane %v2878, %v2971
        %v2973 = vlaneseq
        %v2974 = vshrl.u32 %v2973, 7
        %v2975 = vsub.s32 3, %v2974
        %v2976 = vrot.slane %v2878, %v2975
        %v2977 = vlaneseq
        %v2978 = vshrl.u32 %v2977, 7
        %v2979 = vsub.s32 0, %v2978
        %v2980 = vrot.slane %v2892, %v2979
        %v2981 = vlaneseq
        %v2982 = vshrl.u32 %v2981, 7
        %v2983 = vsub.s32 1, %v2982
        %v2984 = vrot.slane %v2892, %v2983
        %v2985 = vlaneseq
        %v2986 = vshrl.u32 %v2985, 7
        %v2987 = vsub.s32 2, %v2986
        %v2988 = vrot.slane %v2892, %v2987
        %v2989 = vlaneseq
        %v2990 = vshrl.u32 %v2989, 7
        %v2991 = vsub.s32 3, %v2990
        %v2992 = vrot.slane %v2892, %v2991
        %v2993 = vlaneseq
        %v2994 = vshrl.u32 %v2993, 7
        %v2995 = vsub.s32 0, %v2994
        %v2996 = vrot.slane %v2894, %v2995
        %v2997 = vlaneseq
        %v2998 = vshrl.u32 %v2997, 7
        %v2999 = vsub.s32 1, %v2998
        %v3000 = vrot.slane %v2894, %v2999
        %v3001 = vlaneseq
        %v3002 = vshrl.u32 %v3001, 7
        %v3003 = vsub.s32 2, %v3002
        %v3004 = vrot.slane %v2894, %v3003
        %v3005 = vlaneseq
        %v3006 = vshrl.u32 %v3005, 7
        %v3007 = vsub.s32 3, %v3006
        %v3008 = vrot.slane %v2894, %v3007
        %v3009 = vlaneseq
        %v3010 = vshrl.u32 %v3009, 7
        %v3011 = vsub.s32 0, %v3010
        %v3012 = vrot.slane %v2896, %v3011
        %v3013 = vlaneseq
        %v3014 = vshrl.u32 %v3013, 7
        %v3015 = vsub.s32 1, %v3014
        %v3016 = vrot.slane %v2896, %v3015
        %v3017 = vlaneseq
        %v3018 = vshrl.u32 %v3017, 7
        %v3019 = vsub.s32 2, %v3018
        %v3020 = vrot.slane %v2896, %v3019
        %v3021 = vlaneseq
        %v3022 = vshrl.u32 %v3021, 7
        %v3023 = vsub.s32 3, %v3022
        %v3024 = vrot.slane %v2896, %v3023
        %v3059 = vcombine.high %v1970, %v1970
        %v3060 = vcombine.high %v1971, %v1971
        %v3063 = vmul.f32 %v2900, %v1970
        %v3064 = vmul.f32 %v2904, %v3059
        %v3065 = vmul.f32 %v2908, %v1971
        %v3066 = vmul.f32 %v2912, %v3060
        %v3067 = vmul.f32 %v2916, %v1970
        %v3068 = vmul.f32 %v2920, %v3059
        %v3069 = vmul.f32 %v2924, %v1971
        %v3070 = vmul.f32 %v2928, %v3060
        %v3071 = vmul.f32 %v2932, %v1970
        %v3072 = vmul.f32 %v2936, %v3059
        %v3073 = vmul.f32 %v2940, %v1971
        %v3074 = vmul.f32 %v2944, %v3060
        %v3075 = vmul.f32 %v2948, %v1970
        %v3076 = vmul.f32 %v2952, %v3059
        %v3077 = vmul.f32 %v2956, %v1971
        %v3078 = vmul.f32 %v2960, %v3060
        %v3079 = vmul.f32 %v2964, %v1970
        %v3080 = vmul.f32 %v2968, %v3059
        %v3081 = vmul.f32 %v2972, %v1971
        %v3082 = vmul.f32 %v2976, %v3060
        %v3083 = vmul.f32 %v2980, %v1970
        %v3084 = vmul.f32 %v2984, %v3059
        %v3085 = vmul.f32 %v2988, %v1971
        %v3086 = vmul.f32 %v2992, %v3060
        %v3087 = vmul.f32 %v2996, %v1970
        %v3088 = vmul.f32 %v3000, %v3059
        %v3089 = vmul.f32 %v3004, %v1971
        %v3090 = vmul.f32 %v3008, %v3060
        %v3091 = vmul.f32 %v3012, %v1970
        %v3092 = vmul.f32 %v3016, %v3059
        %v3093 = vmul.f32 %v3020, %v1971
        %v3094 = vmul.f32 %v3024, %v3060
        %v3095 = vadd.f32 %v2793, %v3063
        %v3096 = vadd.f32 %v2794, %v3064
        %v3097 = vadd.f32 %v2795, %v3065
        %v3098 = vadd.f32 %v2796, %v3066
        %v3099 = vadd.f32 %v2797, %v3067
        %v3100 = vadd.f32 %v2798, %v3068
        %v3101 = vadd.f32 %v2799, %v3069
        %v3102 = vadd.f32 %v2800, %v3070
        %v3103 = vadd.f32 %v2801, %v3071
        %v3104 = vadd.f32 %v2802, %v3072
        %v3105 = vadd.f32 %v2803, %v3073
        %v3106 = vadd.f32 %v2804, %v3074
        %v3107 = vadd.f32 %v2805, %v3075
        %v3108 = vadd.f32 %v2806, %v3076
        %v3109 = vadd.f32 %v2807, %v3077
        %v3110 = vadd.f32 %v2808, %v3078
        %v3111 = vadd.f32 %v2809, %v3079
        %v3112 = vadd.f32 %v2810, %v3080
        %v3113 = vadd.f32 %v2811, %v3081
        %v3114 = vadd.f32 %v2812, %v3082
        %v3115 = vadd.f32 %v2813, %v3083
        %v3116 = vadd.f32 %v2814, %v3084
        %v3117 = vadd.f32 %v2815, %v3085
        %v3118 = vadd.f32 %v2816, %v3086
        %v3119 = vadd.f32 %v2817, %v3087
        %v3120 = vadd.f32 %v2818, %v3088
        %v3121 = vadd.f32 %v2819, %v3089
        %v3122 = vadd.f32 %v2820, %v3090
        %v3123 = vadd.f32 %v2821, %v3091
        %v3124 = vadd.f32 %v2822, %v3092
        %v3125 = vadd.f32 %v2823, %v3093
        %v3126 = vadd.f32 %v2824, %v3094
        %v3131 = vcombine.low %v732, %v733
        %v3132 = vcombine.high %v732, %v733
        %v3133 = vcombine.low %v734, %v735
        %v3134 = vcombine.high %v734, %v735
        %v3136 = vunpack.c.l.s4 1966171168
        %v3137 = vunpack.c.0.s8 %v3136
        %v3138 = vlaneseq
        %v3139 = vshrl.u32 %v3138, 7
        %v3140 = vsub.s32 %v3137, %v3139
        %v3141 = vrot.slane %v3131, %v3140
        %v3143 = vunpack.c.l.s4 1966171168
        %v3144 = vunpack.c.0.s8 %v3143
        %v3145 = vlaneseq
        %v3146 = vshrl.u32 %v3145, 7
        %v3147 = vsub.s32 %v3144, %v3146
        %v3148 = vrot.slane %v3132, %v3147
        %v3150 = vunpack.c.l.s4 1966171168
        %v3151 = vunpack.c.0.s8 %v3150
        %v3152 = vlaneseq
        %v3153 = vshrl.u32 %v3152, 7
        %v3154 = vsub.s32 %v3151, %v3153
        %v3155 = vrot.slane %v3133, %v3154
        %v3157 = vunpack.c.l.s4 1966171168
        %v3158 = vunpack.c.0.s8 %v3157
        %v3159 = vlaneseq
        %v3160 = vshrl.u32 %v3159, 7
        %v3161 = vsub.s32 %v3158, %v3160
        %v3162 = vrot.slane %v3134, %v3161
        %v3163 = vcombine.low %v3141, %v3155
        %v3164 = vcombine.high %v3141, %v3155
        %v3165 = vcombine.low %v3148, %v3162
        %v3166 = vcombine.high %v3148, %v3162
        %v3168 = vunpack.c.l.s4 1966171168
        %v3169 = vunpack.c.0.s8 %v3168
        %v3170 = vlaneseq
        %v3171 = vshrl.u32 %v3170, 7
        %v3172 = vsub.s32 %v3169, %v3171
        %v3173 = vrot.slane %v3163, %v3172
        %v3175 = vunpack.c.l.s4 1966171168
        %v3176 = vunpack.c.0.s8 %v3175
        %v3177 = vlaneseq
        %v3178 = vshrl.u32 %v3177, 7
        %v3179 = vsub.s32 %v3176, %v3178
        %v3180 = vrot.slane %v3165, %v3179
        %v3182 = vunpack.c.l.s4 1966171168
        %v3183 = vunpack.c.0.s8 %v3182
        %v3184 = vlaneseq
        %v3185 = vshrl.u32 %v3184, 7
        %v3186 = vsub.s32 %v3183, %v3185
        %v3187 = vrot.slane %v3164, %v3186
        %v3189 = vunpack.c.l.s4 1966171168
        %v3190 = vunpack.c.0.s8 %v3189
        %v3191 = vlaneseq
        %v3192 = vshrl.u32 %v3191, 7
        %v3193 = vsub.s32 %v3190, %v3192
        %v3194 = vrot.slane %v3166, %v3193
        %v3195 = vcombine.high %v3173, %v3173
        %v3196 = vcombine.high %v3180, %v3180
        %v3197 = vcombine.high %v3187, %v3187
        %v3198 = vcombine.high %v3194, %v3194
        %v3199 = vlaneseq
        %v3200 = vshrl.u32 %v3199, 7
        %v3201 = vsub.s32 0, %v3200
        %v3202 = vrot.slane %v3173, %v3201
        %v3203 = vlaneseq
        %v3204 = vshrl.u32 %v3203, 7
        %v3205 = vsub.s32 1, %v3204
        %v3206 = vrot.slane %v3173, %v3205
        %v3207 = vlaneseq
        %v3208 = vshrl.u32 %v3207, 7
        %v3209 = vsub.s32 2, %v3208
        %v3210 = vrot.slane %v3173, %v3209
        %v3211 = vlaneseq
        %v3212 = vshrl.u32 %v3211, 7
        %v3213 = vsub.s32 3, %v3212
        %v3214 = vrot.slane %v3173, %v3213
        %v3215 = vlaneseq
        %v3216 = vshrl.u32 %v3215, 7
        %v3217 = vsub.s32 0, %v3216
        %v3218 = vrot.slane %v3187, %v3217
        %v3219 = vlaneseq
        %v3220 = vshrl.u32 %v3219, 7
        %v3221 = vsub.s32 1, %v3220
        %v3222 = vrot.slane %v3187, %v3221
        %v3223 = vlaneseq
        %v3224 = vshrl.u32 %v3223, 7
        %v3225 = vsub.s32 2, %v3224
        %v3226 = vrot.slane %v3187, %v3225
        %v3227 = vlaneseq
        %v3228 = vshrl.u32 %v3227, 7
        %v3229 = vsub.s32 3, %v3228
        %v3230 = vrot.slane %v3187, %v3229
        %v3231 = vlaneseq
        %v3232 = vshrl.u32 %v3231, 7
        %v3233 = vsub.s32 0, %v3232
        %v3234 = vrot.slane %v3195, %v3233
        %v3235 = vlaneseq
        %v3236 = vshrl.u32 %v3235, 7
        %v3237 = vsub.s32 1, %v3236
        %v3238 = vrot.slane %v3195, %v3237
        %v3239 = vlaneseq
        %v3240 = vshrl.u32 %v3239, 7
        %v3241 = vsub.s32 2, %v3240
        %v3242 = vrot.slane %v3195, %v3241
        %v3243 = vlaneseq
        %v3244 = vshrl.u32 %v3243, 7
        %v3245 = vsub.s32 3, %v3244
        %v3246 = vrot.slane %v3195, %v3245
        %v3247 = vlaneseq
        %v3248 = vshrl.u32 %v3247, 7
        %v3249 = vsub.s32 0, %v3248
        %v3250 = vrot.slane %v3197, %v3249
        %v3251 = vlaneseq
        %v3252 = vshrl.u32 %v3251, 7
        %v3253 = vsub.s32 1, %v3252
        %v3254 = vrot.slane %v3197, %v3253
        %v3255 = vlaneseq
        %v3256 = vshrl.u32 %v3255, 7
        %v3257 = vsub.s32 2, %v3256
        %v3258 = vrot.slane %v3197, %v3257
        %v3259 = vlaneseq
        %v3260 = vshrl.u32 %v3259, 7
        %v3261 = vsub.s32 3, %v3260
        %v3262 = vrot.slane %v3197, %v3261
        %v3263 = vlaneseq
        %v3264 = vshrl.u32 %v3263, 7
        %v3265 = vsub.s32 0, %v3264
        %v3266 = vrot.slane %v3180, %v3265
        %v3267 = vlaneseq
        %v3268 = vshrl.u32 %v3267, 7
        %v3269 = vsub.s32 1, %v3268
        %v3270 = vrot.slane %v3180, %v3269
        %v3271 = vlaneseq
        %v3272 = vshrl.u32 %v3271, 7
        %v3273 = vsub.s32 2, %v3272
        %v3274 = vrot.slane %v3180, %v3273
        %v3275 = vlaneseq
        %v3276 = vshrl.u32 %v3275, 7
        %v3277 = vsub.s32 3, %v3276
        %v3278 = vrot.slane %v3180, %v3277
        %v3279 = vlaneseq
        %v3280 = vshrl.u32 %v3279, 7
        %v3281 = vsub.s32 0, %v3280
        %v3282 = vrot.slane %v3194, %v3281
        %v3283 = vlaneseq
        %v3284 = vshrl.u32 %v3283, 7
        %v3285 = vsub.s32 1, %v3284
        %v3286 = vrot.slane %v3194, %v3285
        %v3287 = vlaneseq
        %v3288 = vshrl.u32 %v3287, 7
        %v3289 = vsub.s32 2, %v3288
        %v3290 = vrot.slane %v3194, %v3289
        %v3291 = vlaneseq
        %v3292 = vshrl.u32 %v3291, 7
        %v3293 = vsub.s32 3, %v3292
        %v3294 = vrot.slane %v3194, %v3293
        %v3295 = vlaneseq
        %v3296 = vshrl.u32 %v3295, 7
        %v3297 = vsub.s32 0, %v3296
        %v3298 = vrot.slane %v3196, %v3297
        %v3299 = vlaneseq
        %v3300 = vshrl.u32 %v3299, 7
        %v3301 = vsub.s32 1, %v3300
        %v3302 = vrot.slane %v3196, %v3301
        %v3303 = vlaneseq
        %v3304 = vshrl.u32 %v3303, 7
        %v3305 = vsub.s32 2, %v3304
        %v3306 = vrot.slane %v3196, %v3305
        %v3307 = vlaneseq
        %v3308 = vshrl.u32 %v3307, 7
        %v3309 = vsub.s32 3, %v3308
        %v3310 = vrot.slane %v3196, %v3309
        %v3311 = vlaneseq
        %v3312 = vshrl.u32 %v3311, 7
        %v3313 = vsub.s32 0, %v3312
        %v3314 = vrot.slane %v3198, %v3313
        %v3315 = vlaneseq
        %v3316 = vshrl.u32 %v3315, 7
        %v3317 = vsub.s32 1, %v3316
        %v3318 = vrot.slane %v3198, %v3317
        %v3319 = vlaneseq
        %v3320 = vshrl.u32 %v3319, 7
        %v3321 = vsub.s32 2, %v3320
        %v3322 = vrot.slane %v3198, %v3321
        %v3323 = vlaneseq
        %v3324 = vshrl.u32 %v3323, 7
        %v3325 = vsub.s32 3, %v3324
        %v3326 = vrot.slane %v3198, %v3325
        %v3361 = vcombine.high %v1972, %v1972
        %v3362 = vcombine.high %v1973, %v1973
        %v3365 = vmul.f32 %v3202, %v1972
        %v3366 = vmul.f32 %v3206, %v3361
        %v3367 = vmul.f32 %v3210, %v1973
        %v3368 = vmul.f32 %v3214, %v3362
        %v3369 = vmul.f32 %v3218, %v1972
        %v3370 = vmul.f32 %v3222, %v3361
        %v3371 = vmul.f32 %v3226, %v1973
        %v3372 = vmul.f32 %v3230, %v3362
        %v3373 = vmul.f32 %v3234, %v1972
        %v3374 = vmul.f32 %v3238, %v3361
        %v3375 = vmul.f32 %v3242, %v1973
        %v3376 = vmul.f32 %v3246, %v3362
        %v3377 = vmul.f32 %v3250, %v1972
        %v3378 = vmul.f32 %v3254, %v3361
        %v3379 = vmul.f32 %v3258, %v1973
        %v3380 = vmul.f32 %v3262, %v3362
        %v3381 = vmul.f32 %v3266, %v1972
        %v3382 = vmul.f32 %v3270, %v3361
        %v3383 = vmul.f32 %v3274, %v1973
        %v3384 = vmul.f32 %v3278, %v3362
        %v3385 = vmul.f32 %v3282, %v1972
        %v3386 = vmul.f32 %v3286, %v3361
        %v3387 = vmul.f32 %v3290, %v1973
        %v3388 = vmul.f32 %v3294, %v3362
        %v3389 = vmul.f32 %v3298, %v1972
        %v3390 = vmul.f32 %v3302, %v3361
        %v3391 = vmul.f32 %v3306, %v1973
        %v3392 = vmul.f32 %v3310, %v3362
        %v3393 = vmul.f32 %v3314, %v1972
        %v3394 = vmul.f32 %v3318, %v3361
        %v3395 = vmul.f32 %v3322, %v1973
        %v3396 = vmul.f32 %v3326, %v3362
        %v3397 = vadd.f32 %v3095, %v3365
        %v3398 = vadd.f32 %v3096, %v3366
        %v3399 = vadd.f32 %v3097, %v3367
        %v3400 = vadd.f32 %v3098, %v3368
        %v3401 = vadd.f32 %v3099, %v3369
        %v3402 = vadd.f32 %v3100, %v3370
        %v3403 = vadd.f32 %v3101, %v3371
        %v3404 = vadd.f32 %v3102, %v3372
        %v3405 = vadd.f32 %v3103, %v3373
        %v3406 = vadd.f32 %v3104, %v3374
        %v3407 = vadd.f32 %v3105, %v3375
        %v3408 = vadd.f32 %v3106, %v3376
        %v3409 = vadd.f32 %v3107, %v3377
        %v3410 = vadd.f32 %v3108, %v3378
        %v3411 = vadd.f32 %v3109, %v3379
        %v3412 = vadd.f32 %v3110, %v3380
        %v3413 = vadd.f32 %v3111, %v3381
        %v3414 = vadd.f32 %v3112, %v3382
        %v3415 = vadd.f32 %v3113, %v3383
        %v3416 = vadd.f32 %v3114, %v3384
        %v3417 = vadd.f32 %v3115, %v3385
        %v3418 = vadd.f32 %v3116, %v3386
        %v3419 = vadd.f32 %v3117, %v3387
        %v3420 = vadd.f32 %v3118, %v3388
        %v3421 = vadd.f32 %v3119, %v3389
        %v3422 = vadd.f32 %v3120, %v3390
        %v3423 = vadd.f32 %v3121, %v3391
        %v3424 = vadd.f32 %v3122, %v3392
        %v3425 = vadd.f32 %v3123, %v3393
        %v3426 = vadd.f32 %v3124, %v3394
        %v3427 = vadd.f32 %v3125, %v3395
        %v3428 = vadd.f32 %v3126, %v3396
        %v3433 = vcombine.low %v736, %v737
        %v3434 = vcombine.high %v736, %v737
        %v3435 = vcombine.low %v738, %v739
        %v3436 = vcombine.high %v738, %v739
        %v3438 = vunpack.c.l.s4 1966171168
        %v3439 = vunpack.c.0.s8 %v3438
        %v3440 = vlaneseq
        %v3441 = vshrl.u32 %v3440, 7
        %v3442 = vsub.s32 %v3439, %v3441
        %v3443 = vrot.slane %v3433, %v3442
        %v3445 = vunpack.c.l.s4 1966171168
        %v3446 = vunpack.c.0.s8 %v3445
        %v3447 = vlaneseq
        %v3448 = vshrl.u32 %v3447, 7
        %v3449 = vsub.s32 %v3446, %v3448
        %v3450 = vrot.slane %v3434, %v3449
        %v3452 = vunpack.c.l.s4 1966171168
        %v3453 = vunpack.c.0.s8 %v3452
        %v3454 = vlaneseq
        %v3455 = vshrl.u32 %v3454, 7
        %v3456 = vsub.s32 %v3453, %v3455
        %v3457 = vrot.slane %v3435, %v3456
        %v3459 = vunpack.c.l.s4 1966171168
        %v3460 = vunpack.c.0.s8 %v3459
        %v3461 = vlaneseq
        %v3462 = vshrl.u32 %v3461, 7
        %v3463 = vsub.s32 %v3460, %v3462
        %v3464 = vrot.slane %v3436, %v3463
        %v3465 = vcombine.low %v3443, %v3457
        %v3466 = vcombine.high %v3443, %v3457
        %v3467 = vcombine.low %v3450, %v3464
        %v3468 = vcombine.high %v3450, %v3464
        %v3470 = vunpack.c.l.s4 1966171168
        %v3471 = vunpack.c.0.s8 %v3470
        %v3472 = vlaneseq
        %v3473 = vshrl.u32 %v3472, 7
        %v3474 = vsub.s32 %v3471, %v3473
        %v3475 = vrot.slane %v3465, %v3474
        %v3477 = vunpack.c.l.s4 1966171168
        %v3478 = vunpack.c.0.s8 %v3477
        %v3479 = vlaneseq
        %v3480 = vshrl.u32 %v3479, 7
        %v3481 = vsub.s32 %v3478, %v3480
        %v3482 = vrot.slane %v3467, %v3481
        %v3484 = vunpack.c.l.s4 1966171168
        %v3485 = vunpack.c.0.s8 %v3484
        %v3486 = vlaneseq
        %v3487 = vshrl.u32 %v3486, 7
        %v3488 = vsub.s32 %v3485, %v3487
        %v3489 = vrot.slane %v3466, %v3488
        %v3491 = vunpack.c.l.s4 1966171168
        %v3492 = vunpack.c.0.s8 %v3491
        %v3493 = vlaneseq
        %v3494 = vshrl.u32 %v3493, 7
        %v3495 = vsub.s32 %v3492, %v3494
        %v3496 = vrot.slane %v3468, %v3495
        %v3497 = vcombine.high %v3475, %v3475
        %v3498 = vcombine.high %v3482, %v3482
        %v3499 = vcombine.high %v3489, %v3489
        %v3500 = vcombine.high %v3496, %v3496
        %v3501 = vlaneseq
        %v3502 = vshrl.u32 %v3501, 7
        %v3503 = vsub.s32 0, %v3502
        %v3504 = vrot.slane %v3475, %v3503
        %v3505 = vlaneseq
        %v3506 = vshrl.u32 %v3505, 7
        %v3507 = vsub.s32 1, %v3506
        %v3508 = vrot.slane %v3475, %v3507
        %v3509 = vlaneseq
        %v3510 = vshrl.u32 %v3509, 7
        %v3511 = vsub.s32 2, %v3510
        %v3512 = vrot.slane %v3475, %v3511
        %v3513 = vlaneseq
        %v3514 = vshrl.u32 %v3513, 7
        %v3515 = vsub.s32 3, %v3514
        %v3516 = vrot.slane %v3475, %v3515
        %v3517 = vlaneseq
        %v3518 = vshrl.u32 %v3517, 7
        %v3519 = vsub.s32 0, %v3518
        %v3520 = vrot.slane %v3489, %v3519
        %v3521 = vlaneseq
        %v3522 = vshrl.u32 %v3521, 7
        %v3523 = vsub.s32 1, %v3522
        %v3524 = vrot.slane %v3489, %v3523
        %v3525 = vlaneseq
        %v3526 = vshrl.u32 %v3525, 7
        %v3527 = vsub.s32 2, %v3526
        %v3528 = vrot.slane %v3489, %v3527
        %v3529 = vlaneseq
        %v3530 = vshrl.u32 %v3529, 7
        %v3531 = vsub.s32 3, %v3530
        %v3532 = vrot.slane %v3489, %v3531
        %v3533 = vlaneseq
        %v3534 = vshrl.u32 %v3533, 7
        %v3535 = vsub.s32 0, %v3534
        %v3536 = vrot.slane %v3497, %v3535
        %v3537 = vlaneseq
        %v3538 = vshrl.u32 %v3537, 7
        %v3539 = vsub.s32 1, %v3538
        %v3540 = vrot.slane %v3497, %v3539
        %v3541 = vlaneseq
        %v3542 = vshrl.u32 %v3541, 7
        %v3543 = vsub.s32 2, %v3542
        %v3544 = vrot.slane %v3497, %v3543
        %v3545 = vlaneseq
        %v3546 = vshrl.u32 %v3545, 7
        %v3547 = vsub.s32 3, %v3546
        %v3548 = vrot.slane %v3497, %v3547
        %v3549 = vlaneseq
        %v3550 = vshrl.u32 %v3549, 7
        %v3551 = vsub.s32 0, %v3550
        %v3552 = vrot.slane %v3499, %v3551
        %v3553 = vlaneseq
        %v3554 = vshrl.u32 %v3553, 7
        %v3555 = vsub.s32 1, %v3554
        %v3556 = vrot.slane %v3499, %v3555
        %v3557 = vlaneseq
        %v3558 = vshrl.u32 %v3557, 7
        %v3559 = vsub.s32 2, %v3558
        %v3560 = vrot.slane %v3499, %v3559
        %v3561 = vlaneseq
        %v3562 = vshrl.u32 %v3561, 7
        %v3563 = vsub.s32 3, %v3562
        %v3564 = vrot.slane %v3499, %v3563
        %v3565 = vlaneseq
        %v3566 = vshrl.u32 %v3565, 7
        %v3567 = vsub.s32 0, %v3566
        %v3568 = vrot.slane %v3482, %v3567
        %v3569 = vlaneseq
        %v3570 = vshrl.u32 %v3569, 7
        %v3571 = vsub.s32 1, %v3570
        %v3572 = vrot.slane %v3482, %v3571
        %v3573 = vlaneseq
        %v3574 = vshrl.u32 %v3573, 7
        %v3575 = vsub.s32 2, %v3574
        %v3576 = vrot.slane %v3482, %v3575
        %v3577 = vlaneseq
        %v3578 = vshrl.u32 %v3577, 7
        %v3579 = vsub.s32 3, %v3578
        %v3580 = vrot.slane %v3482, %v3579
        %v3581 = vlaneseq
        %v3582 = vshrl.u32 %v3581, 7
        %v3583 = vsub.s32 0, %v3582
        %v3584 = vrot.slane %v3496, %v3583
        %v3585 = vlaneseq
        %v3586 = vshrl.u32 %v3585, 7
        %v3587 = vsub.s32 1, %v3586
        %v3588 = vrot.slane %v3496, %v3587
        %v3589 = vlaneseq
        %v3590 = vshrl.u32 %v3589, 7
        %v3591 = vsub.s32 2, %v3590
        %v3592 = vrot.slane %v3496, %v3591
        %v3593 = vlaneseq
        %v3594 = vshrl.u32 %v3593, 7
        %v3595 = vsub.s32 3, %v3594
        %v3596 = vrot.slane %v3496, %v3595
        %v3597 = vlaneseq
        %v3598 = vshrl.u32 %v3597, 7
        %v3599 = vsub.s32 0, %v3598
        %v3600 = vrot.slane %v3498, %v3599
        %v3601 = vlaneseq
        %v3602 = vshrl.u32 %v3601, 7
        %v3603 = vsub.s32 1, %v3602
        %v3604 = vrot.slane %v3498, %v3603
        %v3605 = vlaneseq
        %v3606 = vshrl.u32 %v3605, 7
        %v3607 = vsub.s32 2, %v3606
        %v3608 = vrot.slane %v3498, %v3607
        %v3609 = vlaneseq
        %v3610 = vshrl.u32 %v3609, 7
        %v3611 = vsub.s32 3, %v3610
        %v3612 = vrot.slane %v3498, %v3611
        %v3613 = vlaneseq
        %v3614 = vshrl.u32 %v3613, 7
        %v3615 = vsub.s32 0, %v3614
        %v3616 = vrot.slane %v3500, %v3615
        %v3617 = vlaneseq
        %v3618 = vshrl.u32 %v3617, 7
        %v3619 = vsub.s32 1, %v3618
        %v3620 = vrot.slane %v3500, %v3619
        %v3621 = vlaneseq
        %v3622 = vshrl.u32 %v3621, 7
        %v3623 = vsub.s32 2, %v3622
        %v3624 = vrot.slane %v3500, %v3623
        %v3625 = vlaneseq
        %v3626 = vshrl.u32 %v3625, 7
        %v3627 = vsub.s32 3, %v3626
        %v3628 = vrot.slane %v3500, %v3627
        %v3663 = vcombine.high %v1974, %v1974
        %v3664 = vcombine.high %v1975, %v1975
        %v3667 = vmul.f32 %v3504, %v1974
        %v3668 = vmul.f32 %v3508, %v3663
        %v3669 = vmul.f32 %v3512, %v1975
        %v3670 = vmul.f32 %v3516, %v3664
        %v3671 = vmul.f32 %v3520, %v1974
        %v3672 = vmul.f32 %v3524, %v3663
        %v3673 = vmul.f32 %v3528, %v1975
        %v3674 = vmul.f32 %v3532, %v3664
        %v3675 = vmul.f32 %v3536, %v1974
        %v3676 = vmul.f32 %v3540, %v3663
        %v3677 = vmul.f32 %v3544, %v1975
        %v3678 = vmul.f32 %v3548, %v3664
        %v3679 = vmul.f32 %v3552, %v1974
        %v3680 = vmul.f32 %v3556, %v3663
        %v3681 = vmul.f32 %v3560, %v1975
        %v3682 = vmul.f32 %v3564, %v3664
        %v3683 = vmul.f32 %v3568, %v1974
        %v3684 = vmul.f32 %v3572, %v3663
        %v3685 = vmul.f32 %v3576, %v1975
        %v3686 = vmul.f32 %v3580, %v3664
        %v3687 = vmul.f32 %v3584, %v1974
        %v3688 = vmul.f32 %v3588, %v3663
        %v3689 = vmul.f32 %v3592, %v1975
        %v3690 = vmul.f32 %v3596, %v3664
        %v3691 = vmul.f32 %v3600, %v1974
        %v3692 = vmul.f32 %v3604, %v3663
        %v3693 = vmul.f32 %v3608, %v1975
        %v3694 = vmul.f32 %v3612, %v3664
        %v3695 = vmul.f32 %v3616, %v1974
        %v3696 = vmul.f32 %v3620, %v3663
        %v3697 = vmul.f32 %v3624, %v1975
        %v3698 = vmul.f32 %v3628, %v3664
        %v3699 = vadd.f32 %v3397, %v3667
        %v3700 = vadd.f32 %v3398, %v3668
        %v3701 = vadd.f32 %v3399, %v3669
        %v3702 = vadd.f32 %v3400, %v3670
        %v3703 = vadd.f32 %v3401, %v3671
        %v3704 = vadd.f32 %v3402, %v3672
        %v3705 = vadd.f32 %v3403, %v3673
        %v3706 = vadd.f32 %v3404, %v3674
        %v3707 = vadd.f32 %v3405, %v3675
        %v3708 = vadd.f32 %v3406, %v3676
        %v3709 = vadd.f32 %v3407, %v3677
        %v3710 = vadd.f32 %v3408, %v3678
        %v3711 = vadd.f32 %v3409, %v3679
        %v3712 = vadd.f32 %v3410, %v3680
        %v3713 = vadd.f32 %v3411, %v3681
        %v3714 = vadd.f32 %v3412, %v3682
        %v3715 = vadd.f32 %v3413, %v3683
        %v3716 = vadd.f32 %v3414, %v3684
        %v3717 = vadd.f32 %v3415, %v3685
        %v3718 = vadd.f32 %v3416, %v3686
        %v3719 = vadd.f32 %v3417, %v3687
        %v3720 = vadd.f32 %v3418, %v3688
        %v3721 = vadd.f32 %v3419, %v3689
        %v3722 = vadd.f32 %v3420, %v3690
        %v3723 = vadd.f32 %v3421, %v3691
        %v3724 = vadd.f32 %v3422, %v3692
        %v3725 = vadd.f32 %v3423, %v3693
        %v3726 = vadd.f32 %v3424, %v3694
        %v3727 = vadd.f32 %v3425, %v3695
        %v3728 = vadd.f32 %v3426, %v3696
        %v3729 = vadd.f32 %v3427, %v3697
        %v3730 = vadd.f32 %v3428, %v3698
        %v3735 = vcombine.low %v740, %v741
        %v3736 = vcombine.high %v740, %v741
        %v3737 = vcombine.low %v742, %v743
        %v3738 = vcombine.high %v742, %v743
        %v3740 = vunpack.c.l.s4 1966171168
        %v3741 = vunpack.c.0.s8 %v3740
        %v3742 = vlaneseq
        %v3743 = vshrl.u32 %v3742, 7
        %v3744 = vsub.s32 %v3741, %v3743
        %v3745 = vrot.slane %v3735, %v3744
        %v3747 = vunpack.c.l.s4 1966171168
        %v3748 = vunpack.c.0.s8 %v3747
        %v3749 = vlaneseq
        %v3750 = vshrl.u32 %v3749, 7
        %v3751 = vsub.s32 %v3748, %v3750
        %v3752 = vrot.slane %v3736, %v3751
        %v3754 = vunpack.c.l.s4 1966171168
        %v3755 = vunpack.c.0.s8 %v3754
        %v3756 = vlaneseq
        %v3757 = vshrl.u32 %v3756, 7
        %v3758 = vsub.s32 %v3755, %v3757
        %v3759 = vrot.slane %v3737, %v3758
        %v3761 = vunpack.c.l.s4 1966171168
        %v3762 = vunpack.c.0.s8 %v3761
        %v3763 = vlaneseq
        %v3764 = vshrl.u32 %v3763, 7
        %v3765 = vsub.s32 %v3762, %v3764
        %v3766 = vrot.slane %v3738, %v3765
        %v3767 = vcombine.low %v3745, %v3759
        %v3768 = vcombine.high %v3745, %v3759
        %v3769 = vcombine.low %v3752, %v3766
        %v3770 = vcombine.high %v3752, %v3766
        %v3772 = vunpack.c.l.s4 1966171168
        %v3773 = vunpack.c.0.s8 %v3772
        %v3774 = vlaneseq
        %v3775 = vshrl.u32 %v3774, 7
        %v3776 = vsub.s32 %v3773, %v3775
        %v3777 = vrot.slane %v3767, %v3776
        %v3779 = vunpack.c.l.s4 1966171168
        %v3780 = vunpack.c.0.s8 %v3779
        %v3781 = vlaneseq
        %v3782 = vshrl.u32 %v3781, 7
        %v3783 = vsub.s32 %v3780, %v3782
        %v3784 = vrot.slane %v3769, %v3783
        %v3786 = vunpack.c.l.s4 1966171168
        %v3787 = vunpack.c.0.s8 %v3786
        %v3788 = vlaneseq
        %v3789 = vshrl.u32 %v3788, 7
        %v3790 = vsub.s32 %v3787, %v3789
        %v3791 = vrot.slane %v3768, %v3790
        %v3793 = vunpack.c.l.s4 1966171168
        %v3794 = vunpack.c.0.s8 %v3793
        %v3795 = vlaneseq
        %v3796 = vshrl.u32 %v3795, 7
        %v3797 = vsub.s32 %v3794, %v3796
        %v3798 = vrot.slane %v3770, %v3797
        %v3799 = vcombine.high %v3777, %v3777
        %v3800 = vcombine.high %v3784, %v3784
        %v3801 = vcombine.high %v3791, %v3791
        %v3802 = vcombine.high %v3798, %v3798
        %v3803 = vlaneseq
        %v3804 = vshrl.u32 %v3803, 7
        %v3805 = vsub.s32 0, %v3804
        %v3806 = vrot.slane %v3777, %v3805
        %v3807 = vlaneseq
        %v3808 = vshrl.u32 %v3807, 7
        %v3809 = vsub.s32 1, %v3808
        %v3810 = vrot.slane %v3777, %v3809
        %v3811 = vlaneseq
        %v3812 = vshrl.u32 %v3811, 7
        %v3813 = vsub.s32 2, %v3812
        %v3814 = vrot.slane %v3777, %v3813
        %v3815 = vlaneseq
        %v3816 = vshrl.u32 %v3815, 7
        %v3817 = vsub.s32 3, %v3816
        %v3818 = vrot.slane %v3777, %v3817
        %v3819 = vlaneseq
        %v3820 = vshrl.u32 %v3819, 7
        %v3821 = vsub.s32 0, %v3820
        %v3822 = vrot.slane %v3791, %v3821
        %v3823 = vlaneseq
        %v3824 = vshrl.u32 %v3823, 7
        %v3825 = vsub.s32 1, %v3824
        %v3826 = vrot.slane %v3791, %v3825
        %v3827 = vlaneseq
        %v3828 = vshrl.u32 %v3827, 7
        %v3829 = vsub.s32 2, %v3828
        %v3830 = vrot.slane %v3791, %v3829
        %v3831 = vlaneseq
        %v3832 = vshrl.u32 %v3831, 7
        %v3833 = vsub.s32 3, %v3832
        %v3834 = vrot.slane %v3791, %v3833
        %v3835 = vlaneseq
        %v3836 = vshrl.u32 %v3835, 7
        %v3837 = vsub.s32 0, %v3836
        %v3838 = vrot.slane %v3799, %v3837
        %v3839 = vlaneseq
        %v3840 = vshrl.u32 %v3839, 7
        %v3841 = vsub.s32 1, %v3840
        %v3842 = vrot.slane %v3799, %v3841
        %v3843 = vlaneseq
        %v3844 = vshrl.u32 %v3843, 7
        %v3845 = vsub.s32 2, %v3844
        %v3846 = vrot.slane %v3799, %v3845
        %v3847 = vlaneseq
        %v3848 = vshrl.u32 %v3847, 7
        %v3849 = vsub.s32 3, %v3848
        %v3850 = vrot.slane %v3799, %v3849
        %v3851 = vlaneseq
        %v3852 = vshrl.u32 %v3851, 7
        %v3853 = vsub.s32 0, %v3852
        %v3854 = vrot.slane %v3801, %v3853
        %v3855 = vlaneseq
        %v3856 = vshrl.u32 %v3855, 7
        %v3857 = vsub.s32 1, %v3856
        %v3858 = vrot.slane %v3801, %v3857
        %v3859 = vlaneseq
        %v3860 = vshrl.u32 %v3859, 7
        %v3861 = vsub.s32 2, %v3860
        %v3862 = vrot.slane %v3801, %v3861
        %v3863 = vlaneseq
        %v3864 = vshrl.u32 %v3863, 7
        %v3865 = vsub.s32 3, %v3864
        %v3866 = vrot.slane %v3801, %v3865
        %v3867 = vlaneseq
        %v3868 = vshrl.u32 %v3867, 7
        %v3869 = vsub.s32 0, %v3868
        %v3870 = vrot.slane %v3784, %v3869
        %v3871 = vlaneseq
        %v3872 = vshrl.u32 %v3871, 7
        %v3873 = vsub.s32 1, %v3872
        %v3874 = vrot.slane %v3784, %v3873
        %v3875 = vlaneseq
        %v3876 = vshrl.u32 %v3875, 7
        %v3877 = vsub.s32 2, %v3876
        %v3878 = vrot.slane %v3784, %v3877
        %v3879 = vlaneseq
        %v3880 = vshrl.u32 %v3879, 7
        %v3881 = vsub.s32 3, %v3880
        %v3882 = vrot.slane %v3784, %v3881
        %v3883 = vlaneseq
        %v3884 = vshrl.u32 %v3883, 7
        %v3885 = vsub.s32 0, %v3884
        %v3886 = vrot.slane %v3798, %v3885
        %v3887 = vlaneseq
        %v3888 = vshrl.u32 %v3887, 7
        %v3889 = vsub.s32 1, %v3888
        %v3890 = vrot.slane %v3798, %v3889
        %v3891 = vlaneseq
        %v3892 = vshrl.u32 %v3891, 7
        %v3893 = vsub.s32 2, %v3892
        %v3894 = vrot.slane %v3798, %v3893
        %v3895 = vlaneseq
        %v3896 = vshrl.u32 %v3895, 7
        %v3897 = vsub.s32 3, %v3896
        %v3898 = vrot.slane %v3798, %v3897
        %v3899 = vlaneseq
        %v3900 = vshrl.u32 %v3899, 7
        %v3901 = vsub.s32 0, %v3900
        %v3902 = vrot.slane %v3800, %v3901
        %v3903 = vlaneseq
        %v3904 = vshrl.u32 %v3903, 7
        %v3905 = vsub.s32 1, %v3904
        %v3906 = vrot.slane %v3800, %v3905
        %v3907 = vlaneseq
        %v3908 = vshrl.u32 %v3907, 7
        %v3909 = vsub.s32 2, %v3908
        %v3910 = vrot.slane %v3800, %v3909
        %v3911 = vlaneseq
        %v3912 = vshrl.u32 %v3911, 7
        %v3913 = vsub.s32 3, %v3912
        %v3914 = vrot.slane %v3800, %v3913
        %v3915 = vlaneseq
        %v3916 = vshrl.u32 %v3915, 7
        %v3917 = vsub.s32 0, %v3916
        %v3918 = vrot.slane %v3802, %v3917
        %v3919 = vlaneseq
        %v3920 = vshrl.u32 %v3919, 7
        %v3921 = vsub.s32 1, %v3920
        %v3922 = vrot.slane %v3802, %v3921
        %v3923 = vlaneseq
        %v3924 = vshrl.u32 %v3923, 7
        %v3925 = vsub.s32 2, %v3924
        %v3926 = vrot.slane %v3802, %v3925
        %v3927 = vlaneseq
        %v3928 = vshrl.u32 %v3927, 7
        %v3929 = vsub.s32 3, %v3928
        %v3930 = vrot.slane %v3802, %v3929
        %v3965 = vcombine.high %v1976, %v1976
        %v3966 = vcombine.high %v1977, %v1977
        %v3969 = vmul.f32 %v3806, %v1976
        %v3970 = vmul.f32 %v3810, %v3965
        %v3971 = vmul.f32 %v3814, %v1977
        %v3972 = vmul.f32 %v3818, %v3966
        %v3973 = vmul.f32 %v3822, %v1976
        %v3974 = vmul.f32 %v3826, %v3965
        %v3975 = vmul.f32 %v3830, %v1977
        %v3976 = vmul.f32 %v3834, %v3966
        %v3977 = vmul.f32 %v3838, %v1976
        %v3978 = vmul.f32 %v3842, %v3965
        %v3979 = vmul.f32 %v3846, %v1977
        %v3980 = vmul.f32 %v3850, %v3966
        %v3981 = vmul.f32 %v3854, %v1976
        %v3982 = vmul.f32 %v3858, %v3965
        %v3983 = vmul.f32 %v3862, %v1977
        %v3984 = vmul.f32 %v3866, %v3966
        %v3985 = vmul.f32 %v3870, %v1976
        %v3986 = vmul.f32 %v3874, %v3965
        %v3987 = vmul.f32 %v3878, %v1977
        %v3988 = vmul.f32 %v3882, %v3966
        %v3989 = vmul.f32 %v3886, %v1976
        %v3990 = vmul.f32 %v3890, %v3965
        %v3991 = vmul.f32 %v3894, %v1977
        %v3992 = vmul.f32 %v3898, %v3966
        %v3993 = vmul.f32 %v3902, %v1976
        %v3994 = vmul.f32 %v3906, %v3965
        %v3995 = vmul.f32 %v3910, %v1977
        %v3996 = vmul.f32 %v3914, %v3966
        %v3997 = vmul.f32 %v3918, %v1976
        %v3998 = vmul.f32 %v3922, %v3965
        %v3999 = vmul.f32 %v3926, %v1977
        %v4000 = vmul.f32 %v3930, %v3966
        %v4001 = vadd.f32 %v3699, %v3969
        %v4002 = vadd.f32 %v3700, %v3970
        %v4003 = vadd.f32 %v3701, %v3971
        %v4004 = vadd.f32 %v3702, %v3972
        %v4005 = vadd.f32 %v3703, %v3973
        %v4006 = vadd.f32 %v3704, %v3974
        %v4007 = vadd.f32 %v3705, %v3975
        %v4008 = vadd.f32 %v3706, %v3976
        %v4009 = vadd.f32 %v3707, %v3977
        %v4010 = vadd.f32 %v3708, %v3978
        %v4011 = vadd.f32 %v3709, %v3979
        %v4012 = vadd.f32 %v3710, %v3980
        %v4013 = vadd.f32 %v3711, %v3981
        %v4014 = vadd.f32 %v3712, %v3982
        %v4015 = vadd.f32 %v3713, %v3983
        %v4016 = vadd.f32 %v3714, %v3984
        %v4017 = vadd.f32 %v3715, %v3985
        %v4018 = vadd.f32 %v3716, %v3986
        %v4019 = vadd.f32 %v3717, %v3987
        %v4020 = vadd.f32 %v3718, %v3988
        %v4021 = vadd.f32 %v3719, %v3989
        %v4022 = vadd.f32 %v3720, %v3990
        %v4023 = vadd.f32 %v3721, %v3991
        %v4024 = vadd.f32 %v3722, %v3992
        %v4025 = vadd.f32 %v3723, %v3993
        %v4026 = vadd.f32 %v3724, %v3994
        %v4027 = vadd.f32 %v3725, %v3995
        %v4028 = vadd.f32 %v3726, %v3996
        %v4029 = vadd.f32 %v3727, %v3997
        %v4030 = vadd.f32 %v3728, %v3998
        %v4031 = vadd.f32 %v3729, %v3999
        %v4032 = vadd.f32 %v3730, %v4000
        %v4037 = vcombine.low %v744, %v745
        %v4038 = vcombine.high %v744, %v745
        %v4039 = vcombine.low %v746, %v747
        %v4040 = vcombine.high %v746, %v747
        %v4042 = vunpack.c.l.s4 1966171168
        %v4043 = vunpack.c.0.s8 %v4042
        %v4044 = vlaneseq
        %v4045 = vshrl.u32 %v4044, 7
        %v4046 = vsub.s32 %v4043, %v4045
        %v4047 = vrot.slane %v4037, %v4046
        %v4049 = vunpack.c.l.s4 1966171168
        %v4050 = vunpack.c.0.s8 %v4049
        %v4051 = vlaneseq
        %v4052 = vshrl.u32 %v4051, 7
        %v4053 = vsub.s32 %v4050, %v4052
        %v4054 = vrot.slane %v4038, %v4053
        %v4056 = vunpack.c.l.s4 1966171168
        %v4057 = vunpack.c.0.s8 %v4056
        %v4058 = vlaneseq
        %v4059 = vshrl.u32 %v4058, 7
        %v4060 = vsub.s32 %v4057, %v4059
        %v4061 = vrot.slane %v4039, %v4060
        %v4063 = vunpack.c.l.s4 1966171168
        %v4064 = vunpack.c.0.s8 %v4063
        %v4065 = vlaneseq
        %v4066 = vshrl.u32 %v4065, 7
        %v4067 = vsub.s32 %v4064, %v4066
        %v4068 = vrot.slane %v4040, %v4067
        %v4069 = vcombine.low %v4047, %v4061
        %v4070 = vcombine.high %v4047, %v4061
        %v4071 = vcombine.low %v4054, %v4068
        %v4072 = vcombine.high %v4054, %v4068
        %v4074 = vunpack.c.l.s4 1966171168
        %v4075 = vunpack.c.0.s8 %v4074
        %v4076 = vlaneseq
        %v4077 = vshrl.u32 %v4076, 7
        %v4078 = vsub.s32 %v4075, %v4077
        %v4079 = vrot.slane %v4069, %v4078
        %v4081 = vunpack.c.l.s4 1966171168
        %v4082 = vunpack.c.0.s8 %v4081
        %v4083 = vlaneseq
        %v4084 = vshrl.u32 %v4083, 7
        %v4085 = vsub.s32 %v4082, %v4084
        %v4086 = vrot.slane %v4071, %v4085
        %v4088 = vunpack.c.l.s4 1966171168
        %v4089 = vunpack.c.0.s8 %v4088
        %v4090 = vlaneseq
        %v4091 = vshrl.u32 %v4090, 7
        %v4092 = vsub.s32 %v4089, %v4091
        %v4093 = vrot.slane %v4070, %v4092
        %v4095 = vunpack.c.l.s4 1966171168
        %v4096 = vunpack.c.0.s8 %v4095
        %v4097 = vlaneseq
        %v4098 = vshrl.u32 %v4097, 7
        %v4099 = vsub.s32 %v4096, %v4098
        %v4100 = vrot.slane %v4072, %v4099
        %v4101 = vcombine.high %v4079, %v4079
        %v4102 = vcombine.high %v4086, %v4086
        %v4103 = vcombine.high %v4093, %v4093
        %v4104 = vcombine.high %v4100, %v4100
        %v4105 = vlaneseq
        %v4106 = vshrl.u32 %v4105, 7
        %v4107 = vsub.s32 0, %v4106
        %v4108 = vrot.slane %v4079, %v4107
        %v4109 = vlaneseq
        %v4110 = vshrl.u32 %v4109, 7
        %v4111 = vsub.s32 1, %v4110
        %v4112 = vrot.slane %v4079, %v4111
        %v4113 = vlaneseq
        %v4114 = vshrl.u32 %v4113, 7
        %v4115 = vsub.s32 2, %v4114
        %v4116 = vrot.slane %v4079, %v4115
        %v4117 = vlaneseq
        %v4118 = vshrl.u32 %v4117, 7
        %v4119 = vsub.s32 3, %v4118
        %v4120 = vrot.slane %v4079, %v4119
        %v4121 = vlaneseq
        %v4122 = vshrl.u32 %v4121, 7
        %v4123 = vsub.s32 0, %v4122
        %v4124 = vrot.slane %v4093, %v4123
        %v4125 = vlaneseq
        %v4126 = vshrl.u32 %v4125, 7
        %v4127 = vsub.s32 1, %v4126
        %v4128 = vrot.slane %v4093, %v4127
        %v4129 = vlaneseq
        %v4130 = vshrl.u32 %v4129, 7
        %v4131 = vsub.s32 2, %v4130
        %v4132 = vrot.slane %v4093, %v4131
        %v4133 = vlaneseq
        %v4134 = vshrl.u32 %v4133, 7
        %v4135 = vsub.s32 3, %v4134
        %v4136 = vrot.slane %v4093, %v4135
        %v4137 = vlaneseq
        %v4138 = vshrl.u32 %v4137, 7
        %v4139 = vsub.s32 0, %v4138
        %v4140 = vrot.slane %v4101, %v4139
        %v4141 = vlaneseq
        %v4142 = vshrl.u32 %v4141, 7
        %v4143 = vsub.s32 1, %v4142
        %v4144 = vrot.slane %v4101, %v4143
        %v4145 = vlaneseq
        %v4146 = vshrl.u32 %v4145, 7
        %v4147 = vsub.s32 2, %v4146
        %v4148 = vrot.slane %v4101, %v4147
        %v4149 = vlaneseq
        %v4150 = vshrl.u32 %v4149, 7
        %v4151 = vsub.s32 3, %v4150
        %v4152 = vrot.slane %v4101, %v4151
        %v4153 = vlaneseq
        %v4154 = vshrl.u32 %v4153, 7
        %v4155 = vsub.s32 0, %v4154
        %v4156 = vrot.slane %v4103, %v4155
        %v4157 = vlaneseq
        %v4158 = vshrl.u32 %v4157, 7
        %v4159 = vsub.s32 1, %v4158
        %v4160 = vrot.slane %v4103, %v4159
        %v4161 = vlaneseq
        %v4162 = vshrl.u32 %v4161, 7
        %v4163 = vsub.s32 2, %v4162
        %v4164 = vrot.slane %v4103, %v4163
        %v4165 = vlaneseq
        %v4166 = vshrl.u32 %v4165, 7
        %v4167 = vsub.s32 3, %v4166
        %v4168 = vrot.slane %v4103, %v4167
        %v4169 = vlaneseq
        %v4170 = vshrl.u32 %v4169, 7
        %v4171 = vsub.s32 0, %v4170
        %v4172 = vrot.slane %v4086, %v4171
        %v4173 = vlaneseq
        %v4174 = vshrl.u32 %v4173, 7
        %v4175 = vsub.s32 1, %v4174
        %v4176 = vrot.slane %v4086, %v4175
        %v4177 = vlaneseq
        %v4178 = vshrl.u32 %v4177, 7
        %v4179 = vsub.s32 2, %v4178
        %v4180 = vrot.slane %v4086, %v4179
        %v4181 = vlaneseq
        %v4182 = vshrl.u32 %v4181, 7
        %v4183 = vsub.s32 3, %v4182
        %v4184 = vrot.slane %v4086, %v4183
        %v4185 = vlaneseq
        %v4186 = vshrl.u32 %v4185, 7
        %v4187 = vsub.s32 0, %v4186
        %v4188 = vrot.slane %v4100, %v4187
        %v4189 = vlaneseq
        %v4190 = vshrl.u32 %v4189, 7
        %v4191 = vsub.s32 1, %v4190
        %v4192 = vrot.slane %v4100, %v4191
        %v4193 = vlaneseq
        %v4194 = vshrl.u32 %v4193, 7
        %v4195 = vsub.s32 2, %v4194
        %v4196 = vrot.slane %v4100, %v4195
        %v4197 = vlaneseq
        %v4198 = vshrl.u32 %v4197, 7
        %v4199 = vsub.s32 3, %v4198
        %v4200 = vrot.slane %v4100, %v4199
        %v4201 = vlaneseq
        %v4202 = vshrl.u32 %v4201, 7
        %v4203 = vsub.s32 0, %v4202
        %v4204 = vrot.slane %v4102, %v4203
        %v4205 = vlaneseq
        %v4206 = vshrl.u32 %v4205, 7
        %v4207 = vsub.s32 1, %v4206
        %v4208 = vrot.slane %v4102, %v4207
        %v4209 = vlaneseq
        %v4210 = vshrl.u32 %v4209, 7
        %v4211 = vsub.s32 2, %v4210
        %v4212 = vrot.slane %v4102, %v4211
        %v4213 = vlaneseq
        %v4214 = vshrl.u32 %v4213, 7
        %v4215 = vsub.s32 3, %v4214
        %v4216 = vrot.slane %v4102, %v4215
        %v4217 = vlaneseq
        %v4218 = vshrl.u32 %v4217, 7
        %v4219 = vsub.s32 0, %v4218
        %v4220 = vrot.slane %v4104, %v4219
        %v4221 = vlaneseq
        %v4222 = vshrl.u32 %v4221, 7
        %v4223 = vsub.s32 1, %v4222
        %v4224 = vrot.slane %v4104, %v4223
        %v4225 = vlaneseq
        %v4226 = vshrl.u32 %v4225, 7
        %v4227 = vsub.s32 2, %v4226
        %v4228 = vrot.slane %v4104, %v4227
        %v4229 = vlaneseq
        %v4230 = vshrl.u32 %v4229, 7
        %v4231 = vsub.s32 3, %v4230
        %v4232 = vrot.slane %v4104, %v4231
        %v4267 = vcombine.high %v1978, %v1978
        %v4268 = vcombine.high %v1979, %v1979
        %v4271 = vmul.f32 %v4108, %v1978
        %v4272 = vmul.f32 %v4112, %v4267
        %v4273 = vmul.f32 %v4116, %v1979
        %v4274 = vmul.f32 %v4120, %v4268
        %v4275 = vmul.f32 %v4124, %v1978
        %v4276 = vmul.f32 %v4128, %v4267
        %v4277 = vmul.f32 %v4132, %v1979
        %v4278 = vmul.f32 %v4136, %v4268
        %v4279 = vmul.f32 %v4140, %v1978
        %v4280 = vmul.f32 %v4144, %v4267
        %v4281 = vmul.f32 %v4148, %v1979
        %v4282 = vmul.f32 %v4152, %v4268
        %v4283 = vmul.f32 %v4156, %v1978
        %v4284 = vmul.f32 %v4160, %v4267
        %v4285 = vmul.f32 %v4164, %v1979
        %v4286 = vmul.f32 %v4168, %v4268
        %v4287 = vmul.f32 %v4172, %v1978
        %v4288 = vmul.f32 %v4176, %v4267
        %v4289 = vmul.f32 %v4180, %v1979
        %v4290 = vmul.f32 %v4184, %v4268
        %v4291 = vmul.f32 %v4188, %v1978
        %v4292 = vmul.f32 %v4192, %v4267
        %v4293 = vmul.f32 %v4196, %v1979
        %v4294 = vmul.f32 %v4200, %v4268
        %v4295 = vmul.f32 %v4204, %v1978
        %v4296 = vmul.f32 %v4208, %v4267
        %v4297 = vmul.f32 %v4212, %v1979
        %v4298 = vmul.f32 %v4216, %v4268
        %v4299 = vmul.f32 %v4220, %v1978
        %v4300 = vmul.f32 %v4224, %v4267
        %v4301 = vmul.f32 %v4228, %v1979
        %v4302 = vmul.f32 %v4232, %v4268
        %v4303 = vadd.f32 %v4001, %v4271
        %v4304 = vadd.f32 %v4002, %v4272
        %v4305 = vadd.f32 %v4003, %v4273
        %v4306 = vadd.f32 %v4004, %v4274
        %v4307 = vadd.f32 %v4005, %v4275
        %v4308 = vadd.f32 %v4006, %v4276
        %v4309 = vadd.f32 %v4007, %v4277
        %v4310 = vadd.f32 %v4008, %v4278
        %v4311 = vadd.f32 %v4009, %v4279
        %v4312 = vadd.f32 %v4010, %v4280
        %v4313 = vadd.f32 %v4011, %v4281
        %v4314 = vadd.f32 %v4012, %v4282
        %v4315 = vadd.f32 %v4013, %v4283
        %v4316 = vadd.f32 %v4014, %v4284
        %v4317 = vadd.f32 %v4015, %v4285
        %v4318 = vadd.f32 %v4016, %v4286
        %v4319 = vadd.f32 %v4017, %v4287
        %v4320 = vadd.f32 %v4018, %v4288
        %v4321 = vadd.f32 %v4019, %v4289
        %v4322 = vadd.f32 %v4020, %v4290
        %v4323 = vadd.f32 %v4021, %v4291
        %v4324 = vadd.f32 %v4022, %v4292
        %v4325 = vadd.f32 %v4023, %v4293
        %v4326 = vadd.f32 %v4024, %v4294
        %v4327 = vadd.f32 %v4025, %v4295
        %v4328 = vadd.f32 %v4026, %v4296
        %v4329 = vadd.f32 %v4027, %v4297
        %v4330 = vadd.f32 %v4028, %v4298
        %v4331 = vadd.f32 %v4029, %v4299
        %v4332 = vadd.f32 %v4030, %v4300
        %v4333 = vadd.f32 %v4031, %v4301
        %v4334 = vadd.f32 %v4032, %v4302
        %v4339 = vcombine.low %v748, %v749
        %v4340 = vcombine.high %v748, %v749
        %v4341 = vcombine.low %v750, %v751
        %v4342 = vcombine.high %v750, %v751
        %v4344 = vunpack.c.l.s4 1966171168
        %v4345 = vunpack.c.0.s8 %v4344
        %v4346 = vlaneseq
        %v4347 = vshrl.u32 %v4346, 7
        %v4348 = vsub.s32 %v4345, %v4347
        %v4349 = vrot.slane %v4339, %v4348
        %v4351 = vunpack.c.l.s4 1966171168
        %v4352 = vunpack.c.0.s8 %v4351
        %v4353 = vlaneseq
        %v4354 = vshrl.u32 %v4353, 7
        %v4355 = vsub.s32 %v4352, %v4354
        %v4356 = vrot.slane %v4340, %v4355
        %v4358 = vunpack.c.l.s4 1966171168
        %v4359 = vunpack.c.0.s8 %v4358
        %v4360 = vlaneseq
        %v4361 = vshrl.u32 %v4360, 7
        %v4362 = vsub.s32 %v4359, %v4361
        %v4363 = vrot.slane %v4341, %v4362
        %v4365 = vunpack.c.l.s4 1966171168
        %v4366 = vunpack.c.0.s8 %v4365
        %v4367 = vlaneseq
        %v4368 = vshrl.u32 %v4367, 7
        %v4369 = vsub.s32 %v4366, %v4368
        %v4370 = vrot.slane %v4342, %v4369
        %v4371 = vcombine.low %v4349, %v4363
        %v4372 = vcombine.high %v4349, %v4363
        %v4373 = vcombine.low %v4356, %v4370
        %v4374 = vcombine.high %v4356, %v4370
        %v4376 = vunpack.c.l.s4 1966171168
        %v4377 = vunpack.c.0.s8 %v4376
        %v4378 = vlaneseq
        %v4379 = vshrl.u32 %v4378, 7
        %v4380 = vsub.s32 %v4377, %v4379
        %v4381 = vrot.slane %v4371, %v4380
        %v4383 = vunpack.c.l.s4 1966171168
        %v4384 = vunpack.c.0.s8 %v4383
        %v4385 = vlaneseq
        %v4386 = vshrl.u32 %v4385, 7
        %v4387 = vsub.s32 %v4384, %v4386
        %v4388 = vrot.slane %v4373, %v4387
        %v4390 = vunpack.c.l.s4 1966171168
        %v4391 = vunpack.c.0.s8 %v4390
        %v4392 = vlaneseq
        %v4393 = vshrl.u32 %v4392, 7
        %v4394 = vsub.s32 %v4391, %v4393
        %v4395 = vrot.slane %v4372, %v4394
        %v4397 = vunpack.c.l.s4 1966171168
        %v4398 = vunpack.c.0.s8 %v4397
        %v4399 = vlaneseq
        %v4400 = vshrl.u32 %v4399, 7
        %v4401 = vsub.s32 %v4398, %v4400
        %v4402 = vrot.slane %v4374, %v4401
        %v4403 = vcombine.high %v4381, %v4381
        %v4404 = vcombine.high %v4388, %v4388
        %v4405 = vcombine.high %v4395, %v4395
        %v4406 = vcombine.high %v4402, %v4402
        %v4407 = vlaneseq
        %v4408 = vshrl.u32 %v4407, 7
        %v4409 = vsub.s32 0, %v4408
        %v4410 = vrot.slane %v4381, %v4409
        %v4411 = vlaneseq
        %v4412 = vshrl.u32 %v4411, 7
        %v4413 = vsub.s32 1, %v4412
        %v4414 = vrot.slane %v4381, %v4413
        %v4415 = vlaneseq
        %v4416 = vshrl.u32 %v4415, 7
        %v4417 = vsub.s32 2, %v4416
        %v4418 = vrot.slane %v4381, %v4417
        %v4419 = vlaneseq
        %v4420 = vshrl.u32 %v4419, 7
        %v4421 = vsub.s32 3, %v4420
        %v4422 = vrot.slane %v4381, %v4421
        %v4423 = vlaneseq
        %v4424 = vshrl.u32 %v4423, 7
        %v4425 = vsub.s32 0, %v4424
        %v4426 = vrot.slane %v4395, %v4425
        %v4427 = vlaneseq
        %v4428 = vshrl.u32 %v4427, 7
        %v4429 = vsub.s32 1, %v4428
        %v4430 = vrot.slane %v4395, %v4429
        %v4431 = vlaneseq
        %v4432 = vshrl.u32 %v4431, 7
        %v4433 = vsub.s32 2, %v4432
        %v4434 = vrot.slane %v4395, %v4433
        %v4435 = vlaneseq
        %v4436 = vshrl.u32 %v4435, 7
        %v4437 = vsub.s32 3, %v4436
        %v4438 = vrot.slane %v4395, %v4437
        %v4439 = vlaneseq
        %v4440 = vshrl.u32 %v4439, 7
        %v4441 = vsub.s32 0, %v4440
        %v4442 = vrot.slane %v4403, %v4441
        %v4443 = vlaneseq
        %v4444 = vshrl.u32 %v4443, 7
        %v4445 = vsub.s32 1, %v4444
        %v4446 = vrot.slane %v4403, %v4445
        %v4447 = vlaneseq
        %v4448 = vshrl.u32 %v4447, 7
        %v4449 = vsub.s32 2, %v4448
        %v4450 = vrot.slane %v4403, %v4449
        %v4451 = vlaneseq
        %v4452 = vshrl.u32 %v4451, 7
        %v4453 = vsub.s32 3, %v4452
        %v4454 = vrot.slane %v4403, %v4453
        %v4455 = vlaneseq
        %v4456 = vshrl.u32 %v4455, 7
        %v4457 = vsub.s32 0, %v4456
        %v4458 = vrot.slane %v4405, %v4457
        %v4459 = vlaneseq
        %v4460 = vshrl.u32 %v4459, 7
        %v4461 = vsub.s32 1, %v4460
        %v4462 = vrot.slane %v4405, %v4461
        %v4463 = vlaneseq
        %v4464 = vshrl.u32 %v4463, 7
        %v4465 = vsub.s32 2, %v4464
        %v4466 = vrot.slane %v4405, %v4465
        %v4467 = vlaneseq
        %v4468 = vshrl.u32 %v4467, 7
        %v4469 = vsub.s32 3, %v4468
        %v4470 = vrot.slane %v4405, %v4469
        %v4471 = vlaneseq
        %v4472 = vshrl.u32 %v4471, 7
        %v4473 = vsub.s32 0, %v4472
        %v4474 = vrot.slane %v4388, %v4473
        %v4475 = vlaneseq
        %v4476 = vshrl.u32 %v4475, 7
        %v4477 = vsub.s32 1, %v4476
        %v4478 = vrot.slane %v4388, %v4477
        %v4479 = vlaneseq
        %v4480 = vshrl.u32 %v4479, 7
        %v4481 = vsub.s32 2, %v4480
        %v4482 = vrot.slane %v4388, %v4481
        %v4483 = vlaneseq
        %v4484 = vshrl.u32 %v4483, 7
        %v4485 = vsub.s32 3, %v4484
        %v4486 = vrot.slane %v4388, %v4485
        %v4487 = vlaneseq
        %v4488 = vshrl.u32 %v4487, 7
        %v4489 = vsub.s32 0, %v4488
        %v4490 = vrot.slane %v4402, %v4489
        %v4491 = vlaneseq
        %v4492 = vshrl.u32 %v4491, 7
        %v4493 = vsub.s32 1, %v4492
        %v4494 = vrot.slane %v4402, %v4493
        %v4495 = vlaneseq
        %v4496 = vshrl.u32 %v4495, 7
        %v4497 = vsub.s32 2, %v4496
        %v4498 = vrot.slane %v4402, %v4497
        %v4499 = vlaneseq
        %v4500 = vshrl.u32 %v4499, 7
        %v4501 = vsub.s32 3, %v4500
        %v4502 = vrot.slane %v4402, %v4501
        %v4503 = vlaneseq
        %v4504 = vshrl.u32 %v4503, 7
        %v4505 = vsub.s32 0, %v4504
        %v4506 = vrot.slane %v4404, %v4505
        %v4507 = vlaneseq
        %v4508 = vshrl.u32 %v4507, 7
        %v4509 = vsub.s32 1, %v4508
        %v4510 = vrot.slane %v4404, %v4509
        %v4511 = vlaneseq
        %v4512 = vshrl.u32 %v4511, 7
        %v4513 = vsub.s32 2, %v4512
        %v4514 = vrot.slane %v4404, %v4513
        %v4515 = vlaneseq
        %v4516 = vshrl.u32 %v4515, 7
        %v4517 = vsub.s32 3, %v4516
        %v4518 = vrot.slane %v4404, %v4517
        %v4519 = vlaneseq
        %v4520 = vshrl.u32 %v4519, 7
        %v4521 = vsub.s32 0, %v4520
        %v4522 = vrot.slane %v4406, %v4521
        %v4523 = vlaneseq
        %v4524 = vshrl.u32 %v4523, 7
        %v4525 = vsub.s32 1, %v4524
        %v4526 = vrot.slane %v4406, %v4525
        %v4527 = vlaneseq
        %v4528 = vshrl.u32 %v4527, 7
        %v4529 = vsub.s32 2, %v4528
        %v4530 = vrot.slane %v4406, %v4529
        %v4531 = vlaneseq
        %v4532 = vshrl.u32 %v4531, 7
        %v4533 = vsub.s32 3, %v4532
        %v4534 = vrot.slane %v4406, %v4533
        %v4569 = vcombine.high %v1980, %v1980
        %v4570 = vcombine.high %v1981, %v1981
        %v4573 = vmul.f32 %v4410, %v1980
        %v4574 = vmul.f32 %v4414, %v4569
        %v4575 = vmul.f32 %v4418, %v1981
        %v4576 = vmul.f32 %v4422, %v4570
        %v4577 = vmul.f32 %v4426, %v1980
        %v4578 = vmul.f32 %v4430, %v4569
        %v4579 = vmul.f32 %v4434, %v1981
        %v4580 = vmul.f32 %v4438, %v4570
        %v4581 = vmul.f32 %v4442, %v1980
        %v4582 = vmul.f32 %v4446, %v4569
        %v4583 = vmul.f32 %v4450, %v1981
        %v4584 = vmul.f32 %v4454, %v4570
        %v4585 = vmul.f32 %v4458, %v1980
        %v4586 = vmul.f32 %v4462, %v4569
        %v4587 = vmul.f32 %v4466, %v1981
        %v4588 = vmul.f32 %v4470, %v4570
        %v4589 = vmul.f32 %v4474, %v1980
        %v4590 = vmul.f32 %v4478, %v4569
        %v4591 = vmul.f32 %v4482, %v1981
        %v4592 = vmul.f32 %v4486, %v4570
        %v4593 = vmul.f32 %v4490, %v1980
        %v4594 = vmul.f32 %v4494, %v4569
        %v4595 = vmul.f32 %v4498, %v1981
        %v4596 = vmul.f32 %v4502, %v4570
        %v4597 = vmul.f32 %v4506, %v1980
        %v4598 = vmul.f32 %v4510, %v4569
        %v4599 = vmul.f32 %v4514, %v1981
        %v4600 = vmul.f32 %v4518, %v4570
        %v4601 = vmul.f32 %v4522, %v1980
        %v4602 = vmul.f32 %v4526, %v4569
        %v4603 = vmul.f32 %v4530, %v1981
        %v4604 = vmul.f32 %v4534, %v4570
        %v4605 = vadd.f32 %v4303, %v4573
        %v4606 = vadd.f32 %v4304, %v4574
        %v4607 = vadd.f32 %v4305, %v4575
        %v4608 = vadd.f32 %v4306, %v4576
        %v4609 = vadd.f32 %v4307, %v4577
        %v4610 = vadd.f32 %v4308, %v4578
        %v4611 = vadd.f32 %v4309, %v4579
        %v4612 = vadd.f32 %v4310, %v4580
        %v4613 = vadd.f32 %v4311, %v4581
        %v4614 = vadd.f32 %v4312, %v4582
        %v4615 = vadd.f32 %v4313, %v4583
        %v4616 = vadd.f32 %v4314, %v4584
        %v4617 = vadd.f32 %v4315, %v4585
        %v4618 = vadd.f32 %v4316, %v4586
        %v4619 = vadd.f32 %v4317, %v4587
        %v4620 = vadd.f32 %v4318, %v4588
        %v4621 = vadd.f32 %v4319, %v4589
        %v4622 = vadd.f32 %v4320, %v4590
        %v4623 = vadd.f32 %v4321, %v4591
        %v4624 = vadd.f32 %v4322, %v4592
        %v4625 = vadd.f32 %v4323, %v4593
        %v4626 = vadd.f32 %v4324, %v4594
        %v4627 = vadd.f32 %v4325, %v4595
        %v4628 = vadd.f32 %v4326, %v4596
        %v4629 = vadd.f32 %v4327, %v4597
        %v4630 = vadd.f32 %v4328, %v4598
        %v4631 = vadd.f32 %v4329, %v4599
        %v4632 = vadd.f32 %v4330, %v4600
        %v4633 = vadd.f32 %v4331, %v4601
        %v4634 = vadd.f32 %v4332, %v4602
        %v4635 = vadd.f32 %v4333, %v4603
        %v4636 = vadd.f32 %v4334, %v4604
        %v4641 = vcombine.low %v752, %v753
        %v4642 = vcombine.high %v752, %v753
        %v4643 = vcombine.low %v754, %v755
        %v4644 = vcombine.high %v754, %v755
        %v4646 = vunpack.c.l.s4 1966171168
        %v4647 = vunpack.c.0.s8 %v4646
        %v4648 = vlaneseq
        %v4649 = vshrl.u32 %v4648, 7
        %v4650 = vsub.s32 %v4647, %v4649
        %v4651 = vrot.slane %v4641, %v4650
        %v4653 = vunpack.c.l.s4 1966171168
        %v4654 = vunpack.c.0.s8 %v4653
        %v4655 = vlaneseq
        %v4656 = vshrl.u32 %v4655, 7
        %v4657 = vsub.s32 %v4654, %v4656
        %v4658 = vrot.slane %v4642, %v4657
        %v4660 = vunpack.c.l.s4 1966171168
        %v4661 = vunpack.c.0.s8 %v4660
        %v4662 = vlaneseq
        %v4663 = vshrl.u32 %v4662, 7
        %v4664 = vsub.s32 %v4661, %v4663
        %v4665 = vrot.slane %v4643, %v4664
        %v4667 = vunpack.c.l.s4 1966171168
        %v4668 = vunpack.c.0.s8 %v4667
        %v4669 = vlaneseq
        %v4670 = vshrl.u32 %v4669, 7
        %v4671 = vsub.s32 %v4668, %v4670
        %v4672 = vrot.slane %v4644, %v4671
        %v4673 = vcombine.low %v4651, %v4665
        %v4674 = vcombine.high %v4651, %v4665
        %v4675 = vcombine.low %v4658, %v4672
        %v4676 = vcombine.high %v4658, %v4672
        %v4678 = vunpack.c.l.s4 1966171168
        %v4679 = vunpack.c.0.s8 %v4678
        %v4680 = vlaneseq
        %v4681 = vshrl.u32 %v4680, 7
        %v4682 = vsub.s32 %v4679, %v4681
        %v4683 = vrot.slane %v4673, %v4682
        %v4685 = vunpack.c.l.s4 1966171168
        %v4686 = vunpack.c.0.s8 %v4685
        %v4687 = vlaneseq
        %v4688 = vshrl.u32 %v4687, 7
        %v4689 = vsub.s32 %v4686, %v4688
        %v4690 = vrot.slane %v4675, %v4689
        %v4692 = vunpack.c.l.s4 1966171168
        %v4693 = vunpack.c.0.s8 %v4692
        %v4694 = vlaneseq
        %v4695 = vshrl.u32 %v4694, 7
        %v4696 = vsub.s32 %v4693, %v4695
        %v4697 = vrot.slane %v4674, %v4696
        %v4699 = vunpack.c.l.s4 1966171168
        %v4700 = vunpack.c.0.s8 %v4699
        %v4701 = vlaneseq
        %v4702 = vshrl.u32 %v4701, 7
        %v4703 = vsub.s32 %v4700, %v4702
        %v4704 = vrot.slane %v4676, %v4703
        %v4705 = vcombine.high %v4683, %v4683
        %v4706 = vcombine.high %v4690, %v4690
        %v4707 = vcombine.high %v4697, %v4697
        %v4708 = vcombine.high %v4704, %v4704
        %v4709 = vlaneseq
        %v4710 = vshrl.u32 %v4709, 7
        %v4711 = vsub.s32 0, %v4710
        %v4712 = vrot.slane %v4683, %v4711
        %v4713 = vlaneseq
        %v4714 = vshrl.u32 %v4713, 7
        %v4715 = vsub.s32 1, %v4714
        %v4716 = vrot.slane %v4683, %v4715
        %v4717 = vlaneseq
        %v4718 = vshrl.u32 %v4717, 7
        %v4719 = vsub.s32 2, %v4718
        %v4720 = vrot.slane %v4683, %v4719
        %v4721 = vlaneseq
        %v4722 = vshrl.u32 %v4721, 7
        %v4723 = vsub.s32 3, %v4722
        %v4724 = vrot.slane %v4683, %v4723
        %v4725 = vlaneseq
        %v4726 = vshrl.u32 %v4725, 7
        %v4727 = vsub.s32 0, %v4726
        %v4728 = vrot.slane %v4697, %v4727
        %v4729 = vlaneseq
        %v4730 = vshrl.u32 %v4729, 7
        %v4731 = vsub.s32 1, %v4730
        %v4732 = vrot.slane %v4697, %v4731
        %v4733 = vlaneseq
        %v4734 = vshrl.u32 %v4733, 7
        %v4735 = vsub.s32 2, %v4734
        %v4736 = vrot.slane %v4697, %v4735
        %v4737 = vlaneseq
        %v4738 = vshrl.u32 %v4737, 7
        %v4739 = vsub.s32 3, %v4738
        %v4740 = vrot.slane %v4697, %v4739
        %v4741 = vlaneseq
        %v4742 = vshrl.u32 %v4741, 7
        %v4743 = vsub.s32 0, %v4742
        %v4744 = vrot.slane %v4705, %v4743
        %v4745 = vlaneseq
        %v4746 = vshrl.u32 %v4745, 7
        %v4747 = vsub.s32 1, %v4746
        %v4748 = vrot.slane %v4705, %v4747
        %v4749 = vlaneseq
        %v4750 = vshrl.u32 %v4749, 7
        %v4751 = vsub.s32 2, %v4750
        %v4752 = vrot.slane %v4705, %v4751
        %v4753 = vlaneseq
        %v4754 = vshrl.u32 %v4753, 7
        %v4755 = vsub.s32 3, %v4754
        %v4756 = vrot.slane %v4705, %v4755
        %v4757 = vlaneseq
        %v4758 = vshrl.u32 %v4757, 7
        %v4759 = vsub.s32 0, %v4758
        %v4760 = vrot.slane %v4707, %v4759
        %v4761 = vlaneseq
        %v4762 = vshrl.u32 %v4761, 7
        %v4763 = vsub.s32 1, %v4762
        %v4764 = vrot.slane %v4707, %v4763
        %v4765 = vlaneseq
        %v4766 = vshrl.u32 %v4765, 7
        %v4767 = vsub.s32 2, %v4766
        %v4768 = vrot.slane %v4707, %v4767
        %v4769 = vlaneseq
        %v4770 = vshrl.u32 %v4769, 7
        %v4771 = vsub.s32 3, %v4770
        %v4772 = vrot.slane %v4707, %v4771
        %v4773 = vlaneseq
        %v4774 = vshrl.u32 %v4773, 7
        %v4775 = vsub.s32 0, %v4774
        %v4776 = vrot.slane %v4690, %v4775
        %v4777 = vlaneseq
        %v4778 = vshrl.u32 %v4777, 7
        %v4779 = vsub.s32 1, %v4778
        %v4780 = vrot.slane %v4690, %v4779
        %v4781 = vlaneseq
        %v4782 = vshrl.u32 %v4781, 7
        %v4783 = vsub.s32 2, %v4782
        %v4784 = vrot.slane %v4690, %v4783
        %v4785 = vlaneseq
        %v4786 = vshrl.u32 %v4785, 7
        %v4787 = vsub.s32 3, %v4786
        %v4788 = vrot.slane %v4690, %v4787
        %v4789 = vlaneseq
        %v4790 = vshrl.u32 %v4789, 7
        %v4791 = vsub.s32 0, %v4790
        %v4792 = vrot.slane %v4704, %v4791
        %v4793 = vlaneseq
        %v4794 = vshrl.u32 %v4793, 7
        %v4795 = vsub.s32 1, %v4794
        %v4796 = vrot.slane %v4704, %v4795
        %v4797 = vlaneseq
        %v4798 = vshrl.u32 %v4797, 7
        %v4799 = vsub.s32 2, %v4798
        %v4800 = vrot.slane %v4704, %v4799
        %v4801 = vlaneseq
        %v4802 = vshrl.u32 %v4801, 7
        %v4803 = vsub.s32 3, %v4802
        %v4804 = vrot.slane %v4704, %v4803
        %v4805 = vlaneseq
        %v4806 = vshrl.u32 %v4805, 7
        %v4807 = vsub.s32 0, %v4806
        %v4808 = vrot.slane %v4706, %v4807
        %v4809 = vlaneseq
        %v4810 = vshrl.u32 %v4809, 7
        %v4811 = vsub.s32 1, %v4810
        %v4812 = vrot.slane %v4706, %v4811
        %v4813 = vlaneseq
        %v4814 = vshrl.u32 %v4813, 7
        %v4815 = vsub.s32 2, %v4814
        %v4816 = vrot.slane %v4706, %v4815
        %v4817 = vlaneseq
        %v4818 = vshrl.u32 %v4817, 7
        %v4819 = vsub.s32 3, %v4818
        %v4820 = vrot.slane %v4706, %v4819
        %v4821 = vlaneseq
        %v4822 = vshrl.u32 %v4821, 7
        %v4823 = vsub.s32 0, %v4822
        %v4824 = vrot.slane %v4708, %v4823
        %v4825 = vlaneseq
        %v4826 = vshrl.u32 %v4825, 7
        %v4827 = vsub.s32 1, %v4826
        %v4828 = vrot.slane %v4708, %v4827
        %v4829 = vlaneseq
        %v4830 = vshrl.u32 %v4829, 7
        %v4831 = vsub.s32 2, %v4830
        %v4832 = vrot.slane %v4708, %v4831
        %v4833 = vlaneseq
        %v4834 = vshrl.u32 %v4833, 7
        %v4835 = vsub.s32 3, %v4834
        %v4836 = vrot.slane %v4708, %v4835
        %v4871 = vcombine.high %v1982, %v1982
        %v4872 = vcombine.high %v1983, %v1983
        %v4875 = vmul.f32 %v4712, %v1982
        %v4876 = vmul.f32 %v4716, %v4871
        %v4877 = vmul.f32 %v4720, %v1983
        %v4878 = vmul.f32 %v4724, %v4872
        %v4879 = vmul.f32 %v4728, %v1982
        %v4880 = vmul.f32 %v4732, %v4871
        %v4881 = vmul.f32 %v4736, %v1983
        %v4882 = vmul.f32 %v4740, %v4872
        %v4883 = vmul.f32 %v4744, %v1982
        %v4884 = vmul.f32 %v4748, %v4871
        %v4885 = vmul.f32 %v4752, %v1983
        %v4886 = vmul.f32 %v4756, %v4872
        %v4887 = vmul.f32 %v4760, %v1982
        %v4888 = vmul.f32 %v4764, %v4871
        %v4889 = vmul.f32 %v4768, %v1983
        %v4890 = vmul.f32 %v4772, %v4872
        %v4891 = vmul.f32 %v4776, %v1982
        %v4892 = vmul.f32 %v4780, %v4871
        %v4893 = vmul.f32 %v4784, %v1983
        %v4894 = vmul.f32 %v4788, %v4872
        %v4895 = vmul.f32 %v4792, %v1982
        %v4896 = vmul.f32 %v4796, %v4871
        %v4897 = vmul.f32 %v4800, %v1983
        %v4898 = vmul.f32 %v4804, %v4872
        %v4899 = vmul.f32 %v4808, %v1982
        %v4900 = vmul.f32 %v4812, %v4871
        %v4901 = vmul.f32 %v4816, %v1983
        %v4902 = vmul.f32 %v4820, %v4872
        %v4903 = vmul.f32 %v4824, %v1982
        %v4904 = vmul.f32 %v4828, %v4871
        %v4905 = vmul.f32 %v4832, %v1983
        %v4906 = vmul.f32 %v4836, %v4872
        %v4907 = vadd.f32 %v4605, %v4875
        %v4908 = vadd.f32 %v4606, %v4876
        %v4909 = vadd.f32 %v4607, %v4877
        %v4910 = vadd.f32 %v4608, %v4878
        %v4911 = vadd.f32 %v4609, %v4879
        %v4912 = vadd.f32 %v4610, %v4880
        %v4913 = vadd.f32 %v4611, %v4881
        %v4914 = vadd.f32 %v4612, %v4882
        %v4915 = vadd.f32 %v4613, %v4883
        %v4916 = vadd.f32 %v4614, %v4884
        %v4917 = vadd.f32 %v4615, %v4885
        %v4918 = vadd.f32 %v4616, %v4886
        %v4919 = vadd.f32 %v4617, %v4887
        %v4920 = vadd.f32 %v4618, %v4888
        %v4921 = vadd.f32 %v4619, %v4889
        %v4922 = vadd.f32 %v4620, %v4890
        %v4923 = vadd.f32 %v4621, %v4891
        %v4924 = vadd.f32 %v4622, %v4892
        %v4925 = vadd.f32 %v4623, %v4893
        %v4926 = vadd.f32 %v4624, %v4894
        %v4927 = vadd.f32 %v4625, %v4895
        %v4928 = vadd.f32 %v4626, %v4896
        %v4929 = vadd.f32 %v4627, %v4897
        %v4930 = vadd.f32 %v4628, %v4898
        %v4931 = vadd.f32 %v4629, %v4899
        %v4932 = vadd.f32 %v4630, %v4900
        %v4933 = vadd.f32 %v4631, %v4901
        %v4934 = vadd.f32 %v4632, %v4902
        %v4935 = vadd.f32 %v4633, %v4903
        %v4936 = vadd.f32 %v4634, %v4904
        %v4937 = vadd.f32 %v4635, %v4905
        %v4938 = vadd.f32 %v4636, %v4906
        %v4955 = vcombine.low %v2054, %v2056
        %v4956 = vcombine.high %v2054, %v2056
        %v4957 = vcombine.low %v2125, %v2127
        %v4958 = vcombine.high %v2125, %v2127
        %v4959 = vcombine.low %v2196, %v2198
        %v4960 = vcombine.high %v2196, %v2198
        %v4961 = vcombine.low %v2267, %v2269
        %v4962 = vcombine.high %v2267, %v2269
        %v4963 = vcombine.low %v2338, %v2340
        %v4964 = vcombine.high %v2338, %v2340
        %v4965 = vcombine.low %v2409, %v2411
        %v4966 = vcombine.high %v2409, %v2411
        %v4967 = vcombine.low %v2480, %v2482
        %v4968 = vcombine.high %v2480, %v2482
        %v4969 = vcombine.low %v2551, %v2553
        %v4970 = vcombine.high %v2551, %v2553
        %v4987 = vcombine.low %v4955, %v4963
        %v4988 = vcombine.high %v4955, %v4963
        %v4990 = vunpack.c.l.s4 1983009808
        %v4991 = vunpack.c.0.s8 %v4990
        %v4992 = vlaneseq
        %v4993 = vshrl.u32 %v4992, 7
        %v4994 = vsub.s32 %v4991, %v4993
        %v4995 = vrot.slane %v4987, %v4994
        %v4997 = vunpack.c.l.s4 1983009808
        %v4998 = vunpack.c.0.s8 %v4997
        %v4999 = vlaneseq
        %v5000 = vshrl.u32 %v4999, 7
        %v5001 = vsub.s32 %v4998, %v5000
        %v5002 = vrot.slane %v4988, %v5001
        %v5003 = vcombine.low %v4959, %v4967
        %v5004 = vcombine.high %v4959, %v4967
        %v5006 = vunpack.c.l.s4 1983009808
        %v5007 = vunpack.c.0.s8 %v5006
        %v5008 = vlaneseq
        %v5009 = vshrl.u32 %v5008, 7
        %v5010 = vsub.s32 %v5007, %v5009
        %v5011 = vrot.slane %v5003, %v5010
        %v5013 = vunpack.c.l.s4 1983009808
        %v5014 = vunpack.c.0.s8 %v5013
        %v5015 = vlaneseq
        %v5016 = vshrl.u32 %v5015, 7
        %v5017 = vsub.s32 %v5014, %v5016
        %v5018 = vrot.slane %v5004, %v5017
        %v5019 = vcombine.low %v4995, %v5011
        %v5020 = vcombine.high %v4995, %v5011
        %v5022 = vunpack.c.l.s4 1934713408
        %v5023 = vunpack.c.0.s8 %v5022
        %v5024 = vlaneseq
        %v5025 = vshrl.u32 %v5024, 7
        %v5026 = vsub.s32 %v5023, %v5025
        %v5027 = vrot.slane %v5019, %v5026
        %v5029 = vunpack.c.l.s4 1934713408
        %v5030 = vunpack.c.0.s8 %v5029
        %v5031 = vlaneseq
        %v5032 = vshrl.u32 %v5031, 7
        %v5033 = vsub.s32 %v5030, %v5032
        %v5034 = vrot.slane %v5020, %v5033
        %v5035 = vcombine.low %v5002, %v5018
        %v5036 = vcombine.high %v5002, %v5018
        %v5038 = vunpack.c.l.s4 1934713408
        %v5039 = vunpack.c.0.s8 %v5038
        %v5040 = vlaneseq
        %v5041 = vshrl.u32 %v5040, 7
        %v5042 = vsub.s32 %v5039, %v5041
        %v5043 = vrot.slane %v5035, %v5042
        %v5045 = vunpack.c.l.s4 1934713408
        %v5046 = vunpack.c.0.s8 %v5045
        %v5047 = vlaneseq
        %v5048 = vshrl.u32 %v5047, 7
        %v5049 = vsub.s32 %v5046, %v5048
        %v5050 = vrot.slane %v5036, %v5049
        %v5051 = vcombine.low %v5027, %v5043
        %v5052 = vcombine.high %v5027, %v5043
        %v5053 = vcombine.low %v5034, %v5050
        %v5054 = vcombine.high %v5034, %v5050
        %v5055 = vcombine.low %v4956, %v4964
        %v5056 = vcombine.high %v4956, %v4964
        %v5058 = vunpack.c.l.s4 1983009808
        %v5059 = vunpack.c.0.s8 %v5058
        %v5060 = vlaneseq
        %v5061 = vshrl.u32 %v5060, 7
        %v5062 = vsub.s32 %v5059, %v5061
        %v5063 = vrot.slane %v5055, %v5062
        %v5065 = vunpack.c.l.s4 1983009808
        %v5066 = vunpack.c.0.s8 %v5065
        %v5067 = vlaneseq
        %v5068 = vshrl.u32 %v5067, 7
        %v5069 = vsub.s32 %v5066, %v5068
        %v5070 = vrot.slane %v5056, %v5069
        %v5071 = vcombine.low %v4960, %v4968
        %v5072 = vcombine.high %v4960, %v4968
        %v5074 = vunpack.c.l.s4 1983009808
        %v5075 = vunpack.c.0.s8 %v5074
        %v5076 = vlaneseq
        %v5077 = vshrl.u32 %v5076, 7
        %v5078 = vsub.s32 %v5075, %v5077
        %v5079 = vrot.slane %v5071, %v5078
        %v5081 = vunpack.c.l.s4 1983009808
        %v5082 = vunpack.c.0.s8 %v5081
        %v5083 = vlaneseq
        %v5084 = vshrl.u32 %v5083, 7
        %v5085 = vsub.s32 %v5082, %v5084
        %v5086 = vrot.slane %v5072, %v5085
        %v5087 = vcombine.low %v5063, %v5079
        %v5088 = vcombine.high %v5063, %v5079
        %v5090 = vunpack.c.l.s4 1934713408
        %v5091 = vunpack.c.0.s8 %v5090
        %v5092 = vlaneseq
        %v5093 = vshrl.u32 %v5092, 7
        %v5094 = vsub.s32 %v5091, %v5093
        %v5095 = vrot.slane %v5087, %v5094
        %v5097 = vunpack.c.l.s4 1934713408
        %v5098 = vunpack.c.0.s8 %v5097
        %v5099 = vlaneseq
        %v5100 = vshrl.u32 %v5099, 7
        %v5101 = vsub.s32 %v5098, %v5100
        %v5102 = vrot.slane %v5088, %v5101
        %v5103 = vcombine.low %v5070, %v5086
        %v5104 = vcombine.high %v5070, %v5086
        %v5106 = vunpack.c.l.s4 1934713408
        %v5107 = vunpack.c.0.s8 %v5106
        %v5108 = vlaneseq
        %v5109 = vshrl.u32 %v5108, 7
        %v5110 = vsub.s32 %v5107, %v5109
        %v5111 = vrot.slane %v5103, %v5110
        %v5113 = vunpack.c.l.s4 1934713408
        %v5114 = vunpack.c.0.s8 %v5113
        %v5115 = vlaneseq
        %v5116 = vshrl.u32 %v5115, 7
        %v5117 = vsub.s32 %v5114, %v5116
        %v5118 = vrot.slane %v5104, %v5117
        %v5119 = vcombine.low %v5095, %v5111
        %v5120 = vcombine.high %v5095, %v5111
        %v5121 = vcombine.low %v5102, %v5118
        %v5122 = vcombine.high %v5102, %v5118
        %v5123 = vcombine.low %v4957, %v4965
        %v5124 = vcombine.high %v4957, %v4965
        %v5126 = vunpack.c.l.s4 1983009808
        %v5127 = vunpack.c.0.s8 %v5126
        %v5128 = vlaneseq
        %v5129 = vshrl.u32 %v5128, 7
        %v5130 = vsub.s32 %v5127, %v5129
        %v5131 = vrot.slane %v5123, %v5130
        %v5133 = vunpack.c.l.s4 1983009808
        %v5134 = vunpack.c.0.s8 %v5133
        %v5135 = vlaneseq
        %v5136 = vshrl.u32 %v5135, 7
        %v5137 = vsub.s32 %v5134, %v5136
        %v5138 = vrot.slane %v5124, %v5137
        %v5139 = vcombine.low %v4961, %v4969
        %v5140 = vcombine.high %v4961, %v4969
        %v5142 = vunpack.c.l.s4 1983009808
        %v5143 = vunpack.c.0.s8 %v5142
        %v5144 = vlaneseq
        %v5145 = vshrl.u32 %v5144, 7
        %v5146 = vsub.s32 %v5143, %v5145
        %v5147 = vrot.slane %v5139, %v5146
        %v5149 = vunpack.c.l.s4 1983009808
        %v5150 = vunpack.c.0.s8 %v5149
        %v5151 = vlaneseq
        %v5152 = vshrl.u32 %v5151, 7
        %v5153 = vsub.s32 %v5150, %v5152
        %v5154 = vrot.slane %v5140, %v5153
        %v5155 = vcombine.low %v5131, %v5147
        %v5156 = vcombine.high %v5131, %v5147
        %v5158 = vunpack.c.l.s4 1934713408
        %v5159 = vunpack.c.0.s8 %v5158
        %v5160 = vlaneseq
        %v5161 = vshrl.u32 %v5160, 7
        %v5162 = vsub.s32 %v5159, %v5161
        %v5163 = vrot.slane %v5155, %v5162
        %v5165 = vunpack.c.l.s4 1934713408
        %v5166 = vunpack.c.0.s8 %v5165
        %v5167 = vlaneseq
        %v5168 = vshrl.u32 %v5167, 7
        %v5169 = vsub.s32 %v5166, %v5168
        %v5170 = vrot.slane %v5156, %v5169
        %v5171 = vcombine.low %v5138, %v5154
        %v5172 = vcombine.high %v5138, %v5154
        %v5174 = vunpack.c.l.s4 1934713408
        %v5175 = vunpack.c.0.s8 %v5174
        %v5176 = vlaneseq
        %v5177 = vshrl.u32 %v5176, 7
        %v5178 = vsub.s32 %v5175, %v5177
        %v5179 = vrot.slane %v5171, %v5178
        %v5181 = vunpack.c.l.s4 1934713408
        %v5182 = vunpack.c.0.s8 %v5181
        %v5183 = vlaneseq
        %v5184 = vshrl.u32 %v5183, 7
        %v5185 = vsub.s32 %v5182, %v5184
        %v5186 = vrot.slane %v5172, %v5185
        %v5187 = vcombine.low %v5163, %v5179
        %v5188 = vcombine.high %v5163, %v5179
        %v5189 = vcombine.low %v5170, %v5186
        %v5190 = vcombine.high %v5170, %v5186
        %v5191 = vcombine.low %v4958, %v4966
        %v5192 = vcombine.high %v4958, %v4966
        %v5194 = vunpack.c.l.s4 1983009808
        %v5195 = vunpack.c.0.s8 %v5194
        %v5196 = vlaneseq
        %v5197 = vshrl.u32 %v5196, 7
        %v5198 = vsub.s32 %v5195, %v5197
        %v5199 = vrot.slane %v5191, %v5198
        %v5201 = vunpack.c.l.s4 1983009808
        %v5202 = vunpack.c.0.s8 %v5201
        %v5203 = vlaneseq
        %v5204 = vshrl.u32 %v5203, 7
        %v5205 = vsub.s32 %v5202, %v5204
        %v5206 = vrot.slane %v5192, %v5205
        %v5207 = vcombine.low %v4962, %v4970
        %v5208 = vcombine.high %v4962, %v4970
        %v5210 = vunpack.c.l.s4 1983009808
        %v5211 = vunpack.c.0.s8 %v5210
        %v5212 = vlaneseq
        %v5213 = vshrl.u32 %v5212, 7
        %v5214 = vsub.s32 %v5211, %v5213
        %v5215 = vrot.slane %v5207, %v5214
        %v5217 = vunpack.c.l.s4 1983009808
        %v5218 = vunpack.c.0.s8 %v5217
        %v5219 = vlaneseq
        %v5220 = vshrl.u32 %v5219, 7
        %v5221 = vsub.s32 %v5218, %v5220
        %v5222 = vrot.slane %v5208, %v5221
        %v5223 = vcombine.low %v5199, %v5215
        %v5224 = vcombine.high %v5199, %v5215
        %v5226 = vunpack.c.l.s4 1934713408
        %v5227 = vunpack.c.0.s8 %v5226
        %v5228 = vlaneseq
        %v5229 = vshrl.u32 %v5228, 7
        %v5230 = vsub.s32 %v5227, %v5229
        %v5231 = vrot.slane %v5223, %v5230
        %v5233 = vunpack.c.l.s4 1934713408
        %v5234 = vunpack.c.0.s8 %v5233
        %v5235 = vlaneseq
        %v5236 = vshrl.u32 %v5235, 7
        %v5237 = vsub.s32 %v5234, %v5236
        %v5238 = vrot.slane %v5224, %v5237
        %v5239 = vcombine.low %v5206, %v5222
        %v5240 = vcombine.high %v5206, %v5222
        %v5242 = vunpack.c.l.s4 1934713408
        %v5243 = vunpack.c.0.s8 %v5242
        %v5244 = vlaneseq
        %v5245 = vshrl.u32 %v5244, 7
        %v5246 = vsub.s32 %v5243, %v5245
        %v5247 = vrot.slane %v5239, %v5246
        %v5249 = vunpack.c.l.s4 1934713408
        %v5250 = vunpack.c.0.s8 %v5249
        %v5251 = vlaneseq
        %v5252 = vshrl.u32 %v5251, 7
        %v5253 = vsub.s32 %v5250, %v5252
        %v5254 = vrot.slane %v5240, %v5253
        %v5255 = vcombine.low %v5231, %v5247
        %v5256 = vcombine.high %v5231, %v5247
        %v5257 = vcombine.low %v5238, %v5254
        %v5258 = vcombine.high %v5238, %v5254
        %v5291 = vcombine.low %v4907, %v4908
        %v5292 = vcombine.low %v4909, %v4910
        %v5293 = vcombine.low %v4911, %v4912
        %v5294 = vcombine.low %v4913, %v4914
        %v5295 = vcombine.low %v4915, %v4916
        %v5296 = vcombine.low %v4917, %v4918
        %v5297 = vcombine.low %v4919, %v4920
        %v5298 = vcombine.low %v4921, %v4922
        %v5299 = vcombine.low %v4923, %v4924
        %v5300 = vcombine.low %v4925, %v4926
        %v5301 = vcombine.low %v4927, %v4928
        %v5302 = vcombine.low %v4929, %v4930
        %v5303 = vcombine.low %v4931, %v4932
        %v5304 = vcombine.low %v4933, %v4934
        %v5305 = vcombine.low %v4935, %v4936
        %v5306 = vcombine.low %v4937, %v4938
        %v5323 = vadd.f32 %v5051, %v5291
        %v5324 = vadd.f32 %v5187, %v5292
        %v5325 = vadd.f32 %v5052, %v5293
        %v5326 = vadd.f32 %v5188, %v5294
        %v5327 = vadd.f32 %v5053, %v5295
        %v5328 = vadd.f32 %v5189, %v5296
        %v5329 = vadd.f32 %v5054, %v5297
        %v5330 = vadd.f32 %v5190, %v5298
        %v5331 = vadd.f32 %v5119, %v5299
        %v5332 = vadd.f32 %v5255, %v5300
        %v5333 = vadd.f32 %v5120, %v5301
        %v5334 = vadd.f32 %v5256, %v5302
        %v5335 = vadd.f32 %v5121, %v5303
        %v5336 = vadd.f32 %v5257, %v5304
        %v5337 = vadd.f32 %v5122, %v5305
        %v5338 = vadd.f32 %v5258, %v5306
        %v5339 = vcombine.low %v5323, %v5327
        %v5340 = vcombine.high %v5323, %v5327
        %v5342 = vunpack.c.l.s4 1983009808
        %v5343 = vunpack.c.0.s8 %v5342
        %v5344 = vlaneseq
        %v5345 = vshrl.u32 %v5344, 7
        %v5346 = vsub.s32 %v5343, %v5345
        %v5347 = vrot.slane %v5339, %v5346
        %v5349 = vunpack.c.l.s4 1983009808
        %v5350 = vunpack.c.0.s8 %v5349
        %v5351 = vlaneseq
        %v5352 = vshrl.u32 %v5351, 7
        %v5353 = vsub.s32 %v5350, %v5352
        %v5354 = vrot.slane %v5340, %v5353
        %v5355 = vcombine.low %v5325, %v5329
        %v5356 = vcombine.high %v5325, %v5329
        %v5358 = vunpack.c.l.s4 1983009808
        %v5359 = vunpack.c.0.s8 %v5358
        %v5360 = vlaneseq
        %v5361 = vshrl.u32 %v5360, 7
        %v5362 = vsub.s32 %v5359, %v5361
        %v5363 = vrot.slane %v5355, %v5362
        %v5365 = vunpack.c.l.s4 1983009808
        %v5366 = vunpack.c.0.s8 %v5365
        %v5367 = vlaneseq
        %v5368 = vshrl.u32 %v5367, 7
        %v5369 = vsub.s32 %v5366, %v5368
        %v5370 = vrot.slane %v5356, %v5369
        %v5371 = vcombine.low %v5347, %v5363
        %v5372 = vcombine.high %v5347, %v5363
        %v5374 = vunpack.c.l.s4 1934713408
        %v5375 = vunpack.c.0.s8 %v5374
        %v5376 = vlaneseq
        %v5377 = vshrl.u32 %v5376, 7
        %v5378 = vsub.s32 %v5375, %v5377
        %v5379 = vrot.slane %v5371, %v5378
        %v5381 = vunpack.c.l.s4 1934713408
        %v5382 = vunpack.c.0.s8 %v5381
        %v5383 = vlaneseq
        %v5384 = vshrl.u32 %v5383, 7
        %v5385 = vsub.s32 %v5382, %v5384
        %v5386 = vrot.slane %v5372, %v5385
        %v5387 = vcombine.low %v5354, %v5370
        %v5388 = vcombine.high %v5354, %v5370
        %v5390 = vunpack.c.l.s4 1934713408
        %v5391 = vunpack.c.0.s8 %v5390
        %v5392 = vlaneseq
        %v5393 = vshrl.u32 %v5392, 7
        %v5394 = vsub.s32 %v5391, %v5393
        %v5395 = vrot.slane %v5387, %v5394
        %v5397 = vunpack.c.l.s4 1934713408
        %v5398 = vunpack.c.0.s8 %v5397
        %v5399 = vlaneseq
        %v5400 = vshrl.u32 %v5399, 7
        %v5401 = vsub.s32 %v5398, %v5400
        %v5402 = vrot.slane %v5388, %v5401
        %v5403 = vcombine.low %v5379, %v5395
        %v5404 = vcombine.high %v5379, %v5395
        %v5405 = vcombine.low %v5386, %v5402
        %v5406 = vcombine.high %v5386, %v5402
        %v5407 = vcombine.low %v5331, %v5335
        %v5408 = vcombine.high %v5331, %v5335
        %v5410 = vunpack.c.l.s4 1983009808
        %v5411 = vunpack.c.0.s8 %v5410
        %v5412 = vlaneseq
        %v5413 = vshrl.u32 %v5412, 7
        %v5414 = vsub.s32 %v5411, %v5413
        %v5415 = vrot.slane %v5407, %v5414
        %v5417 = vunpack.c.l.s4 1983009808
        %v5418 = vunpack.c.0.s8 %v5417
        %v5419 = vlaneseq
        %v5420 = vshrl.u32 %v5419, 7
        %v5421 = vsub.s32 %v5418, %v5420
        %v5422 = vrot.slane %v5408, %v5421
        %v5423 = vcombine.low %v5333, %v5337
        %v5424 = vcombine.high %v5333, %v5337
        %v5426 = vunpack.c.l.s4 1983009808
        %v5427 = vunpack.c.0.s8 %v5426
        %v5428 = vlaneseq
        %v5429 = vshrl.u32 %v5428, 7
        %v5430 = vsub.s32 %v5427, %v5429
        %v5431 = vrot.slane %v5423, %v5430
        %v5433 = vunpack.c.l.s4 1983009808
        %v5434 = vunpack.c.0.s8 %v5433
        %v5435 = vlaneseq
        %v5436 = vshrl.u32 %v5435, 7
        %v5437 = vsub.s32 %v5434, %v5436
        %v5438 = vrot.slane %v5424, %v5437
        %v5439 = vcombine.low %v5415, %v5431
        %v5440 = vcombine.high %v5415, %v5431
        %v5442 = vunpack.c.l.s4 1934713408
        %v5443 = vunpack.c.0.s8 %v5442
        %v5444 = vlaneseq
        %v5445 = vshrl.u32 %v5444, 7
        %v5446 = vsub.s32 %v5443, %v5445
        %v5447 = vrot.slane %v5439, %v5446
        %v5449 = vunpack.c.l.s4 1934713408
        %v5450 = vunpack.c.0.s8 %v5449
        %v5451 = vlaneseq
        %v5452 = vshrl.u32 %v5451, 7
        %v5453 = vsub.s32 %v5450, %v5452
        %v5454 = vrot.slane %v5440, %v5453
        %v5455 = vcombine.low %v5422, %v5438
        %v5456 = vcombine.high %v5422, %v5438
        %v5458 = vunpack.c.l.s4 1934713408
        %v5459 = vunpack.c.0.s8 %v5458
        %v5460 = vlaneseq
        %v5461 = vshrl.u32 %v5460, 7
        %v5462 = vsub.s32 %v5459, %v5461
        %v5463 = vrot.slane %v5455, %v5462
        %v5465 = vunpack.c.l.s4 1934713408
        %v5466 = vunpack.c.0.s8 %v5465
        %v5467 = vlaneseq
        %v5468 = vshrl.u32 %v5467, 7
        %v5469 = vsub.s32 %v5466, %v5468
        %v5470 = vrot.slane %v5456, %v5469
        %v5471 = vcombine.low %v5447, %v5463
        %v5472 = vcombine.high %v5447, %v5463
        %v5473 = vcombine.low %v5454, %v5470
        %v5474 = vcombine.high %v5454, %v5470
        %v5475 = vcombine.low %v5324, %v5328
        %v5476 = vcombine.high %v5324, %v5328
        %v5478 = vunpack.c.l.s4 1983009808
        %v5479 = vunpack.c.0.s8 %v5478
        %v5480 = vlaneseq
        %v5481 = vshrl.u32 %v5480, 7
        %v5482 = vsub.s32 %v5479, %v5481
        %v5483 = vrot.slane %v5475, %v5482
        %v5485 = vunpack.c.l.s4 1983009808
        %v5486 = vunpack.c.0.s8 %v5485
        %v5487 = vlaneseq
        %v5488 = vshrl.u32 %v5487, 7
        %v5489 = vsub.s32 %v5486, %v5488
        %v5490 = vrot.slane %v5476, %v5489
        %v5491 = vcombine.low %v5326, %v5330
        %v5492 = vcombine.high %v5326, %v5330
        %v5494 = vunpack.c.l.s4 1983009808
        %v5495 = vunpack.c.0.s8 %v5494
        %v5496 = vlaneseq
        %v5497 = vshrl.u32 %v5496, 7
        %v5498 = vsub.s32 %v5495, %v5497
        %v5499 = vrot.slane %v5491, %v5498
        %v5501 = vunpack.c.l.s4 1983009808
        %v5502 = vunpack.c.0.s8 %v5501
        %v5503 = vlaneseq
        %v5504 = vshrl.u32 %v5503, 7
        %v5505 = vsub.s32 %v5502, %v5504
        %v5506 = vrot.slane %v5492, %v5505
        %v5507 = vcombine.low %v5483, %v5499
        %v5508 = vcombine.high %v5483, %v5499
        %v5510 = vunpack.c.l.s4 1934713408
        %v5511 = vunpack.c.0.s8 %v5510
        %v5512 = vlaneseq
        %v5513 = vshrl.u32 %v5512, 7
        %v5514 = vsub.s32 %v5511, %v5513
        %v5515 = vrot.slane %v5507, %v5514
        %v5517 = vunpack.c.l.s4 1934713408
        %v5518 = vunpack.c.0.s8 %v5517
        %v5519 = vlaneseq
        %v5520 = vshrl.u32 %v5519, 7
        %v5521 = vsub.s32 %v5518, %v5520
        %v5522 = vrot.slane %v5508, %v5521
        %v5523 = vcombine.low %v5490, %v5506
        %v5524 = vcombine.high %v5490, %v5506
        %v5526 = vunpack.c.l.s4 1934713408
        %v5527 = vunpack.c.0.s8 %v5526
        %v5528 = vlaneseq
        %v5529 = vshrl.u32 %v5528, 7
        %v5530 = vsub.s32 %v5527, %v5529
        %v5531 = vrot.slane %v5523, %v5530
        %v5533 = vunpack.c.l.s4 1934713408
        %v5534 = vunpack.c.0.s8 %v5533
        %v5535 = vlaneseq
        %v5536 = vshrl.u32 %v5535, 7
        %v5537 = vsub.s32 %v5534, %v5536
        %v5538 = vrot.slane %v5524, %v5537
        %v5539 = vcombine.low %v5515, %v5531
        %v5540 = vcombine.high %v5515, %v5531
        %v5541 = vcombine.low %v5522, %v5538
        %v5542 = vcombine.high %v5522, %v5538
        %v5543 = vcombine.low %v5332, %v5336
        %v5544 = vcombine.high %v5332, %v5336
        %v5546 = vunpack.c.l.s4 1983009808
        %v5547 = vunpack.c.0.s8 %v5546
        %v5548 = vlaneseq
        %v5549 = vshrl.u32 %v5548, 7
        %v5550 = vsub.s32 %v5547, %v5549
        %v5551 = vrot.slane %v5543, %v5550
        %v5553 = vunpack.c.l.s4 1983009808
        %v5554 = vunpack.c.0.s8 %v5553
        %v5555 = vlaneseq
        %v5556 = vshrl.u32 %v5555, 7
        %v5557 = vsub.s32 %v5554, %v5556
        %v5558 = vrot.slane %v5544, %v5557
        %v5559 = vcombine.low %v5334, %v5338
        %v5560 = vcombine.high %v5334, %v5338
        %v5562 = vunpack.c.l.s4 1983009808
        %v5563 = vunpack.c.0.s8 %v5562
        %v5564 = vlaneseq
        %v5565 = vshrl.u32 %v5564, 7
        %v5566 = vsub.s32 %v5563, %v5565
        %v5567 = vrot.slane %v5559, %v5566
        %v5569 = vunpack.c.l.s4 1983009808
        %v5570 = vunpack.c.0.s8 %v5569
        %v5571 = vlaneseq
        %v5572 = vshrl.u32 %v5571, 7
        %v5573 = vsub.s32 %v5570, %v5572
        %v5574 = vrot.slane %v5560, %v5573
        %v5575 = vcombine.low %v5551, %v5567
        %v5576 = vcombine.high %v5551, %v5567
        %v5578 = vunpack.c.l.s4 1934713408
        %v5579 = vunpack.c.0.s8 %v5578
        %v5580 = vlaneseq
        %v5581 = vshrl.u32 %v5580, 7
        %v5582 = vsub.s32 %v5579, %v5581
        %v5583 = vrot.slane %v5575, %v5582
        %v5585 = vunpack.c.l.s4 1934713408
        %v5586 = vunpack.c.0.s8 %v5585
        %v5587 = vlaneseq
        %v5588 = vshrl.u32 %v5587, 7
        %v5589 = vsub.s32 %v5586, %v5588
        %v5590 = vrot.slane %v5576, %v5589
        %v5591 = vcombine.low %v5558, %v5574
        %v5592 = vcombine.high %v5558, %v5574
        %v5594 = vunpack.c.l.s4 1934713408
        %v5595 = vunpack.c.0.s8 %v5594
        %v5596 = vlaneseq
        %v5597 = vshrl.u32 %v5596, 7
        %v5598 = vsub.s32 %v5595, %v5597
        %v5599 = vrot.slane %v5591, %v5598
        %v5601 = vunpack.c.l.s4 1934713408
        %v5602 = vunpack.c.0.s8 %v5601
        %v5603 = vlaneseq
        %v5604 = vshrl.u32 %v5603, 7
        %v5605 = vsub.s32 %v5602, %v5604
        %v5606 = vrot.slane %v5592, %v5605
        %v5607 = vcombine.low %v5583, %v5599
        %v5608 = vcombine.high %v5583, %v5599
        %v5609 = vcombine.low %v5590, %v5606
        %v5610 = vcombine.high %v5590, %v5606
        %v5611 = vcombine.low %v5403, %v5405
        %v5612 = vcombine.high %v5403, %v5405
        %v5614 = vunpack.c.l.s4 1983009808
        %v5615 = vunpack.c.0.s8 %v5614
        %v5616 = vlaneseq
        %v5617 = vshrl.u32 %v5616, 7
        %v5618 = vsub.s32 %v5615, %v5617
        %v5619 = vrot.slane %v5611, %v5618
        %v5621 = vunpack.c.l.s4 1983009808
        %v5622 = vunpack.c.0.s8 %v5621
        %v5623 = vlaneseq
        %v5624 = vshrl.u32 %v5623, 7
        %v5625 = vsub.s32 %v5622, %v5624
        %v5626 = vrot.slane %v5612, %v5625
        %v5627 = vcombine.low %v5404, %v5406
        %v5628 = vcombine.high %v5404, %v5406
        %v5630 = vunpack.c.l.s4 1983009808
        %v5631 = vunpack.c.0.s8 %v5630
        %v5632 = vlaneseq
        %v5633 = vshrl.u32 %v5632, 7
        %v5634 = vsub.s32 %v5631, %v5633
        %v5635 = vrot.slane %v5627, %v5634
        %v5637 = vunpack.c.l.s4 1983009808
        %v5638 = vunpack.c.0.s8 %v5637
        %v5639 = vlaneseq
        %v5640 = vshrl.u32 %v5639, 7
        %v5641 = vsub.s32 %v5638, %v5640
        %v5642 = vrot.slane %v5628, %v5641
        %v5643 = vcombine.low %v5619, %v5635
        %v5644 = vcombine.high %v5619, %v5635
        %v5646 = vunpack.c.l.s4 1934713408
        %v5647 = vunpack.c.0.s8 %v5646
        %v5648 = vlaneseq
        %v5649 = vshrl.u32 %v5648, 7
        %v5650 = vsub.s32 %v5647, %v5649
        %v5651 = vrot.slane %v5643, %v5650
        %v5653 = vunpack.c.l.s4 1934713408
        %v5654 = vunpack.c.0.s8 %v5653
        %v5655 = vlaneseq
        %v5656 = vshrl.u32 %v5655, 7
        %v5657 = vsub.s32 %v5654, %v5656
        %v5658 = vrot.slane %v5644, %v5657
        %v5659 = vcombine.low %v5626, %v5642
        %v5660 = vcombine.high %v5626, %v5642
        %v5662 = vunpack.c.l.s4 1934713408
        %v5663 = vunpack.c.0.s8 %v5662
        %v5664 = vlaneseq
        %v5665 = vshrl.u32 %v5664, 7
        %v5666 = vsub.s32 %v5663, %v5665
        %v5667 = vrot.slane %v5659, %v5666
        %v5669 = vunpack.c.l.s4 1934713408
        %v5670 = vunpack.c.0.s8 %v5669
        %v5671 = vlaneseq
        %v5672 = vshrl.u32 %v5671, 7
        %v5673 = vsub.s32 %v5670, %v5672
        %v5674 = vrot.slane %v5660, %v5673
        %v5675 = vcombine.low %v5651, %v5667
        %v5676 = vcombine.high %v5651, %v5667
        %v5677 = vcombine.low %v5658, %v5674
        %v5678 = vcombine.high %v5658, %v5674
        %v5679 = vcombine.low %v5471, %v5473
        %v5680 = vcombine.high %v5471, %v5473
        %v5682 = vunpack.c.l.s4 1983009808
        %v5683 = vunpack.c.0.s8 %v5682
        %v5684 = vlaneseq
        %v5685 = vshrl.u32 %v5684, 7
        %v5686 = vsub.s32 %v5683, %v5685
        %v5687 = vrot.slane %v5679, %v5686
        %v5689 = vunpack.c.l.s4 1983009808
        %v5690 = vunpack.c.0.s8 %v5689
        %v5691 = vlaneseq
        %v5692 = vshrl.u32 %v5691, 7
        %v5693 = vsub.s32 %v5690, %v5692
        %v5694 = vrot.slane %v5680, %v5693
        %v5695 = vcombine.low %v5472, %v5474
        %v5696 = vcombine.high %v5472, %v5474
        %v5698 = vunpack.c.l.s4 1983009808
        %v5699 = vunpack.c.0.s8 %v5698
        %v5700 = vlaneseq
        %v5701 = vshrl.u32 %v5700, 7
        %v5702 = vsub.s32 %v5699, %v5701
        %v5703 = vrot.slane %v5695, %v5702
        %v5705 = vunpack.c.l.s4 1983009808
        %v5706 = vunpack.c.0.s8 %v5705
        %v5707 = vlaneseq
        %v5708 = vshrl.u32 %v5707, 7
        %v5709 = vsub.s32 %v5706, %v5708
        %v5710 = vrot.slane %v5696, %v5709
        %v5711 = vcombine.low %v5687, %v5703
        %v5712 = vcombine.high %v5687, %v5703
        %v5714 = vunpack.c.l.s4 1934713408
        %v5715 = vunpack.c.0.s8 %v5714
        %v5716 = vlaneseq
        %v5717 = vshrl.u32 %v5716, 7
        %v5718 = vsub.s32 %v5715, %v5717
        %v5719 = vrot.slane %v5711, %v5718
        %v5721 = vunpack.c.l.s4 1934713408
        %v5722 = vunpack.c.0.s8 %v5721
        %v5723 = vlaneseq
        %v5724 = vshrl.u32 %v5723, 7
        %v5725 = vsub.s32 %v5722, %v5724
        %v5726 = vrot.slane %v5712, %v5725
        %v5727 = vcombine.low %v5694, %v5710
        %v5728 = vcombine.high %v5694, %v5710
        %v5730 = vunpack.c.l.s4 1934713408
        %v5731 = vunpack.c.0.s8 %v5730
        %v5732 = vlaneseq
        %v5733 = vshrl.u32 %v5732, 7
        %v5734 = vsub.s32 %v5731, %v5733
        %v5735 = vrot.slane %v5727, %v5734
        %v5737 = vunpack.c.l.s4 1934713408
        %v5738 = vunpack.c.0.s8 %v5737
        %v5739 = vlaneseq
        %v5740 = vshrl.u32 %v5739, 7
        %v5741 = vsub.s32 %v5738, %v5740
        %v5742 = vrot.slane %v5728, %v5741
        %v5743 = vcombine.low %v5719, %v5735
        %v5744 = vcombine.high %v5719, %v5735
        %v5745 = vcombine.low %v5726, %v5742
        %v5746 = vcombine.high %v5726, %v5742
        %v5747 = vcombine.low %v5539, %v5541
        %v5748 = vcombine.high %v5539, %v5541
        %v5750 = vunpack.c.l.s4 1983009808
        %v5751 = vunpack.c.0.s8 %v5750
        %v5752 = vlaneseq
        %v5753 = vshrl.u32 %v5752, 7
        %v5754 = vsub.s32 %v5751, %v5753
        %v5755 = vrot.slane %v5747, %v5754
        %v5757 = vunpack.c.l.s4 1983009808
        %v5758 = vunpack.c.0.s8 %v5757
        %v5759 = vlaneseq
        %v5760 = vshrl.u32 %v5759, 7
        %v5761 = vsub.s32 %v5758, %v5760
        %v5762 = vrot.slane %v5748, %v5761
        %v5763 = vcombine.low %v5540, %v5542
        %v5764 = vcombine.high %v5540, %v5542
        %v5766 = vunpack.c.l.s4 1983009808
        %v5767 = vunpack.c.0.s8 %v5766
        %v5768 = vlaneseq
        %v5769 = vshrl.u32 %v5768, 7
        %v5770 = vsub.s32 %v5767, %v5769
        %v5771 = vrot.slane %v5763, %v5770
        %v5773 = vunpack.c.l.s4 1983009808
        %v5774 = vunpack.c.0.s8 %v5773
        %v5775 = vlaneseq
        %v5776 = vshrl.u32 %v5775, 7
        %v5777 = vsub.s32 %v5774, %v5776
        %v5778 = vrot.slane %v5764, %v5777
        %v5779 = vcombine.low %v5755, %v5771
        %v5780 = vcombine.high %v5755, %v5771
        %v5782 = vunpack.c.l.s4 1934713408
        %v5783 = vunpack.c.0.s8 %v5782
        %v5784 = vlaneseq
        %v5785 = vshrl.u32 %v5784, 7
        %v5786 = vsub.s32 %v5783, %v5785
        %v5787 = vrot.slane %v5779, %v5786
        %v5789 = vunpack.c.l.s4 1934713408
        %v5790 = vunpack.c.0.s8 %v5789
        %v5791 = vlaneseq
        %v5792 = vshrl.u32 %v5791, 7
        %v5793 = vsub.s32 %v5790, %v5792
        %v5794 = vrot.slane %v5780, %v5793
        %v5795 = vcombine.low %v5762, %v5778
        %v5796 = vcombine.high %v5762, %v5778
        %v5798 = vunpack.c.l.s4 1934713408
        %v5799 = vunpack.c.0.s8 %v5798
        %v5800 = vlaneseq
        %v5801 = vshrl.u32 %v5800, 7
        %v5802 = vsub.s32 %v5799, %v5801
        %v5803 = vrot.slane %v5795, %v5802
        %v5805 = vunpack.c.l.s4 1934713408
        %v5806 = vunpack.c.0.s8 %v5805
        %v5807 = vlaneseq
        %v5808 = vshrl.u32 %v5807, 7
        %v5809 = vsub.s32 %v5806, %v5808
        %v5810 = vrot.slane %v5796, %v5809
        %v5811 = vcombine.low %v5787, %v5803
        %v5812 = vcombine.high %v5787, %v5803
        %v5813 = vcombine.low %v5794, %v5810
        %v5814 = vcombine.high %v5794, %v5810
        %v5815 = vcombine.low %v5607, %v5609
        %v5816 = vcombine.high %v5607, %v5609
        %v5818 = vunpack.c.l.s4 1983009808
        %v5819 = vunpack.c.0.s8 %v5818
        %v5820 = vlaneseq
        %v5821 = vshrl.u32 %v5820, 7
        %v5822 = vsub.s32 %v5819, %v5821
        %v5823 = vrot.slane %v5815, %v5822
        %v5825 = vunpack.c.l.s4 1983009808
        %v5826 = vunpack.c.0.s8 %v5825
        %v5827 = vlaneseq
        %v5828 = vshrl.u32 %v5827, 7
        %v5829 = vsub.s32 %v5826, %v5828
        %v5830 = vrot.slane %v5816, %v5829
        %v5831 = vcombine.low %v5608, %v5610
        %v5832 = vcombine.high %v5608, %v5610
        %v5834 = vunpack.c.l.s4 1983009808
        %v5835 = vunpack.c.0.s8 %v5834
        %v5836 = vlaneseq
        %v5837 = vshrl.u32 %v5836, 7
        %v5838 = vsub.s32 %v5835, %v5837
        %v5839 = vrot.slane %v5831, %v5838
        %v5841 = vunpack.c.l.s4 1983009808
        %v5842 = vunpack.c.0.s8 %v5841
        %v5843 = vlaneseq
        %v5844 = vshrl.u32 %v5843, 7
        %v5845 = vsub.s32 %v5842, %v5844
        %v5846 = vrot.slane %v5832, %v5845
        %v5847 = vcombine.low %v5823, %v5839
        %v5848 = vcombine.high %v5823, %v5839
        %v5850 = vunpack.c.l.s4 1934713408
        %v5851 = vunpack.c.0.s8 %v5850
        %v5852 = vlaneseq
        %v5853 = vshrl.u32 %v5852, 7
        %v5854 = vsub.s32 %v5851, %v5853
        %v5855 = vrot.slane %v5847, %v5854
        %v5857 = vunpack.c.l.s4 1934713408
        %v5858 = vunpack.c.0.s8 %v5857
        %v5859 = vlaneseq
        %v5860 = vshrl.u32 %v5859, 7
        %v5861 = vsub.s32 %v5858, %v5860
        %v5862 = vrot.slane %v5848, %v5861
        %v5863 = vcombine.low %v5830, %v5846
        %v5864 = vcombine.high %v5830, %v5846
        %v5866 = vunpack.c.l.s4 1934713408
        %v5867 = vunpack.c.0.s8 %v5866
        %v5868 = vlaneseq
        %v5869 = vshrl.u32 %v5868, 7
        %v5870 = vsub.s32 %v5867, %v5869
        %v5871 = vrot.slane %v5863, %v5870
        %v5873 = vunpack.c.l.s4 1934713408
        %v5874 = vunpack.c.0.s8 %v5873
        %v5875 = vlaneseq
        %v5876 = vshrl.u32 %v5875, 7
        %v5877 = vsub.s32 %v5874, %v5876
        %v5878 = vrot.slane %v5864, %v5877
        %v5879 = vcombine.low %v5855, %v5871
        %v5880 = vcombine.high %v5855, %v5871
        %v5881 = vcombine.low %v5862, %v5878
        %v5882 = vcombine.high %v5862, %v5878
        %v5885 = vcombine.high %v5675, %v5675
        %v5886 = vcombine.high %v5811, %v5811
        %v5889 = vcombine.high %v5676, %v5676
        %v5890 = vcombine.high %v5812, %v5812
        %v5893 = vcombine.high %v5677, %v5677
        %v5894 = vcombine.high %v5813, %v5813
        %v5897 = vcombine.high %v5678, %v5678
        %v5898 = vcombine.high %v5814, %v5814
        %v5901 = vcombine.high %v5743, %v5743
        %v5902 = vcombine.high %v5879, %v5879
        %v5905 = vcombine.high %v5744, %v5744
        %v5906 = vcombine.high %v5880, %v5880
        %v5909 = vcombine.high %v5745, %v5745
        %v5910 = vcombine.high %v5881, %v5881
        %v5913 = vcombine.high %v5746, %v5746
        %v5914 = vcombine.high %v5882, %v5882
        %vm5915 = vcmask 31744
        %v5917 = vsel %vm5915, %v354, 0
        %vm5919 = vcmask 1043456
        %v5920 = vsel %vm5919, %v5675, 0
        %v5922 = vsel %vm5919, %v5885, 0
        %v5924 = vsel %vm5919, %v5811, 0
        %v5926 = vsel %vm5919, %v5886, 0
        %v5928 = vsel %vm5919, %v5676, 0
        %v5930 = vsel %vm5919, %v5889, 0
        %v5932 = vsel %vm5919, %v5812, 0
        %v5934 = vsel %vm5919, %v5890, 0
        %v5936 = vsel %vm5919, %v5677, 0
        %v5938 = vsel %vm5919, %v5893, 0
        %v5940 = vsel %vm5919, %v5813, 0
        %v5942 = vsel %vm5919, %v5894, 0
        %v5944 = vsel %vm5919, %v5678, 0
        %v5946 = vsel %vm5919, %v5897, 0
        %v5948 = vsel %vm5919, %v5814, 0
        %v5950 = vsel %vm5919, %v5898, 0
        %v5952 = vsel %vm5919, %v5743, 0
        %v5954 = vsel %vm5919, %v5901, 0
        %v5956 = vsel %vm5919, %v5879, 0
        %v5958 = vsel %vm5919, %v5902, 0
        %v5960 = vsel %vm5919, %v5744, 0
        %v5962 = vsel %vm5919, %v5905, 0
        %v5964 = vsel %vm5919, %v5880, 0
        %v5966 = vsel %vm5919, %v5906, 0
        %v5968 = vsel %vm5919, %v5745, 0
        %v5970 = vsel %vm5919, %v5909, 0
        %v5972 = vsel %vm5919, %v5881, 0
        %v5974 = vsel %vm5919, %v5910, 0
        %v5976 = vsel %vm5919, %v5746, 0
        %v5978 = vsel %vm5919, %v5913, 0
        %v5980 = vsel %vm5919, %v5882, 0
        %v5982 = vsel %vm5919, %v5914, 0
        %5984 = vmatprep.subr.mxu0 %v5922
        %5985 = vmatpush1.msra.mxu0 %v5920
        %5986 = vmatprep.subr.mxu0 0.0
        %5987 = vmatpush1.msra.mxu0 0.0
        %5988 = vmatprep.subr.mxu0 0.0
        %5989 = vmatpush1.msra.mxu0 0.0
        %5990 = vmatprep.subr.mxu0 0.0
        %5991 = vmatpush1.msra.mxu0 0.0
        %5992 = vmatprep.subr.mxu0 0.0
        %5993 = vmatpush1.msra.mxu0 0.0
        %5994 = vmatprep.subr.mxu0 0.0
        %5995 = vmatpush1.msra.mxu0 0.0
        %5996 = vmatprep.subr.mxu0 0.0
        %5997 = vmatpush1.msra.mxu0 0.0
        %5998 = vmatprep.subr.mxu0 0.0
        %5999 = vmatpush1.msra.mxu0 0.0
        %6000 = vmatprep.subr.mxu0 0.0
        %6001 = vmatpush1.msra.mxu0 0.0
        %6002 = vmatprep.subr.mxu0 0.0
        %6003 = vmatpush1.msra.mxu0 0.0
        %6004 = vmatprep.subr.mxu0 0.0
        %6005 = vmatpush1.msra.mxu0 0.0
        %6006 = vmatprep.subr.mxu0 0.0
        %6007 = vmatpush1.msra.mxu0 0.0
        %6008 = vmatprep.subr.mxu0 0.0
        %6009 = vmatpush1.msra.mxu0 0.0
        %6010 = vmatprep.subr.mxu0 0.0
        %6011 = vmatpush1.msra.mxu0 0.0
        %6012 = vmatprep.subr.mxu0 0.0
        %6013 = vmatpush1.msra.mxu0 0.0
        %6014 = vmatprep.subr.mxu0 0.0
        %6015 = vmatpush1.msra.mxu0 0.0
        %6016 = vmatprep.subr.mxu0 0.0
        %6017 = vmatpush1.msra.mxu0 0.0
        %6018 = vmatprep.subr.mxu0 0.0
        %6019 = vmatpush1.msra.mxu0 0.0
        %6020 = vmatprep.subr.mxu0 0.0
        %6021 = vmatpush1.msra.mxu0 0.0
        %6022 = vmatprep.subr.mxu0 0.0
        %6023 = vmatpush1.msra.mxu0 0.0
        %6024 = vmatprep.subr.mxu0 0.0
        %6025 = vmatpush1.msra.mxu0 0.0
        %6026 = vmatprep.subr.mxu0 0.0
        %6027 = vmatpush1.msra.mxu0 0.0
        %6028 = vmatprep.subr.mxu0 0.0
        %6029 = vmatpush1.msra.mxu0 0.0
        %6030 = vmatprep.subr.mxu0 0.0
        %6031 = vmatpush1.msra.mxu0 0.0
        %6032 = vmatprep.subr.mxu0 0.0
        %6033 = vmatpush1.msra.mxu0 0.0
        %6034 = vmatprep.subr.mxu0 0.0
        %6035 = vmatpush1.msra.mxu0 0.0
        %6036 = vmatprep.subr.mxu0 0.0
        %6037 = vmatpush1.msra.mxu0 0.0
        %6038 = vmatprep.subr.mxu0 0.0
        %6039 = vmatpush1.msra.mxu0 0.0
        %6040 = vmatprep.subr.mxu0 0.0
        %6041 = vmatpush1.msra.mxu0 0.0
        %6042 = vmatprep.subr.mxu0 0.0
        %6043 = vmatpush1.msra.mxu0 0.0
        %6044 = vmatprep.subr.mxu0 0.0
        %6045 = vmatpush1.msra.mxu0 0.0
        %6046 = vmatprep.subr.mxu0 0.0
        %6047 = vmatpush1.msra.mxu0 0.0
        %6048 = vmatprep.mubr.f32.mxu0 0.0
        %6049 = vmatmul.mubr.f32.gmra.mrb[0].mxu0 %v5917
        %v6050 = vpop.f32.mrb[0].mxu0
        %v6051 = vadd.f32 0.0, %v6050
        %v6052 = vpop.f32.mrb[0].mxu0
        %v6053 = vadd.f32 0.0, %v6052
        %6054 = vdwg.mxu0
        %6055 = vmatprep.subr.mxu0 %v5926
        %6056 = vmatpush1.msra.mxu0 %v5924
        %6057 = vmatprep.subr.mxu0 0.0
        %6058 = vmatpush1.msra.mxu0 0.0
        %6059 = vmatprep.subr.mxu0 0.0
        %6060 = vmatpush1.msra.mxu0 0.0
        %6061 = vmatprep.subr.mxu0 0.0
        %6062 = vmatpush1.msra.mxu0 0.0
        %6063 = vmatprep.subr.mxu0 0.0
        %6064 = vmatpush1.msra.mxu0 0.0
        %6065 = vmatprep.subr.mxu0 0.0
        %6066 = vmatpush1.msra.mxu0 0.0
        %6067 = vmatprep.subr.mxu0 0.0
        %6068 = vmatpush1.msra.mxu0 0.0
        %6069 = vmatprep.subr.mxu0 0.0
        %6070 = vmatpush1.msra.mxu0 0.0
        %6071 = vmatprep.subr.mxu0 0.0
        %6072 = vmatpush1.msra.mxu0 0.0
        %6073 = vmatprep.subr.mxu0 0.0
        %6074 = vmatpush1.msra.mxu0 0.0
        %6075 = vmatprep.subr.mxu0 0.0
        %6076 = vmatpush1.msra.mxu0 0.0
        %6077 = vmatprep.subr.mxu0 0.0
        %6078 = vmatpush1.msra.mxu0 0.0
        %6079 = vmatprep.subr.mxu0 0.0
        %6080 = vmatpush1.msra.mxu0 0.0
        %6081 = vmatprep.subr.mxu0 0.0
        %6082 = vmatpush1.msra.mxu0 0.0
        %6083 = vmatprep.subr.mxu0 0.0
        %6084 = vmatpush1.msra.mxu0 0.0
        %6085 = vmatprep.subr.mxu0 0.0
        %6086 = vmatpush1.msra.mxu0 0.0
        %6087 = vmatprep.subr.mxu0 0.0
        %6088 = vmatpush1.msra.mxu0 0.0
        %6089 = vmatprep.subr.mxu0 0.0
        %6090 = vmatpush1.msra.mxu0 0.0
        %6091 = vmatprep.subr.mxu0 0.0
        %6092 = vmatpush1.msra.mxu0 0.0
        %6093 = vmatprep.subr.mxu0 0.0
        %6094 = vmatpush1.msra.mxu0 0.0
        %6095 = vmatprep.subr.mxu0 0.0
        %6096 = vmatpush1.msra.mxu0 0.0
        %6097 = vmatprep.subr.mxu0 0.0
        %6098 = vmatpush1.msra.mxu0 0.0
        %6099 = vmatprep.subr.mxu0 0.0
        %6100 = vmatpush1.msra.mxu0 0.0
        %6101 = vmatprep.subr.mxu0 0.0
        %6102 = vmatpush1.msra.mxu0 0.0
        %6103 = vmatprep.subr.mxu0 0.0
        %6104 = vmatpush1.msra.mxu0 0.0
        %6105 = vmatprep.subr.mxu0 0.0
        %6106 = vmatpush1.msra.mxu0 0.0
        %6107 = vmatprep.subr.mxu0 0.0
        %6108 = vmatpush1.msra.mxu0 0.0
        %6109 = vmatprep.subr.mxu0 0.0
        %6110 = vmatpush1.msra.mxu0 0.0
        %6111 = vmatprep.subr.mxu0 0.0
        %6112 = vmatpush1.msra.mxu0 0.0
        %6113 = vmatprep.subr.mxu0 0.0
        %6114 = vmatpush1.msra.mxu0 0.0
        %6115 = vmatprep.subr.mxu0 0.0
        %6116 = vmatpush1.msra.mxu0 0.0
        %6117 = vmatprep.subr.mxu0 0.0
        %6118 = vmatpush1.msra.mxu0 0.0
        %6119 = vmatprep.mubr.f32.mxu0 0.0
        %6120 = vmatmul.mubr.f32.gmra.mrb[0].mxu0 %v5917
        %v6121 = vpop.f32.mrb[0].mxu0
        %v6122 = vadd.f32 0.0, %v6121
        %v6123 = vpop.f32.mrb[0].mxu0
        %v6124 = vadd.f32 0.0, %v6123
        %6125 = vdwg.mxu0
        %6126 = vmatprep.subr.mxu0 %v5930
        %6127 = vmatpush1.msra.mxu0 %v5928
        %6128 = vmatprep.subr.mxu0 0.0
        %6129 = vmatpush1.msra.mxu0 0.0
        %6130 = vmatprep.subr.mxu0 0.0
        %6131 = vmatpush1.msra.mxu0 0.0
        %6132 = vmatprep.subr.mxu0 0.0
        %6133 = vmatpush1.msra.mxu0 0.0
        %6134 = vmatprep.subr.mxu0 0.0
        %6135 = vmatpush1.msra.mxu0 0.0
        %6136 = vmatprep.subr.mxu0 0.0
        %6137 = vmatpush1.msra.mxu0 0.0
        %6138 = vmatprep.subr.mxu0 0.0
        %6139 = vmatpush1.msra.mxu0 0.0
        %6140 = vmatprep.subr.mxu0 0.0
        %6141 = vmatpush1.msra.mxu0 0.0
        %6142 = vmatprep.subr.mxu0 0.0
        %6143 = vmatpush1.msra.mxu0 0.0
        %6144 = vmatprep.subr.mxu0 0.0
        %6145 = vmatpush1.msra.mxu0 0.0
        %6146 = vmatprep.subr.mxu0 0.0
        %6147 = vmatpush1.msra.mxu0 0.0
        %6148 = vmatprep.subr.mxu0 0.0
        %6149 = vmatpush1.msra.mxu0 0.0
        %6150 = vmatprep.subr.mxu0 0.0
        %6151 = vmatpush1.msra.mxu0 0.0
        %6152 = vmatprep.subr.mxu0 0.0
        %6153 = vmatpush1.msra.mxu0 0.0
        %6154 = vmatprep.subr.mxu0 0.0
        %6155 = vmatpush1.msra.mxu0 0.0
        %6156 = vmatprep.subr.mxu0 0.0
        %6157 = vmatpush1.msra.mxu0 0.0
        %6158 = vmatprep.subr.mxu0 0.0
        %6159 = vmatpush1.msra.mxu0 0.0
        %6160 = vmatprep.subr.mxu0 0.0
        %6161 = vmatpush1.msra.mxu0 0.0
        %6162 = vmatprep.subr.mxu0 0.0
        %6163 = vmatpush1.msra.mxu0 0.0
        %6164 = vmatprep.subr.mxu0 0.0
        %6165 = vmatpush1.msra.mxu0 0.0
        %6166 = vmatprep.subr.mxu0 0.0
        %6167 = vmatpush1.msra.mxu0 0.0
        %6168 = vmatprep.subr.mxu0 0.0
        %6169 = vmatpush1.msra.mxu0 0.0
        %6170 = vmatprep.subr.mxu0 0.0
        %6171 = vmatpush1.msra.mxu0 0.0
        %6172 = vmatprep.subr.mxu0 0.0
        %6173 = vmatpush1.msra.mxu0 0.0
        %6174 = vmatprep.subr.mxu0 0.0
        %6175 = vmatpush1.msra.mxu0 0.0
        %6176 = vmatprep.subr.mxu0 0.0
        %6177 = vmatpush1.msra.mxu0 0.0
        %6178 = vmatprep.subr.mxu0 0.0
        %6179 = vmatpush1.msra.mxu0 0.0
        %6180 = vmatprep.subr.mxu0 0.0
        %6181 = vmatpush1.msra.mxu0 0.0
        %6182 = vmatprep.subr.mxu0 0.0
        %6183 = vmatpush1.msra.mxu0 0.0
        %6184 = vmatprep.subr.mxu0 0.0
        %6185 = vmatpush1.msra.mxu0 0.0
        %6186 = vmatprep.subr.mxu0 0.0
        %6187 = vmatpush1.msra.mxu0 0.0
        %6188 = vmatprep.subr.mxu0 0.0
        %6189 = vmatpush1.msra.mxu0 0.0
        %6190 = vmatprep.mubr.f32.mxu0 0.0
        %6191 = vmatmul.mubr.f32.gmra.mrb[0].mxu0 %v5917
        %v6192 = vpop.f32.mrb[0].mxu0
        %v6193 = vadd.f32 0.0, %v6192
        %v6194 = vpop.f32.mrb[0].mxu0
        %v6195 = vadd.f32 0.0, %v6194
        %6196 = vdwg.mxu0
        %6197 = vmatprep.subr.mxu0 %v5934
        %6198 = vmatpush1.msra.mxu0 %v5932
        %6199 = vmatprep.subr.mxu0 0.0
        %6200 = vmatpush1.msra.mxu0 0.0
        %6201 = vmatprep.subr.mxu0 0.0
        %6202 = vmatpush1.msra.mxu0 0.0
        %6203 = vmatprep.subr.mxu0 0.0
        %6204 = vmatpush1.msra.mxu0 0.0
        %6205 = vmatprep.subr.mxu0 0.0
        %6206 = vmatpush1.msra.mxu0 0.0
        %6207 = vmatprep.subr.mxu0 0.0
        %6208 = vmatpush1.msra.mxu0 0.0
        %6209 = vmatprep.subr.mxu0 0.0
        %6210 = vmatpush1.msra.mxu0 0.0
        %6211 = vmatprep.subr.mxu0 0.0
        %6212 = vmatpush1.msra.mxu0 0.0
        %6213 = vmatprep.subr.mxu0 0.0
        %6214 = vmatpush1.msra.mxu0 0.0
        %6215 = vmatprep.subr.mxu0 0.0
        %6216 = vmatpush1.msra.mxu0 0.0
        %6217 = vmatprep.subr.mxu0 0.0
        %6218 = vmatpush1.msra.mxu0 0.0
        %6219 = vmatprep.subr.mxu0 0.0
        %6220 = vmatpush1.msra.mxu0 0.0
        %6221 = vmatprep.subr.mxu0 0.0
        %6222 = vmatpush1.msra.mxu0 0.0
        %6223 = vmatprep.subr.mxu0 0.0
        %6224 = vmatpush1.msra.mxu0 0.0
        %6225 = vmatprep.subr.mxu0 0.0
        %6226 = vmatpush1.msra.mxu0 0.0
        %6227 = vmatprep.subr.mxu0 0.0
        %6228 = vmatpush1.msra.mxu0 0.0
        %6229 = vmatprep.subr.mxu0 0.0
        %6230 = vmatpush1.msra.mxu0 0.0
        %6231 = vmatprep.subr.mxu0 0.0
        %6232 = vmatpush1.msra.mxu0 0.0
        %6233 = vmatprep.subr.mxu0 0.0
        %6234 = vmatpush1.msra.mxu0 0.0
        %6235 = vmatprep.subr.mxu0 0.0
        %6236 = vmatpush1.msra.mxu0 0.0
        %6237 = vmatprep.subr.mxu0 0.0
        %6238 = vmatpush1.msra.mxu0 0.0
        %6239 = vmatprep.subr.mxu0 0.0
        %6240 = vmatpush1.msra.mxu0 0.0
        %6241 = vmatprep.subr.mxu0 0.0
        %6242 = vmatpush1.msra.mxu0 0.0
        %6243 = vmatprep.subr.mxu0 0.0
        %6244 = vmatpush1.msra.mxu0 0.0
        %6245 = vmatprep.subr.mxu0 0.0
        %6246 = vmatpush1.msra.mxu0 0.0
        %6247 = vmatprep.subr.mxu0 0.0
        %6248 = vmatpush1.msra.mxu0 0.0
        %6249 = vmatprep.subr.mxu0 0.0
        %6250 = vmatpush1.msra.mxu0 0.0
        %6251 = vmatprep.subr.mxu0 0.0
        %6252 = vmatpush1.msra.mxu0 0.0
        %6253 = vmatprep.subr.mxu0 0.0
        %6254 = vmatpush1.msra.mxu0 0.0
        %6255 = vmatprep.subr.mxu0 0.0
        %6256 = vmatpush1.msra.mxu0 0.0
        %6257 = vmatprep.subr.mxu0 0.0
        %6258 = vmatpush1.msra.mxu0 0.0
        %6259 = vmatprep.subr.mxu0 0.0
        %6260 = vmatpush1.msra.mxu0 0.0
        %6261 = vmatprep.mubr.f32.mxu0 0.0
        %6262 = vmatmul.mubr.f32.gmra.mrb[0].mxu0 %v5917
        %v6263 = vpop.f32.mrb[0].mxu0
        %v6264 = vadd.f32 0.0, %v6263
        %v6265 = vpop.f32.mrb[0].mxu0
        %v6266 = vadd.f32 0.0, %v6265
        %6267 = vdwg.mxu0
        %6268 = vmatprep.subr.mxu0 %v5938
        %6269 = vmatpush1.msra.mxu0 %v5936
        %6270 = vmatprep.subr.mxu0 0.0
        %6271 = vmatpush1.msra.mxu0 0.0
        %6272 = vmatprep.subr.mxu0 0.0
        %6273 = vmatpush1.msra.mxu0 0.0
        %6274 = vmatprep.subr.mxu0 0.0
        %6275 = vmatpush1.msra.mxu0 0.0
        %6276 = vmatprep.subr.mxu0 0.0
        %6277 = vmatpush1.msra.mxu0 0.0
        %6278 = vmatprep.subr.mxu0 0.0
        %6279 = vmatpush1.msra.mxu0 0.0
        %6280 = vmatprep.subr.mxu0 0.0
        %6281 = vmatpush1.msra.mxu0 0.0
        %6282 = vmatprep.subr.mxu0 0.0
        %6283 = vmatpush1.msra.mxu0 0.0
        %6284 = vmatprep.subr.mxu0 0.0
        %6285 = vmatpush1.msra.mxu0 0.0
        %6286 = vmatprep.subr.mxu0 0.0
        %6287 = vmatpush1.msra.mxu0 0.0
        %6288 = vmatprep.subr.mxu0 0.0
        %6289 = vmatpush1.msra.mxu0 0.0
        %6290 = vmatprep.subr.mxu0 0.0
        %6291 = vmatpush1.msra.mxu0 0.0
        %6292 = vmatprep.subr.mxu0 0.0
        %6293 = vmatpush1.msra.mxu0 0.0
        %6294 = vmatprep.subr.mxu0 0.0
        %6295 = vmatpush1.msra.mxu0 0.0
        %6296 = vmatprep.subr.mxu0 0.0
        %6297 = vmatpush1.msra.mxu0 0.0
        %6298 = vmatprep.subr.mxu0 0.0
        %6299 = vmatpush1.msra.mxu0 0.0
        %6300 = vmatprep.subr.mxu0 0.0
        %6301 = vmatpush1.msra.mxu0 0.0
        %6302 = vmatprep.subr.mxu0 0.0
        %6303 = vmatpush1.msra.mxu0 0.0
        %6304 = vmatprep.subr.mxu0 0.0
        %6305 = vmatpush1.msra.mxu0 0.0
        %6306 = vmatprep.subr.mxu0 0.0
        %6307 = vmatpush1.msra.mxu0 0.0
        %6308 = vmatprep.subr.mxu0 0.0
        %6309 = vmatpush1.msra.mxu0 0.0
        %6310 = vmatprep.subr.mxu0 0.0
        %6311 = vmatpush1.msra.mxu0 0.0
        %6312 = vmatprep.subr.mxu0 0.0
        %6313 = vmatpush1.msra.mxu0 0.0
        %6314 = vmatprep.subr.mxu0 0.0
        %6315 = vmatpush1.msra.mxu0 0.0
        %6316 = vmatprep.subr.mxu0 0.0
        %6317 = vmatpush1.msra.mxu0 0.0
        %6318 = vmatprep.subr.mxu0 0.0
        %6319 = vmatpush1.msra.mxu0 0.0
        %6320 = vmatprep.subr.mxu0 0.0
        %6321 = vmatpush1.msra.mxu0 0.0
        %6322 = vmatprep.subr.mxu0 0.0
        %6323 = vmatpush1.msra.mxu0 0.0
        %6324 = vmatprep.subr.mxu0 0.0
        %6325 = vmatpush1.msra.mxu0 0.0
        %6326 = vmatprep.subr.mxu0 0.0
        %6327 = vmatpush1.msra.mxu0 0.0
        %6328 = vmatprep.subr.mxu0 0.0
        %6329 = vmatpush1.msra.mxu0 0.0
        %6330 = vmatprep.subr.mxu0 0.0
        %6331 = vmatpush1.msra.mxu0 0.0
        %6332 = vmatprep.mubr.f32.mxu0 0.0
        %6333 = vmatmul.mubr.f32.gmra.mrb[0].mxu0 %v5917
        %v6334 = vpop.f32.mrb[0].mxu0
        %v6335 = vadd.f32 0.0, %v6334
        %v6336 = vpop.f32.mrb[0].mxu0
        %v6337 = vadd.f32 0.0, %v6336
        %6338 = vdwg.mxu0
        %6339 = vmatprep.subr.mxu0 %v5942
        %6340 = vmatpush1.msra.mxu0 %v5940
        %6341 = vmatprep.subr.mxu0 0.0
        %6342 = vmatpush1.msra.mxu0 0.0
        %6343 = vmatprep.subr.mxu0 0.0
        %6344 = vmatpush1.msra.mxu0 0.0
        %6345 = vmatprep.subr.mxu0 0.0
        %6346 = vmatpush1.msra.mxu0 0.0
        %6347 = vmatprep.subr.mxu0 0.0
        %6348 = vmatpush1.msra.mxu0 0.0
        %6349 = vmatprep.subr.mxu0 0.0
        %6350 = vmatpush1.msra.mxu0 0.0
        %6351 = vmatprep.subr.mxu0 0.0
        %6352 = vmatpush1.msra.mxu0 0.0
        %6353 = vmatprep.subr.mxu0 0.0
        %6354 = vmatpush1.msra.mxu0 0.0
        %6355 = vmatprep.subr.mxu0 0.0
        %6356 = vmatpush1.msra.mxu0 0.0
        %6357 = vmatprep.subr.mxu0 0.0
        %6358 = vmatpush1.msra.mxu0 0.0
        %6359 = vmatprep.subr.mxu0 0.0
        %6360 = vmatpush1.msra.mxu0 0.0
        %6361 = vmatprep.subr.mxu0 0.0
        %6362 = vmatpush1.msra.mxu0 0.0
        %6363 = vmatprep.subr.mxu0 0.0
        %6364 = vmatpush1.msra.mxu0 0.0
        %6365 = vmatprep.subr.mxu0 0.0
        %6366 = vmatpush1.msra.mxu0 0.0
        %6367 = vmatprep.subr.mxu0 0.0
        %6368 = vmatpush1.msra.mxu0 0.0
        %6369 = vmatprep.subr.mxu0 0.0
        %6370 = vmatpush1.msra.mxu0 0.0
        %6371 = vmatprep.subr.mxu0 0.0
        %6372 = vmatpush1.msra.mxu0 0.0
        %6373 = vmatprep.subr.mxu0 0.0
        %6374 = vmatpush1.msra.mxu0 0.0
        %6375 = vmatprep.subr.mxu0 0.0
        %6376 = vmatpush1.msra.mxu0 0.0
        %6377 = vmatprep.subr.mxu0 0.0
        %6378 = vmatpush1.msra.mxu0 0.0
        %6379 = vmatprep.subr.mxu0 0.0
        %6380 = vmatpush1.msra.mxu0 0.0
        %6381 = vmatprep.subr.mxu0 0.0
        %6382 = vmatpush1.msra.mxu0 0.0
        %6383 = vmatprep.subr.mxu0 0.0
        %6384 = vmatpush1.msra.mxu0 0.0
        %6385 = vmatprep.subr.mxu0 0.0
        %6386 = vmatpush1.msra.mxu0 0.0
        %6387 = vmatprep.subr.mxu0 0.0
        %6388 = vmatpush1.msra.mxu0 0.0
        %6389 = vmatprep.subr.mxu0 0.0
        %6390 = vmatpush1.msra.mxu0 0.0
        %6391 = vmatprep.subr.mxu0 0.0
        %6392 = vmatpush1.msra.mxu0 0.0
        %6393 = vmatprep.subr.mxu0 0.0
        %6394 = vmatpush1.msra.mxu0 0.0
        %6395 = vmatprep.subr.mxu0 0.0
        %6396 = vmatpush1.msra.mxu0 0.0
        %6397 = vmatprep.subr.mxu0 0.0
        %6398 = vmatpush1.msra.mxu0 0.0
        %6399 = vmatprep.subr.mxu0 0.0
        %6400 = vmatpush1.msra.mxu0 0.0
        %6401 = vmatprep.subr.mxu0 0.0
        %6402 = vmatpush1.msra.mxu0 0.0
        %6403 = vmatprep.mubr.f32.mxu0 0.0
        %6404 = vmatmul.mubr.f32.gmra.mrb[0].mxu0 %v5917
        %v6405 = vpop.f32.mrb[0].mxu0
        %v6406 = vadd.f32 0.0, %v6405
        %v6407 = vpop.f32.mrb[0].mxu0
        %v6408 = vadd.f32 0.0, %v6407
        %6409 = vdwg.mxu0
        %6410 = vmatprep.subr.mxu0 %v5946
        %6411 = vmatpush1.msra.mxu0 %v5944
        %6412 = vmatprep.subr.mxu0 0.0
        %6413 = vmatpush1.msra.mxu0 0.0
        %6414 = vmatprep.subr.mxu0 0.0
        %6415 = vmatpush1.msra.mxu0 0.0
        %6416 = vmatprep.subr.mxu0 0.0
        %6417 = vmatpush1.msra.mxu0 0.0
        %6418 = vmatprep.subr.mxu0 0.0
        %6419 = vmatpush1.msra.mxu0 0.0
        %6420 = vmatprep.subr.mxu0 0.0
        %6421 = vmatpush1.msra.mxu0 0.0
        %6422 = vmatprep.subr.mxu0 0.0
        %6423 = vmatpush1.msra.mxu0 0.0
        %6424 = vmatprep.subr.mxu0 0.0
        %6425 = vmatpush1.msra.mxu0 0.0
        %6426 = vmatprep.subr.mxu0 0.0
        %6427 = vmatpush1.msra.mxu0 0.0
        %6428 = vmatprep.subr.mxu0 0.0
        %6429 = vmatpush1.msra.mxu0 0.0
        %6430 = vmatprep.subr.mxu0 0.0
        %6431 = vmatpush1.msra.mxu0 0.0
        %6432 = vmatprep.subr.mxu0 0.0
        %6433 = vmatpush1.msra.mxu0 0.0
        %6434 = vmatprep.subr.mxu0 0.0
        %6435 = vmatpush1.msra.mxu0 0.0
        %6436 = vmatprep.subr.mxu0 0.0
        %6437 = vmatpush1.msra.mxu0 0.0
        %6438 = vmatprep.subr.mxu0 0.0
        %6439 = vmatpush1.msra.mxu0 0.0
        %6440 = vmatprep.subr.mxu0 0.0
        %6441 = vmatpush1.msra.mxu0 0.0
        %6442 = vmatprep.subr.mxu0 0.0
        %6443 = vmatpush1.msra.mxu0 0.0
        %6444 = vmatprep.subr.mxu0 0.0
        %6445 = vmatpush1.msra.mxu0 0.0
        %6446 = vmatprep.subr.mxu0 0.0
        %6447 = vmatpush1.msra.mxu0 0.0
        %6448 = vmatprep.subr.mxu0 0.0
        %6449 = vmatpush1.msra.mxu0 0.0
        %6450 = vmatprep.subr.mxu0 0.0
        %6451 = vmatpush1.msra.mxu0 0.0
        %6452 = vmatprep.subr.mxu0 0.0
        %6453 = vmatpush1.msra.mxu0 0.0
        %6454 = vmatprep.subr.mxu0 0.0
        %6455 = vmatpush1.msra.mxu0 0.0
        %6456 = vmatprep.subr.mxu0 0.0
        %6457 = vmatpush1.msra.mxu0 0.0
        %6458 = vmatprep.subr.mxu0 0.0
        %6459 = vmatpush1.msra.mxu0 0.0
        %6460 = vmatprep.subr.mxu0 0.0
        %6461 = vmatpush1.msra.mxu0 0.0
        %6462 = vmatprep.subr.mxu0 0.0
        %6463 = vmatpush1.msra.mxu0 0.0
        %6464 = vmatprep.subr.mxu0 0.0
        %6465 = vmatpush1.msra.mxu0 0.0
        %6466 = vmatprep.subr.mxu0 0.0
        %6467 = vmatpush1.msra.mxu0 0.0
        %6468 = vmatprep.subr.mxu0 0.0
        %6469 = vmatpush1.msra.mxu0 0.0
        %6470 = vmatprep.subr.mxu0 0.0
        %6471 = vmatpush1.msra.mxu0 0.0
        %6472 = vmatprep.subr.mxu0 0.0
        %6473 = vmatpush1.msra.mxu0 0.0
        %6474 = vmatprep.mubr.f32.mxu0 0.0
        %6475 = vmatmul.mubr.f32.gmra.mrb[0].mxu0 %v5917
        %v6476 = vpop.f32.mrb[0].mxu0
        %v6477 = vadd.f32 0.0, %v6476
        %v6478 = vpop.f32.mrb[0].mxu0
        %v6479 = vadd.f32 0.0, %v6478
        %6480 = vdwg.mxu0
        %6481 = vmatprep.subr.mxu0 %v5950
        %6482 = vmatpush1.msra.mxu0 %v5948
        %6483 = vmatprep.subr.mxu0 0.0
        %6484 = vmatpush1.msra.mxu0 0.0
        %6485 = vmatprep.subr.mxu0 0.0
        %6486 = vmatpush1.msra.mxu0 0.0
        %6487 = vmatprep.subr.mxu0 0.0
        %6488 = vmatpush1.msra.mxu0 0.0
        %6489 = vmatprep.subr.mxu0 0.0
        %6490 = vmatpush1.msra.mxu0 0.0
        %6491 = vmatprep.subr.mxu0 0.0
        %6492 = vmatpush1.msra.mxu0 0.0
        %6493 = vmatprep.subr.mxu0 0.0
        %6494 = vmatpush1.msra.mxu0 0.0
        %6495 = vmatprep.subr.mxu0 0.0
        %6496 = vmatpush1.msra.mxu0 0.0
        %6497 = vmatprep.subr.mxu0 0.0
        %6498 = vmatpush1.msra.mxu0 0.0
        %6499 = vmatprep.subr.mxu0 0.0
        %6500 = vmatpush1.msra.mxu0 0.0
        %6501 = vmatprep.subr.mxu0 0.0
        %6502 = vmatpush1.msra.mxu0 0.0
        %6503 = vmatprep.subr.mxu0 0.0
        %6504 = vmatpush1.msra.mxu0 0.0
        %6505 = vmatprep.subr.mxu0 0.0
        %6506 = vmatpush1.msra.mxu0 0.0
        %6507 = vmatprep.subr.mxu0 0.0
        %6508 = vmatpush1.msra.mxu0 0.0
        %6509 = vmatprep.subr.mxu0 0.0
        %6510 = vmatpush1.msra.mxu0 0.0
        %6511 = vmatprep.subr.mxu0 0.0
        %6512 = vmatpush1.msra.mxu0 0.0
        %6513 = vmatprep.subr.mxu0 0.0
        %6514 = vmatpush1.msra.mxu0 0.0
        %6515 = vmatprep.subr.mxu0 0.0
        %6516 = vmatpush1.msra.mxu0 0.0
        %6517 = vmatprep.subr.mxu0 0.0
        %6518 = vmatpush1.msra.mxu0 0.0
        %6519 = vmatprep.subr.mxu0 0.0
        %6520 = vmatpush1.msra.mxu0 0.0
        %6521 = vmatprep.subr.mxu0 0.0
        %6522 = vmatpush1.msra.mxu0 0.0
        %6523 = vmatprep.subr.mxu0 0.0
        %6524 = vmatpush1.msra.mxu0 0.0
        %6525 = vmatprep.subr.mxu0 0.0
        %6526 = vmatpush1.msra.mxu0 0.0
        %6527 = vmatprep.subr.mxu0 0.0
        %6528 = vmatpush1.msra.mxu0 0.0
        %6529 = vmatprep.subr.mxu0 0.0
        %6530 = vmatpush1.msra.mxu0 0.0
        %6531 = vmatprep.subr.mxu0 0.0
        %6532 = vmatpush1.msra.mxu0 0.0
        %6533 = vmatprep.subr.mxu0 0.0
        %6534 = vmatpush1.msra.mxu0 0.0
        %6535 = vmatprep.subr.mxu0 0.0
        %6536 = vmatpush1.msra.mxu0 0.0
        %6537 = vmatprep.subr.mxu0 0.0
        %6538 = vmatpush1.msra.mxu0 0.0
        %6539 = vmatprep.subr.mxu0 0.0
        %6540 = vmatpush1.msra.mxu0 0.0
        %6541 = vmatprep.subr.mxu0 0.0
        %6542 = vmatpush1.msra.mxu0 0.0
        %6543 = vmatprep.subr.mxu0 0.0
        %6544 = vmatpush1.msra.mxu0 0.0
        %6545 = vmatprep.mubr.f32.mxu0 0.0
        %6546 = vmatmul.mubr.f32.gmra.mrb[0].mxu0 %v5917
        %v6547 = vpop.f32.mrb[0].mxu0
        %v6548 = vadd.f32 0.0, %v6547
        %v6549 = vpop.f32.mrb[0].mxu0
        %v6550 = vadd.f32 0.0, %v6549
        %6551 = vdwg.mxu0
        %6552 = vmatprep.subr.mxu0 %v5954
        %6553 = vmatpush1.msra.mxu0 %v5952
        %6554 = vmatprep.subr.mxu0 0.0
        %6555 = vmatpush1.msra.mxu0 0.0
        %6556 = vmatprep.subr.mxu0 0.0
        %6557 = vmatpush1.msra.mxu0 0.0
        %6558 = vmatprep.subr.mxu0 0.0
        %6559 = vmatpush1.msra.mxu0 0.0
        %6560 = vmatprep.subr.mxu0 0.0
        %6561 = vmatpush1.msra.mxu0 0.0
        %6562 = vmatprep.subr.mxu0 0.0
        %6563 = vmatpush1.msra.mxu0 0.0
        %6564 = vmatprep.subr.mxu0 0.0
        %6565 = vmatpush1.msra.mxu0 0.0
        %6566 = vmatprep.subr.mxu0 0.0
        %6567 = vmatpush1.msra.mxu0 0.0
        %6568 = vmatprep.subr.mxu0 0.0
        %6569 = vmatpush1.msra.mxu0 0.0
        %6570 = vmatprep.subr.mxu0 0.0
        %6571 = vmatpush1.msra.mxu0 0.0
        %6572 = vmatprep.subr.mxu0 0.0
        %6573 = vmatpush1.msra.mxu0 0.0
        %6574 = vmatprep.subr.mxu0 0.0
        %6575 = vmatpush1.msra.mxu0 0.0
        %6576 = vmatprep.subr.mxu0 0.0
        %6577 = vmatpush1.msra.mxu0 0.0
        %6578 = vmatprep.subr.mxu0 0.0
        %6579 = vmatpush1.msra.mxu0 0.0
        %6580 = vmatprep.subr.mxu0 0.0
        %6581 = vmatpush1.msra.mxu0 0.0
        %6582 = vmatprep.subr.mxu0 0.0
        %6583 = vmatpush1.msra.mxu0 0.0
        %6584 = vmatprep.subr.mxu0 0.0
        %6585 = vmatpush1.msra.mxu0 0.0
        %6586 = vmatprep.subr.mxu0 0.0
        %6587 = vmatpush1.msra.mxu0 0.0
        %6588 = vmatprep.subr.mxu0 0.0
        %6589 = vmatpush1.msra.mxu0 0.0
        %6590 = vmatprep.subr.mxu0 0.0
        %6591 = vmatpush1.msra.mxu0 0.0
        %6592 = vmatprep.subr.mxu0 0.0
        %6593 = vmatpush1.msra.mxu0 0.0
        %6594 = vmatprep.subr.mxu0 0.0
        %6595 = vmatpush1.msra.mxu0 0.0
        %6596 = vmatprep.subr.mxu0 0.0
        %6597 = vmatpush1.msra.mxu0 0.0
        %6598 = vmatprep.subr.mxu0 0.0
        %6599 = vmatpush1.msra.mxu0 0.0
        %6600 = vmatprep.subr.mxu0 0.0
        %6601 = vmatpush1.msra.mxu0 0.0
        %6602 = vmatprep.subr.mxu0 0.0
        %6603 = vmatpush1.msra.mxu0 0.0
        %6604 = vmatprep.subr.mxu0 0.0
        %6605 = vmatpush1.msra.mxu0 0.0
        %6606 = vmatprep.subr.mxu0 0.0
        %6607 = vmatpush1.msra.mxu0 0.0
        %6608 = vmatprep.subr.mxu0 0.0
        %6609 = vmatpush1.msra.mxu0 0.0
        %6610 = vmatprep.subr.mxu0 0.0
        %6611 = vmatpush1.msra.mxu0 0.0
        %6612 = vmatprep.subr.mxu0 0.0
        %6613 = vmatpush1.msra.mxu0 0.0
        %6614 = vmatprep.subr.mxu0 0.0
        %6615 = vmatpush1.msra.mxu0 0.0
        %6616 = vmatprep.mubr.f32.mxu0 0.0
        %6617 = vmatmul.mubr.f32.gmra.mrb[0].mxu0 %v5917
        %v6618 = vpop.f32.mrb[0].mxu0
        %v6619 = vadd.f32 0.0, %v6618
        %v6620 = vpop.f32.mrb[0].mxu0
        %v6621 = vadd.f32 0.0, %v6620
        %6622 = vdwg.mxu0
        %6623 = vmatprep.subr.mxu0 %v5958
        %6624 = vmatpush1.msra.mxu0 %v5956
        %6625 = vmatprep.subr.mxu0 0.0
        %6626 = vmatpush1.msra.mxu0 0.0
        %6627 = vmatprep.subr.mxu0 0.0
        %6628 = vmatpush1.msra.mxu0 0.0
        %6629 = vmatprep.subr.mxu0 0.0
        %6630 = vmatpush1.msra.mxu0 0.0
        %6631 = vmatprep.subr.mxu0 0.0
        %6632 = vmatpush1.msra.mxu0 0.0
        %6633 = vmatprep.subr.mxu0 0.0
        %6634 = vmatpush1.msra.mxu0 0.0
        %6635 = vmatprep.subr.mxu0 0.0
        %6636 = vmatpush1.msra.mxu0 0.0
        %6637 = vmatprep.subr.mxu0 0.0
        %6638 = vmatpush1.msra.mxu0 0.0
        %6639 = vmatprep.subr.mxu0 0.0
        %6640 = vmatpush1.msra.mxu0 0.0
        %6641 = vmatprep.subr.mxu0 0.0
        %6642 = vmatpush1.msra.mxu0 0.0
        %6643 = vmatprep.subr.mxu0 0.0
        %6644 = vmatpush1.msra.mxu0 0.0
        %6645 = vmatprep.subr.mxu0 0.0
        %6646 = vmatpush1.msra.mxu0 0.0
        %6647 = vmatprep.subr.mxu0 0.0
        %6648 = vmatpush1.msra.mxu0 0.0
        %6649 = vmatprep.subr.mxu0 0.0
        %6650 = vmatpush1.msra.mxu0 0.0
        %6651 = vmatprep.subr.mxu0 0.0
        %6652 = vmatpush1.msra.mxu0 0.0
        %6653 = vmatprep.subr.mxu0 0.0
        %6654 = vmatpush1.msra.mxu0 0.0
        %6655 = vmatprep.subr.mxu0 0.0
        %6656 = vmatpush1.msra.mxu0 0.0
        %6657 = vmatprep.subr.mxu0 0.0
        %6658 = vmatpush1.msra.mxu0 0.0
        %6659 = vmatprep.subr.mxu0 0.0
        %6660 = vmatpush1.msra.mxu0 0.0
        %6661 = vmatprep.subr.mxu0 0.0
        %6662 = vmatpush1.msra.mxu0 0.0
        %6663 = vmatprep.subr.mxu0 0.0
        %6664 = vmatpush1.msra.mxu0 0.0
        %6665 = vmatprep.subr.mxu0 0.0
        %6666 = vmatpush1.msra.mxu0 0.0
        %6667 = vmatprep.subr.mxu0 0.0
        %6668 = vmatpush1.msra.mxu0 0.0
        %6669 = vmatprep.subr.mxu0 0.0
        %6670 = vmatpush1.msra.mxu0 0.0
        %6671 = vmatprep.subr.mxu0 0.0
        %6672 = vmatpush1.msra.mxu0 0.0
        %6673 = vmatprep.subr.mxu0 0.0
        %6674 = vmatpush1.msra.mxu0 0.0
        %6675 = vmatprep.subr.mxu0 0.0
        %6676 = vmatpush1.msra.mxu0 0.0
        %6677 = vmatprep.subr.mxu0 0.0
        %6678 = vmatpush1.msra.mxu0 0.0
        %6679 = vmatprep.subr.mxu0 0.0
        %6680 = vmatpush1.msra.mxu0 0.0
        %6681 = vmatprep.subr.mxu0 0.0
        %6682 = vmatpush1.msra.mxu0 0.0
        %6683 = vmatprep.subr.mxu0 0.0
        %6684 = vmatpush1.msra.mxu0 0.0
        %6685 = vmatprep.subr.mxu0 0.0
        %6686 = vmatpush1.msra.mxu0 0.0
        %6687 = vmatprep.mubr.f32.mxu0 0.0
        %6688 = vmatmul.mubr.f32.gmra.mrb[0].mxu0 %v5917
        %v6689 = vpop.f32.mrb[0].mxu0
        %v6690 = vadd.f32 0.0, %v6689
        %v6691 = vpop.f32.mrb[0].mxu0
        %v6692 = vadd.f32 0.0, %v6691
        %6693 = vdwg.mxu0
        %6694 = vmatprep.subr.mxu0 %v5962
        %6695 = vmatpush1.msra.mxu0 %v5960
        %6696 = vmatprep.subr.mxu0 0.0
        %6697 = vmatpush1.msra.mxu0 0.0
        %6698 = vmatprep.subr.mxu0 0.0
        %6699 = vmatpush1.msra.mxu0 0.0
        %6700 = vmatprep.subr.mxu0 0.0
        %6701 = vmatpush1.msra.mxu0 0.0
        %6702 = vmatprep.subr.mxu0 0.0
        %6703 = vmatpush1.msra.mxu0 0.0
        %6704 = vmatprep.subr.mxu0 0.0
        %6705 = vmatpush1.msra.mxu0 0.0
        %6706 = vmatprep.subr.mxu0 0.0
        %6707 = vmatpush1.msra.mxu0 0.0
        %6708 = vmatprep.subr.mxu0 0.0
        %6709 = vmatpush1.msra.mxu0 0.0
        %6710 = vmatprep.subr.mxu0 0.0
        %6711 = vmatpush1.msra.mxu0 0.0
        %6712 = vmatprep.subr.mxu0 0.0
        %6713 = vmatpush1.msra.mxu0 0.0
        %6714 = vmatprep.subr.mxu0 0.0
        %6715 = vmatpush1.msra.mxu0 0.0
        %6716 = vmatprep.subr.mxu0 0.0
        %6717 = vmatpush1.msra.mxu0 0.0
        %6718 = vmatprep.subr.mxu0 0.0
        %6719 = vmatpush1.msra.mxu0 0.0
        %6720 = vmatprep.subr.mxu0 0.0
        %6721 = vmatpush1.msra.mxu0 0.0
        %6722 = vmatprep.subr.mxu0 0.0
        %6723 = vmatpush1.msra.mxu0 0.0
        %6724 = vmatprep.subr.mxu0 0.0
        %6725 = vmatpush1.msra.mxu0 0.0
        %6726 = vmatprep.subr.mxu0 0.0
        %6727 = vmatpush1.msra.mxu0 0.0
        %6728 = vmatprep.subr.mxu0 0.0
        %6729 = vmatpush1.msra.mxu0 0.0
        %6730 = vmatprep.subr.mxu0 0.0
        %6731 = vmatpush1.msra.mxu0 0.0
        %6732 = vmatprep.subr.mxu0 0.0
        %6733 = vmatpush1.msra.mxu0 0.0
        %6734 = vmatprep.subr.mxu0 0.0
        %6735 = vmatpush1.msra.mxu0 0.0
        %6736 = vmatprep.subr.mxu0 0.0
        %6737 = vmatpush1.msra.mxu0 0.0
        %6738 = vmatprep.subr.mxu0 0.0
        %6739 = vmatpush1.msra.mxu0 0.0
        %6740 = vmatprep.subr.mxu0 0.0
        %6741 = vmatpush1.msra.mxu0 0.0
        %6742 = vmatprep.subr.mxu0 0.0
        %6743 = vmatpush1.msra.mxu0 0.0
        %6744 = vmatprep.subr.mxu0 0.0
        %6745 = vmatpush1.msra.mxu0 0.0
        %6746 = vmatprep.subr.mxu0 0.0
        %6747 = vmatpush1.msra.mxu0 0.0
        %6748 = vmatprep.subr.mxu0 0.0
        %6749 = vmatpush1.msra.mxu0 0.0
        %6750 = vmatprep.subr.mxu0 0.0
        %6751 = vmatpush1.msra.mxu0 0.0
        %6752 = vmatprep.subr.mxu0 0.0
        %6753 = vmatpush1.msra.mxu0 0.0
        %6754 = vmatprep.subr.mxu0 0.0
        %6755 = vmatpush1.msra.mxu0 0.0
        %6756 = vmatprep.subr.mxu0 0.0
        %6757 = vmatpush1.msra.mxu0 0.0
        %6758 = vmatprep.mubr.f32.mxu0 0.0
        %6759 = vmatmul.mubr.f32.gmra.mrb[0].mxu0 %v5917
        %v6760 = vpop.f32.mrb[0].mxu0
        %v6761 = vadd.f32 0.0, %v6760
        %v6762 = vpop.f32.mrb[0].mxu0
        %v6763 = vadd.f32 0.0, %v6762
        %6764 = vdwg.mxu0
        %6765 = vmatprep.subr.mxu0 %v5966
        %6766 = vmatpush1.msra.mxu0 %v5964
        %6767 = vmatprep.subr.mxu0 0.0
        %6768 = vmatpush1.msra.mxu0 0.0
        %6769 = vmatprep.subr.mxu0 0.0
        %6770 = vmatpush1.msra.mxu0 0.0
        %6771 = vmatprep.subr.mxu0 0.0
        %6772 = vmatpush1.msra.mxu0 0.0
        %6773 = vmatprep.subr.mxu0 0.0
        %6774 = vmatpush1.msra.mxu0 0.0
        %6775 = vmatprep.subr.mxu0 0.0
        %6776 = vmatpush1.msra.mxu0 0.0
        %6777 = vmatprep.subr.mxu0 0.0
        %6778 = vmatpush1.msra.mxu0 0.0
        %6779 = vmatprep.subr.mxu0 0.0
        %6780 = vmatpush1.msra.mxu0 0.0
        %6781 = vmatprep.subr.mxu0 0.0
        %6782 = vmatpush1.msra.mxu0 0.0
        %6783 = vmatprep.subr.mxu0 0.0
        %6784 = vmatpush1.msra.mxu0 0.0
        %6785 = vmatprep.subr.mxu0 0.0
        %6786 = vmatpush1.msra.mxu0 0.0
        %6787 = vmatprep.subr.mxu0 0.0
        %6788 = vmatpush1.msra.mxu0 0.0
        %6789 = vmatprep.subr.mxu0 0.0
        %6790 = vmatpush1.msra.mxu0 0.0
        %6791 = vmatprep.subr.mxu0 0.0
        %6792 = vmatpush1.msra.mxu0 0.0
        %6793 = vmatprep.subr.mxu0 0.0
        %6794 = vmatpush1.msra.mxu0 0.0
        %6795 = vmatprep.subr.mxu0 0.0
        %6796 = vmatpush1.msra.mxu0 0.0
        %6797 = vmatprep.subr.mxu0 0.0
        %6798 = vmatpush1.msra.mxu0 0.0
        %6799 = vmatprep.subr.mxu0 0.0
        %6800 = vmatpush1.msra.mxu0 0.0
        %6801 = vmatprep.subr.mxu0 0.0
        %6802 = vmatpush1.msra.mxu0 0.0
        %6803 = vmatprep.subr.mxu0 0.0
        %6804 = vmatpush1.msra.mxu0 0.0
        %6805 = vmatprep.subr.mxu0 0.0
        %6806 = vmatpush1.msra.mxu0 0.0
        %6807 = vmatprep.subr.mxu0 0.0
        %6808 = vmatpush1.msra.mxu0 0.0
        %6809 = vmatprep.subr.mxu0 0.0
        %6810 = vmatpush1.msra.mxu0 0.0
        %6811 = vmatprep.subr.mxu0 0.0
        %6812 = vmatpush1.msra.mxu0 0.0
        %6813 = vmatprep.subr.mxu0 0.0
        %6814 = vmatpush1.msra.mxu0 0.0
        %6815 = vmatprep.subr.mxu0 0.0
        %6816 = vmatpush1.msra.mxu0 0.0
        %6817 = vmatprep.subr.mxu0 0.0
        %6818 = vmatpush1.msra.mxu0 0.0
        %6819 = vmatprep.subr.mxu0 0.0
        %6820 = vmatpush1.msra.mxu0 0.0
        %6821 = vmatprep.subr.mxu0 0.0
        %6822 = vmatpush1.msra.mxu0 0.0
        %6823 = vmatprep.subr.mxu0 0.0
        %6824 = vmatpush1.msra.mxu0 0.0
        %6825 = vmatprep.subr.mxu0 0.0
        %6826 = vmatpush1.msra.mxu0 0.0
        %6827 = vmatprep.subr.mxu0 0.0
        %6828 = vmatpush1.msra.mxu0 0.0
        %6829 = vmatprep.mubr.f32.mxu0 0.0
        %6830 = vmatmul.mubr.f32.gmra.mrb[0].mxu0 %v5917
        %v6831 = vpop.f32.mrb[0].mxu0
        %v6832 = vadd.f32 0.0, %v6831
        %v6833 = vpop.f32.mrb[0].mxu0
        %v6834 = vadd.f32 0.0, %v6833
        %6835 = vdwg.mxu0
        %6836 = vmatprep.subr.mxu0 %v5970
        %6837 = vmatpush1.msra.mxu0 %v5968
        %6838 = vmatprep.subr.mxu0 0.0
        %6839 = vmatpush1.msra.mxu0 0.0
        %6840 = vmatprep.subr.mxu0 0.0
        %6841 = vmatpush1.msra.mxu0 0.0
        %6842 = vmatprep.subr.mxu0 0.0
        %6843 = vmatpush1.msra.mxu0 0.0
        %6844 = vmatprep.subr.mxu0 0.0
        %6845 = vmatpush1.msra.mxu0 0.0
        %6846 = vmatprep.subr.mxu0 0.0
        %6847 = vmatpush1.msra.mxu0 0.0
        %6848 = vmatprep.subr.mxu0 0.0
        %6849 = vmatpush1.msra.mxu0 0.0
        %6850 = vmatprep.subr.mxu0 0.0
        %6851 = vmatpush1.msra.mxu0 0.0
        %6852 = vmatprep.subr.mxu0 0.0
        %6853 = vmatpush1.msra.mxu0 0.0
        %6854 = vmatprep.subr.mxu0 0.0
        %6855 = vmatpush1.msra.mxu0 0.0
        %6856 = vmatprep.subr.mxu0 0.0
        %6857 = vmatpush1.msra.mxu0 0.0
        %6858 = vmatprep.subr.mxu0 0.0
        %6859 = vmatpush1.msra.mxu0 0.0
        %6860 = vmatprep.subr.mxu0 0.0
        %6861 = vmatpush1.msra.mxu0 0.0
        %6862 = vmatprep.subr.mxu0 0.0
        %6863 = vmatpush1.msra.mxu0 0.0
        %6864 = vmatprep.subr.mxu0 0.0
        %6865 = vmatpush1.msra.mxu0 0.0
        %6866 = vmatprep.subr.mxu0 0.0
        %6867 = vmatpush1.msra.mxu0 0.0
        %6868 = vmatprep.subr.mxu0 0.0
        %6869 = vmatpush1.msra.mxu0 0.0
        %6870 = vmatprep.subr.mxu0 0.0
        %6871 = vmatpush1.msra.mxu0 0.0
        %6872 = vmatprep.subr.mxu0 0.0
        %6873 = vmatpush1.msra.mxu0 0.0
        %6874 = vmatprep.subr.mxu0 0.0
        %6875 = vmatpush1.msra.mxu0 0.0
        %6876 = vmatprep.subr.mxu0 0.0
        %6877 = vmatpush1.msra.mxu0 0.0
        %6878 = vmatprep.subr.mxu0 0.0
        %6879 = vmatpush1.msra.mxu0 0.0
        %6880 = vmatprep.subr.mxu0 0.0
        %6881 = vmatpush1.msra.mxu0 0.0
        %6882 = vmatprep.subr.mxu0 0.0
        %6883 = vmatpush1.msra.mxu0 0.0
        %6884 = vmatprep.subr.mxu0 0.0
        %6885 = vmatpush1.msra.mxu0 0.0
        %6886 = vmatprep.subr.mxu0 0.0
        %6887 = vmatpush1.msra.mxu0 0.0
        %6888 = vmatprep.subr.mxu0 0.0
        %6889 = vmatpush1.msra.mxu0 0.0
        %6890 = vmatprep.subr.mxu0 0.0
        %6891 = vmatpush1.msra.mxu0 0.0
        %6892 = vmatprep.subr.mxu0 0.0
        %6893 = vmatpush1.msra.mxu0 0.0
        %6894 = vmatprep.subr.mxu0 0.0
        %6895 = vmatpush1.msra.mxu0 0.0
        %6896 = vmatprep.subr.mxu0 0.0
        %6897 = vmatpush1.msra.mxu0 0.0
        %6898 = vmatprep.subr.mxu0 0.0
        %6899 = vmatpush1.msra.mxu0 0.0
        %6900 = vmatprep.mubr.f32.mxu0 0.0
        %6901 = vmatmul.mubr.f32.gmra.mrb[0].mxu0 %v5917
        %v6902 = vpop.f32.mrb[0].mxu0
        %v6903 = vadd.f32 0.0, %v6902
        %v6904 = vpop.f32.mrb[0].mxu0
        %v6905 = vadd.f32 0.0, %v6904
        %6906 = vdwg.mxu0
        %6907 = vmatprep.subr.mxu0 %v5974
        %6908 = vmatpush1.msra.mxu0 %v5972
        %6909 = vmatprep.subr.mxu0 0.0
        %6910 = vmatpush1.msra.mxu0 0.0
        %6911 = vmatprep.subr.mxu0 0.0
        %6912 = vmatpush1.msra.mxu0 0.0
        %6913 = vmatprep.subr.mxu0 0.0
        %6914 = vmatpush1.msra.mxu0 0.0
        %6915 = vmatprep.subr.mxu0 0.0
        %6916 = vmatpush1.msra.mxu0 0.0
        %6917 = vmatprep.subr.mxu0 0.0
        %6918 = vmatpush1.msra.mxu0 0.0
        %6919 = vmatprep.subr.mxu0 0.0
        %6920 = vmatpush1.msra.mxu0 0.0
        %6921 = vmatprep.subr.mxu0 0.0
        %6922 = vmatpush1.msra.mxu0 0.0
        %6923 = vmatprep.subr.mxu0 0.0
        %6924 = vmatpush1.msra.mxu0 0.0
        %6925 = vmatprep.subr.mxu0 0.0
        %6926 = vmatpush1.msra.mxu0 0.0
        %6927 = vmatprep.subr.mxu0 0.0
        %6928 = vmatpush1.msra.mxu0 0.0
        %6929 = vmatprep.subr.mxu0 0.0
        %6930 = vmatpush1.msra.mxu0 0.0
        %6931 = vmatprep.subr.mxu0 0.0
        %6932 = vmatpush1.msra.mxu0 0.0
        %6933 = vmatprep.subr.mxu0 0.0
        %6934 = vmatpush1.msra.mxu0 0.0
        %6935 = vmatprep.subr.mxu0 0.0
        %6936 = vmatpush1.msra.mxu0 0.0
        %6937 = vmatprep.subr.mxu0 0.0
        %6938 = vmatpush1.msra.mxu0 0.0
        %6939 = vmatprep.subr.mxu0 0.0
        %6940 = vmatpush1.msra.mxu0 0.0
        %6941 = vmatprep.subr.mxu0 0.0
        %6942 = vmatpush1.msra.mxu0 0.0
        %6943 = vmatprep.subr.mxu0 0.0
        %6944 = vmatpush1.msra.mxu0 0.0
        %6945 = vmatprep.subr.mxu0 0.0
        %6946 = vmatpush1.msra.mxu0 0.0
        %6947 = vmatprep.subr.mxu0 0.0
        %6948 = vmatpush1.msra.mxu0 0.0
        %6949 = vmatprep.subr.mxu0 0.0
        %6950 = vmatpush1.msra.mxu0 0.0
        %6951 = vmatprep.subr.mxu0 0.0
        %6952 = vmatpush1.msra.mxu0 0.0
        %6953 = vmatprep.subr.mxu0 0.0
        %6954 = vmatpush1.msra.mxu0 0.0
        %6955 = vmatprep.subr.mxu0 0.0
        %6956 = vmatpush1.msra.mxu0 0.0
        %6957 = vmatprep.subr.mxu0 0.0
        %6958 = vmatpush1.msra.mxu0 0.0
        %6959 = vmatprep.subr.mxu0 0.0
        %6960 = vmatpush1.msra.mxu0 0.0
        %6961 = vmatprep.subr.mxu0 0.0
        %6962 = vmatpush1.msra.mxu0 0.0
        %6963 = vmatprep.subr.mxu0 0.0
        %6964 = vmatpush1.msra.mxu0 0.0
        %6965 = vmatprep.subr.mxu0 0.0
        %6966 = vmatpush1.msra.mxu0 0.0
        %6967 = vmatprep.subr.mxu0 0.0
        %6968 = vmatpush1.msra.mxu0 0.0
        %6969 = vmatprep.subr.mxu0 0.0
        %6970 = vmatpush1.msra.mxu0 0.0
        %6971 = vmatprep.mubr.f32.mxu0 0.0
        %6972 = vmatmul.mubr.f32.gmra.mrb[0].mxu0 %v5917
        %v6973 = vpop.f32.mrb[0].mxu0
        %v6974 = vadd.f32 0.0, %v6973
        %v6975 = vpop.f32.mrb[0].mxu0
        %v6976 = vadd.f32 0.0, %v6975
        %6977 = vdwg.mxu0
        %6978 = vmatprep.subr.mxu0 %v5978
        %6979 = vmatpush1.msra.mxu0 %v5976
        %6980 = vmatprep.subr.mxu0 0.0
        %6981 = vmatpush1.msra.mxu0 0.0
        %6982 = vmatprep.subr.mxu0 0.0
        %6983 = vmatpush1.msra.mxu0 0.0
        %6984 = vmatprep.subr.mxu0 0.0
        %6985 = vmatpush1.msra.mxu0 0.0
        %6986 = vmatprep.subr.mxu0 0.0
        %6987 = vmatpush1.msra.mxu0 0.0
        %6988 = vmatprep.subr.mxu0 0.0
        %6989 = vmatpush1.msra.mxu0 0.0
        %6990 = vmatprep.subr.mxu0 0.0
        %6991 = vmatpush1.msra.mxu0 0.0
        %6992 = vmatprep.subr.mxu0 0.0
        %6993 = vmatpush1.msra.mxu0 0.0
        %6994 = vmatprep.subr.mxu0 0.0
        %6995 = vmatpush1.msra.mxu0 0.0
        %6996 = vmatprep.subr.mxu0 0.0
        %6997 = vmatpush1.msra.mxu0 0.0
        %6998 = vmatprep.subr.mxu0 0.0
        %6999 = vmatpush1.msra.mxu0 0.0
        %7000 = vmatprep.subr.mxu0 0.0
        %7001 = vmatpush1.msra.mxu0 0.0
        %7002 = vmatprep.subr.mxu0 0.0
        %7003 = vmatpush1.msra.mxu0 0.0
        %7004 = vmatprep.subr.mxu0 0.0
        %7005 = vmatpush1.msra.mxu0 0.0
        %7006 = vmatprep.subr.mxu0 0.0
        %7007 = vmatpush1.msra.mxu0 0.0
        %7008 = vmatprep.subr.mxu0 0.0
        %7009 = vmatpush1.msra.mxu0 0.0
        %7010 = vmatprep.subr.mxu0 0.0
        %7011 = vmatpush1.msra.mxu0 0.0
        %7012 = vmatprep.subr.mxu0 0.0
        %7013 = vmatpush1.msra.mxu0 0.0
        %7014 = vmatprep.subr.mxu0 0.0
        %7015 = vmatpush1.msra.mxu0 0.0
        %7016 = vmatprep.subr.mxu0 0.0
        %7017 = vmatpush1.msra.mxu0 0.0
        %7018 = vmatprep.subr.mxu0 0.0
        %7019 = vmatpush1.msra.mxu0 0.0
        %7020 = vmatprep.subr.mxu0 0.0
        %7021 = vmatpush1.msra.mxu0 0.0
        %7022 = vmatprep.subr.mxu0 0.0
        %7023 = vmatpush1.msra.mxu0 0.0
        %7024 = vmatprep.subr.mxu0 0.0
        %7025 = vmatpush1.msra.mxu0 0.0
        %7026 = vmatprep.subr.mxu0 0.0
        %7027 = vmatpush1.msra.mxu0 0.0
        %7028 = vmatprep.subr.mxu0 0.0
        %7029 = vmatpush1.msra.mxu0 0.0
        %7030 = vmatprep.subr.mxu0 0.0
        %7031 = vmatpush1.msra.mxu0 0.0
        %7032 = vmatprep.subr.mxu0 0.0
        %7033 = vmatpush1.msra.mxu0 0.0
        %7034 = vmatprep.subr.mxu0 0.0
        %7035 = vmatpush1.msra.mxu0 0.0
        %7036 = vmatprep.subr.mxu0 0.0
        %7037 = vmatpush1.msra.mxu0 0.0
        %7038 = vmatprep.subr.mxu0 0.0
        %7039 = vmatpush1.msra.mxu0 0.0
        %7040 = vmatprep.subr.mxu0 0.0
        %7041 = vmatpush1.msra.mxu0 0.0
        %7042 = vmatprep.mubr.f32.mxu0 0.0
        %7043 = vmatmul.mubr.f32.gmra.mrb[0].mxu0 %v5917
        %v7044 = vpop.f32.mrb[0].mxu0
        %v7045 = vadd.f32 0.0, %v7044
        %v7046 = vpop.f32.mrb[0].mxu0
        %v7047 = vadd.f32 0.0, %v7046
        %7048 = vdwg.mxu0
        %7049 = vmatprep.subr.mxu0 %v5982
        %7050 = vmatpush1.msra.mxu0 %v5980
        %7051 = vmatprep.subr.mxu0 0.0
        %7052 = vmatpush1.msra.mxu0 0.0
        %7053 = vmatprep.subr.mxu0 0.0
        %7054 = vmatpush1.msra.mxu0 0.0
        %7055 = vmatprep.subr.mxu0 0.0
        %7056 = vmatpush1.msra.mxu0 0.0
        %7057 = vmatprep.subr.mxu0 0.0
        %7058 = vmatpush1.msra.mxu0 0.0
        %7059 = vmatprep.subr.mxu0 0.0
        %7060 = vmatpush1.msra.mxu0 0.0
        %7061 = vmatprep.subr.mxu0 0.0
        %7062 = vmatpush1.msra.mxu0 0.0
        %7063 = vmatprep.subr.mxu0 0.0
        %7064 = vmatpush1.msra.mxu0 0.0
        %7065 = vmatprep.subr.mxu0 0.0
        %7066 = vmatpush1.msra.mxu0 0.0
        %7067 = vmatprep.subr.mxu0 0.0
        %7068 = vmatpush1.msra.mxu0 0.0
        %7069 = vmatprep.subr.mxu0 0.0
        %7070 = vmatpush1.msra.mxu0 0.0
        %7071 = vmatprep.subr.mxu0 0.0
        %7072 = vmatpush1.msra.mxu0 0.0
        %7073 = vmatprep.subr.mxu0 0.0
        %7074 = vmatpush1.msra.mxu0 0.0
        %7075 = vmatprep.subr.mxu0 0.0
        %7076 = vmatpush1.msra.mxu0 0.0
        %7077 = vmatprep.subr.mxu0 0.0
        %7078 = vmatpush1.msra.mxu0 0.0
        %7079 = vmatprep.subr.mxu0 0.0
        %7080 = vmatpush1.msra.mxu0 0.0
        %7081 = vmatprep.subr.mxu0 0.0
        %7082 = vmatpush1.msra.mxu0 0.0
        %7083 = vmatprep.subr.mxu0 0.0
        %7084 = vmatpush1.msra.mxu0 0.0
        %7085 = vmatprep.subr.mxu0 0.0
        %7086 = vmatpush1.msra.mxu0 0.0
        %7087 = vmatprep.subr.mxu0 0.0
        %7088 = vmatpush1.msra.mxu0 0.0
        %7089 = vmatprep.subr.mxu0 0.0
        %7090 = vmatpush1.msra.mxu0 0.0
        %7091 = vmatprep.subr.mxu0 0.0
        %7092 = vmatpush1.msra.mxu0 0.0
        %7093 = vmatprep.subr.mxu0 0.0
        %7094 = vmatpush1.msra.mxu0 0.0
        %7095 = vmatprep.subr.mxu0 0.0
        %7096 = vmatpush1.msra.mxu0 0.0
        %7097 = vmatprep.subr.mxu0 0.0
        %7098 = vmatpush1.msra.mxu0 0.0
        %7099 = vmatprep.subr.mxu0 0.0
        %7100 = vmatpush1.msra.mxu0 0.0
        %7101 = vmatprep.subr.mxu0 0.0
        %7102 = vmatpush1.msra.mxu0 0.0
        %7103 = vmatprep.subr.mxu0 0.0
        %7104 = vmatpush1.msra.mxu0 0.0
        %7105 = vmatprep.subr.mxu0 0.0
        %7106 = vmatpush1.msra.mxu0 0.0
        %7107 = vmatprep.subr.mxu0 0.0
        %7108 = vmatpush1.msra.mxu0 0.0
        %7109 = vmatprep.subr.mxu0 0.0
        %7110 = vmatpush1.msra.mxu0 0.0
        %7111 = vmatprep.subr.mxu0 0.0
        %7112 = vmatpush1.msra.mxu0 0.0
        %7113 = vmatprep.mubr.f32.mxu0 0.0
        %7114 = vmatmul.mubr.f32.gmra.mrb[0].mxu0 %v5917
        %v7115 = vpop.f32.mrb[0].mxu0
        %v7116 = vadd.f32 0.0, %v7115
        %v7117 = vpop.f32.mrb[0].mxu0
        %v7118 = vadd.f32 0.0, %v7117
        %7119 = vdwg.mxu0
        %v7121 = vsel %vm5915, %v353, 0
        %v7123 = vsel %vm5919, %v468, 0
        %v7125 = vsel %vm5919, %v678, 0
        %v7127 = vsel %vm5919, %v604, 0
        %v7129 = vsel %vm5919, %v679, 0
        %v7131 = vsel %vm5919, %v469, 0
        %v7133 = vsel %vm5919, %v682, 0
        %v7135 = vsel %vm5919, %v605, 0
        %v7137 = vsel %vm5919, %v683, 0
        %v7139 = vsel %vm5919, %v470, 0
        %v7141 = vsel %vm5919, %v686, 0
        %v7143 = vsel %vm5919, %v606, 0
        %v7145 = vsel %vm5919, %v687, 0
        %v7147 = vsel %vm5919, %v471, 0
        %v7149 = vsel %vm5919, %v690, 0
        %v7151 = vsel %vm5919, %v607, 0
        %v7153 = vsel %vm5919, %v691, 0
        %v7155 = vsel %vm5919, %v536, 0
        %v7157 = vsel %vm5919, %v694, 0
        %v7159 = vsel %vm5919, %v672, 0
        %v7161 = vsel %vm5919, %v695, 0
        %v7163 = vsel %vm5919, %v537, 0
        %v7165 = vsel %vm5919, %v698, 0
        %v7167 = vsel %vm5919, %v673, 0
        %v7169 = vsel %vm5919, %v699, 0
        %v7171 = vsel %vm5919, %v538, 0
        %v7173 = vsel %vm5919, %v702, 0
        %v7175 = vsel %vm5919, %v674, 0
        %v7177 = vsel %vm5919, %v703, 0
        %v7179 = vsel %vm5919, %v539, 0
        %v7181 = vsel %vm5919, %v706, 0
        %v7183 = vsel %vm5919, %v675, 0
        %v7185 = vsel %vm5919, %v707, 0
        %7187 = vmatprep.subr.mxu0 %v7125
        %7188 = vmatpush1.msra.mxu0 %v7123
        %7189 = vmatprep.subr.mxu0 0.0
        %7190 = vmatpush1.msra.mxu0 0.0
        %7191 = vmatprep.subr.mxu0 0.0
        %7192 = vmatpush1.msra.mxu0 0.0
        %7193 = vmatprep.subr.mxu0 0.0
        %7194 = vmatpush1.msra.mxu0 0.0
        %7195 = vmatprep.subr.mxu0 0.0
        %7196 = vmatpush1.msra.mxu0 0.0
        %7197 = vmatprep.subr.mxu0 0.0
        %7198 = vmatpush1.msra.mxu0 0.0
        %7199 = vmatprep.subr.mxu0 0.0
        %7200 = vmatpush1.msra.mxu0 0.0
        %7201 = vmatprep.subr.mxu0 0.0
        %7202 = vmatpush1.msra.mxu0 0.0
        %7203 = vmatprep.subr.mxu0 0.0
        %7204 = vmatpush1.msra.mxu0 0.0
        %7205 = vmatprep.subr.mxu0 0.0
        %7206 = vmatpush1.msra.mxu0 0.0
        %7207 = vmatprep.subr.mxu0 0.0
        %7208 = vmatpush1.msra.mxu0 0.0
        %7209 = vmatprep.subr.mxu0 0.0
        %7210 = vmatpush1.msra.mxu0 0.0
        %7211 = vmatprep.subr.mxu0 0.0
        %7212 = vmatpush1.msra.mxu0 0.0
        %7213 = vmatprep.subr.mxu0 0.0
        %7214 = vmatpush1.msra.mxu0 0.0
        %7215 = vmatprep.subr.mxu0 0.0
        %7216 = vmatpush1.msra.mxu0 0.0
        %7217 = vmatprep.subr.mxu0 0.0
        %7218 = vmatpush1.msra.mxu0 0.0
        %7219 = vmatprep.subr.mxu0 0.0
        %7220 = vmatpush1.msra.mxu0 0.0
        %7221 = vmatprep.subr.mxu0 0.0
        %7222 = vmatpush1.msra.mxu0 0.0
        %7223 = vmatprep.subr.mxu0 0.0
        %7224 = vmatpush1.msra.mxu0 0.0
        %7225 = vmatprep.subr.mxu0 0.0
        %7226 = vmatpush1.msra.mxu0 0.0
        %7227 = vmatprep.subr.mxu0 0.0
        %7228 = vmatpush1.msra.mxu0 0.0
        %7229 = vmatprep.subr.mxu0 0.0
        %7230 = vmatpush1.msra.mxu0 0.0
        %7231 = vmatprep.subr.mxu0 0.0
        %7232 = vmatpush1.msra.mxu0 0.0
        %7233 = vmatprep.subr.mxu0 0.0
        %7234 = vmatpush1.msra.mxu0 0.0
        %7235 = vmatprep.subr.mxu0 0.0
        %7236 = vmatpush1.msra.mxu0 0.0
        %7237 = vmatprep.subr.mxu0 0.0
        %7238 = vmatpush1.msra.mxu0 0.0
        %7239 = vmatprep.subr.mxu0 0.0
        %7240 = vmatpush1.msra.mxu0 0.0
        %7241 = vmatprep.subr.mxu0 0.0
        %7242 = vmatpush1.msra.mxu0 0.0
        %7243 = vmatprep.subr.mxu0 0.0
        %7244 = vmatpush1.msra.mxu0 0.0
        %7245 = vmatprep.subr.mxu0 0.0
        %7246 = vmatpush1.msra.mxu0 0.0
        %7247 = vmatprep.subr.mxu0 0.0
        %7248 = vmatpush1.msra.mxu0 0.0
        %7249 = vmatprep.subr.mxu0 0.0
        %7250 = vmatpush1.msra.mxu0 0.0
        %7251 = vmatprep.mubr.f32.mxu0 0.0
        %7252 = vmatmul.mubr.f32.gmra.mrb[0].mxu0 %v7121
        %v7253 = vpop.f32.mrb[0].mxu0
        %v7254 = vadd.f32 %v6051, %v7253
        %v7255 = vpop.f32.mrb[0].mxu0
        %v7256 = vadd.f32 %v6053, %v7255
        %7257 = vdwg.mxu0
        %7258 = vmatprep.subr.mxu0 %v7129
        %7259 = vmatpush1.msra.mxu0 %v7127
        %7260 = vmatprep.subr.mxu0 0.0
        %7261 = vmatpush1.msra.mxu0 0.0
        %7262 = vmatprep.subr.mxu0 0.0
        %7263 = vmatpush1.msra.mxu0 0.0
        %7264 = vmatprep.subr.mxu0 0.0
        %7265 = vmatpush1.msra.mxu0 0.0
        %7266 = vmatprep.subr.mxu0 0.0
        %7267 = vmatpush1.msra.mxu0 0.0
        %7268 = vmatprep.subr.mxu0 0.0
        %7269 = vmatpush1.msra.mxu0 0.0
        %7270 = vmatprep.subr.mxu0 0.0
        %7271 = vmatpush1.msra.mxu0 0.0
        %7272 = vmatprep.subr.mxu0 0.0
        %7273 = vmatpush1.msra.mxu0 0.0
        %7274 = vmatprep.subr.mxu0 0.0
        %7275 = vmatpush1.msra.mxu0 0.0
        %7276 = vmatprep.subr.mxu0 0.0
        %7277 = vmatpush1.msra.mxu0 0.0
        %7278 = vmatprep.subr.mxu0 0.0
        %7279 = vmatpush1.msra.mxu0 0.0
        %7280 = vmatprep.subr.mxu0 0.0
        %7281 = vmatpush1.msra.mxu0 0.0
        %7282 = vmatprep.subr.mxu0 0.0
        %7283 = vmatpush1.msra.mxu0 0.0
        %7284 = vmatprep.subr.mxu0 0.0
        %7285 = vmatpush1.msra.mxu0 0.0
        %7286 = vmatprep.subr.mxu0 0.0
        %7287 = vmatpush1.msra.mxu0 0.0
        %7288 = vmatprep.subr.mxu0 0.0
        %7289 = vmatpush1.msra.mxu0 0.0
        %7290 = vmatprep.subr.mxu0 0.0
        %7291 = vmatpush1.msra.mxu0 0.0
        %7292 = vmatprep.subr.mxu0 0.0
        %7293 = vmatpush1.msra.mxu0 0.0
        %7294 = vmatprep.subr.mxu0 0.0
        %7295 = vmatpush1.msra.mxu0 0.0
        %7296 = vmatprep.subr.mxu0 0.0
        %7297 = vmatpush1.msra.mxu0 0.0
        %7298 = vmatprep.subr.mxu0 0.0
        %7299 = vmatpush1.msra.mxu0 0.0
        %7300 = vmatprep.subr.mxu0 0.0
        %7301 = vmatpush1.msra.mxu0 0.0
        %7302 = vmatprep.subr.mxu0 0.0
        %7303 = vmatpush1.msra.mxu0 0.0
        %7304 = vmatprep.subr.mxu0 0.0
        %7305 = vmatpush1.msra.mxu0 0.0
        %7306 = vmatprep.subr.mxu0 0.0
        %7307 = vmatpush1.msra.mxu0 0.0
        %7308 = vmatprep.subr.mxu0 0.0
        %7309 = vmatpush1.msra.mxu0 0.0
        %7310 = vmatprep.subr.mxu0 0.0
        %7311 = vmatpush1.msra.mxu0 0.0
        %7312 = vmatprep.subr.mxu0 0.0
        %7313 = vmatpush1.msra.mxu0 0.0
        %7314 = vmatprep.subr.mxu0 0.0
        %7315 = vmatpush1.msra.mxu0 0.0
        %7316 = vmatprep.subr.mxu0 0.0
        %7317 = vmatpush1.msra.mxu0 0.0
        %7318 = vmatprep.subr.mxu0 0.0
        %7319 = vmatpush1.msra.mxu0 0.0
        %7320 = vmatprep.subr.mxu0 0.0
        %7321 = vmatpush1.msra.mxu0 0.0
        %7322 = vmatprep.mubr.f32.mxu0 0.0
        %7323 = vmatmul.mubr.f32.gmra.mrb[0].mxu0 %v7121
        %v7324 = vpop.f32.mrb[0].mxu0
        %v7325 = vadd.f32 %v6122, %v7324
        %v7326 = vpop.f32.mrb[0].mxu0
        %v7327 = vadd.f32 %v6124, %v7326
        %7328 = vdwg.mxu0
        %7329 = vmatprep.subr.mxu0 %v7133
        %7330 = vmatpush1.msra.mxu0 %v7131
        %7331 = vmatprep.subr.mxu0 0.0
        %7332 = vmatpush1.msra.mxu0 0.0
        %7333 = vmatprep.subr.mxu0 0.0
        %7334 = vmatpush1.msra.mxu0 0.0
        %7335 = vmatprep.subr.mxu0 0.0
        %7336 = vmatpush1.msra.mxu0 0.0
        %7337 = vmatprep.subr.mxu0 0.0
        %7338 = vmatpush1.msra.mxu0 0.0
        %7339 = vmatprep.subr.mxu0 0.0
        %7340 = vmatpush1.msra.mxu0 0.0
        %7341 = vmatprep.subr.mxu0 0.0
        %7342 = vmatpush1.msra.mxu0 0.0
        %7343 = vmatprep.subr.mxu0 0.0
        %7344 = vmatpush1.msra.mxu0 0.0
        %7345 = vmatprep.subr.mxu0 0.0
        %7346 = vmatpush1.msra.mxu0 0.0
        %7347 = vmatprep.subr.mxu0 0.0
        %7348 = vmatpush1.msra.mxu0 0.0
        %7349 = vmatprep.subr.mxu0 0.0
        %7350 = vmatpush1.msra.mxu0 0.0
        %7351 = vmatprep.subr.mxu0 0.0
        %7352 = vmatpush1.msra.mxu0 0.0
        %7353 = vmatprep.subr.mxu0 0.0
        %7354 = vmatpush1.msra.mxu0 0.0
        %7355 = vmatprep.subr.mxu0 0.0
        %7356 = vmatpush1.msra.mxu0 0.0
        %7357 = vmatprep.subr.mxu0 0.0
        %7358 = vmatpush1.msra.mxu0 0.0
        %7359 = vmatprep.subr.mxu0 0.0
        %7360 = vmatpush1.msra.mxu0 0.0
        %7361 = vmatprep.subr.mxu0 0.0
        %7362 = vmatpush1.msra.mxu0 0.0
        %7363 = vmatprep.subr.mxu0 0.0
        %7364 = vmatpush1.msra.mxu0 0.0
        %7365 = vmatprep.subr.mxu0 0.0
        %7366 = vmatpush1.msra.mxu0 0.0
        %7367 = vmatprep.subr.mxu0 0.0
        %7368 = vmatpush1.msra.mxu0 0.0
        %7369 = vmatprep.subr.mxu0 0.0
        %7370 = vmatpush1.msra.mxu0 0.0
        %7371 = vmatprep.subr.mxu0 0.0
        %7372 = vmatpush1.msra.mxu0 0.0
        %7373 = vmatprep.subr.mxu0 0.0
        %7374 = vmatpush1.msra.mxu0 0.0
        %7375 = vmatprep.subr.mxu0 0.0
        %7376 = vmatpush1.msra.mxu0 0.0
        %7377 = vmatprep.subr.mxu0 0.0
        %7378 = vmatpush1.msra.mxu0 0.0
        %7379 = vmatprep.subr.mxu0 0.0
        %7380 = vmatpush1.msra.mxu0 0.0
        %7381 = vmatprep.subr.mxu0 0.0
        %7382 = vmatpush1.msra.mxu0 0.0
        %7383 = vmatprep.subr.mxu0 0.0
        %7384 = vmatpush1.msra.mxu0 0.0
        %7385 = vmatprep.subr.mxu0 0.0
        %7386 = vmatpush1.msra.mxu0 0.0
        %7387 = vmatprep.subr.mxu0 0.0
        %7388 = vmatpush1.msra.mxu0 0.0
        %7389 = vmatprep.subr.mxu0 0.0
        %7390 = vmatpush1.msra.mxu0 0.0
        %7391 = vmatprep.subr.mxu0 0.0
        %7392 = vmatpush1.msra.mxu0 0.0
        %7393 = vmatprep.mubr.f32.mxu0 0.0
        %7394 = vmatmul.mubr.f32.gmra.mrb[0].mxu0 %v7121
        %v7395 = vpop.f32.mrb[0].mxu0
        %v7396 = vadd.f32 %v6193, %v7395
        %v7397 = vpop.f32.mrb[0].mxu0
        %v7398 = vadd.f32 %v6195, %v7397
        %7399 = vdwg.mxu0
        %7400 = vmatprep.subr.mxu0 %v7137
        %7401 = vmatpush1.msra.mxu0 %v7135
        %7402 = vmatprep.subr.mxu0 0.0
        %7403 = vmatpush1.msra.mxu0 0.0
        %7404 = vmatprep.subr.mxu0 0.0
        %7405 = vmatpush1.msra.mxu0 0.0
        %7406 = vmatprep.subr.mxu0 0.0
        %7407 = vmatpush1.msra.mxu0 0.0
        %7408 = vmatprep.subr.mxu0 0.0
        %7409 = vmatpush1.msra.mxu0 0.0
        %7410 = vmatprep.subr.mxu0 0.0
        %7411 = vmatpush1.msra.mxu0 0.0
        %7412 = vmatprep.subr.mxu0 0.0
        %7413 = vmatpush1.msra.mxu0 0.0
        %7414 = vmatprep.subr.mxu0 0.0
        %7415 = vmatpush1.msra.mxu0 0.0
        %7416 = vmatprep.subr.mxu0 0.0
        %7417 = vmatpush1.msra.mxu0 0.0
        %7418 = vmatprep.subr.mxu0 0.0
        %7419 = vmatpush1.msra.mxu0 0.0
        %7420 = vmatprep.subr.mxu0 0.0
        %7421 = vmatpush1.msra.mxu0 0.0
        %7422 = vmatprep.subr.mxu0 0.0
        %7423 = vmatpush1.msra.mxu0 0.0
        %7424 = vmatprep.subr.mxu0 0.0
        %7425 = vmatpush1.msra.mxu0 0.0
        %7426 = vmatprep.subr.mxu0 0.0
        %7427 = vmatpush1.msra.mxu0 0.0
        %7428 = vmatprep.subr.mxu0 0.0
        %7429 = vmatpush1.msra.mxu0 0.0
        %7430 = vmatprep.subr.mxu0 0.0
        %7431 = vmatpush1.msra.mxu0 0.0
        %7432 = vmatprep.subr.mxu0 0.0
        %7433 = vmatpush1.msra.mxu0 0.0
        %7434 = vmatprep.subr.mxu0 0.0
        %7435 = vmatpush1.msra.mxu0 0.0
        %7436 = vmatprep.subr.mxu0 0.0
        %7437 = vmatpush1.msra.mxu0 0.0
        %7438 = vmatprep.subr.mxu0 0.0
        %7439 = vmatpush1.msra.mxu0 0.0
        %7440 = vmatprep.subr.mxu0 0.0
        %7441 = vmatpush1.msra.mxu0 0.0
        %7442 = vmatprep.subr.mxu0 0.0
        %7443 = vmatpush1.msra.mxu0 0.0
        %7444 = vmatprep.subr.mxu0 0.0
        %7445 = vmatpush1.msra.mxu0 0.0
        %7446 = vmatprep.subr.mxu0 0.0
        %7447 = vmatpush1.msra.mxu0 0.0
        %7448 = vmatprep.subr.mxu0 0.0
        %7449 = vmatpush1.msra.mxu0 0.0
        %7450 = vmatprep.subr.mxu0 0.0
        %7451 = vmatpush1.msra.mxu0 0.0
        %7452 = vmatprep.subr.mxu0 0.0
        %7453 = vmatpush1.msra.mxu0 0.0
        %7454 = vmatprep.subr.mxu0 0.0
        %7455 = vmatpush1.msra.mxu0 0.0
        %7456 = vmatprep.subr.mxu0 0.0
        %7457 = vmatpush1.msra.mxu0 0.0
        %7458 = vmatprep.subr.mxu0 0.0
        %7459 = vmatpush1.msra.mxu0 0.0
        %7460 = vmatprep.subr.mxu0 0.0
        %7461 = vmatpush1.msra.mxu0 0.0
        %7462 = vmatprep.subr.mxu0 0.0
        %7463 = vmatpush1.msra.mxu0 0.0
        %7464 = vmatprep.mubr.f32.mxu0 0.0
        %7465 = vmatmul.mubr.f32.gmra.mrb[0].mxu0 %v7121
        %v7466 = vpop.f32.mrb[0].mxu0
        %v7467 = vadd.f32 %v6264, %v7466
        %v7468 = vpop.f32.mrb[0].mxu0
        %v7469 = vadd.f32 %v6266, %v7468
        %7470 = vdwg.mxu0
        %7471 = vmatprep.subr.mxu0 %v7141
        %7472 = vmatpush1.msra.mxu0 %v7139
        %7473 = vmatprep.subr.mxu0 0.0
        %7474 = vmatpush1.msra.mxu0 0.0
        %7475 = vmatprep.subr.mxu0 0.0
        %7476 = vmatpush1.msra.mxu0 0.0
        %7477 = vmatprep.subr.mxu0 0.0
        %7478 = vmatpush1.msra.mxu0 0.0
        %7479 = vmatprep.subr.mxu0 0.0
        %7480 = vmatpush1.msra.mxu0 0.0
        %7481 = vmatprep.subr.mxu0 0.0
        %7482 = vmatpush1.msra.mxu0 0.0
        %7483 = vmatprep.subr.mxu0 0.0
        %7484 = vmatpush1.msra.mxu0 0.0
        %7485 = vmatprep.subr.mxu0 0.0
        %7486 = vmatpush1.msra.mxu0 0.0
        %7487 = vmatprep.subr.mxu0 0.0
        %7488 = vmatpush1.msra.mxu0 0.0
        %7489 = vmatprep.subr.mxu0 0.0
        %7490 = vmatpush1.msra.mxu0 0.0
        %7491 = vmatprep.subr.mxu0 0.0
        %7492 = vmatpush1.msra.mxu0 0.0
        %7493 = vmatprep.subr.mxu0 0.0
        %7494 = vmatpush1.msra.mxu0 0.0
        %7495 = vmatprep.subr.mxu0 0.0
        %7496 = vmatpush1.msra.mxu0 0.0
        %7497 = vmatprep.subr.mxu0 0.0
        %7498 = vmatpush1.msra.mxu0 0.0
        %7499 = vmatprep.subr.mxu0 0.0
        %7500 = vmatpush1.msra.mxu0 0.0
        %7501 = vmatprep.subr.mxu0 0.0
        %7502 = vmatpush1.msra.mxu0 0.0
        %7503 = vmatprep.subr.mxu0 0.0
        %7504 = vmatpush1.msra.mxu0 0.0
        %7505 = vmatprep.subr.mxu0 0.0
        %7506 = vmatpush1.msra.mxu0 0.0
        %7507 = vmatprep.subr.mxu0 0.0
        %7508 = vmatpush1.msra.mxu0 0.0
        %7509 = vmatprep.subr.mxu0 0.0
        %7510 = vmatpush1.msra.mxu0 0.0
        %7511 = vmatprep.subr.mxu0 0.0
        %7512 = vmatpush1.msra.mxu0 0.0
        %7513 = vmatprep.subr.mxu0 0.0
        %7514 = vmatpush1.msra.mxu0 0.0
        %7515 = vmatprep.subr.mxu0 0.0
        %7516 = vmatpush1.msra.mxu0 0.0
        %7517 = vmatprep.subr.mxu0 0.0
        %7518 = vmatpush1.msra.mxu0 0.0
        %7519 = vmatprep.subr.mxu0 0.0
        %7520 = vmatpush1.msra.mxu0 0.0
        %7521 = vmatprep.subr.mxu0 0.0
        %7522 = vmatpush1.msra.mxu0 0.0
        %7523 = vmatprep.subr.mxu0 0.0
        %7524 = vmatpush1.msra.mxu0 0.0
        %7525 = vmatprep.subr.mxu0 0.0
        %7526 = vmatpush1.msra.mxu0 0.0
        %7527 = vmatprep.subr.mxu0 0.0
        %7528 = vmatpush1.msra.mxu0 0.0
        %7529 = vmatprep.subr.mxu0 0.0
        %7530 = vmatpush1.msra.mxu0 0.0
        %7531 = vmatprep.subr.mxu0 0.0
        %7532 = vmatpush1.msra.mxu0 0.0
        %7533 = vmatprep.subr.mxu0 0.0
        %7534 = vmatpush1.msra.mxu0 0.0
        %7535 = vmatprep.mubr.f32.mxu0 0.0
        %7536 = vmatmul.mubr.f32.gmra.mrb[0].mxu0 %v7121
        %v7537 = vpop.f32.mrb[0].mxu0
        %v7538 = vadd.f32 %v6335, %v7537
        %v7539 = vpop.f32.mrb[0].mxu0
        %v7540 = vadd.f32 %v6337, %v7539
        %7541 = vdwg.mxu0
        %7542 = vmatprep.subr.mxu0 %v7145
        %7543 = vmatpush1.msra.mxu0 %v7143
        %7544 = vmatprep.subr.mxu0 0.0
        %7545 = vmatpush1.msra.mxu0 0.0
        %7546 = vmatprep.subr.mxu0 0.0
        %7547 = vmatpush1.msra.mxu0 0.0
        %7548 = vmatprep.subr.mxu0 0.0
        %7549 = vmatpush1.msra.mxu0 0.0
        %7550 = vmatprep.subr.mxu0 0.0
        %7551 = vmatpush1.msra.mxu0 0.0
        %7552 = vmatprep.subr.mxu0 0.0
        %7553 = vmatpush1.msra.mxu0 0.0
        %7554 = vmatprep.subr.mxu0 0.0
        %7555 = vmatpush1.msra.mxu0 0.0
        %7556 = vmatprep.subr.mxu0 0.0
        %7557 = vmatpush1.msra.mxu0 0.0
        %7558 = vmatprep.subr.mxu0 0.0
        %7559 = vmatpush1.msra.mxu0 0.0
        %7560 = vmatprep.subr.mxu0 0.0
        %7561 = vmatpush1.msra.mxu0 0.0
        %7562 = vmatprep.subr.mxu0 0.0
        %7563 = vmatpush1.msra.mxu0 0.0
        %7564 = vmatprep.subr.mxu0 0.0
        %7565 = vmatpush1.msra.mxu0 0.0
        %7566 = vmatprep.subr.mxu0 0.0
        %7567 = vmatpush1.msra.mxu0 0.0
        %7568 = vmatprep.subr.mxu0 0.0
        %7569 = vmatpush1.msra.mxu0 0.0
        %7570 = vmatprep.subr.mxu0 0.0
        %7571 = vmatpush1.msra.mxu0 0.0
        %7572 = vmatprep.subr.mxu0 0.0
        %7573 = vmatpush1.msra.mxu0 0.0
        %7574 = vmatprep.subr.mxu0 0.0
        %7575 = vmatpush1.msra.mxu0 0.0
        %7576 = vmatprep.subr.mxu0 0.0
        %7577 = vmatpush1.msra.mxu0 0.0
        %7578 = vmatprep.subr.mxu0 0.0
        %7579 = vmatpush1.msra.mxu0 0.0
        %7580 = vmatprep.subr.mxu0 0.0
        %7581 = vmatpush1.msra.mxu0 0.0
        %7582 = vmatprep.subr.mxu0 0.0
        %7583 = vmatpush1.msra.mxu0 0.0
        %7584 = vmatprep.subr.mxu0 0.0
        %7585 = vmatpush1.msra.mxu0 0.0
        %7586 = vmatprep.subr.mxu0 0.0
        %7587 = vmatpush1.msra.mxu0 0.0
        %7588 = vmatprep.subr.mxu0 0.0
        %7589 = vmatpush1.msra.mxu0 0.0
        %7590 = vmatprep.subr.mxu0 0.0
        %7591 = vmatpush1.msra.mxu0 0.0
        %7592 = vmatprep.subr.mxu0 0.0
        %7593 = vmatpush1.msra.mxu0 0.0
        %7594 = vmatprep.subr.mxu0 0.0
        %7595 = vmatpush1.msra.mxu0 0.0
        %7596 = vmatprep.subr.mxu0 0.0
        %7597 = vmatpush1.msra.mxu0 0.0
        %7598 = vmatprep.subr.mxu0 0.0
        %7599 = vmatpush1.msra.mxu0 0.0
        %7600 = vmatprep.subr.mxu0 0.0
        %7601 = vmatpush1.msra.mxu0 0.0
        %7602 = vmatprep.subr.mxu0 0.0
        %7603 = vmatpush1.msra.mxu0 0.0
        %7604 = vmatprep.subr.mxu0 0.0
        %7605 = vmatpush1.msra.mxu0 0.0
        %7606 = vmatprep.mubr.f32.mxu0 0.0
        %7607 = vmatmul.mubr.f32.gmra.mrb[0].mxu0 %v7121
        %v7608 = vpop.f32.mrb[0].mxu0
        %v7609 = vadd.f32 %v6406, %v7608
        %v7610 = vpop.f32.mrb[0].mxu0
        %v7611 = vadd.f32 %v6408, %v7610
        %7612 = vdwg.mxu0
        %7613 = vmatprep.subr.mxu0 %v7149
        %7614 = vmatpush1.msra.mxu0 %v7147
        %7615 = vmatprep.subr.mxu0 0.0
        %7616 = vmatpush1.msra.mxu0 0.0
        %7617 = vmatprep.subr.mxu0 0.0
        %7618 = vmatpush1.msra.mxu0 0.0
        %7619 = vmatprep.subr.mxu0 0.0
        %7620 = vmatpush1.msra.mxu0 0.0
        %7621 = vmatprep.subr.mxu0 0.0
        %7622 = vmatpush1.msra.mxu0 0.0
        %7623 = vmatprep.subr.mxu0 0.0
        %7624 = vmatpush1.msra.mxu0 0.0
        %7625 = vmatprep.subr.mxu0 0.0
        %7626 = vmatpush1.msra.mxu0 0.0
        %7627 = vmatprep.subr.mxu0 0.0
        %7628 = vmatpush1.msra.mxu0 0.0
        %7629 = vmatprep.subr.mxu0 0.0
        %7630 = vmatpush1.msra.mxu0 0.0
        %7631 = vmatprep.subr.mxu0 0.0
        %7632 = vmatpush1.msra.mxu0 0.0
        %7633 = vmatprep.subr.mxu0 0.0
        %7634 = vmatpush1.msra.mxu0 0.0
        %7635 = vmatprep.subr.mxu0 0.0
        %7636 = vmatpush1.msra.mxu0 0.0
        %7637 = vmatprep.subr.mxu0 0.0
        %7638 = vmatpush1.msra.mxu0 0.0
        %7639 = vmatprep.subr.mxu0 0.0
        %7640 = vmatpush1.msra.mxu0 0.0
        %7641 = vmatprep.subr.mxu0 0.0
        %7642 = vmatpush1.msra.mxu0 0.0
        %7643 = vmatprep.subr.mxu0 0.0
        %7644 = vmatpush1.msra.mxu0 0.0
        %7645 = vmatprep.subr.mxu0 0.0
        %7646 = vmatpush1.msra.mxu0 0.0
        %7647 = vmatprep.subr.mxu0 0.0
        %7648 = vmatpush1.msra.mxu0 0.0
        %7649 = vmatprep.subr.mxu0 0.0
        %7650 = vmatpush1.msra.mxu0 0.0
        %7651 = vmatprep.subr.mxu0 0.0
        %7652 = vmatpush1.msra.mxu0 0.0
        %7653 = vmatprep.subr.mxu0 0.0
        %7654 = vmatpush1.msra.mxu0 0.0
        %7655 = vmatprep.subr.mxu0 0.0
        %7656 = vmatpush1.msra.mxu0 0.0
        %7657 = vmatprep.subr.mxu0 0.0
        %7658 = vmatpush1.msra.mxu0 0.0
        %7659 = vmatprep.subr.mxu0 0.0
        %7660 = vmatpush1.msra.mxu0 0.0
        %7661 = vmatprep.subr.mxu0 0.0
        %7662 = vmatpush1.msra.mxu0 0.0
        %7663 = vmatprep.subr.mxu0 0.0
        %7664 = vmatpush1.msra.mxu0 0.0
        %7665 = vmatprep.subr.mxu0 0.0
        %7666 = vmatpush1.msra.mxu0 0.0
        %7667 = vmatprep.subr.mxu0 0.0
        %7668 = vmatpush1.msra.mxu0 0.0
        %7669 = vmatprep.subr.mxu0 0.0
        %7670 = vmatpush1.msra.mxu0 0.0
        %7671 = vmatprep.subr.mxu0 0.0
        %7672 = vmatpush1.msra.mxu0 0.0
        %7673 = vmatprep.subr.mxu0 0.0
        %7674 = vmatpush1.msra.mxu0 0.0
        %7675 = vmatprep.subr.mxu0 0.0
        %7676 = vmatpush1.msra.mxu0 0.0
        %7677 = vmatprep.mubr.f32.mxu0 0.0
        %7678 = vmatmul.mubr.f32.gmra.mrb[0].mxu0 %v7121
        %v7679 = vpop.f32.mrb[0].mxu0
        %v7680 = vadd.f32 %v6477, %v7679
        %v7681 = vpop.f32.mrb[0].mxu0
        %v7682 = vadd.f32 %v6479, %v7681
        %7683 = vdwg.mxu0
        %7684 = vmatprep.subr.mxu0 %v7153
        %7685 = vmatpush1.msra.mxu0 %v7151
        %7686 = vmatprep.subr.mxu0 0.0
        %7687 = vmatpush1.msra.mxu0 0.0
        %7688 = vmatprep.subr.mxu0 0.0
        %7689 = vmatpush1.msra.mxu0 0.0
        %7690 = vmatprep.subr.mxu0 0.0
        %7691 = vmatpush1.msra.mxu0 0.0
        %7692 = vmatprep.subr.mxu0 0.0
        %7693 = vmatpush1.msra.mxu0 0.0
        %7694 = vmatprep.subr.mxu0 0.0
        %7695 = vmatpush1.msra.mxu0 0.0
        %7696 = vmatprep.subr.mxu0 0.0
        %7697 = vmatpush1.msra.mxu0 0.0
        %7698 = vmatprep.subr.mxu0 0.0
        %7699 = vmatpush1.msra.mxu0 0.0
        %7700 = vmatprep.subr.mxu0 0.0
        %7701 = vmatpush1.msra.mxu0 0.0
        %7702 = vmatprep.subr.mxu0 0.0
        %7703 = vmatpush1.msra.mxu0 0.0
        %7704 = vmatprep.subr.mxu0 0.0
        %7705 = vmatpush1.msra.mxu0 0.0
        %7706 = vmatprep.subr.mxu0 0.0
        %7707 = vmatpush1.msra.mxu0 0.0
        %7708 = vmatprep.subr.mxu0 0.0
        %7709 = vmatpush1.msra.mxu0 0.0
        %7710 = vmatprep.subr.mxu0 0.0
        %7711 = vmatpush1.msra.mxu0 0.0
        %7712 = vmatprep.subr.mxu0 0.0
        %7713 = vmatpush1.msra.mxu0 0.0
        %7714 = vmatprep.subr.mxu0 0.0
        %7715 = vmatpush1.msra.mxu0 0.0
        %7716 = vmatprep.subr.mxu0 0.0
        %7717 = vmatpush1.msra.mxu0 0.0
        %7718 = vmatprep.subr.mxu0 0.0
        %7719 = vmatpush1.msra.mxu0 0.0
        %7720 = vmatprep.subr.mxu0 0.0
        %7721 = vmatpush1.msra.mxu0 0.0
        %7722 = vmatprep.subr.mxu0 0.0
        %7723 = vmatpush1.msra.mxu0 0.0
        %7724 = vmatprep.subr.mxu0 0.0
        %7725 = vmatpush1.msra.mxu0 0.0
        %7726 = vmatprep.subr.mxu0 0.0
        %7727 = vmatpush1.msra.mxu0 0.0
        %7728 = vmatprep.subr.mxu0 0.0
        %7729 = vmatpush1.msra.mxu0 0.0
        %7730 = vmatprep.subr.mxu0 0.0
        %7731 = vmatpush1.msra.mxu0 0.0
        %7732 = vmatprep.subr.mxu0 0.0
        %7733 = vmatpush1.msra.mxu0 0.0
        %7734 = vmatprep.subr.mxu0 0.0
        %7735 = vmatpush1.msra.mxu0 0.0
        %7736 = vmatprep.subr.mxu0 0.0
        %7737 = vmatpush1.msra.mxu0 0.0
        %7738 = vmatprep.subr.mxu0 0.0
        %7739 = vmatpush1.msra.mxu0 0.0
        %7740 = vmatprep.subr.mxu0 0.0
        %7741 = vmatpush1.msra.mxu0 0.0
        %7742 = vmatprep.subr.mxu0 0.0
        %7743 = vmatpush1.msra.mxu0 0.0
        %7744 = vmatprep.subr.mxu0 0.0
        %7745 = vmatpush1.msra.mxu0 0.0
        %7746 = vmatprep.subr.mxu0 0.0
        %7747 = vmatpush1.msra.mxu0 0.0
        %7748 = vmatprep.mubr.f32.mxu0 0.0
        %7749 = vmatmul.mubr.f32.gmra.mrb[0].mxu0 %v7121
        %v7750 = vpop.f32.mrb[0].mxu0
        %v7751 = vadd.f32 %v6548, %v7750
        %v7752 = vpop.f32.mrb[0].mxu0
        %v7753 = vadd.f32 %v6550, %v7752
        %7754 = vdwg.mxu0
        %7755 = vmatprep.subr.mxu0 %v7157
        %7756 = vmatpush1.msra.mxu0 %v7155
        %7757 = vmatprep.subr.mxu0 0.0
        %7758 = vmatpush1.msra.mxu0 0.0
        %7759 = vmatprep.subr.mxu0 0.0
        %7760 = vmatpush1.msra.mxu0 0.0
        %7761 = vmatprep.subr.mxu0 0.0
        %7762 = vmatpush1.msra.mxu0 0.0
        %7763 = vmatprep.subr.mxu0 0.0
        %7764 = vmatpush1.msra.mxu0 0.0
        %7765 = vmatprep.subr.mxu0 0.0
        %7766 = vmatpush1.msra.mxu0 0.0
        %7767 = vmatprep.subr.mxu0 0.0
        %7768 = vmatpush1.msra.mxu0 0.0
        %7769 = vmatprep.subr.mxu0 0.0
        %7770 = vmatpush1.msra.mxu0 0.0
        %7771 = vmatprep.subr.mxu0 0.0
        %7772 = vmatpush1.msra.mxu0 0.0
        %7773 = vmatprep.subr.mxu0 0.0
        %7774 = vmatpush1.msra.mxu0 0.0
        %7775 = vmatprep.subr.mxu0 0.0
        %7776 = vmatpush1.msra.mxu0 0.0
        %7777 = vmatprep.subr.mxu0 0.0
        %7778 = vmatpush1.msra.mxu0 0.0
        %7779 = vmatprep.subr.mxu0 0.0
        %7780 = vmatpush1.msra.mxu0 0.0
        %7781 = vmatprep.subr.mxu0 0.0
        %7782 = vmatpush1.msra.mxu0 0.0
        %7783 = vmatprep.subr.mxu0 0.0
        %7784 = vmatpush1.msra.mxu0 0.0
        %7785 = vmatprep.subr.mxu0 0.0
        %7786 = vmatpush1.msra.mxu0 0.0
        %7787 = vmatprep.subr.mxu0 0.0
        %7788 = vmatpush1.msra.mxu0 0.0
        %7789 = vmatprep.subr.mxu0 0.0
        %7790 = vmatpush1.msra.mxu0 0.0
        %7791 = vmatprep.subr.mxu0 0.0
        %7792 = vmatpush1.msra.mxu0 0.0
        %7793 = vmatprep.subr.mxu0 0.0
        %7794 = vmatpush1.msra.mxu0 0.0
        %7795 = vmatprep.subr.mxu0 0.0
        %7796 = vmatpush1.msra.mxu0 0.0
        %7797 = vmatprep.subr.mxu0 0.0
        %7798 = vmatpush1.msra.mxu0 0.0
        %7799 = vmatprep.subr.mxu0 0.0
        %7800 = vmatpush1.msra.mxu0 0.0
        %7801 = vmatprep.subr.mxu0 0.0
        %7802 = vmatpush1.msra.mxu0 0.0
        %7803 = vmatprep.subr.mxu0 0.0
        %7804 = vmatpush1.msra.mxu0 0.0
        %7805 = vmatprep.subr.mxu0 0.0
        %7806 = vmatpush1.msra.mxu0 0.0
        %7807 = vmatprep.subr.mxu0 0.0
        %7808 = vmatpush1.msra.mxu0 0.0
        %7809 = vmatprep.subr.mxu0 0.0
        %7810 = vmatpush1.msra.mxu0 0.0
        %7811 = vmatprep.subr.mxu0 0.0
        %7812 = vmatpush1.msra.mxu0 0.0
        %7813 = vmatprep.subr.mxu0 0.0
        %7814 = vmatpush1.msra.mxu0 0.0
        %7815 = vmatprep.subr.mxu0 0.0
        %7816 = vmatpush1.msra.mxu0 0.0
        %7817 = vmatprep.subr.mxu0 0.0
        %7818 = vmatpush1.msra.mxu0 0.0
        %7819 = vmatprep.mubr.f32.mxu0 0.0
        %7820 = vmatmul.mubr.f32.gmra.mrb[0].mxu0 %v7121
        %v7821 = vpop.f32.mrb[0].mxu0
        %v7822 = vadd.f32 %v6619, %v7821
        %v7823 = vpop.f32.mrb[0].mxu0
        %v7824 = vadd.f32 %v6621, %v7823
        %7825 = vdwg.mxu0
        %7826 = vmatprep.subr.mxu0 %v7161
        %7827 = vmatpush1.msra.mxu0 %v7159
        %7828 = vmatprep.subr.mxu0 0.0
        %7829 = vmatpush1.msra.mxu0 0.0
        %7830 = vmatprep.subr.mxu0 0.0
        %7831 = vmatpush1.msra.mxu0 0.0
        %7832 = vmatprep.subr.mxu0 0.0
        %7833 = vmatpush1.msra.mxu0 0.0
        %7834 = vmatprep.subr.mxu0 0.0
        %7835 = vmatpush1.msra.mxu0 0.0
        %7836 = vmatprep.subr.mxu0 0.0
        %7837 = vmatpush1.msra.mxu0 0.0
        %7838 = vmatprep.subr.mxu0 0.0
        %7839 = vmatpush1.msra.mxu0 0.0
        %7840 = vmatprep.subr.mxu0 0.0
        %7841 = vmatpush1.msra.mxu0 0.0
        %7842 = vmatprep.subr.mxu0 0.0
        %7843 = vmatpush1.msra.mxu0 0.0
        %7844 = vmatprep.subr.mxu0 0.0
        %7845 = vmatpush1.msra.mxu0 0.0
        %7846 = vmatprep.subr.mxu0 0.0
        %7847 = vmatpush1.msra.mxu0 0.0
        %7848 = vmatprep.subr.mxu0 0.0
        %7849 = vmatpush1.msra.mxu0 0.0
        %7850 = vmatprep.subr.mxu0 0.0
        %7851 = vmatpush1.msra.mxu0 0.0
        %7852 = vmatprep.subr.mxu0 0.0
        %7853 = vmatpush1.msra.mxu0 0.0
        %7854 = vmatprep.subr.mxu0 0.0
        %7855 = vmatpush1.msra.mxu0 0.0
        %7856 = vmatprep.subr.mxu0 0.0
        %7857 = vmatpush1.msra.mxu0 0.0
        %7858 = vmatprep.subr.mxu0 0.0
        %7859 = vmatpush1.msra.mxu0 0.0
        %7860 = vmatprep.subr.mxu0 0.0
        %7861 = vmatpush1.msra.mxu0 0.0
        %7862 = vmatprep.subr.mxu0 0.0
        %7863 = vmatpush1.msra.mxu0 0.0
        %7864 = vmatprep.subr.mxu0 0.0
        %7865 = vmatpush1.msra.mxu0 0.0
        %7866 = vmatprep.subr.mxu0 0.0
        %7867 = vmatpush1.msra.mxu0 0.0
        %7868 = vmatprep.subr.mxu0 0.0
        %7869 = vmatpush1.msra.mxu0 0.0
        %7870 = vmatprep.subr.mxu0 0.0
        %7871 = vmatpush1.msra.mxu0 0.0
        %7872 = vmatprep.subr.mxu0 0.0
        %7873 = vmatpush1.msra.mxu0 0.0
        %7874 = vmatprep.subr.mxu0 0.0
        %7875 = vmatpush1.msra.mxu0 0.0
        %7876 = vmatprep.subr.mxu0 0.0
        %7877 = vmatpush1.msra.mxu0 0.0
        %7878 = vmatprep.subr.mxu0 0.0
        %7879 = vmatpush1.msra.mxu0 0.0
        %7880 = vmatprep.subr.mxu0 0.0
        %7881 = vmatpush1.msra.mxu0 0.0
        %7882 = vmatprep.subr.mxu0 0.0
        %7883 = vmatpush1.msra.mxu0 0.0
        %7884 = vmatprep.subr.mxu0 0.0
        %7885 = vmatpush1.msra.mxu0 0.0
        %7886 = vmatprep.subr.mxu0 0.0
        %7887 = vmatpush1.msra.mxu0 0.0
        %7888 = vmatprep.subr.mxu0 0.0
        %7889 = vmatpush1.msra.mxu0 0.0
        %7890 = vmatprep.mubr.f32.mxu0 0.0
        %7891 = vmatmul.mubr.f32.gmra.mrb[0].mxu0 %v7121
        %v7892 = vpop.f32.mrb[0].mxu0
        %v7893 = vadd.f32 %v6690, %v7892
        %v7894 = vpop.f32.mrb[0].mxu0
        %v7895 = vadd.f32 %v6692, %v7894
        %7896 = vdwg.mxu0
        %7897 = vmatprep.subr.mxu0 %v7165
        %7898 = vmatpush1.msra.mxu0 %v7163
        %7899 = vmatprep.subr.mxu0 0.0
        %7900 = vmatpush1.msra.mxu0 0.0
        %7901 = vmatprep.subr.mxu0 0.0
        %7902 = vmatpush1.msra.mxu0 0.0
        %7903 = vmatprep.subr.mxu0 0.0
        %7904 = vmatpush1.msra.mxu0 0.0
        %7905 = vmatprep.subr.mxu0 0.0
        %7906 = vmatpush1.msra.mxu0 0.0
        %7907 = vmatprep.subr.mxu0 0.0
        %7908 = vmatpush1.msra.mxu0 0.0
        %7909 = vmatprep.subr.mxu0 0.0
        %7910 = vmatpush1.msra.mxu0 0.0
        %7911 = vmatprep.subr.mxu0 0.0
        %7912 = vmatpush1.msra.mxu0 0.0
        %7913 = vmatprep.subr.mxu0 0.0
        %7914 = vmatpush1.msra.mxu0 0.0
        %7915 = vmatprep.subr.mxu0 0.0
        %7916 = vmatpush1.msra.mxu0 0.0
        %7917 = vmatprep.subr.mxu0 0.0
        %7918 = vmatpush1.msra.mxu0 0.0
        %7919 = vmatprep.subr.mxu0 0.0
        %7920 = vmatpush1.msra.mxu0 0.0
        %7921 = vmatprep.subr.mxu0 0.0
        %7922 = vmatpush1.msra.mxu0 0.0
        %7923 = vmatprep.subr.mxu0 0.0
        %7924 = vmatpush1.msra.mxu0 0.0
        %7925 = vmatprep.subr.mxu0 0.0
        %7926 = vmatpush1.msra.mxu0 0.0
        %7927 = vmatprep.subr.mxu0 0.0
        %7928 = vmatpush1.msra.mxu0 0.0
        %7929 = vmatprep.subr.mxu0 0.0
        %7930 = vmatpush1.msra.mxu0 0.0
        %7931 = vmatprep.subr.mxu0 0.0
        %7932 = vmatpush1.msra.mxu0 0.0
        %7933 = vmatprep.subr.mxu0 0.0
        %7934 = vmatpush1.msra.mxu0 0.0
        %7935 = vmatprep.subr.mxu0 0.0
        %7936 = vmatpush1.msra.mxu0 0.0
        %7937 = vmatprep.subr.mxu0 0.0
        %7938 = vmatpush1.msra.mxu0 0.0
        %7939 = vmatprep.subr.mxu0 0.0
        %7940 = vmatpush1.msra.mxu0 0.0
        %7941 = vmatprep.subr.mxu0 0.0
        %7942 = vmatpush1.msra.mxu0 0.0
        %7943 = vmatprep.subr.mxu0 0.0
        %7944 = vmatpush1.msra.mxu0 0.0
        %7945 = vmatprep.subr.mxu0 0.0
        %7946 = vmatpush1.msra.mxu0 0.0
        %7947 = vmatprep.subr.mxu0 0.0
        %7948 = vmatpush1.msra.mxu0 0.0
        %7949 = vmatprep.subr.mxu0 0.0
        %7950 = vmatpush1.msra.mxu0 0.0
        %7951 = vmatprep.subr.mxu0 0.0
        %7952 = vmatpush1.msra.mxu0 0.0
        %7953 = vmatprep.subr.mxu0 0.0
        %7954 = vmatpush1.msra.mxu0 0.0
        %7955 = vmatprep.subr.mxu0 0.0
        %7956 = vmatpush1.msra.mxu0 0.0
        %7957 = vmatprep.subr.mxu0 0.0
        %7958 = vmatpush1.msra.mxu0 0.0
        %7959 = vmatprep.subr.mxu0 0.0
        %7960 = vmatpush1.msra.mxu0 0.0
        %7961 = vmatprep.mubr.f32.mxu0 0.0
        %7962 = vmatmul.mubr.f32.gmra.mrb[0].mxu0 %v7121
        %v7963 = vpop.f32.mrb[0].mxu0
        %v7964 = vadd.f32 %v6761, %v7963
        %v7965 = vpop.f32.mrb[0].mxu0
        %v7966 = vadd.f32 %v6763, %v7965
        %7967 = vdwg.mxu0
        %7968 = vmatprep.subr.mxu0 %v7169
        %7969 = vmatpush1.msra.mxu0 %v7167
        %7970 = vmatprep.subr.mxu0 0.0
        %7971 = vmatpush1.msra.mxu0 0.0
        %7972 = vmatprep.subr.mxu0 0.0
        %7973 = vmatpush1.msra.mxu0 0.0
        %7974 = vmatprep.subr.mxu0 0.0
        %7975 = vmatpush1.msra.mxu0 0.0
        %7976 = vmatprep.subr.mxu0 0.0
        %7977 = vmatpush1.msra.mxu0 0.0
        %7978 = vmatprep.subr.mxu0 0.0
        %7979 = vmatpush1.msra.mxu0 0.0
        %7980 = vmatprep.subr.mxu0 0.0
        %7981 = vmatpush1.msra.mxu0 0.0
        %7982 = vmatprep.subr.mxu0 0.0
        %7983 = vmatpush1.msra.mxu0 0.0
        %7984 = vmatprep.subr.mxu0 0.0
        %7985 = vmatpush1.msra.mxu0 0.0
        %7986 = vmatprep.subr.mxu0 0.0
        %7987 = vmatpush1.msra.mxu0 0.0
        %7988 = vmatprep.subr.mxu0 0.0
        %7989 = vmatpush1.msra.mxu0 0.0
        %7990 = vmatprep.subr.mxu0 0.0
        %7991 = vmatpush1.msra.mxu0 0.0
        %7992 = vmatprep.subr.mxu0 0.0
        %7993 = vmatpush1.msra.mxu0 0.0
        %7994 = vmatprep.subr.mxu0 0.0
        %7995 = vmatpush1.msra.mxu0 0.0
        %7996 = vmatprep.subr.mxu0 0.0
        %7997 = vmatpush1.msra.mxu0 0.0
        %7998 = vmatprep.subr.mxu0 0.0
        %7999 = vmatpush1.msra.mxu0 0.0
        %8000 = vmatprep.subr.mxu0 0.0
        %8001 = vmatpush1.msra.mxu0 0.0
        %8002 = vmatprep.subr.mxu0 0.0
        %8003 = vmatpush1.msra.mxu0 0.0
        %8004 = vmatprep.subr.mxu0 0.0
        %8005 = vmatpush1.msra.mxu0 0.0
        %8006 = vmatprep.subr.mxu0 0.0
        %8007 = vmatpush1.msra.mxu0 0.0
        %8008 = vmatprep.subr.mxu0 0.0
        %8009 = vmatpush1.msra.mxu0 0.0
        %8010 = vmatprep.subr.mxu0 0.0
        %8011 = vmatpush1.msra.mxu0 0.0
        %8012 = vmatprep.subr.mxu0 0.0
        %8013 = vmatpush1.msra.mxu0 0.0
        %8014 = vmatprep.subr.mxu0 0.0
        %8015 = vmatpush1.msra.mxu0 0.0
        %8016 = vmatprep.subr.mxu0 0.0
        %8017 = vmatpush1.msra.mxu0 0.0
        %8018 = vmatprep.subr.mxu0 0.0
        %8019 = vmatpush1.msra.mxu0 0.0
        %8020 = vmatprep.subr.mxu0 0.0
        %8021 = vmatpush1.msra.mxu0 0.0
        %8022 = vmatprep.subr.mxu0 0.0
        %8023 = vmatpush1.msra.mxu0 0.0
        %8024 = vmatprep.subr.mxu0 0.0
        %8025 = vmatpush1.msra.mxu0 0.0
        %8026 = vmatprep.subr.mxu0 0.0
        %8027 = vmatpush1.msra.mxu0 0.0
        %8028 = vmatprep.subr.mxu0 0.0
        %8029 = vmatpush1.msra.mxu0 0.0
        %8030 = vmatprep.subr.mxu0 0.0
        %8031 = vmatpush1.msra.mxu0 0.0
        %8032 = vmatprep.mubr.f32.mxu0 0.0
        %8033 = vmatmul.mubr.f32.gmra.mrb[0].mxu0 %v7121
        %v8034 = vpop.f32.mrb[0].mxu0
        %v8035 = vadd.f32 %v6832, %v8034
        %v8036 = vpop.f32.mrb[0].mxu0
        %v8037 = vadd.f32 %v6834, %v8036
        %8038 = vdwg.mxu0
        %8039 = vmatprep.subr.mxu0 %v7173
        %8040 = vmatpush1.msra.mxu0 %v7171
        %8041 = vmatprep.subr.mxu0 0.0
        %8042 = vmatpush1.msra.mxu0 0.0
        %8043 = vmatprep.subr.mxu0 0.0
        %8044 = vmatpush1.msra.mxu0 0.0
        %8045 = vmatprep.subr.mxu0 0.0
        %8046 = vmatpush1.msra.mxu0 0.0
        %8047 = vmatprep.subr.mxu0 0.0
        %8048 = vmatpush1.msra.mxu0 0.0
        %8049 = vmatprep.subr.mxu0 0.0
        %8050 = vmatpush1.msra.mxu0 0.0
        %8051 = vmatprep.subr.mxu0 0.0
        %8052 = vmatpush1.msra.mxu0 0.0
        %8053 = vmatprep.subr.mxu0 0.0
        %8054 = vmatpush1.msra.mxu0 0.0
        %8055 = vmatprep.subr.mxu0 0.0
        %8056 = vmatpush1.msra.mxu0 0.0
        %8057 = vmatprep.subr.mxu0 0.0
        %8058 = vmatpush1.msra.mxu0 0.0
        %8059 = vmatprep.subr.mxu0 0.0
        %8060 = vmatpush1.msra.mxu0 0.0
        %8061 = vmatprep.subr.mxu0 0.0
        %8062 = vmatpush1.msra.mxu0 0.0
        %8063 = vmatprep.subr.mxu0 0.0
        %8064 = vmatpush1.msra.mxu0 0.0
        %8065 = vmatprep.subr.mxu0 0.0
        %8066 = vmatpush1.msra.mxu0 0.0
        %8067 = vmatprep.subr.mxu0 0.0
        %8068 = vmatpush1.msra.mxu0 0.0
        %8069 = vmatprep.subr.mxu0 0.0
        %8070 = vmatpush1.msra.mxu0 0.0
        %8071 = vmatprep.subr.mxu0 0.0
        %8072 = vmatpush1.msra.mxu0 0.0
        %8073 = vmatprep.subr.mxu0 0.0
        %8074 = vmatpush1.msra.mxu0 0.0
        %8075 = vmatprep.subr.mxu0 0.0
        %8076 = vmatpush1.msra.mxu0 0.0
        %8077 = vmatprep.subr.mxu0 0.0
        %8078 = vmatpush1.msra.mxu0 0.0
        %8079 = vmatprep.subr.mxu0 0.0
        %8080 = vmatpush1.msra.mxu0 0.0
        %8081 = vmatprep.subr.mxu0 0.0
        %8082 = vmatpush1.msra.mxu0 0.0
        %8083 = vmatprep.subr.mxu0 0.0
        %8084 = vmatpush1.msra.mxu0 0.0
        %8085 = vmatprep.subr.mxu0 0.0
        %8086 = vmatpush1.msra.mxu0 0.0
        %8087 = vmatprep.subr.mxu0 0.0
        %8088 = vmatpush1.msra.mxu0 0.0
        %8089 = vmatprep.subr.mxu0 0.0
        %8090 = vmatpush1.msra.mxu0 0.0
        %8091 = vmatprep.subr.mxu0 0.0
        %8092 = vmatpush1.msra.mxu0 0.0
        %8093 = vmatprep.subr.mxu0 0.0
        %8094 = vmatpush1.msra.mxu0 0.0
        %8095 = vmatprep.subr.mxu0 0.0
        %8096 = vmatpush1.msra.mxu0 0.0
        %8097 = vmatprep.subr.mxu0 0.0
        %8098 = vmatpush1.msra.mxu0 0.0
        %8099 = vmatprep.subr.mxu0 0.0
        %8100 = vmatpush1.msra.mxu0 0.0
        %8101 = vmatprep.subr.mxu0 0.0
        %8102 = vmatpush1.msra.mxu0 0.0
        %8103 = vmatprep.mubr.f32.mxu0 0.0
        %8104 = vmatmul.mubr.f32.gmra.mrb[0].mxu0 %v7121
        %v8105 = vpop.f32.mrb[0].mxu0
        %v8106 = vadd.f32 %v6903, %v8105
        %v8107 = vpop.f32.mrb[0].mxu0
        %v8108 = vadd.f32 %v6905, %v8107
        %8109 = vdwg.mxu0
        %8110 = vmatprep.subr.mxu0 %v7177
        %8111 = vmatpush1.msra.mxu0 %v7175
        %8112 = vmatprep.subr.mxu0 0.0
        %8113 = vmatpush1.msra.mxu0 0.0
        %8114 = vmatprep.subr.mxu0 0.0
        %8115 = vmatpush1.msra.mxu0 0.0
        %8116 = vmatprep.subr.mxu0 0.0
        %8117 = vmatpush1.msra.mxu0 0.0
        %8118 = vmatprep.subr.mxu0 0.0
        %8119 = vmatpush1.msra.mxu0 0.0
        %8120 = vmatprep.subr.mxu0 0.0
        %8121 = vmatpush1.msra.mxu0 0.0
        %8122 = vmatprep.subr.mxu0 0.0
        %8123 = vmatpush1.msra.mxu0 0.0
        %8124 = vmatprep.subr.mxu0 0.0
        %8125 = vmatpush1.msra.mxu0 0.0
        %8126 = vmatprep.subr.mxu0 0.0
        %8127 = vmatpush1.msra.mxu0 0.0
        %8128 = vmatprep.subr.mxu0 0.0
        %8129 = vmatpush1.msra.mxu0 0.0
        %8130 = vmatprep.subr.mxu0 0.0
        %8131 = vmatpush1.msra.mxu0 0.0
        %8132 = vmatprep.subr.mxu0 0.0
        %8133 = vmatpush1.msra.mxu0 0.0
        %8134 = vmatprep.subr.mxu0 0.0
        %8135 = vmatpush1.msra.mxu0 0.0
        %8136 = vmatprep.subr.mxu0 0.0
        %8137 = vmatpush1.msra.mxu0 0.0
        %8138 = vmatprep.subr.mxu0 0.0
        %8139 = vmatpush1.msra.mxu0 0.0
        %8140 = vmatprep.subr.mxu0 0.0
        %8141 = vmatpush1.msra.mxu0 0.0
        %8142 = vmatprep.subr.mxu0 0.0
        %8143 = vmatpush1.msra.mxu0 0.0
        %8144 = vmatprep.subr.mxu0 0.0
        %8145 = vmatpush1.msra.mxu0 0.0
        %8146 = vmatprep.subr.mxu0 0.0
        %8147 = vmatpush1.msra.mxu0 0.0
        %8148 = vmatprep.subr.mxu0 0.0
        %8149 = vmatpush1.msra.mxu0 0.0
        %8150 = vmatprep.subr.mxu0 0.0
        %8151 = vmatpush1.msra.mxu0 0.0
        %8152 = vmatprep.subr.mxu0 0.0
        %8153 = vmatpush1.msra.mxu0 0.0
        %8154 = vmatprep.subr.mxu0 0.0
        %8155 = vmatpush1.msra.mxu0 0.0
        %8156 = vmatprep.subr.mxu0 0.0
        %8157 = vmatpush1.msra.mxu0 0.0
        %8158 = vmatprep.subr.mxu0 0.0
        %8159 = vmatpush1.msra.mxu0 0.0
        %8160 = vmatprep.subr.mxu0 0.0
        %8161 = vmatpush1.msra.mxu0 0.0
        %8162 = vmatprep.subr.mxu0 0.0
        %8163 = vmatpush1.msra.mxu0 0.0
        %8164 = vmatprep.subr.mxu0 0.0
        %8165 = vmatpush1.msra.mxu0 0.0
        %8166 = vmatprep.subr.mxu0 0.0
        %8167 = vmatpush1.msra.mxu0 0.0
        %8168 = vmatprep.subr.mxu0 0.0
        %8169 = vmatpush1.msra.mxu0 0.0
        %8170 = vmatprep.subr.mxu0 0.0
        %8171 = vmatpush1.msra.mxu0 0.0
        %8172 = vmatprep.subr.mxu0 0.0
        %8173 = vmatpush1.msra.mxu0 0.0
        %8174 = vmatprep.mubr.f32.mxu0 0.0
        %8175 = vmatmul.mubr.f32.gmra.mrb[0].mxu0 %v7121
        %v8176 = vpop.f32.mrb[0].mxu0
        %v8177 = vadd.f32 %v6974, %v8176
        %v8178 = vpop.f32.mrb[0].mxu0
        %v8179 = vadd.f32 %v6976, %v8178
        %8180 = vdwg.mxu0
        %8181 = vmatprep.subr.mxu0 %v7181
        %8182 = vmatpush1.msra.mxu0 %v7179
        %8183 = vmatprep.subr.mxu0 0.0
        %8184 = vmatpush1.msra.mxu0 0.0
        %8185 = vmatprep.subr.mxu0 0.0
        %8186 = vmatpush1.msra.mxu0 0.0
        %8187 = vmatprep.subr.mxu0 0.0
        %8188 = vmatpush1.msra.mxu0 0.0
        %8189 = vmatprep.subr.mxu0 0.0
        %8190 = vmatpush1.msra.mxu0 0.0
        %8191 = vmatprep.subr.mxu0 0.0
        %8192 = vmatpush1.msra.mxu0 0.0
        %8193 = vmatprep.subr.mxu0 0.0
        %8194 = vmatpush1.msra.mxu0 0.0
        %8195 = vmatprep.subr.mxu0 0.0
        %8196 = vmatpush1.msra.mxu0 0.0
        %8197 = vmatprep.subr.mxu0 0.0
        %8198 = vmatpush1.msra.mxu0 0.0
        %8199 = vmatprep.subr.mxu0 0.0
        %8200 = vmatpush1.msra.mxu0 0.0
        %8201 = vmatprep.subr.mxu0 0.0
        %8202 = vmatpush1.msra.mxu0 0.0
        %8203 = vmatprep.subr.mxu0 0.0
        %8204 = vmatpush1.msra.mxu0 0.0
        %8205 = vmatprep.subr.mxu0 0.0
        %8206 = vmatpush1.msra.mxu0 0.0
        %8207 = vmatprep.subr.mxu0 0.0
        %8208 = vmatpush1.msra.mxu0 0.0
        %8209 = vmatprep.subr.mxu0 0.0
        %8210 = vmatpush1.msra.mxu0 0.0
        %8211 = vmatprep.subr.mxu0 0.0
        %8212 = vmatpush1.msra.mxu0 0.0
        %8213 = vmatprep.subr.mxu0 0.0
        %8214 = vmatpush1.msra.mxu0 0.0
        %8215 = vmatprep.subr.mxu0 0.0
        %8216 = vmatpush1.msra.mxu0 0.0
        %8217 = vmatprep.subr.mxu0 0.0
        %8218 = vmatpush1.msra.mxu0 0.0
        %8219 = vmatprep.subr.mxu0 0.0
        %8220 = vmatpush1.msra.mxu0 0.0
        %8221 = vmatprep.subr.mxu0 0.0
        %8222 = vmatpush1.msra.mxu0 0.0
        %8223 = vmatprep.subr.mxu0 0.0
        %8224 = vmatpush1.msra.mxu0 0.0
        %8225 = vmatprep.subr.mxu0 0.0
        %8226 = vmatpush1.msra.mxu0 0.0
        %8227 = vmatprep.subr.mxu0 0.0
        %8228 = vmatpush1.msra.mxu0 0.0
        %8229 = vmatprep.subr.mxu0 0.0
        %8230 = vmatpush1.msra.mxu0 0.0
        %8231 = vmatprep.subr.mxu0 0.0
        %8232 = vmatpush1.msra.mxu0 0.0
        %8233 = vmatprep.subr.mxu0 0.0
        %8234 = vmatpush1.msra.mxu0 0.0
        %8235 = vmatprep.subr.mxu0 0.0
        %8236 = vmatpush1.msra.mxu0 0.0
        %8237 = vmatprep.subr.mxu0 0.0
        %8238 = vmatpush1.msra.mxu0 0.0
        %8239 = vmatprep.subr.mxu0 0.0
        %8240 = vmatpush1.msra.mxu0 0.0
        %8241 = vmatprep.subr.mxu0 0.0
        %8242 = vmatpush1.msra.mxu0 0.0
        %8243 = vmatprep.subr.mxu0 0.0
        %8244 = vmatpush1.msra.mxu0 0.0
        %8245 = vmatprep.mubr.f32.mxu0 0.0
        %8246 = vmatmul.mubr.f32.gmra.mrb[0].mxu0 %v7121
        %v8247 = vpop.f32.mrb[0].mxu0
        %v8248 = vadd.f32 %v7045, %v8247
        %v8249 = vpop.f32.mrb[0].mxu0
        %v8250 = vadd.f32 %v7047, %v8249
        %8251 = vdwg.mxu0
        %8252 = vmatprep.subr.mxu0 %v7185
        %8253 = vmatpush1.msra.mxu0 %v7183
        %8254 = vmatprep.subr.mxu0 0.0
        %8255 = vmatpush1.msra.mxu0 0.0
        %8256 = vmatprep.subr.mxu0 0.0
        %8257 = vmatpush1.msra.mxu0 0.0
        %8258 = vmatprep.subr.mxu0 0.0
        %8259 = vmatpush1.msra.mxu0 0.0
        %8260 = vmatprep.subr.mxu0 0.0
        %8261 = vmatpush1.msra.mxu0 0.0
        %8262 = vmatprep.subr.mxu0 0.0
        %8263 = vmatpush1.msra.mxu0 0.0
        %8264 = vmatprep.subr.mxu0 0.0
        %8265 = vmatpush1.msra.mxu0 0.0
        %8266 = vmatprep.subr.mxu0 0.0
        %8267 = vmatpush1.msra.mxu0 0.0
        %8268 = vmatprep.subr.mxu0 0.0
        %8269 = vmatpush1.msra.mxu0 0.0
        %8270 = vmatprep.subr.mxu0 0.0
        %8271 = vmatpush1.msra.mxu0 0.0
        %8272 = vmatprep.subr.mxu0 0.0
        %8273 = vmatpush1.msra.mxu0 0.0
        %8274 = vmatprep.subr.mxu0 0.0
        %8275 = vmatpush1.msra.mxu0 0.0
        %8276 = vmatprep.subr.mxu0 0.0
        %8277 = vmatpush1.msra.mxu0 0.0
        %8278 = vmatprep.subr.mxu0 0.0
        %8279 = vmatpush1.msra.mxu0 0.0
        %8280 = vmatprep.subr.mxu0 0.0
        %8281 = vmatpush1.msra.mxu0 0.0
        %8282 = vmatprep.subr.mxu0 0.0
        %8283 = vmatpush1.msra.mxu0 0.0
        %8284 = vmatprep.subr.mxu0 0.0
        %8285 = vmatpush1.msra.mxu0 0.0
        %8286 = vmatprep.subr.mxu0 0.0
        %8287 = vmatpush1.msra.mxu0 0.0
        %8288 = vmatprep.subr.mxu0 0.0
        %8289 = vmatpush1.msra.mxu0 0.0
        %8290 = vmatprep.subr.mxu0 0.0
        %8291 = vmatpush1.msra.mxu0 0.0
        %8292 = vmatprep.subr.mxu0 0.0
        %8293 = vmatpush1.msra.mxu0 0.0
        %8294 = vmatprep.subr.mxu0 0.0
        %8295 = vmatpush1.msra.mxu0 0.0
        %8296 = vmatprep.subr.mxu0 0.0
        %8297 = vmatpush1.msra.mxu0 0.0
        %8298 = vmatprep.subr.mxu0 0.0
        %8299 = vmatpush1.msra.mxu0 0.0
        %8300 = vmatprep.subr.mxu0 0.0
        %8301 = vmatpush1.msra.mxu0 0.0
        %8302 = vmatprep.subr.mxu0 0.0
        %8303 = vmatpush1.msra.mxu0 0.0
        %8304 = vmatprep.subr.mxu0 0.0
        %8305 = vmatpush1.msra.mxu0 0.0
        %8306 = vmatprep.subr.mxu0 0.0
        %8307 = vmatpush1.msra.mxu0 0.0
        %8308 = vmatprep.subr.mxu0 0.0
        %8309 = vmatpush1.msra.mxu0 0.0
        %8310 = vmatprep.subr.mxu0 0.0
        %8311 = vmatpush1.msra.mxu0 0.0
        %8312 = vmatprep.subr.mxu0 0.0
        %8313 = vmatpush1.msra.mxu0 0.0
        %8314 = vmatprep.subr.mxu0 0.0
        %8315 = vmatpush1.msra.mxu0 0.0
        %8316 = vmatprep.mubr.f32.mxu0 0.0
        %8317 = vmatmul.mubr.f32.gmra.mrb[0].mxu0 %v7121
        %v8318 = vpop.f32.mrb[0].mxu0
        %v8319 = vadd.f32 %v7116, %v8318
        %v8320 = vpop.f32.mrb[0].mxu0
        %v8321 = vadd.f32 %v7118, %v8320
        %8322 = vdwg.mxu0
        %8323 = vmatprep.subr.mxu0 %v2056
        %8324 = vmatpush1.msra.mxu0 %v2054
        %8325 = vmatprep.subr.mxu0 0.0
        %8326 = vmatpush1.msra.mxu0 0.0
        %8327 = vmatprep.subr.mxu0 0.0
        %8328 = vmatpush1.msra.mxu0 0.0
        %8329 = vmatprep.subr.mxu0 0.0
        %8330 = vmatpush1.msra.mxu0 0.0
        %8331 = vmatprep.subr.mxu0 0.0
        %8332 = vmatpush1.msra.mxu0 0.0
        %8333 = vmatprep.subr.mxu0 0.0
        %8334 = vmatpush1.msra.mxu0 0.0
        %8335 = vmatprep.subr.mxu0 0.0
        %8336 = vmatpush1.msra.mxu0 0.0
        %8337 = vmatprep.subr.mxu0 0.0
        %8338 = vmatpush1.msra.mxu0 0.0
        %8339 = vmatprep.subr.mxu0 0.0
        %8340 = vmatpush1.msra.mxu0 0.0
        %8341 = vmatprep.subr.mxu0 0.0
        %8342 = vmatpush1.msra.mxu0 0.0
        %8343 = vmatprep.subr.mxu0 0.0
        %8344 = vmatpush1.msra.mxu0 0.0
        %8345 = vmatprep.subr.mxu0 0.0
        %8346 = vmatpush1.msra.mxu0 0.0
        %8347 = vmatprep.subr.mxu0 0.0
        %8348 = vmatpush1.msra.mxu0 0.0
        %8349 = vmatprep.subr.mxu0 0.0
        %8350 = vmatpush1.msra.mxu0 0.0
        %8351 = vmatprep.subr.mxu0 0.0
        %8352 = vmatpush1.msra.mxu0 0.0
        %8353 = vmatprep.subr.mxu0 0.0
        %8354 = vmatpush1.msra.mxu0 0.0
        %8355 = vmatprep.subr.mxu0 0.0
        %8356 = vmatpush1.msra.mxu0 0.0
        %8357 = vmatprep.subr.mxu0 0.0
        %8358 = vmatpush1.msra.mxu0 0.0
        %8359 = vmatprep.subr.mxu0 0.0
        %8360 = vmatpush1.msra.mxu0 0.0
        %8361 = vmatprep.subr.mxu0 0.0
        %8362 = vmatpush1.msra.mxu0 0.0
        %8363 = vmatprep.subr.mxu0 0.0
        %8364 = vmatpush1.msra.mxu0 0.0
        %8365 = vmatprep.subr.mxu0 0.0
        %8366 = vmatpush1.msra.mxu0 0.0
        %8367 = vmatprep.subr.mxu0 0.0
        %8368 = vmatpush1.msra.mxu0 0.0
        %8369 = vmatprep.subr.mxu0 0.0
        %8370 = vmatpush1.msra.mxu0 0.0
        %8371 = vmatprep.subr.mxu0 0.0
        %8372 = vmatpush1.msra.mxu0 0.0
        %8373 = vmatprep.subr.mxu0 0.0
        %8374 = vmatpush1.msra.mxu0 0.0
        %8375 = vmatprep.subr.mxu0 0.0
        %8376 = vmatpush1.msra.mxu0 0.0
        %8377 = vmatprep.subr.mxu0 0.0
        %8378 = vmatpush1.msra.mxu0 0.0
        %8379 = vmatprep.subr.mxu0 0.0
        %8380 = vmatpush1.msra.mxu0 0.0
        %8381 = vmatprep.subr.mxu0 0.0
        %8382 = vmatpush1.msra.mxu0 0.0
        %8383 = vmatprep.subr.mxu0 0.0
        %8384 = vmatpush1.msra.mxu0 0.0
        %8385 = vmatprep.subr.mxu0 0.0
        %8386 = vmatpush1.msra.mxu0 0.0
        %8387 = vmatprep.mubr.f32.mxu0 0.0
        %8388 = vmatmul.mubr.f32.gmra.mrb[0].mxu0 %v1985
        %v8389 = vpop.f32.mrb[0].mxu0
        %v8390 = vadd.f32 0.0, %v8389
        %v8391 = vpop.f32.mrb[0].mxu0
        %v8392 = vadd.f32 0.0, %v8391
        %8393 = vdwg.mxu0
        %8394 = vmatprep.subr.mxu0 %v2127
        %8395 = vmatpush1.msra.mxu0 %v2125
        %8396 = vmatprep.subr.mxu0 0.0
        %8397 = vmatpush1.msra.mxu0 0.0
        %8398 = vmatprep.subr.mxu0 0.0
        %8399 = vmatpush1.msra.mxu0 0.0
        %8400 = vmatprep.subr.mxu0 0.0
        %8401 = vmatpush1.msra.mxu0 0.0
        %8402 = vmatprep.subr.mxu0 0.0
        %8403 = vmatpush1.msra.mxu0 0.0
        %8404 = vmatprep.subr.mxu0 0.0
        %8405 = vmatpush1.msra.mxu0 0.0
        %8406 = vmatprep.subr.mxu0 0.0
        %8407 = vmatpush1.msra.mxu0 0.0
        %8408 = vmatprep.subr.mxu0 0.0
        %8409 = vmatpush1.msra.mxu0 0.0
        %8410 = vmatprep.subr.mxu0 0.0
        %8411 = vmatpush1.msra.mxu0 0.0
        %8412 = vmatprep.subr.mxu0 0.0
        %8413 = vmatpush1.msra.mxu0 0.0
        %8414 = vmatprep.subr.mxu0 0.0
        %8415 = vmatpush1.msra.mxu0 0.0
        %8416 = vmatprep.subr.mxu0 0.0
        %8417 = vmatpush1.msra.mxu0 0.0
        %8418 = vmatprep.subr.mxu0 0.0
        %8419 = vmatpush1.msra.mxu0 0.0
        %8420 = vmatprep.subr.mxu0 0.0
        %8421 = vmatpush1.msra.mxu0 0.0
        %8422 = vmatprep.subr.mxu0 0.0
        %8423 = vmatpush1.msra.mxu0 0.0
        %8424 = vmatprep.subr.mxu0 0.0
        %8425 = vmatpush1.msra.mxu0 0.0
        %8426 = vmatprep.subr.mxu0 0.0
        %8427 = vmatpush1.msra.mxu0 0.0
        %8428 = vmatprep.subr.mxu0 0.0
        %8429 = vmatpush1.msra.mxu0 0.0
        %8430 = vmatprep.subr.mxu0 0.0
        %8431 = vmatpush1.msra.mxu0 0.0
        %8432 = vmatprep.subr.mxu0 0.0
        %8433 = vmatpush1.msra.mxu0 0.0
        %8434 = vmatprep.subr.mxu0 0.0
        %8435 = vmatpush1.msra.mxu0 0.0
        %8436 = vmatprep.subr.mxu0 0.0
        %8437 = vmatpush1.msra.mxu0 0.0
        %8438 = vmatprep.subr.mxu0 0.0
        %8439 = vmatpush1.msra.mxu0 0.0
        %8440 = vmatprep.subr.mxu0 0.0
        %8441 = vmatpush1.msra.mxu0 0.0
        %8442 = vmatprep.subr.mxu0 0.0
        %8443 = vmatpush1.msra.mxu0 0.0
        %8444 = vmatprep.subr.mxu0 0.0
        %8445 = vmatpush1.msra.mxu0 0.0
        %8446 = vmatprep.subr.mxu0 0.0
        %8447 = vmatpush1.msra.mxu0 0.0
        %8448 = vmatprep.subr.mxu0 0.0
        %8449 = vmatpush1.msra.mxu0 0.0
        %8450 = vmatprep.subr.mxu0 0.0
        %8451 = vmatpush1.msra.mxu0 0.0
        %8452 = vmatprep.subr.mxu0 0.0
        %8453 = vmatpush1.msra.mxu0 0.0
        %8454 = vmatprep.subr.mxu0 0.0
        %8455 = vmatpush1.msra.mxu0 0.0
        %8456 = vmatprep.subr.mxu0 0.0
        %8457 = vmatpush1.msra.mxu0 0.0
        %8458 = vmatprep.mubr.f32.mxu0 0.0
        %8459 = vmatmul.mubr.f32.gmra.mrb[0].mxu0 %v1985
        %v8460 = vpop.f32.mrb[0].mxu0
        %v8461 = vadd.f32 0.0, %v8460
        %v8462 = vpop.f32.mrb[0].mxu0
        %v8463 = vadd.f32 0.0, %v8462
        %8464 = vdwg.mxu0
        %8465 = vmatprep.subr.mxu0 %v2198
        %8466 = vmatpush1.msra.mxu0 %v2196
        %8467 = vmatprep.subr.mxu0 0.0
        %8468 = vmatpush1.msra.mxu0 0.0
        %8469 = vmatprep.subr.mxu0 0.0
        %8470 = vmatpush1.msra.mxu0 0.0
        %8471 = vmatprep.subr.mxu0 0.0
        %8472 = vmatpush1.msra.mxu0 0.0
        %8473 = vmatprep.subr.mxu0 0.0
        %8474 = vmatpush1.msra.mxu0 0.0
        %8475 = vmatprep.subr.mxu0 0.0
        %8476 = vmatpush1.msra.mxu0 0.0
        %8477 = vmatprep.subr.mxu0 0.0
        %8478 = vmatpush1.msra.mxu0 0.0
        %8479 = vmatprep.subr.mxu0 0.0
        %8480 = vmatpush1.msra.mxu0 0.0
        %8481 = vmatprep.subr.mxu0 0.0
        %8482 = vmatpush1.msra.mxu0 0.0
        %8483 = vmatprep.subr.mxu0 0.0
        %8484 = vmatpush1.msra.mxu0 0.0
        %8485 = vmatprep.subr.mxu0 0.0
        %8486 = vmatpush1.msra.mxu0 0.0
        %8487 = vmatprep.subr.mxu0 0.0
        %8488 = vmatpush1.msra.mxu0 0.0
        %8489 = vmatprep.subr.mxu0 0.0
        %8490 = vmatpush1.msra.mxu0 0.0
        %8491 = vmatprep.subr.mxu0 0.0
        %8492 = vmatpush1.msra.mxu0 0.0
        %8493 = vmatprep.subr.mxu0 0.0
        %8494 = vmatpush1.msra.mxu0 0.0
        %8495 = vmatprep.subr.mxu0 0.0
        %8496 = vmatpush1.msra.mxu0 0.0
        %8497 = vmatprep.subr.mxu0 0.0
        %8498 = vmatpush1.msra.mxu0 0.0
        %8499 = vmatprep.subr.mxu0 0.0
        %8500 = vmatpush1.msra.mxu0 0.0
        %8501 = vmatprep.subr.mxu0 0.0
        %8502 = vmatpush1.msra.mxu0 0.0
        %8503 = vmatprep.subr.mxu0 0.0
        %8504 = vmatpush1.msra.mxu0 0.0
        %8505 = vmatprep.subr.mxu0 0.0
        %8506 = vmatpush1.msra.mxu0 0.0
        %8507 = vmatprep.subr.mxu0 0.0
        %8508 = vmatpush1.msra.mxu0 0.0
        %8509 = vmatprep.subr.mxu0 0.0
        %8510 = vmatpush1.msra.mxu0 0.0
        %8511 = vmatprep.subr.mxu0 0.0
        %8512 = vmatpush1.msra.mxu0 0.0
        %8513 = vmatprep.subr.mxu0 0.0
        %8514 = vmatpush1.msra.mxu0 0.0
        %8515 = vmatprep.subr.mxu0 0.0
        %8516 = vmatpush1.msra.mxu0 0.0
        %8517 = vmatprep.subr.mxu0 0.0
        %8518 = vmatpush1.msra.mxu0 0.0
        %8519 = vmatprep.subr.mxu0 0.0
        %8520 = vmatpush1.msra.mxu0 0.0
        %8521 = vmatprep.subr.mxu0 0.0
        %8522 = vmatpush1.msra.mxu0 0.0
        %8523 = vmatprep.subr.mxu0 0.0
        %8524 = vmatpush1.msra.mxu0 0.0
        %8525 = vmatprep.subr.mxu0 0.0
        %8526 = vmatpush1.msra.mxu0 0.0
        %8527 = vmatprep.subr.mxu0 0.0
        %8528 = vmatpush1.msra.mxu0 0.0
        %8529 = vmatprep.mubr.f32.mxu0 0.0
        %8530 = vmatmul.mubr.f32.gmra.mrb[0].mxu0 %v1985
        %v8531 = vpop.f32.mrb[0].mxu0
        %v8532 = vadd.f32 0.0, %v8531
        %v8533 = vpop.f32.mrb[0].mxu0
        %v8534 = vadd.f32 0.0, %v8533
        %8535 = vdwg.mxu0
        %8536 = vmatprep.subr.mxu0 %v2269
        %8537 = vmatpush1.msra.mxu0 %v2267
        %8538 = vmatprep.subr.mxu0 0.0
        %8539 = vmatpush1.msra.mxu0 0.0
        %8540 = vmatprep.subr.mxu0 0.0
        %8541 = vmatpush1.msra.mxu0 0.0
        %8542 = vmatprep.subr.mxu0 0.0
        %8543 = vmatpush1.msra.mxu0 0.0
        %8544 = vmatprep.subr.mxu0 0.0
        %8545 = vmatpush1.msra.mxu0 0.0
        %8546 = vmatprep.subr.mxu0 0.0
        %8547 = vmatpush1.msra.mxu0 0.0
        %8548 = vmatprep.subr.mxu0 0.0
        %8549 = vmatpush1.msra.mxu0 0.0
        %8550 = vmatprep.subr.mxu0 0.0
        %8551 = vmatpush1.msra.mxu0 0.0
        %8552 = vmatprep.subr.mxu0 0.0
        %8553 = vmatpush1.msra.mxu0 0.0
        %8554 = vmatprep.subr.mxu0 0.0
        %8555 = vmatpush1.msra.mxu0 0.0
        %8556 = vmatprep.subr.mxu0 0.0
        %8557 = vmatpush1.msra.mxu0 0.0
        %8558 = vmatprep.subr.mxu0 0.0
        %8559 = vmatpush1.msra.mxu0 0.0
        %8560 = vmatprep.subr.mxu0 0.0
        %8561 = vmatpush1.msra.mxu0 0.0
        %8562 = vmatprep.subr.mxu0 0.0
        %8563 = vmatpush1.msra.mxu0 0.0
        %8564 = vmatprep.subr.mxu0 0.0
        %8565 = vmatpush1.msra.mxu0 0.0
        %8566 = vmatprep.subr.mxu0 0.0
        %8567 = vmatpush1.msra.mxu0 0.0
        %8568 = vmatprep.subr.mxu0 0.0
        %8569 = vmatpush1.msra.mxu0 0.0
        %8570 = vmatprep.subr.mxu0 0.0
        %8571 = vmatpush1.msra.mxu0 0.0
        %8572 = vmatprep.subr.mxu0 0.0
        %8573 = vmatpush1.msra.mxu0 0.0
        %8574 = vmatprep.subr.mxu0 0.0
        %8575 = vmatpush1.msra.mxu0 0.0
        %8576 = vmatprep.subr.mxu0 0.0
        %8577 = vmatpush1.msra.mxu0 0.0
        %8578 = vmatprep.subr.mxu0 0.0
        %8579 = vmatpush1.msra.mxu0 0.0
        %8580 = vmatprep.subr.mxu0 0.0
        %8581 = vmatpush1.msra.mxu0 0.0
        %8582 = vmatprep.subr.mxu0 0.0
        %8583 = vmatpush1.msra.mxu0 0.0
        %8584 = vmatprep.subr.mxu0 0.0
        %8585 = vmatpush1.msra.mxu0 0.0
        %8586 = vmatprep.subr.mxu0 0.0
        %8587 = vmatpush1.msra.mxu0 0.0
        %8588 = vmatprep.subr.mxu0 0.0
        %8589 = vmatpush1.msra.mxu0 0.0
        %8590 = vmatprep.subr.mxu0 0.0
        %8591 = vmatpush1.msra.mxu0 0.0
        %8592 = vmatprep.subr.mxu0 0.0
        %8593 = vmatpush1.msra.mxu0 0.0
        %8594 = vmatprep.subr.mxu0 0.0
        %8595 = vmatpush1.msra.mxu0 0.0
        %8596 = vmatprep.subr.mxu0 0.0
        %8597 = vmatpush1.msra.mxu0 0.0
        %8598 = vmatprep.subr.mxu0 0.0
        %8599 = vmatpush1.msra.mxu0 0.0
        %8600 = vmatprep.mubr.f32.mxu0 0.0
        %8601 = vmatmul.mubr.f32.gmra.mrb[0].mxu0 %v1985
        %v8602 = vpop.f32.mrb[0].mxu0
        %v8603 = vadd.f32 0.0, %v8602
        %v8604 = vpop.f32.mrb[0].mxu0
        %v8605 = vadd.f32 0.0, %v8604
        %8606 = vdwg.mxu0
        %8607 = vmatprep.subr.mxu0 %v2340
        %8608 = vmatpush1.msra.mxu0 %v2338
        %8609 = vmatprep.subr.mxu0 0.0
        %8610 = vmatpush1.msra.mxu0 0.0
        %8611 = vmatprep.subr.mxu0 0.0
        %8612 = vmatpush1.msra.mxu0 0.0
        %8613 = vmatprep.subr.mxu0 0.0
        %8614 = vmatpush1.msra.mxu0 0.0
        %8615 = vmatprep.subr.mxu0 0.0
        %8616 = vmatpush1.msra.mxu0 0.0
        %8617 = vmatprep.subr.mxu0 0.0
        %8618 = vmatpush1.msra.mxu0 0.0
        %8619 = vmatprep.subr.mxu0 0.0
        %8620 = vmatpush1.msra.mxu0 0.0
        %8621 = vmatprep.subr.mxu0 0.0
        %8622 = vmatpush1.msra.mxu0 0.0
        %8623 = vmatprep.subr.mxu0 0.0
        %8624 = vmatpush1.msra.mxu0 0.0
        %8625 = vmatprep.subr.mxu0 0.0
        %8626 = vmatpush1.msra.mxu0 0.0
        %8627 = vmatprep.subr.mxu0 0.0
        %8628 = vmatpush1.msra.mxu0 0.0
        %8629 = vmatprep.subr.mxu0 0.0
        %8630 = vmatpush1.msra.mxu0 0.0
        %8631 = vmatprep.subr.mxu0 0.0
        %8632 = vmatpush1.msra.mxu0 0.0
        %8633 = vmatprep.subr.mxu0 0.0
        %8634 = vmatpush1.msra.mxu0 0.0
        %8635 = vmatprep.subr.mxu0 0.0
        %8636 = vmatpush1.msra.mxu0 0.0
        %8637 = vmatprep.subr.mxu0 0.0
        %8638 = vmatpush1.msra.mxu0 0.0
        %8639 = vmatprep.subr.mxu0 0.0
        %8640 = vmatpush1.msra.mxu0 0.0
        %8641 = vmatprep.subr.mxu0 0.0
        %8642 = vmatpush1.msra.mxu0 0.0
        %8643 = vmatprep.subr.mxu0 0.0
        %8644 = vmatpush1.msra.mxu0 0.0
        %8645 = vmatprep.subr.mxu0 0.0
        %8646 = vmatpush1.msra.mxu0 0.0
        %8647 = vmatprep.subr.mxu0 0.0
        %8648 = vmatpush1.msra.mxu0 0.0
        %8649 = vmatprep.subr.mxu0 0.0
        %8650 = vmatpush1.msra.mxu0 0.0
        %8651 = vmatprep.subr.mxu0 0.0
        %8652 = vmatpush1.msra.mxu0 0.0
        %8653 = vmatprep.subr.mxu0 0.0
        %8654 = vmatpush1.msra.mxu0 0.0
        %8655 = vmatprep.subr.mxu0 0.0
        %8656 = vmatpush1.msra.mxu0 0.0
        %8657 = vmatprep.subr.mxu0 0.0
        %8658 = vmatpush1.msra.mxu0 0.0
        %8659 = vmatprep.subr.mxu0 0.0
        %8660 = vmatpush1.msra.mxu0 0.0
        %8661 = vmatprep.subr.mxu0 0.0
        %8662 = vmatpush1.msra.mxu0 0.0
        %8663 = vmatprep.subr.mxu0 0.0
        %8664 = vmatpush1.msra.mxu0 0.0
        %8665 = vmatprep.subr.mxu0 0.0
        %8666 = vmatpush1.msra.mxu0 0.0
        %8667 = vmatprep.subr.mxu0 0.0
        %8668 = vmatpush1.msra.mxu0 0.0
        %8669 = vmatprep.subr.mxu0 0.0
        %8670 = vmatpush1.msra.mxu0 0.0
        %8671 = vmatprep.mubr.f32.mxu0 0.0
        %8672 = vmatmul.mubr.f32.gmra.mrb[0].mxu0 %v1985
        %v8673 = vpop.f32.mrb[0].mxu0
        %v8674 = vadd.f32 0.0, %v8673
        %v8675 = vpop.f32.mrb[0].mxu0
        %v8676 = vadd.f32 0.0, %v8675
        %8677 = vdwg.mxu0
        %8678 = vmatprep.subr.mxu0 %v2411
        %8679 = vmatpush1.msra.mxu0 %v2409
        %8680 = vmatprep.subr.mxu0 0.0
        %8681 = vmatpush1.msra.mxu0 0.0
        %8682 = vmatprep.subr.mxu0 0.0
        %8683 = vmatpush1.msra.mxu0 0.0
        %8684 = vmatprep.subr.mxu0 0.0
        %8685 = vmatpush1.msra.mxu0 0.0
        %8686 = vmatprep.subr.mxu0 0.0
        %8687 = vmatpush1.msra.mxu0 0.0
        %8688 = vmatprep.subr.mxu0 0.0
        %8689 = vmatpush1.msra.mxu0 0.0
        %8690 = vmatprep.subr.mxu0 0.0
        %8691 = vmatpush1.msra.mxu0 0.0
        %8692 = vmatprep.subr.mxu0 0.0
        %8693 = vmatpush1.msra.mxu0 0.0
        %8694 = vmatprep.subr.mxu0 0.0
        %8695 = vmatpush1.msra.mxu0 0.0
        %8696 = vmatprep.subr.mxu0 0.0
        %8697 = vmatpush1.msra.mxu0 0.0
        %8698 = vmatprep.subr.mxu0 0.0
        %8699 = vmatpush1.msra.mxu0 0.0
        %8700 = vmatprep.subr.mxu0 0.0
        %8701 = vmatpush1.msra.mxu0 0.0
        %8702 = vmatprep.subr.mxu0 0.0
        %8703 = vmatpush1.msra.mxu0 0.0
        %8704 = vmatprep.subr.mxu0 0.0
        %8705 = vmatpush1.msra.mxu0 0.0
        %8706 = vmatprep.subr.mxu0 0.0
        %8707 = vmatpush1.msra.mxu0 0.0
        %8708 = vmatprep.subr.mxu0 0.0
        %8709 = vmatpush1.msra.mxu0 0.0
        %8710 = vmatprep.subr.mxu0 0.0
        %8711 = vmatpush1.msra.mxu0 0.0
        %8712 = vmatprep.subr.mxu0 0.0
        %8713 = vmatpush1.msra.mxu0 0.0
        %8714 = vmatprep.subr.mxu0 0.0
        %8715 = vmatpush1.msra.mxu0 0.0
        %8716 = vmatprep.subr.mxu0 0.0
        %8717 = vmatpush1.msra.mxu0 0.0
        %8718 = vmatprep.subr.mxu0 0.0
        %8719 = vmatpush1.msra.mxu0 0.0
        %8720 = vmatprep.subr.mxu0 0.0
        %8721 = vmatpush1.msra.mxu0 0.0
        %8722 = vmatprep.subr.mxu0 0.0
        %8723 = vmatpush1.msra.mxu0 0.0
        %8724 = vmatprep.subr.mxu0 0.0
        %8725 = vmatpush1.msra.mxu0 0.0
        %8726 = vmatprep.subr.mxu0 0.0
        %8727 = vmatpush1.msra.mxu0 0.0
        %8728 = vmatprep.subr.mxu0 0.0
        %8729 = vmatpush1.msra.mxu0 0.0
        %8730 = vmatprep.subr.mxu0 0.0
        %8731 = vmatpush1.msra.mxu0 0.0
        %8732 = vmatprep.subr.mxu0 0.0
        %8733 = vmatpush1.msra.mxu0 0.0
        %8734 = vmatprep.subr.mxu0 0.0
        %8735 = vmatpush1.msra.mxu0 0.0
        %8736 = vmatprep.subr.mxu0 0.0
        %8737 = vmatpush1.msra.mxu0 0.0
        %8738 = vmatprep.subr.mxu0 0.0
        %8739 = vmatpush1.msra.mxu0 0.0
        %8740 = vmatprep.subr.mxu0 0.0
        %8741 = vmatpush1.msra.mxu0 0.0
        %8742 = vmatprep.mubr.f32.mxu0 0.0
        %8743 = vmatmul.mubr.f32.gmra.mrb[0].mxu0 %v1985
        %v8744 = vpop.f32.mrb[0].mxu0
        %v8745 = vadd.f32 0.0, %v8744
        %v8746 = vpop.f32.mrb[0].mxu0
        %v8747 = vadd.f32 0.0, %v8746
        %8748 = vdwg.mxu0
        %8749 = vmatprep.subr.mxu0 %v2482
        %8750 = vmatpush1.msra.mxu0 %v2480
        %8751 = vmatprep.subr.mxu0 0.0
        %8752 = vmatpush1.msra.mxu0 0.0
        %8753 = vmatprep.subr.mxu0 0.0
        %8754 = vmatpush1.msra.mxu0 0.0
        %8755 = vmatprep.subr.mxu0 0.0
        %8756 = vmatpush1.msra.mxu0 0.0
        %8757 = vmatprep.subr.mxu0 0.0
        %8758 = vmatpush1.msra.mxu0 0.0
        %8759 = vmatprep.subr.mxu0 0.0
        %8760 = vmatpush1.msra.mxu0 0.0
        %8761 = vmatprep.subr.mxu0 0.0
        %8762 = vmatpush1.msra.mxu0 0.0
        %8763 = vmatprep.subr.mxu0 0.0
        %8764 = vmatpush1.msra.mxu0 0.0
        %8765 = vmatprep.subr.mxu0 0.0
        %8766 = vmatpush1.msra.mxu0 0.0
        %8767 = vmatprep.subr.mxu0 0.0
        %8768 = vmatpush1.msra.mxu0 0.0
        %8769 = vmatprep.subr.mxu0 0.0
        %8770 = vmatpush1.msra.mxu0 0.0
        %8771 = vmatprep.subr.mxu0 0.0
        %8772 = vmatpush1.msra.mxu0 0.0
        %8773 = vmatprep.subr.mxu0 0.0
        %8774 = vmatpush1.msra.mxu0 0.0
        %8775 = vmatprep.subr.mxu0 0.0
        %8776 = vmatpush1.msra.mxu0 0.0
        %8777 = vmatprep.subr.mxu0 0.0
        %8778 = vmatpush1.msra.mxu0 0.0
        %8779 = vmatprep.subr.mxu0 0.0
        %8780 = vmatpush1.msra.mxu0 0.0
        %8781 = vmatprep.subr.mxu0 0.0
        %8782 = vmatpush1.msra.mxu0 0.0
        %8783 = vmatprep.subr.mxu0 0.0
        %8784 = vmatpush1.msra.mxu0 0.0
        %8785 = vmatprep.subr.mxu0 0.0
        %8786 = vmatpush1.msra.mxu0 0.0
        %8787 = vmatprep.subr.mxu0 0.0
        %8788 = vmatpush1.msra.mxu0 0.0
        %8789 = vmatprep.subr.mxu0 0.0
        %8790 = vmatpush1.msra.mxu0 0.0
        %8791 = vmatprep.subr.mxu0 0.0
        %8792 = vmatpush1.msra.mxu0 0.0
        %8793 = vmatprep.subr.mxu0 0.0
        %8794 = vmatpush1.msra.mxu0 0.0
        %8795 = vmatprep.subr.mxu0 0.0
        %8796 = vmatpush1.msra.mxu0 0.0
        %8797 = vmatprep.subr.mxu0 0.0
        %8798 = vmatpush1.msra.mxu0 0.0
        %8799 = vmatprep.subr.mxu0 0.0
        %8800 = vmatpush1.msra.mxu0 0.0
        %8801 = vmatprep.subr.mxu0 0.0
        %8802 = vmatpush1.msra.mxu0 0.0
        %8803 = vmatprep.subr.mxu0 0.0
        %8804 = vmatpush1.msra.mxu0 0.0
        %8805 = vmatprep.subr.mxu0 0.0
        %8806 = vmatpush1.msra.mxu0 0.0
        %8807 = vmatprep.subr.mxu0 0.0
        %8808 = vmatpush1.msra.mxu0 0.0
        %8809 = vmatprep.subr.mxu0 0.0
        %8810 = vmatpush1.msra.mxu0 0.0
        %8811 = vmatprep.subr.mxu0 0.0
        %8812 = vmatpush1.msra.mxu0 0.0
        %8813 = vmatprep.mubr.f32.mxu0 0.0
        %8814 = vmatmul.mubr.f32.gmra.mrb[0].mxu0 %v1985
        %v8815 = vpop.f32.mrb[0].mxu0
        %v8816 = vadd.f32 0.0, %v8815
        %v8817 = vpop.f32.mrb[0].mxu0
        %v8818 = vadd.f32 0.0, %v8817
        %8819 = vdwg.mxu0
        %8820 = vmatprep.subr.mxu0 %v2553
        %8821 = vmatpush1.msra.mxu0 %v2551
        %8822 = vmatprep.subr.mxu0 0.0
        %8823 = vmatpush1.msra.mxu0 0.0
        %8824 = vmatprep.subr.mxu0 0.0
        %8825 = vmatpush1.msra.mxu0 0.0
        %8826 = vmatprep.subr.mxu0 0.0
        %8827 = vmatpush1.msra.mxu0 0.0
        %8828 = vmatprep.subr.mxu0 0.0
        %8829 = vmatpush1.msra.mxu0 0.0
        %8830 = vmatprep.subr.mxu0 0.0
        %8831 = vmatpush1.msra.mxu0 0.0
        %8832 = vmatprep.subr.mxu0 0.0
        %8833 = vmatpush1.msra.mxu0 0.0
        %8834 = vmatprep.subr.mxu0 0.0
        %8835 = vmatpush1.msra.mxu0 0.0
        %8836 = vmatprep.subr.mxu0 0.0
        %8837 = vmatpush1.msra.mxu0 0.0
        %8838 = vmatprep.subr.mxu0 0.0
        %8839 = vmatpush1.msra.mxu0 0.0
        %8840 = vmatprep.subr.mxu0 0.0
        %8841 = vmatpush1.msra.mxu0 0.0
        %8842 = vmatprep.subr.mxu0 0.0
        %8843 = vmatpush1.msra.mxu0 0.0
        %8844 = vmatprep.subr.mxu0 0.0
        %8845 = vmatpush1.msra.mxu0 0.0
        %8846 = vmatprep.subr.mxu0 0.0
        %8847 = vmatpush1.msra.mxu0 0.0
        %8848 = vmatprep.subr.mxu0 0.0
        %8849 = vmatpush1.msra.mxu0 0.0
        %8850 = vmatprep.subr.mxu0 0.0
        %8851 = vmatpush1.msra.mxu0 0.0
        %8852 = vmatprep.subr.mxu0 0.0
        %8853 = vmatpush1.msra.mxu0 0.0
        %8854 = vmatprep.subr.mxu0 0.0
        %8855 = vmatpush1.msra.mxu0 0.0
        %8856 = vmatprep.subr.mxu0 0.0
        %8857 = vmatpush1.msra.mxu0 0.0
        %8858 = vmatprep.subr.mxu0 0.0
        %8859 = vmatpush1.msra.mxu0 0.0
        %8860 = vmatprep.subr.mxu0 0.0
        %8861 = vmatpush1.msra.mxu0 0.0
        %8862 = vmatprep.subr.mxu0 0.0
        %8863 = vmatpush1.msra.mxu0 0.0
        %8864 = vmatprep.subr.mxu0 0.0
        %8865 = vmatpush1.msra.mxu0 0.0
        %8866 = vmatprep.subr.mxu0 0.0
        %8867 = vmatpush1.msra.mxu0 0.0
        %8868 = vmatprep.subr.mxu0 0.0
        %8869 = vmatpush1.msra.mxu0 0.0
        %8870 = vmatprep.subr.mxu0 0.0
        %8871 = vmatpush1.msra.mxu0 0.0
        %8872 = vmatprep.subr.mxu0 0.0
        %8873 = vmatpush1.msra.mxu0 0.0
        %8874 = vmatprep.subr.mxu0 0.0
        %8875 = vmatpush1.msra.mxu0 0.0
        %8876 = vmatprep.subr.mxu0 0.0
        %8877 = vmatpush1.msra.mxu0 0.0
        %8878 = vmatprep.subr.mxu0 0.0
        %8879 = vmatpush1.msra.mxu0 0.0
        %8880 = vmatprep.subr.mxu0 0.0
        %8881 = vmatpush1.msra.mxu0 0.0
        %8882 = vmatprep.subr.mxu0 0.0
        %8883 = vmatpush1.msra.mxu0 0.0
        %8884 = vmatprep.mubr.f32.mxu0 0.0
        %8885 = vmatmul.mubr.f32.gmra.mrb[0].mxu0 %v1985
        %v8886 = vpop.f32.mrb[0].mxu0
        %v8887 = vadd.f32 0.0, %v8886
        %v8888 = vpop.f32.mrb[0].mxu0
        %v8889 = vadd.f32 0.0, %v8888
        %8890 = vdwg.mxu0
        %v8891 = vmul.f32 %v2630, %v4907
        %v8892 = vmul.f32 %v2634, %v4908
        %v8893 = vmul.f32 %v2638, %v4909
        %v8894 = vmul.f32 %v2642, %v4910
        %v8895 = vmul.f32 %v2646, %v4907
        %v8896 = vmul.f32 %v2650, %v4908
        %v8897 = vmul.f32 %v2654, %v4909
        %v8898 = vmul.f32 %v2658, %v4910
        %v8899 = vmul.f32 %v2662, %v4907
        %v8900 = vmul.f32 %v2666, %v4908
        %v8901 = vmul.f32 %v2670, %v4909
        %v8902 = vmul.f32 %v2674, %v4910
        %v8903 = vmul.f32 %v2678, %v4907
        %v8904 = vmul.f32 %v2682, %v4908
        %v8905 = vmul.f32 %v2686, %v4909
        %v8906 = vmul.f32 %v2690, %v4910
        %v8907 = vmul.f32 %v2694, %v4907
        %v8908 = vmul.f32 %v2698, %v4908
        %v8909 = vmul.f32 %v2702, %v4909
        %v8910 = vmul.f32 %v2706, %v4910
        %v8911 = vmul.f32 %v2710, %v4907
        %v8912 = vmul.f32 %v2714, %v4908
        %v8913 = vmul.f32 %v2718, %v4909
        %v8914 = vmul.f32 %v2722, %v4910
        %v8915 = vmul.f32 %v2726, %v4907
        %v8916 = vmul.f32 %v2730, %v4908
        %v8917 = vmul.f32 %v2734, %v4909
        %v8918 = vmul.f32 %v2738, %v4910
        %v8919 = vmul.f32 %v2742, %v4907
        %v8920 = vmul.f32 %v2746, %v4908
        %v8921 = vmul.f32 %v2750, %v4909
        %v8922 = vmul.f32 %v2754, %v4910
        %v8923 = vmul.f32 %v2900, %v4911
        %v8924 = vmul.f32 %v2904, %v4912
        %v8925 = vmul.f32 %v2908, %v4913
        %v8926 = vmul.f32 %v2912, %v4914
        %v8927 = vmul.f32 %v2916, %v4911
        %v8928 = vmul.f32 %v2920, %v4912
        %v8929 = vmul.f32 %v2924, %v4913
        %v8930 = vmul.f32 %v2928, %v4914
        %v8931 = vmul.f32 %v2932, %v4911
        %v8932 = vmul.f32 %v2936, %v4912
        %v8933 = vmul.f32 %v2940, %v4913
        %v8934 = vmul.f32 %v2944, %v4914
        %v8935 = vmul.f32 %v2948, %v4911
        %v8936 = vmul.f32 %v2952, %v4912
        %v8937 = vmul.f32 %v2956, %v4913
        %v8938 = vmul.f32 %v2960, %v4914
        %v8939 = vmul.f32 %v2964, %v4911
        %v8940 = vmul.f32 %v2968, %v4912
        %v8941 = vmul.f32 %v2972, %v4913
        %v8942 = vmul.f32 %v2976, %v4914
        %v8943 = vmul.f32 %v2980, %v4911
        %v8944 = vmul.f32 %v2984, %v4912
        %v8945 = vmul.f32 %v2988, %v4913
        %v8946 = vmul.f32 %v2992, %v4914
        %v8947 = vmul.f32 %v2996, %v4911
        %v8948 = vmul.f32 %v3000, %v4912
        %v8949 = vmul.f32 %v3004, %v4913
        %v8950 = vmul.f32 %v3008, %v4914
        %v8951 = vmul.f32 %v3012, %v4911
        %v8952 = vmul.f32 %v3016, %v4912
        %v8953 = vmul.f32 %v3020, %v4913
        %v8954 = vmul.f32 %v3024, %v4914
        %v8955 = vadd.f32 %v8891, %v8923
        %v8956 = vadd.f32 %v8892, %v8924
        %v8957 = vadd.f32 %v8893, %v8925
        %v8958 = vadd.f32 %v8894, %v8926
        %v8959 = vadd.f32 %v8895, %v8927
        %v8960 = vadd.f32 %v8896, %v8928
        %v8961 = vadd.f32 %v8897, %v8929
        %v8962 = vadd.f32 %v8898, %v8930
        %v8963 = vadd.f32 %v8899, %v8931
        %v8964 = vadd.f32 %v8900, %v8932
        %v8965 = vadd.f32 %v8901, %v8933
        %v8966 = vadd.f32 %v8902, %v8934
        %v8967 = vadd.f32 %v8903, %v8935
        %v8968 = vadd.f32 %v8904, %v8936
        %v8969 = vadd.f32 %v8905, %v8937
        %v8970 = vadd.f32 %v8906, %v8938
        %v8971 = vadd.f32 %v8907, %v8939
        %v8972 = vadd.f32 %v8908, %v8940
        %v8973 = vadd.f32 %v8909, %v8941
        %v8974 = vadd.f32 %v8910, %v8942
        %v8975 = vadd.f32 %v8911, %v8943
        %v8976 = vadd.f32 %v8912, %v8944
        %v8977 = vadd.f32 %v8913, %v8945
        %v8978 = vadd.f32 %v8914, %v8946
        %v8979 = vadd.f32 %v8915, %v8947
        %v8980 = vadd.f32 %v8916, %v8948
        %v8981 = vadd.f32 %v8917, %v8949
        %v8982 = vadd.f32 %v8918, %v8950
        %v8983 = vadd.f32 %v8919, %v8951
        %v8984 = vadd.f32 %v8920, %v8952
        %v8985 = vadd.f32 %v8921, %v8953
        %v8986 = vadd.f32 %v8922, %v8954
        %v8987 = vmul.f32 %v3202, %v4915
        %v8988 = vmul.f32 %v3206, %v4916
        %v8989 = vmul.f32 %v3210, %v4917
        %v8990 = vmul.f32 %v3214, %v4918
        %v8991 = vmul.f32 %v3218, %v4915
        %v8992 = vmul.f32 %v3222, %v4916
        %v8993 = vmul.f32 %v3226, %v4917
        %v8994 = vmul.f32 %v3230, %v4918
        %v8995 = vmul.f32 %v3234, %v4915
        %v8996 = vmul.f32 %v3238, %v4916
        %v8997 = vmul.f32 %v3242, %v4917
        %v8998 = vmul.f32 %v3246, %v4918
        %v8999 = vmul.f32 %v3250, %v4915
        %v9000 = vmul.f32 %v3254, %v4916
        %v9001 = vmul.f32 %v3258, %v4917
        %v9002 = vmul.f32 %v3262, %v4918
        %v9003 = vmul.f32 %v3266, %v4915
        %v9004 = vmul.f32 %v3270, %v4916
        %v9005 = vmul.f32 %v3274, %v4917
        %v9006 = vmul.f32 %v3278, %v4918
        %v9007 = vmul.f32 %v3282, %v4915
        %v9008 = vmul.f32 %v3286, %v4916
        %v9009 = vmul.f32 %v3290, %v4917
        %v9010 = vmul.f32 %v3294, %v4918
        %v9011 = vmul.f32 %v3298, %v4915
        %v9012 = vmul.f32 %v3302, %v4916
        %v9013 = vmul.f32 %v3306, %v4917
        %v9014 = vmul.f32 %v3310, %v4918
        %v9015 = vmul.f32 %v3314, %v4915
        %v9016 = vmul.f32 %v3318, %v4916
        %v9017 = vmul.f32 %v3322, %v4917
        %v9018 = vmul.f32 %v3326, %v4918
        %v9019 = vadd.f32 %v8955, %v8987
        %v9020 = vadd.f32 %v8956, %v8988
        %v9021 = vadd.f32 %v8957, %v8989
        %v9022 = vadd.f32 %v8958, %v8990
        %v9023 = vadd.f32 %v8959, %v8991
        %v9024 = vadd.f32 %v8960, %v8992
        %v9025 = vadd.f32 %v8961, %v8993
        %v9026 = vadd.f32 %v8962, %v8994
        %v9027 = vadd.f32 %v8963, %v8995
        %v9028 = vadd.f32 %v8964, %v8996
        %v9029 = vadd.f32 %v8965, %v8997
        %v9030 = vadd.f32 %v8966, %v8998
        %v9031 = vadd.f32 %v8967, %v8999
        %v9032 = vadd.f32 %v8968, %v9000
        %v9033 = vadd.f32 %v8969, %v9001
        %v9034 = vadd.f32 %v8970, %v9002
        %v9035 = vadd.f32 %v8971, %v9003
        %v9036 = vadd.f32 %v8972, %v9004
        %v9037 = vadd.f32 %v8973, %v9005
        %v9038 = vadd.f32 %v8974, %v9006
        %v9039 = vadd.f32 %v8975, %v9007
        %v9040 = vadd.f32 %v8976, %v9008
        %v9041 = vadd.f32 %v8977, %v9009
        %v9042 = vadd.f32 %v8978, %v9010
        %v9043 = vadd.f32 %v8979, %v9011
        %v9044 = vadd.f32 %v8980, %v9012
        %v9045 = vadd.f32 %v8981, %v9013
        %v9046 = vadd.f32 %v8982, %v9014
        %v9047 = vadd.f32 %v8983, %v9015
        %v9048 = vadd.f32 %v8984, %v9016
        %v9049 = vadd.f32 %v8985, %v9017
        %v9050 = vadd.f32 %v8986, %v9018
        %v9051 = vmul.f32 %v3504, %v4919
        %v9052 = vmul.f32 %v3508, %v4920
        %v9053 = vmul.f32 %v3512, %v4921
        %v9054 = vmul.f32 %v3516, %v4922
        %v9055 = vmul.f32 %v3520, %v4919
        %v9056 = vmul.f32 %v3524, %v4920
        %v9057 = vmul.f32 %v3528, %v4921
        %v9058 = vmul.f32 %v3532, %v4922
        %v9059 = vmul.f32 %v3536, %v4919
        %v9060 = vmul.f32 %v3540, %v4920
        %v9061 = vmul.f32 %v3544, %v4921
        %v9062 = vmul.f32 %v3548, %v4922
        %v9063 = vmul.f32 %v3552, %v4919
        %v9064 = vmul.f32 %v3556, %v4920
        %v9065 = vmul.f32 %v3560, %v4921
        %v9066 = vmul.f32 %v3564, %v4922
        %v9067 = vmul.f32 %v3568, %v4919
        %v9068 = vmul.f32 %v3572, %v4920
        %v9069 = vmul.f32 %v3576, %v4921
        %v9070 = vmul.f32 %v3580, %v4922
        %v9071 = vmul.f32 %v3584, %v4919
        %v9072 = vmul.f32 %v3588, %v4920
        %v9073 = vmul.f32 %v3592, %v4921
        %v9074 = vmul.f32 %v3596, %v4922
        %v9075 = vmul.f32 %v3600, %v4919
        %v9076 = vmul.f32 %v3604, %v4920
        %v9077 = vmul.f32 %v3608, %v4921
        %v9078 = vmul.f32 %v3612, %v4922
        %v9079 = vmul.f32 %v3616, %v4919
        %v9080 = vmul.f32 %v3620, %v4920
        %v9081 = vmul.f32 %v3624, %v4921
        %v9082 = vmul.f32 %v3628, %v4922
        %v9083 = vadd.f32 %v9019, %v9051
        %v9084 = vadd.f32 %v9020, %v9052
        %v9085 = vadd.f32 %v9021, %v9053
        %v9086 = vadd.f32 %v9022, %v9054
        %v9087 = vadd.f32 %v9023, %v9055
        %v9088 = vadd.f32 %v9024, %v9056
        %v9089 = vadd.f32 %v9025, %v9057
        %v9090 = vadd.f32 %v9026, %v9058
        %v9091 = vadd.f32 %v9027, %v9059
        %v9092 = vadd.f32 %v9028, %v9060
        %v9093 = vadd.f32 %v9029, %v9061
        %v9094 = vadd.f32 %v9030, %v9062
        %v9095 = vadd.f32 %v9031, %v9063
        %v9096 = vadd.f32 %v9032, %v9064
        %v9097 = vadd.f32 %v9033, %v9065
        %v9098 = vadd.f32 %v9034, %v9066
        %v9099 = vadd.f32 %v9035, %v9067
        %v9100 = vadd.f32 %v9036, %v9068
        %v9101 = vadd.f32 %v9037, %v9069
        %v9102 = vadd.f32 %v9038, %v9070
        %v9103 = vadd.f32 %v9039, %v9071
        %v9104 = vadd.f32 %v9040, %v9072
        %v9105 = vadd.f32 %v9041, %v9073
        %v9106 = vadd.f32 %v9042, %v9074
        %v9107 = vadd.f32 %v9043, %v9075
        %v9108 = vadd.f32 %v9044, %v9076
        %v9109 = vadd.f32 %v9045, %v9077
        %v9110 = vadd.f32 %v9046, %v9078
        %v9111 = vadd.f32 %v9047, %v9079
        %v9112 = vadd.f32 %v9048, %v9080
        %v9113 = vadd.f32 %v9049, %v9081
        %v9114 = vadd.f32 %v9050, %v9082
        %v9115 = vmul.f32 %v3806, %v4923
        %v9116 = vmul.f32 %v3810, %v4924
        %v9117 = vmul.f32 %v3814, %v4925
        %v9118 = vmul.f32 %v3818, %v4926
        %v9119 = vmul.f32 %v3822, %v4923
        %v9120 = vmul.f32 %v3826, %v4924
        %v9121 = vmul.f32 %v3830, %v4925
        %v9122 = vmul.f32 %v3834, %v4926
        %v9123 = vmul.f32 %v3838, %v4923
        %v9124 = vmul.f32 %v3842, %v4924
        %v9125 = vmul.f32 %v3846, %v4925
        %v9126 = vmul.f32 %v3850, %v4926
        %v9127 = vmul.f32 %v3854, %v4923
        %v9128 = vmul.f32 %v3858, %v4924
        %v9129 = vmul.f32 %v3862, %v4925
        %v9130 = vmul.f32 %v3866, %v4926
        %v9131 = vmul.f32 %v3870, %v4923
        %v9132 = vmul.f32 %v3874, %v4924
        %v9133 = vmul.f32 %v3878, %v4925
        %v9134 = vmul.f32 %v3882, %v4926
        %v9135 = vmul.f32 %v3886, %v4923
        %v9136 = vmul.f32 %v3890, %v4924
        %v9137 = vmul.f32 %v3894, %v4925
        %v9138 = vmul.f32 %v3898, %v4926
        %v9139 = vmul.f32 %v3902, %v4923
        %v9140 = vmul.f32 %v3906, %v4924
        %v9141 = vmul.f32 %v3910, %v4925
        %v9142 = vmul.f32 %v3914, %v4926
        %v9143 = vmul.f32 %v3918, %v4923
        %v9144 = vmul.f32 %v3922, %v4924
        %v9145 = vmul.f32 %v3926, %v4925
        %v9146 = vmul.f32 %v3930, %v4926
        %v9147 = vadd.f32 %v9083, %v9115
        %v9148 = vadd.f32 %v9084, %v9116
        %v9149 = vadd.f32 %v9085, %v9117
        %v9150 = vadd.f32 %v9086, %v9118
        %v9151 = vadd.f32 %v9087, %v9119
        %v9152 = vadd.f32 %v9088, %v9120
        %v9153 = vadd.f32 %v9089, %v9121
        %v9154 = vadd.f32 %v9090, %v9122
        %v9155 = vadd.f32 %v9091, %v9123
        %v9156 = vadd.f32 %v9092, %v9124
        %v9157 = vadd.f32 %v9093, %v9125
        %v9158 = vadd.f32 %v9094, %v9126
        %v9159 = vadd.f32 %v9095, %v9127
        %v9160 = vadd.f32 %v9096, %v9128
        %v9161 = vadd.f32 %v9097, %v9129
        %v9162 = vadd.f32 %v9098, %v9130
        %v9163 = vadd.f32 %v9099, %v9131
        %v9164 = vadd.f32 %v9100, %v9132
        %v9165 = vadd.f32 %v9101, %v9133
        %v9166 = vadd.f32 %v9102, %v9134
        %v9167 = vadd.f32 %v9103, %v9135
        %v9168 = vadd.f32 %v9104, %v9136
        %v9169 = vadd.f32 %v9105, %v9137
        %v9170 = vadd.f32 %v9106, %v9138
        %v9171 = vadd.f32 %v9107, %v9139
        %v9172 = vadd.f32 %v9108, %v9140
        %v9173 = vadd.f32 %v9109, %v9141
        %v9174 = vadd.f32 %v9110, %v9142
        %v9175 = vadd.f32 %v9111, %v9143
        %v9176 = vadd.f32 %v9112, %v9144
        %v9177 = vadd.f32 %v9113, %v9145
        %v9178 = vadd.f32 %v9114, %v9146
        %v9179 = vmul.f32 %v4108, %v4927
        %v9180 = vmul.f32 %v4112, %v4928
        %v9181 = vmul.f32 %v4116, %v4929
        %v9182 = vmul.f32 %v4120, %v4930
        %v9183 = vmul.f32 %v4124, %v4927
        %v9184 = vmul.f32 %v4128, %v4928
        %v9185 = vmul.f32 %v4132, %v4929
        %v9186 = vmul.f32 %v4136, %v4930
        %v9187 = vmul.f32 %v4140, %v4927
        %v9188 = vmul.f32 %v4144, %v4928
        %v9189 = vmul.f32 %v4148, %v4929
        %v9190 = vmul.f32 %v4152, %v4930
        %v9191 = vmul.f32 %v4156, %v4927
        %v9192 = vmul.f32 %v4160, %v4928
        %v9193 = vmul.f32 %v4164, %v4929
        %v9194 = vmul.f32 %v4168, %v4930
        %v9195 = vmul.f32 %v4172, %v4927
        %v9196 = vmul.f32 %v4176, %v4928
        %v9197 = vmul.f32 %v4180, %v4929
        %v9198 = vmul.f32 %v4184, %v4930
        %v9199 = vmul.f32 %v4188, %v4927
        %v9200 = vmul.f32 %v4192, %v4928
        %v9201 = vmul.f32 %v4196, %v4929
        %v9202 = vmul.f32 %v4200, %v4930
        %v9203 = vmul.f32 %v4204, %v4927
        %v9204 = vmul.f32 %v4208, %v4928
        %v9205 = vmul.f32 %v4212, %v4929
        %v9206 = vmul.f32 %v4216, %v4930
        %v9207 = vmul.f32 %v4220, %v4927
        %v9208 = vmul.f32 %v4224, %v4928
        %v9209 = vmul.f32 %v4228, %v4929
        %v9210 = vmul.f32 %v4232, %v4930
        %v9211 = vadd.f32 %v9147, %v9179
        %v9212 = vadd.f32 %v9148, %v9180
        %v9213 = vadd.f32 %v9149, %v9181
        %v9214 = vadd.f32 %v9150, %v9182
        %v9215 = vadd.f32 %v9151, %v9183
        %v9216 = vadd.f32 %v9152, %v9184
        %v9217 = vadd.f32 %v9153, %v9185
        %v9218 = vadd.f32 %v9154, %v9186
        %v9219 = vadd.f32 %v9155, %v9187
        %v9220 = vadd.f32 %v9156, %v9188
        %v9221 = vadd.f32 %v9157, %v9189
        %v9222 = vadd.f32 %v9158, %v9190
        %v9223 = vadd.f32 %v9159, %v9191
        %v9224 = vadd.f32 %v9160, %v9192
        %v9225 = vadd.f32 %v9161, %v9193
        %v9226 = vadd.f32 %v9162, %v9194
        %v9227 = vadd.f32 %v9163, %v9195
        %v9228 = vadd.f32 %v9164, %v9196
        %v9229 = vadd.f32 %v9165, %v9197
        %v9230 = vadd.f32 %v9166, %v9198
        %v9231 = vadd.f32 %v9167, %v9199
        %v9232 = vadd.f32 %v9168, %v9200
        %v9233 = vadd.f32 %v9169, %v9201
        %v9234 = vadd.f32 %v9170, %v9202
        %v9235 = vadd.f32 %v9171, %v9203
        %v9236 = vadd.f32 %v9172, %v9204
        %v9237 = vadd.f32 %v9173, %v9205
        %v9238 = vadd.f32 %v9174, %v9206
        %v9239 = vadd.f32 %v9175, %v9207
        %v9240 = vadd.f32 %v9176, %v9208
        %v9241 = vadd.f32 %v9177, %v9209
        %v9242 = vadd.f32 %v9178, %v9210
        %v9243 = vmul.f32 %v4410, %v4931
        %v9244 = vmul.f32 %v4414, %v4932
        %v9245 = vmul.f32 %v4418, %v4933
        %v9246 = vmul.f32 %v4422, %v4934
        %v9247 = vmul.f32 %v4426, %v4931
        %v9248 = vmul.f32 %v4430, %v4932
        %v9249 = vmul.f32 %v4434, %v4933
        %v9250 = vmul.f32 %v4438, %v4934
        %v9251 = vmul.f32 %v4442, %v4931
        %v9252 = vmul.f32 %v4446, %v4932
        %v9253 = vmul.f32 %v4450, %v4933
        %v9254 = vmul.f32 %v4454, %v4934
        %v9255 = vmul.f32 %v4458, %v4931
        %v9256 = vmul.f32 %v4462, %v4932
        %v9257 = vmul.f32 %v4466, %v4933
        %v9258 = vmul.f32 %v4470, %v4934
        %v9259 = vmul.f32 %v4474, %v4931
        %v9260 = vmul.f32 %v4478, %v4932
        %v9261 = vmul.f32 %v4482, %v4933
        %v9262 = vmul.f32 %v4486, %v4934
        %v9263 = vmul.f32 %v4490, %v4931
        %v9264 = vmul.f32 %v4494, %v4932
        %v9265 = vmul.f32 %v4498, %v4933
        %v9266 = vmul.f32 %v4502, %v4934
        %v9267 = vmul.f32 %v4506, %v4931
        %v9268 = vmul.f32 %v4510, %v4932
        %v9269 = vmul.f32 %v4514, %v4933
        %v9270 = vmul.f32 %v4518, %v4934
        %v9271 = vmul.f32 %v4522, %v4931
        %v9272 = vmul.f32 %v4526, %v4932
        %v9273 = vmul.f32 %v4530, %v4933
        %v9274 = vmul.f32 %v4534, %v4934
        %v9275 = vadd.f32 %v9211, %v9243
        %v9276 = vadd.f32 %v9212, %v9244
        %v9277 = vadd.f32 %v9213, %v9245
        %v9278 = vadd.f32 %v9214, %v9246
        %v9279 = vadd.f32 %v9215, %v9247
        %v9280 = vadd.f32 %v9216, %v9248
        %v9281 = vadd.f32 %v9217, %v9249
        %v9282 = vadd.f32 %v9218, %v9250
        %v9283 = vadd.f32 %v9219, %v9251
        %v9284 = vadd.f32 %v9220, %v9252
        %v9285 = vadd.f32 %v9221, %v9253
        %v9286 = vadd.f32 %v9222, %v9254
        %v9287 = vadd.f32 %v9223, %v9255
        %v9288 = vadd.f32 %v9224, %v9256
        %v9289 = vadd.f32 %v9225, %v9257
        %v9290 = vadd.f32 %v9226, %v9258
        %v9291 = vadd.f32 %v9227, %v9259
        %v9292 = vadd.f32 %v9228, %v9260
        %v9293 = vadd.f32 %v9229, %v9261
        %v9294 = vadd.f32 %v9230, %v9262
        %v9295 = vadd.f32 %v9231, %v9263
        %v9296 = vadd.f32 %v9232, %v9264
        %v9297 = vadd.f32 %v9233, %v9265
        %v9298 = vadd.f32 %v9234, %v9266
        %v9299 = vadd.f32 %v9235, %v9267
        %v9300 = vadd.f32 %v9236, %v9268
        %v9301 = vadd.f32 %v9237, %v9269
        %v9302 = vadd.f32 %v9238, %v9270
        %v9303 = vadd.f32 %v9239, %v9271
        %v9304 = vadd.f32 %v9240, %v9272
        %v9305 = vadd.f32 %v9241, %v9273
        %v9306 = vadd.f32 %v9242, %v9274
        %v9307 = vmul.f32 %v4712, %v4935
        %v9308 = vmul.f32 %v4716, %v4936
        %v9309 = vmul.f32 %v4720, %v4937
        %v9310 = vmul.f32 %v4724, %v4938
        %v9311 = vmul.f32 %v4728, %v4935
        %v9312 = vmul.f32 %v4732, %v4936
        %v9313 = vmul.f32 %v4736, %v4937
        %v9314 = vmul.f32 %v4740, %v4938
        %v9315 = vmul.f32 %v4744, %v4935
        %v9316 = vmul.f32 %v4748, %v4936
        %v9317 = vmul.f32 %v4752, %v4937
        %v9318 = vmul.f32 %v4756, %v4938
        %v9319 = vmul.f32 %v4760, %v4935
        %v9320 = vmul.f32 %v4764, %v4936
        %v9321 = vmul.f32 %v4768, %v4937
        %v9322 = vmul.f32 %v4772, %v4938
        %v9323 = vmul.f32 %v4776, %v4935
        %v9324 = vmul.f32 %v4780, %v4936
        %v9325 = vmul.f32 %v4784, %v4937
        %v9326 = vmul.f32 %v4788, %v4938
        %v9327 = vmul.f32 %v4792, %v4935
        %v9328 = vmul.f32 %v4796, %v4936
        %v9329 = vmul.f32 %v4800, %v4937
        %v9330 = vmul.f32 %v4804, %v4938
        %v9331 = vmul.f32 %v4808, %v4935
        %v9332 = vmul.f32 %v4812, %v4936
        %v9333 = vmul.f32 %v4816, %v4937
        %v9334 = vmul.f32 %v4820, %v4938
        %v9335 = vmul.f32 %v4824, %v4935
        %v9336 = vmul.f32 %v4828, %v4936
        %v9337 = vmul.f32 %v4832, %v4937
        %v9338 = vmul.f32 %v4836, %v4938
        %v9339 = vadd.f32 %v9275, %v9307
        %v9340 = vadd.f32 %v9276, %v9308
        %v9341 = vadd.f32 %v9277, %v9309
        %v9342 = vadd.f32 %v9278, %v9310
        %v9343 = vadd.f32 %v9279, %v9311
        %v9344 = vadd.f32 %v9280, %v9312
        %v9345 = vadd.f32 %v9281, %v9313
        %v9346 = vadd.f32 %v9282, %v9314
        %v9347 = vadd.f32 %v9283, %v9315
        %v9348 = vadd.f32 %v9284, %v9316
        %v9349 = vadd.f32 %v9285, %v9317
        %v9350 = vadd.f32 %v9286, %v9318
        %v9351 = vadd.f32 %v9287, %v9319
        %v9352 = vadd.f32 %v9288, %v9320
        %v9353 = vadd.f32 %v9289, %v9321
        %v9354 = vadd.f32 %v9290, %v9322
        %v9355 = vadd.f32 %v9291, %v9323
        %v9356 = vadd.f32 %v9292, %v9324
        %v9357 = vadd.f32 %v9293, %v9325
        %v9358 = vadd.f32 %v9294, %v9326
        %v9359 = vadd.f32 %v9295, %v9327
        %v9360 = vadd.f32 %v9296, %v9328
        %v9361 = vadd.f32 %v9297, %v9329
        %v9362 = vadd.f32 %v9298, %v9330
        %v9363 = vadd.f32 %v9299, %v9331
        %v9364 = vadd.f32 %v9300, %v9332
        %v9365 = vadd.f32 %v9301, %v9333
        %v9366 = vadd.f32 %v9302, %v9334
        %v9367 = vadd.f32 %v9303, %v9335
        %v9368 = vadd.f32 %v9304, %v9336
        %v9369 = vadd.f32 %v9305, %v9337
        %v9370 = vadd.f32 %v9306, %v9338
        %v9387 = vcombine.low %v8390, %v8392
        %v9388 = vcombine.high %v8390, %v8392
        %v9389 = vcombine.low %v8461, %v8463
        %v9390 = vcombine.high %v8461, %v8463
        %v9391 = vcombine.low %v8532, %v8534
        %v9392 = vcombine.high %v8532, %v8534
        %v9393 = vcombine.low %v8603, %v8605
        %v9394 = vcombine.high %v8603, %v8605
        %v9395 = vcombine.low %v8674, %v8676
        %v9396 = vcombine.high %v8674, %v8676
        %v9397 = vcombine.low %v8745, %v8747
        %v9398 = vcombine.high %v8745, %v8747
        %v9399 = vcombine.low %v8816, %v8818
        %v9400 = vcombine.high %v8816, %v8818
        %v9401 = vcombine.low %v8887, %v8889
        %v9402 = vcombine.high %v8887, %v8889
        %v9419 = vcombine.low %v9387, %v9395
        %v9420 = vcombine.high %v9387, %v9395
        %v9422 = vunpack.c.l.s4 1983009808
        %v9423 = vunpack.c.0.s8 %v9422
        %v9424 = vlaneseq
        %v9425 = vshrl.u32 %v9424, 7
        %v9426 = vsub.s32 %v9423, %v9425
        %v9427 = vrot.slane %v9419, %v9426
        %v9429 = vunpack.c.l.s4 1983009808
        %v9430 = vunpack.c.0.s8 %v9429
        %v9431 = vlaneseq
        %v9432 = vshrl.u32 %v9431, 7
        %v9433 = vsub.s32 %v9430, %v9432
        %v9434 = vrot.slane %v9420, %v9433
        %v9435 = vcombine.low %v9391, %v9399
        %v9436 = vcombine.high %v9391, %v9399
        %v9438 = vunpack.c.l.s4 1983009808
        %v9439 = vunpack.c.0.s8 %v9438
        %v9440 = vlaneseq
        %v9441 = vshrl.u32 %v9440, 7
        %v9442 = vsub.s32 %v9439, %v9441
        %v9443 = vrot.slane %v9435, %v9442
        %v9445 = vunpack.c.l.s4 1983009808
        %v9446 = vunpack.c.0.s8 %v9445
        %v9447 = vlaneseq
        %v9448 = vshrl.u32 %v9447, 7
        %v9449 = vsub.s32 %v9446, %v9448
        %v9450 = vrot.slane %v9436, %v9449
        %v9451 = vcombine.low %v9427, %v9443
        %v9452 = vcombine.high %v9427, %v9443
        %v9454 = vunpack.c.l.s4 1934713408
        %v9455 = vunpack.c.0.s8 %v9454
        %v9456 = vlaneseq
        %v9457 = vshrl.u32 %v9456, 7
        %v9458 = vsub.s32 %v9455, %v9457
        %v9459 = vrot.slane %v9451, %v9458
        %v9461 = vunpack.c.l.s4 1934713408
        %v9462 = vunpack.c.0.s8 %v9461
        %v9463 = vlaneseq
        %v9464 = vshrl.u32 %v9463, 7
        %v9465 = vsub.s32 %v9462, %v9464
        %v9466 = vrot.slane %v9452, %v9465
        %v9467 = vcombine.low %v9434, %v9450
        %v9468 = vcombine.high %v9434, %v9450
        %v9470 = vunpack.c.l.s4 1934713408
        %v9471 = vunpack.c.0.s8 %v9470
        %v9472 = vlaneseq
        %v9473 = vshrl.u32 %v9472, 7
        %v9474 = vsub.s32 %v9471, %v9473
        %v9475 = vrot.slane %v9467, %v9474
        %v9477 = vunpack.c.l.s4 1934713408
        %v9478 = vunpack.c.0.s8 %v9477
        %v9479 = vlaneseq
        %v9480 = vshrl.u32 %v9479, 7
        %v9481 = vsub.s32 %v9478, %v9480
        %v9482 = vrot.slane %v9468, %v9481
        %v9483 = vcombine.low %v9459, %v9475
        %v9484 = vcombine.high %v9459, %v9475
        %v9485 = vcombine.low %v9466, %v9482
        %v9486 = vcombine.high %v9466, %v9482
        %v9487 = vcombine.low %v9388, %v9396
        %v9488 = vcombine.high %v9388, %v9396
        %v9490 = vunpack.c.l.s4 1983009808
        %v9491 = vunpack.c.0.s8 %v9490
        %v9492 = vlaneseq
        %v9493 = vshrl.u32 %v9492, 7
        %v9494 = vsub.s32 %v9491, %v9493
        %v9495 = vrot.slane %v9487, %v9494
        %v9497 = vunpack.c.l.s4 1983009808
        %v9498 = vunpack.c.0.s8 %v9497
        %v9499 = vlaneseq
        %v9500 = vshrl.u32 %v9499, 7
        %v9501 = vsub.s32 %v9498, %v9500
        %v9502 = vrot.slane %v9488, %v9501
        %v9503 = vcombine.low %v9392, %v9400
        %v9504 = vcombine.high %v9392, %v9400
        %v9506 = vunpack.c.l.s4 1983009808
        %v9507 = vunpack.c.0.s8 %v9506
        %v9508 = vlaneseq
        %v9509 = vshrl.u32 %v9508, 7
        %v9510 = vsub.s32 %v9507, %v9509
        %v9511 = vrot.slane %v9503, %v9510
        %v9513 = vunpack.c.l.s4 1983009808
        %v9514 = vunpack.c.0.s8 %v9513
        %v9515 = vlaneseq
        %v9516 = vshrl.u32 %v9515, 7
        %v9517 = vsub.s32 %v9514, %v9516
        %v9518 = vrot.slane %v9504, %v9517
        %v9519 = vcombine.low %v9495, %v9511
        %v9520 = vcombine.high %v9495, %v9511
        %v9522 = vunpack.c.l.s4 1934713408
        %v9523 = vunpack.c.0.s8 %v9522
        %v9524 = vlaneseq
        %v9525 = vshrl.u32 %v9524, 7
        %v9526 = vsub.s32 %v9523, %v9525
        %v9527 = vrot.slane %v9519, %v9526
        %v9529 = vunpack.c.l.s4 1934713408
        %v9530 = vunpack.c.0.s8 %v9529
        %v9531 = vlaneseq
        %v9532 = vshrl.u32 %v9531, 7
        %v9533 = vsub.s32 %v9530, %v9532
        %v9534 = vrot.slane %v9520, %v9533
        %v9535 = vcombine.low %v9502, %v9518
        %v9536 = vcombine.high %v9502, %v9518
        %v9538 = vunpack.c.l.s4 1934713408
        %v9539 = vunpack.c.0.s8 %v9538
        %v9540 = vlaneseq
        %v9541 = vshrl.u32 %v9540, 7
        %v9542 = vsub.s32 %v9539, %v9541
        %v9543 = vrot.slane %v9535, %v9542
        %v9545 = vunpack.c.l.s4 1934713408
        %v9546 = vunpack.c.0.s8 %v9545
        %v9547 = vlaneseq
        %v9548 = vshrl.u32 %v9547, 7
        %v9549 = vsub.s32 %v9546, %v9548
        %v9550 = vrot.slane %v9536, %v9549
        %v9551 = vcombine.low %v9527, %v9543
        %v9552 = vcombine.high %v9527, %v9543
        %v9553 = vcombine.low %v9534, %v9550
        %v9554 = vcombine.high %v9534, %v9550
        %v9555 = vcombine.low %v9389, %v9397
        %v9556 = vcombine.high %v9389, %v9397
        %v9558 = vunpack.c.l.s4 1983009808
        %v9559 = vunpack.c.0.s8 %v9558
        %v9560 = vlaneseq
        %v9561 = vshrl.u32 %v9560, 7
        %v9562 = vsub.s32 %v9559, %v9561
        %v9563 = vrot.slane %v9555, %v9562
        %v9565 = vunpack.c.l.s4 1983009808
        %v9566 = vunpack.c.0.s8 %v9565
        %v9567 = vlaneseq
        %v9568 = vshrl.u32 %v9567, 7
        %v9569 = vsub.s32 %v9566, %v9568
        %v9570 = vrot.slane %v9556, %v9569
        %v9571 = vcombine.low %v9393, %v9401
        %v9572 = vcombine.high %v9393, %v9401
        %v9574 = vunpack.c.l.s4 1983009808
        %v9575 = vunpack.c.0.s8 %v9574
        %v9576 = vlaneseq
        %v9577 = vshrl.u32 %v9576, 7
        %v9578 = vsub.s32 %v9575, %v9577
        %v9579 = vrot.slane %v9571, %v9578
        %v9581 = vunpack.c.l.s4 1983009808
        %v9582 = vunpack.c.0.s8 %v9581
        %v9583 = vlaneseq
        %v9584 = vshrl.u32 %v9583, 7
        %v9585 = vsub.s32 %v9582, %v9584
        %v9586 = vrot.slane %v9572, %v9585
        %v9587 = vcombine.low %v9563, %v9579
        %v9588 = vcombine.high %v9563, %v9579
        %v9590 = vunpack.c.l.s4 1934713408
        %v9591 = vunpack.c.0.s8 %v9590
        %v9592 = vlaneseq
        %v9593 = vshrl.u32 %v9592, 7
        %v9594 = vsub.s32 %v9591, %v9593
        %v9595 = vrot.slane %v9587, %v9594
        %v9597 = vunpack.c.l.s4 1934713408
        %v9598 = vunpack.c.0.s8 %v9597
        %v9599 = vlaneseq
        %v9600 = vshrl.u32 %v9599, 7
        %v9601 = vsub.s32 %v9598, %v9600
        %v9602 = vrot.slane %v9588, %v9601
        %v9603 = vcombine.low %v9570, %v9586
        %v9604 = vcombine.high %v9570, %v9586
        %v9606 = vunpack.c.l.s4 1934713408
        %v9607 = vunpack.c.0.s8 %v9606
        %v9608 = vlaneseq
        %v9609 = vshrl.u32 %v9608, 7
        %v9610 = vsub.s32 %v9607, %v9609
        %v9611 = vrot.slane %v9603, %v9610
        %v9613 = vunpack.c.l.s4 1934713408
        %v9614 = vunpack.c.0.s8 %v9613
        %v9615 = vlaneseq
        %v9616 = vshrl.u32 %v9615, 7
        %v9617 = vsub.s32 %v9614, %v9616
        %v9618 = vrot.slane %v9604, %v9617
        %v9619 = vcombine.low %v9595, %v9611
        %v9620 = vcombine.high %v9595, %v9611
        %v9621 = vcombine.low %v9602, %v9618
        %v9622 = vcombine.high %v9602, %v9618
        %v9623 = vcombine.low %v9390, %v9398
        %v9624 = vcombine.high %v9390, %v9398
        %v9626 = vunpack.c.l.s4 1983009808
        %v9627 = vunpack.c.0.s8 %v9626
        %v9628 = vlaneseq
        %v9629 = vshrl.u32 %v9628, 7
        %v9630 = vsub.s32 %v9627, %v9629
        %v9631 = vrot.slane %v9623, %v9630
        %v9633 = vunpack.c.l.s4 1983009808
        %v9634 = vunpack.c.0.s8 %v9633
        %v9635 = vlaneseq
        %v9636 = vshrl.u32 %v9635, 7
        %v9637 = vsub.s32 %v9634, %v9636
        %v9638 = vrot.slane %v9624, %v9637
        %v9639 = vcombine.low %v9394, %v9402
        %v9640 = vcombine.high %v9394, %v9402
        %v9642 = vunpack.c.l.s4 1983009808
        %v9643 = vunpack.c.0.s8 %v9642
        %v9644 = vlaneseq
        %v9645 = vshrl.u32 %v9644, 7
        %v9646 = vsub.s32 %v9643, %v9645
        %v9647 = vrot.slane %v9639, %v9646
        %v9649 = vunpack.c.l.s4 1983009808
        %v9650 = vunpack.c.0.s8 %v9649
        %v9651 = vlaneseq
        %v9652 = vshrl.u32 %v9651, 7
        %v9653 = vsub.s32 %v9650, %v9652
        %v9654 = vrot.slane %v9640, %v9653
        %v9655 = vcombine.low %v9631, %v9647
        %v9656 = vcombine.high %v9631, %v9647
        %v9658 = vunpack.c.l.s4 1934713408
        %v9659 = vunpack.c.0.s8 %v9658
        %v9660 = vlaneseq
        %v9661 = vshrl.u32 %v9660, 7
        %v9662 = vsub.s32 %v9659, %v9661
        %v9663 = vrot.slane %v9655, %v9662
        %v9665 = vunpack.c.l.s4 1934713408
        %v9666 = vunpack.c.0.s8 %v9665
        %v9667 = vlaneseq
        %v9668 = vshrl.u32 %v9667, 7
        %v9669 = vsub.s32 %v9666, %v9668
        %v9670 = vrot.slane %v9656, %v9669
        %v9671 = vcombine.low %v9638, %v9654
        %v9672 = vcombine.high %v9638, %v9654
        %v9674 = vunpack.c.l.s4 1934713408
        %v9675 = vunpack.c.0.s8 %v9674
        %v9676 = vlaneseq
        %v9677 = vshrl.u32 %v9676, 7
        %v9678 = vsub.s32 %v9675, %v9677
        %v9679 = vrot.slane %v9671, %v9678
        %v9681 = vunpack.c.l.s4 1934713408
        %v9682 = vunpack.c.0.s8 %v9681
        %v9683 = vlaneseq
        %v9684 = vshrl.u32 %v9683, 7
        %v9685 = vsub.s32 %v9682, %v9684
        %v9686 = vrot.slane %v9672, %v9685
        %v9687 = vcombine.low %v9663, %v9679
        %v9688 = vcombine.high %v9663, %v9679
        %v9689 = vcombine.low %v9670, %v9686
        %v9690 = vcombine.high %v9670, %v9686
        %v9723 = vcombine.low %v9339, %v9340
        %v9724 = vcombine.low %v9341, %v9342
        %v9725 = vcombine.low %v9343, %v9344
        %v9726 = vcombine.low %v9345, %v9346
        %v9727 = vcombine.low %v9347, %v9348
        %v9728 = vcombine.low %v9349, %v9350
        %v9729 = vcombine.low %v9351, %v9352
        %v9730 = vcombine.low %v9353, %v9354
        %v9731 = vcombine.low %v9355, %v9356
        %v9732 = vcombine.low %v9357, %v9358
        %v9733 = vcombine.low %v9359, %v9360
        %v9734 = vcombine.low %v9361, %v9362
        %v9735 = vcombine.low %v9363, %v9364
        %v9736 = vcombine.low %v9365, %v9366
        %v9737 = vcombine.low %v9367, %v9368
        %v9738 = vcombine.low %v9369, %v9370
        %v9755 = vadd.f32 %v9483, %v9723
        %v9756 = vadd.f32 %v9619, %v9724
        %v9757 = vadd.f32 %v9484, %v9725
        %v9758 = vadd.f32 %v9620, %v9726
        %v9759 = vadd.f32 %v9485, %v9727
        %v9760 = vadd.f32 %v9621, %v9728
        %v9761 = vadd.f32 %v9486, %v9729
        %v9762 = vadd.f32 %v9622, %v9730
        %v9763 = vadd.f32 %v9551, %v9731
        %v9764 = vadd.f32 %v9687, %v9732
        %v9765 = vadd.f32 %v9552, %v9733
        %v9766 = vadd.f32 %v9688, %v9734
        %v9767 = vadd.f32 %v9553, %v9735
        %v9768 = vadd.f32 %v9689, %v9736
        %v9769 = vadd.f32 %v9554, %v9737
        %v9770 = vadd.f32 %v9690, %v9738
        %v9771 = vcombine.low %v9755, %v9759
        %v9772 = vcombine.high %v9755, %v9759
        %v9774 = vunpack.c.l.s4 1983009808
        %v9775 = vunpack.c.0.s8 %v9774
        %v9776 = vlaneseq
        %v9777 = vshrl.u32 %v9776, 7
        %v9778 = vsub.s32 %v9775, %v9777
        %v9779 = vrot.slane %v9771, %v9778
        %v9781 = vunpack.c.l.s4 1983009808
        %v9782 = vunpack.c.0.s8 %v9781
        %v9783 = vlaneseq
        %v9784 = vshrl.u32 %v9783, 7
        %v9785 = vsub.s32 %v9782, %v9784
        %v9786 = vrot.slane %v9772, %v9785
        %v9787 = vcombine.low %v9757, %v9761
        %v9788 = vcombine.high %v9757, %v9761
        %v9790 = vunpack.c.l.s4 1983009808
        %v9791 = vunpack.c.0.s8 %v9790
        %v9792 = vlaneseq
        %v9793 = vshrl.u32 %v9792, 7
        %v9794 = vsub.s32 %v9791, %v9793
        %v9795 = vrot.slane %v9787, %v9794
        %v9797 = vunpack.c.l.s4 1983009808
        %v9798 = vunpack.c.0.s8 %v9797
        %v9799 = vlaneseq
        %v9800 = vshrl.u32 %v9799, 7
        %v9801 = vsub.s32 %v9798, %v9800
        %v9802 = vrot.slane %v9788, %v9801
        %v9803 = vcombine.low %v9779, %v9795
        %v9804 = vcombine.high %v9779, %v9795
        %v9806 = vunpack.c.l.s4 1934713408
        %v9807 = vunpack.c.0.s8 %v9806
        %v9808 = vlaneseq
        %v9809 = vshrl.u32 %v9808, 7
        %v9810 = vsub.s32 %v9807, %v9809
        %v9811 = vrot.slane %v9803, %v9810
        %v9813 = vunpack.c.l.s4 1934713408
        %v9814 = vunpack.c.0.s8 %v9813
        %v9815 = vlaneseq
        %v9816 = vshrl.u32 %v9815, 7
        %v9817 = vsub.s32 %v9814, %v9816
        %v9818 = vrot.slane %v9804, %v9817
        %v9819 = vcombine.low %v9786, %v9802
        %v9820 = vcombine.high %v9786, %v9802
        %v9822 = vunpack.c.l.s4 1934713408
        %v9823 = vunpack.c.0.s8 %v9822
        %v9824 = vlaneseq
        %v9825 = vshrl.u32 %v9824, 7
        %v9826 = vsub.s32 %v9823, %v9825
        %v9827 = vrot.slane %v9819, %v9826
        %v9829 = vunpack.c.l.s4 1934713408
        %v9830 = vunpack.c.0.s8 %v9829
        %v9831 = vlaneseq
        %v9832 = vshrl.u32 %v9831, 7
        %v9833 = vsub.s32 %v9830, %v9832
        %v9834 = vrot.slane %v9820, %v9833
        %v9835 = vcombine.low %v9811, %v9827
        %v9836 = vcombine.high %v9811, %v9827
        %v9837 = vcombine.low %v9818, %v9834
        %v9838 = vcombine.high %v9818, %v9834
        %v9839 = vcombine.low %v9763, %v9767
        %v9840 = vcombine.high %v9763, %v9767
        %v9842 = vunpack.c.l.s4 1983009808
        %v9843 = vunpack.c.0.s8 %v9842
        %v9844 = vlaneseq
        %v9845 = vshrl.u32 %v9844, 7
        %v9846 = vsub.s32 %v9843, %v9845
        %v9847 = vrot.slane %v9839, %v9846
        %v9849 = vunpack.c.l.s4 1983009808
        %v9850 = vunpack.c.0.s8 %v9849
        %v9851 = vlaneseq
        %v9852 = vshrl.u32 %v9851, 7
        %v9853 = vsub.s32 %v9850, %v9852
        %v9854 = vrot.slane %v9840, %v9853
        %v9855 = vcombine.low %v9765, %v9769
        %v9856 = vcombine.high %v9765, %v9769
        %v9858 = vunpack.c.l.s4 1983009808
        %v9859 = vunpack.c.0.s8 %v9858
        %v9860 = vlaneseq
        %v9861 = vshrl.u32 %v9860, 7
        %v9862 = vsub.s32 %v9859, %v9861
        %v9863 = vrot.slane %v9855, %v9862
        %v9865 = vunpack.c.l.s4 1983009808
        %v9866 = vunpack.c.0.s8 %v9865
        %v9867 = vlaneseq
        %v9868 = vshrl.u32 %v9867, 7
        %v9869 = vsub.s32 %v9866, %v9868
        %v9870 = vrot.slane %v9856, %v9869
        %v9871 = vcombine.low %v9847, %v9863
        %v9872 = vcombine.high %v9847, %v9863
        %v9874 = vunpack.c.l.s4 1934713408
        %v9875 = vunpack.c.0.s8 %v9874
        %v9876 = vlaneseq
        %v9877 = vshrl.u32 %v9876, 7
        %v9878 = vsub.s32 %v9875, %v9877
        %v9879 = vrot.slane %v9871, %v9878
        %v9881 = vunpack.c.l.s4 1934713408
        %v9882 = vunpack.c.0.s8 %v9881
        %v9883 = vlaneseq
        %v9884 = vshrl.u32 %v9883, 7
        %v9885 = vsub.s32 %v9882, %v9884
        %v9886 = vrot.slane %v9872, %v9885
        %v9887 = vcombine.low %v9854, %v9870
        %v9888 = vcombine.high %v9854, %v9870
        %v9890 = vunpack.c.l.s4 1934713408
        %v9891 = vunpack.c.0.s8 %v9890
        %v9892 = vlaneseq
        %v9893 = vshrl.u32 %v9892, 7
        %v9894 = vsub.s32 %v9891, %v9893
        %v9895 = vrot.slane %v9887, %v9894
        %v9897 = vunpack.c.l.s4 1934713408
        %v9898 = vunpack.c.0.s8 %v9897
        %v9899 = vlaneseq
        %v9900 = vshrl.u32 %v9899, 7
        %v9901 = vsub.s32 %v9898, %v9900
        %v9902 = vrot.slane %v9888, %v9901
        %v9903 = vcombine.low %v9879, %v9895
        %v9904 = vcombine.high %v9879, %v9895
        %v9905 = vcombine.low %v9886, %v9902
        %v9906 = vcombine.high %v9886, %v9902
        %v9907 = vcombine.low %v9756, %v9760
        %v9908 = vcombine.high %v9756, %v9760
        %v9910 = vunpack.c.l.s4 1983009808
        %v9911 = vunpack.c.0.s8 %v9910
        %v9912 = vlaneseq
        %v9913 = vshrl.u32 %v9912, 7
        %v9914 = vsub.s32 %v9911, %v9913
        %v9915 = vrot.slane %v9907, %v9914
        %v9917 = vunpack.c.l.s4 1983009808
        %v9918 = vunpack.c.0.s8 %v9917
        %v9919 = vlaneseq
        %v9920 = vshrl.u32 %v9919, 7
        %v9921 = vsub.s32 %v9918, %v9920
        %v9922 = vrot.slane %v9908, %v9921
        %v9923 = vcombine.low %v9758, %v9762
        %v9924 = vcombine.high %v9758, %v9762
        %v9926 = vunpack.c.l.s4 1983009808
        %v9927 = vunpack.c.0.s8 %v9926
        %v9928 = vlaneseq
        %v9929 = vshrl.u32 %v9928, 7
        %v9930 = vsub.s32 %v9927, %v9929
        %v9931 = vrot.slane %v9923, %v9930
        %v9933 = vunpack.c.l.s4 1983009808
        %v9934 = vunpack.c.0.s8 %v9933
        %v9935 = vlaneseq
        %v9936 = vshrl.u32 %v9935, 7
        %v9937 = vsub.s32 %v9934, %v9936
        %v9938 = vrot.slane %v9924, %v9937
        %v9939 = vcombine.low %v9915, %v9931
        %v9940 = vcombine.high %v9915, %v9931
        %v9942 = vunpack.c.l.s4 1934713408
        %v9943 = vunpack.c.0.s8 %v9942
        %v9944 = vlaneseq
        %v9945 = vshrl.u32 %v9944, 7
        %v9946 = vsub.s32 %v9943, %v9945
        %v9947 = vrot.slane %v9939, %v9946
        %v9949 = vunpack.c.l.s4 1934713408
        %v9950 = vunpack.c.0.s8 %v9949
        %v9951 = vlaneseq
        %v9952 = vshrl.u32 %v9951, 7
        %v9953 = vsub.s32 %v9950, %v9952
        %v9954 = vrot.slane %v9940, %v9953
        %v9955 = vcombine.low %v9922, %v9938
        %v9956 = vcombine.high %v9922, %v9938
        %v9958 = vunpack.c.l.s4 1934713408
        %v9959 = vunpack.c.0.s8 %v9958
        %v9960 = vlaneseq
        %v9961 = vshrl.u32 %v9960, 7
        %v9962 = vsub.s32 %v9959, %v9961
        %v9963 = vrot.slane %v9955, %v9962
        %v9965 = vunpack.c.l.s4 1934713408
        %v9966 = vunpack.c.0.s8 %v9965
        %v9967 = vlaneseq
        %v9968 = vshrl.u32 %v9967, 7
        %v9969 = vsub.s32 %v9966, %v9968
        %v9970 = vrot.slane %v9956, %v9969
        %v9971 = vcombine.low %v9947, %v9963
        %v9972 = vcombine.high %v9947, %v9963
        %v9973 = vcombine.low %v9954, %v9970
        %v9974 = vcombine.high %v9954, %v9970
        %v9975 = vcombine.low %v9764, %v9768
        %v9976 = vcombine.high %v9764, %v9768
        %v9978 = vunpack.c.l.s4 1983009808
        %v9979 = vunpack.c.0.s8 %v9978
        %v9980 = vlaneseq
        %v9981 = vshrl.u32 %v9980, 7
        %v9982 = vsub.s32 %v9979, %v9981
        %v9983 = vrot.slane %v9975, %v9982
        %v9985 = vunpack.c.l.s4 1983009808
        %v9986 = vunpack.c.0.s8 %v9985
        %v9987 = vlaneseq
        %v9988 = vshrl.u32 %v9987, 7
        %v9989 = vsub.s32 %v9986, %v9988
        %v9990 = vrot.slane %v9976, %v9989
        %v9991 = vcombine.low %v9766, %v9770
        %v9992 = vcombine.high %v9766, %v9770
        %v9994 = vunpack.c.l.s4 1983009808
        %v9995 = vunpack.c.0.s8 %v9994
        %v9996 = vlaneseq
        %v9997 = vshrl.u32 %v9996, 7
        %v9998 = vsub.s32 %v9995, %v9997
        %v9999 = vrot.slane %v9991, %v9998
        %v10001 = vunpack.c.l.s4 1983009808
        %v10002 = vunpack.c.0.s8 %v10001
        %v10003 = vlaneseq
        %v10004 = vshrl.u32 %v10003, 7
        %v10005 = vsub.s32 %v10002, %v10004
        %v10006 = vrot.slane %v9992, %v10005
        %v10007 = vcombine.low %v9983, %v9999
        %v10008 = vcombine.high %v9983, %v9999
        %v10010 = vunpack.c.l.s4 1934713408
        %v10011 = vunpack.c.0.s8 %v10010
        %v10012 = vlaneseq
        %v10013 = vshrl.u32 %v10012, 7
        %v10014 = vsub.s32 %v10011, %v10013
        %v10015 = vrot.slane %v10007, %v10014
        %v10017 = vunpack.c.l.s4 1934713408
        %v10018 = vunpack.c.0.s8 %v10017
        %v10019 = vlaneseq
        %v10020 = vshrl.u32 %v10019, 7
        %v10021 = vsub.s32 %v10018, %v10020
        %v10022 = vrot.slane %v10008, %v10021
        %v10023 = vcombine.low %v9990, %v10006
        %v10024 = vcombine.high %v9990, %v10006
        %v10026 = vunpack.c.l.s4 1934713408
        %v10027 = vunpack.c.0.s8 %v10026
        %v10028 = vlaneseq
        %v10029 = vshrl.u32 %v10028, 7
        %v10030 = vsub.s32 %v10027, %v10029
        %v10031 = vrot.slane %v10023, %v10030
        %v10033 = vunpack.c.l.s4 1934713408
        %v10034 = vunpack.c.0.s8 %v10033
        %v10035 = vlaneseq
        %v10036 = vshrl.u32 %v10035, 7
        %v10037 = vsub.s32 %v10034, %v10036
        %v10038 = vrot.slane %v10024, %v10037
        %v10039 = vcombine.low %v10015, %v10031
        %v10040 = vcombine.high %v10015, %v10031
        %v10041 = vcombine.low %v10022, %v10038
        %v10042 = vcombine.high %v10022, %v10038
        %v10043 = vcombine.low %v9835, %v9837
        %v10044 = vcombine.high %v9835, %v9837
        %v10046 = vunpack.c.l.s4 1983009808
        %v10047 = vunpack.c.0.s8 %v10046
        %v10048 = vlaneseq
        %v10049 = vshrl.u32 %v10048, 7
        %v10050 = vsub.s32 %v10047, %v10049
        %v10051 = vrot.slane %v10043, %v10050
        %v10053 = vunpack.c.l.s4 1983009808
        %v10054 = vunpack.c.0.s8 %v10053
        %v10055 = vlaneseq
        %v10056 = vshrl.u32 %v10055, 7
        %v10057 = vsub.s32 %v10054, %v10056
        %v10058 = vrot.slane %v10044, %v10057
        %v10059 = vcombine.low %v9836, %v9838
        %v10060 = vcombine.high %v9836, %v9838
        %v10062 = vunpack.c.l.s4 1983009808
        %v10063 = vunpack.c.0.s8 %v10062
        %v10064 = vlaneseq
        %v10065 = vshrl.u32 %v10064, 7
        %v10066 = vsub.s32 %v10063, %v10065
        %v10067 = vrot.slane %v10059, %v10066
        %v10069 = vunpack.c.l.s4 1983009808
        %v10070 = vunpack.c.0.s8 %v10069
        %v10071 = vlaneseq
        %v10072 = vshrl.u32 %v10071, 7
        %v10073 = vsub.s32 %v10070, %v10072
        %v10074 = vrot.slane %v10060, %v10073
        %v10075 = vcombine.low %v10051, %v10067
        %v10076 = vcombine.high %v10051, %v10067
        %v10078 = vunpack.c.l.s4 1934713408
        %v10079 = vunpack.c.0.s8 %v10078
        %v10080 = vlaneseq
        %v10081 = vshrl.u32 %v10080, 7
        %v10082 = vsub.s32 %v10079, %v10081
        %v10083 = vrot.slane %v10075, %v10082
        %v10085 = vunpack.c.l.s4 1934713408
        %v10086 = vunpack.c.0.s8 %v10085
        %v10087 = vlaneseq
        %v10088 = vshrl.u32 %v10087, 7
        %v10089 = vsub.s32 %v10086, %v10088
        %v10090 = vrot.slane %v10076, %v10089
        %v10091 = vcombine.low %v10058, %v10074
        %v10092 = vcombine.high %v10058, %v10074
        %v10094 = vunpack.c.l.s4 1934713408
        %v10095 = vunpack.c.0.s8 %v10094
        %v10096 = vlaneseq
        %v10097 = vshrl.u32 %v10096, 7
        %v10098 = vsub.s32 %v10095, %v10097
        %v10099 = vrot.slane %v10091, %v10098
        %v10101 = vunpack.c.l.s4 1934713408
        %v10102 = vunpack.c.0.s8 %v10101
        %v10103 = vlaneseq
        %v10104 = vshrl.u32 %v10103, 7
        %v10105 = vsub.s32 %v10102, %v10104
        %v10106 = vrot.slane %v10092, %v10105
        %v10107 = vcombine.low %v10083, %v10099
        %v10108 = vcombine.high %v10083, %v10099
        %v10109 = vcombine.low %v10090, %v10106
        %v10110 = vcombine.high %v10090, %v10106
        %v10111 = vcombine.low %v9903, %v9905
        %v10112 = vcombine.high %v9903, %v9905
        %v10114 = vunpack.c.l.s4 1983009808
        %v10115 = vunpack.c.0.s8 %v10114
        %v10116 = vlaneseq
        %v10117 = vshrl.u32 %v10116, 7
        %v10118 = vsub.s32 %v10115, %v10117
        %v10119 = vrot.slane %v10111, %v10118
        %v10121 = vunpack.c.l.s4 1983009808
        %v10122 = vunpack.c.0.s8 %v10121
        %v10123 = vlaneseq
        %v10124 = vshrl.u32 %v10123, 7
        %v10125 = vsub.s32 %v10122, %v10124
        %v10126 = vrot.slane %v10112, %v10125
        %v10127 = vcombine.low %v9904, %v9906
        %v10128 = vcombine.high %v9904, %v9906
        %v10130 = vunpack.c.l.s4 1983009808
        %v10131 = vunpack.c.0.s8 %v10130
        %v10132 = vlaneseq
        %v10133 = vshrl.u32 %v10132, 7
        %v10134 = vsub.s32 %v10131, %v10133
        %v10135 = vrot.slane %v10127, %v10134
        %v10137 = vunpack.c.l.s4 1983009808
        %v10138 = vunpack.c.0.s8 %v10137
        %v10139 = vlaneseq
        %v10140 = vshrl.u32 %v10139, 7
        %v10141 = vsub.s32 %v10138, %v10140
        %v10142 = vrot.slane %v10128, %v10141
        %v10143 = vcombine.low %v10119, %v10135
        %v10144 = vcombine.high %v10119, %v10135
        %v10146 = vunpack.c.l.s4 1934713408
        %v10147 = vunpack.c.0.s8 %v10146
        %v10148 = vlaneseq
        %v10149 = vshrl.u32 %v10148, 7
        %v10150 = vsub.s32 %v10147, %v10149
        %v10151 = vrot.slane %v10143, %v10150
        %v10153 = vunpack.c.l.s4 1934713408
        %v10154 = vunpack.c.0.s8 %v10153
        %v10155 = vlaneseq
        %v10156 = vshrl.u32 %v10155, 7
        %v10157 = vsub.s32 %v10154, %v10156
        %v10158 = vrot.slane %v10144, %v10157
        %v10159 = vcombine.low %v10126, %v10142
        %v10160 = vcombine.high %v10126, %v10142
        %v10162 = vunpack.c.l.s4 1934713408
        %v10163 = vunpack.c.0.s8 %v10162
        %v10164 = vlaneseq
        %v10165 = vshrl.u32 %v10164, 7
        %v10166 = vsub.s32 %v10163, %v10165
        %v10167 = vrot.slane %v10159, %v10166
        %v10169 = vunpack.c.l.s4 1934713408
        %v10170 = vunpack.c.0.s8 %v10169
        %v10171 = vlaneseq
        %v10172 = vshrl.u32 %v10171, 7
        %v10173 = vsub.s32 %v10170, %v10172
        %v10174 = vrot.slane %v10160, %v10173
        %v10175 = vcombine.low %v10151, %v10167
        %v10176 = vcombine.high %v10151, %v10167
        %v10177 = vcombine.low %v10158, %v10174
        %v10178 = vcombine.high %v10158, %v10174
        %v10179 = vcombine.low %v9971, %v9973
        %v10180 = vcombine.high %v9971, %v9973
        %v10182 = vunpack.c.l.s4 1983009808
        %v10183 = vunpack.c.0.s8 %v10182
        %v10184 = vlaneseq
        %v10185 = vshrl.u32 %v10184, 7
        %v10186 = vsub.s32 %v10183, %v10185
        %v10187 = vrot.slane %v10179, %v10186
        %v10189 = vunpack.c.l.s4 1983009808
        %v10190 = vunpack.c.0.s8 %v10189
        %v10191 = vlaneseq
        %v10192 = vshrl.u32 %v10191, 7
        %v10193 = vsub.s32 %v10190, %v10192
        %v10194 = vrot.slane %v10180, %v10193
        %v10195 = vcombine.low %v9972, %v9974
        %v10196 = vcombine.high %v9972, %v9974
        %v10198 = vunpack.c.l.s4 1983009808
        %v10199 = vunpack.c.0.s8 %v10198
        %v10200 = vlaneseq
        %v10201 = vshrl.u32 %v10200, 7
        %v10202 = vsub.s32 %v10199, %v10201
        %v10203 = vrot.slane %v10195, %v10202
        %v10205 = vunpack.c.l.s4 1983009808
        %v10206 = vunpack.c.0.s8 %v10205
        %v10207 = vlaneseq
        %v10208 = vshrl.u32 %v10207, 7
        %v10209 = vsub.s32 %v10206, %v10208
        %v10210 = vrot.slane %v10196, %v10209
        %v10211 = vcombine.low %v10187, %v10203
        %v10212 = vcombine.high %v10187, %v10203
        %v10214 = vunpack.c.l.s4 1934713408
        %v10215 = vunpack.c.0.s8 %v10214
        %v10216 = vlaneseq
        %v10217 = vshrl.u32 %v10216, 7
        %v10218 = vsub.s32 %v10215, %v10217
        %v10219 = vrot.slane %v10211, %v10218
        %v10221 = vunpack.c.l.s4 1934713408
        %v10222 = vunpack.c.0.s8 %v10221
        %v10223 = vlaneseq
        %v10224 = vshrl.u32 %v10223, 7
        %v10225 = vsub.s32 %v10222, %v10224
        %v10226 = vrot.slane %v10212, %v10225
        %v10227 = vcombine.low %v10194, %v10210
        %v10228 = vcombine.high %v10194, %v10210
        %v10230 = vunpack.c.l.s4 1934713408
        %v10231 = vunpack.c.0.s8 %v10230
        %v10232 = vlaneseq
        %v10233 = vshrl.u32 %v10232, 7
        %v10234 = vsub.s32 %v10231, %v10233
        %v10235 = vrot.slane %v10227, %v10234
        %v10237 = vunpack.c.l.s4 1934713408
        %v10238 = vunpack.c.0.s8 %v10237
        %v10239 = vlaneseq
        %v10240 = vshrl.u32 %v10239, 7
        %v10241 = vsub.s32 %v10238, %v10240
        %v10242 = vrot.slane %v10228, %v10241
        %v10243 = vcombine.low %v10219, %v10235
        %v10244 = vcombine.high %v10219, %v10235
        %v10245 = vcombine.low %v10226, %v10242
        %v10246 = vcombine.high %v10226, %v10242
        %v10247 = vcombine.low %v10039, %v10041
        %v10248 = vcombine.high %v10039, %v10041
        %v10250 = vunpack.c.l.s4 1983009808
        %v10251 = vunpack.c.0.s8 %v10250
        %v10252 = vlaneseq
        %v10253 = vshrl.u32 %v10252, 7
        %v10254 = vsub.s32 %v10251, %v10253
        %v10255 = vrot.slane %v10247, %v10254
        %v10257 = vunpack.c.l.s4 1983009808
        %v10258 = vunpack.c.0.s8 %v10257
        %v10259 = vlaneseq
        %v10260 = vshrl.u32 %v10259, 7
        %v10261 = vsub.s32 %v10258, %v10260
        %v10262 = vrot.slane %v10248, %v10261
        %v10263 = vcombine.low %v10040, %v10042
        %v10264 = vcombine.high %v10040, %v10042
        %v10266 = vunpack.c.l.s4 1983009808
        %v10267 = vunpack.c.0.s8 %v10266
        %v10268 = vlaneseq
        %v10269 = vshrl.u32 %v10268, 7
        %v10270 = vsub.s32 %v10267, %v10269
        %v10271 = vrot.slane %v10263, %v10270
        %v10273 = vunpack.c.l.s4 1983009808
        %v10274 = vunpack.c.0.s8 %v10273
        %v10275 = vlaneseq
        %v10276 = vshrl.u32 %v10275, 7
        %v10277 = vsub.s32 %v10274, %v10276
        %v10278 = vrot.slane %v10264, %v10277
        %v10279 = vcombine.low %v10255, %v10271
        %v10280 = vcombine.high %v10255, %v10271
        %v10282 = vunpack.c.l.s4 1934713408
        %v10283 = vunpack.c.0.s8 %v10282
        %v10284 = vlaneseq
        %v10285 = vshrl.u32 %v10284, 7
        %v10286 = vsub.s32 %v10283, %v10285
        %v10287 = vrot.slane %v10279, %v10286
        %v10289 = vunpack.c.l.s4 1934713408
        %v10290 = vunpack.c.0.s8 %v10289
        %v10291 = vlaneseq
        %v10292 = vshrl.u32 %v10291, 7
        %v10293 = vsub.s32 %v10290, %v10292
        %v10294 = vrot.slane %v10280, %v10293
        %v10295 = vcombine.low %v10262, %v10278
        %v10296 = vcombine.high %v10262, %v10278
        %v10298 = vunpack.c.l.s4 1934713408
        %v10299 = vunpack.c.0.s8 %v10298
        %v10300 = vlaneseq
        %v10301 = vshrl.u32 %v10300, 7
        %v10302 = vsub.s32 %v10299, %v10301
        %v10303 = vrot.slane %v10295, %v10302
        %v10305 = vunpack.c.l.s4 1934713408
        %v10306 = vunpack.c.0.s8 %v10305
        %v10307 = vlaneseq
        %v10308 = vshrl.u32 %v10307, 7
        %v10309 = vsub.s32 %v10306, %v10308
        %v10310 = vrot.slane %v10296, %v10309
        %v10311 = vcombine.low %v10287, %v10303
        %v10312 = vcombine.high %v10287, %v10303
        %v10313 = vcombine.low %v10294, %v10310
        %v10314 = vcombine.high %v10294, %v10310
        %v10317 = vcombine.high %v10107, %v10107
        %v10318 = vcombine.high %v10243, %v10243
        %v10321 = vcombine.high %v10108, %v10108
        %v10322 = vcombine.high %v10244, %v10244
        %v10325 = vcombine.high %v10109, %v10109
        %v10326 = vcombine.high %v10245, %v10245
        %v10329 = vcombine.high %v10110, %v10110
        %v10330 = vcombine.high %v10246, %v10246
        %v10333 = vcombine.high %v10175, %v10175
        %v10334 = vcombine.high %v10311, %v10311
        %v10337 = vcombine.high %v10176, %v10176
        %v10338 = vcombine.high %v10312, %v10312
        %v10341 = vcombine.high %v10177, %v10177
        %v10342 = vcombine.high %v10313, %v10313
        %v10345 = vcombine.high %v10178, %v10178
        %v10346 = vcombine.high %v10314, %v10314
        %v10348 = vsel %vm5915, %v355, 0
        %v10350 = vsel %vm5919, %v10107, 0
        %v10352 = vsel %vm5919, %v10317, 0
        %v10354 = vsel %vm5919, %v10243, 0
        %v10356 = vsel %vm5919, %v10318, 0
        %v10358 = vsel %vm5919, %v10108, 0
        %v10360 = vsel %vm5919, %v10321, 0
        %v10362 = vsel %vm5919, %v10244, 0
        %v10364 = vsel %vm5919, %v10322, 0
        %v10366 = vsel %vm5919, %v10109, 0
        %v10368 = vsel %vm5919, %v10325, 0
        %v10370 = vsel %vm5919, %v10245, 0
        %v10372 = vsel %vm5919, %v10326, 0
        %v10374 = vsel %vm5919, %v10110, 0
        %v10376 = vsel %vm5919, %v10329, 0
        %v10378 = vsel %vm5919, %v10246, 0
        %v10380 = vsel %vm5919, %v10330, 0
        %v10382 = vsel %vm5919, %v10175, 0
        %v10384 = vsel %vm5919, %v10333, 0
        %v10386 = vsel %vm5919, %v10311, 0
        %v10388 = vsel %vm5919, %v10334, 0
        %v10390 = vsel %vm5919, %v10176, 0
        %v10392 = vsel %vm5919, %v10337, 0
        %v10394 = vsel %vm5919, %v10312, 0
        %v10396 = vsel %vm5919, %v10338, 0
        %v10398 = vsel %vm5919, %v10177, 0
        %v10400 = vsel %vm5919, %v10341, 0
        %v10402 = vsel %vm5919, %v10313, 0
        %v10404 = vsel %vm5919, %v10342, 0
        %v10406 = vsel %vm5919, %v10178, 0
        %v10408 = vsel %vm5919, %v10345, 0
        %v10410 = vsel %vm5919, %v10314, 0
        %v10412 = vsel %vm5919, %v10346, 0
        %10414 = vmatprep.subr.mxu0 %v10352
        %10415 = vmatpush1.msra.mxu0 %v10350
        %10416 = vmatprep.subr.mxu0 0.0
        %10417 = vmatpush1.msra.mxu0 0.0
        %10418 = vmatprep.subr.mxu0 0.0
        %10419 = vmatpush1.msra.mxu0 0.0
        %10420 = vmatprep.subr.mxu0 0.0
        %10421 = vmatpush1.msra.mxu0 0.0
        %10422 = vmatprep.subr.mxu0 0.0
        %10423 = vmatpush1.msra.mxu0 0.0
        %10424 = vmatprep.subr.mxu0 0.0
        %10425 = vmatpush1.msra.mxu0 0.0
        %10426 = vmatprep.subr.mxu0 0.0
        %10427 = vmatpush1.msra.mxu0 0.0
        %10428 = vmatprep.subr.mxu0 0.0
        %10429 = vmatpush1.msra.mxu0 0.0
        %10430 = vmatprep.subr.mxu0 0.0
        %10431 = vmatpush1.msra.mxu0 0.0
        %10432 = vmatprep.subr.mxu0 0.0
        %10433 = vmatpush1.msra.mxu0 0.0
        %10434 = vmatprep.subr.mxu0 0.0
        %10435 = vmatpush1.msra.mxu0 0.0
        %10436 = vmatprep.subr.mxu0 0.0
        %10437 = vmatpush1.msra.mxu0 0.0
        %10438 = vmatprep.subr.mxu0 0.0
        %10439 = vmatpush1.msra.mxu0 0.0
        %10440 = vmatprep.subr.mxu0 0.0
        %10441 = vmatpush1.msra.mxu0 0.0
        %10442 = vmatprep.subr.mxu0 0.0
        %10443 = vmatpush1.msra.mxu0 0.0
        %10444 = vmatprep.subr.mxu0 0.0
        %10445 = vmatpush1.msra.mxu0 0.0
        %10446 = vmatprep.subr.mxu0 0.0
        %10447 = vmatpush1.msra.mxu0 0.0
        %10448 = vmatprep.subr.mxu0 0.0
        %10449 = vmatpush1.msra.mxu0 0.0
        %10450 = vmatprep.subr.mxu0 0.0
        %10451 = vmatpush1.msra.mxu0 0.0
        %10452 = vmatprep.subr.mxu0 0.0
        %10453 = vmatpush1.msra.mxu0 0.0
        %10454 = vmatprep.subr.mxu0 0.0
        %10455 = vmatpush1.msra.mxu0 0.0
        %10456 = vmatprep.subr.mxu0 0.0
        %10457 = vmatpush1.msra.mxu0 0.0
        %10458 = vmatprep.subr.mxu0 0.0
        %10459 = vmatpush1.msra.mxu0 0.0
        %10460 = vmatprep.subr.mxu0 0.0
        %10461 = vmatpush1.msra.mxu0 0.0
        %10462 = vmatprep.subr.mxu0 0.0
        %10463 = vmatpush1.msra.mxu0 0.0
        %10464 = vmatprep.subr.mxu0 0.0
        %10465 = vmatpush1.msra.mxu0 0.0
        %10466 = vmatprep.subr.mxu0 0.0
        %10467 = vmatpush1.msra.mxu0 0.0
        %10468 = vmatprep.subr.mxu0 0.0
        %10469 = vmatpush1.msra.mxu0 0.0
        %10470 = vmatprep.subr.mxu0 0.0
        %10471 = vmatpush1.msra.mxu0 0.0
        %10472 = vmatprep.subr.mxu0 0.0
        %10473 = vmatpush1.msra.mxu0 0.0
        %10474 = vmatprep.subr.mxu0 0.0
        %10475 = vmatpush1.msra.mxu0 0.0
        %10476 = vmatprep.subr.mxu0 0.0
        %10477 = vmatpush1.msra.mxu0 0.0
        %10478 = vmatprep.mubr.f32.mxu0 0.0
        %10479 = vmatmul.mubr.f32.gmra.mrb[0].mxu0 %v10348
        %v10480 = vpop.f32.mrb[0].mxu0
        %v10481 = vadd.f32 0.0, %v10480
        %v10482 = vpop.f32.mrb[0].mxu0
        %v10483 = vadd.f32 0.0, %v10482
        %10484 = vdwg.mxu0
        %10485 = vmatprep.subr.mxu0 %v10356
        %10486 = vmatpush1.msra.mxu0 %v10354
        %10487 = vmatprep.subr.mxu0 0.0
        %10488 = vmatpush1.msra.mxu0 0.0
        %10489 = vmatprep.subr.mxu0 0.0
        %10490 = vmatpush1.msra.mxu0 0.0
        %10491 = vmatprep.subr.mxu0 0.0
        %10492 = vmatpush1.msra.mxu0 0.0
        %10493 = vmatprep.subr.mxu0 0.0
        %10494 = vmatpush1.msra.mxu0 0.0
        %10495 = vmatprep.subr.mxu0 0.0
        %10496 = vmatpush1.msra.mxu0 0.0
        %10497 = vmatprep.subr.mxu0 0.0
        %10498 = vmatpush1.msra.mxu0 0.0
        %10499 = vmatprep.subr.mxu0 0.0
        %10500 = vmatpush1.msra.mxu0 0.0
        %10501 = vmatprep.subr.mxu0 0.0
        %10502 = vmatpush1.msra.mxu0 0.0
        %10503 = vmatprep.subr.mxu0 0.0
        %10504 = vmatpush1.msra.mxu0 0.0
        %10505 = vmatprep.subr.mxu0 0.0
        %10506 = vmatpush1.msra.mxu0 0.0
        %10507 = vmatprep.subr.mxu0 0.0
        %10508 = vmatpush1.msra.mxu0 0.0
        %10509 = vmatprep.subr.mxu0 0.0
        %10510 = vmatpush1.msra.mxu0 0.0
        %10511 = vmatprep.subr.mxu0 0.0
        %10512 = vmatpush1.msra.mxu0 0.0
        %10513 = vmatprep.subr.mxu0 0.0
        %10514 = vmatpush1.msra.mxu0 0.0
        %10515 = vmatprep.subr.mxu0 0.0
        %10516 = vmatpush1.msra.mxu0 0.0
        %10517 = vmatprep.subr.mxu0 0.0
        %10518 = vmatpush1.msra.mxu0 0.0
        %10519 = vmatprep.subr.mxu0 0.0
        %10520 = vmatpush1.msra.mxu0 0.0
        %10521 = vmatprep.subr.mxu0 0.0
        %10522 = vmatpush1.msra.mxu0 0.0
        %10523 = vmatprep.subr.mxu0 0.0
        %10524 = vmatpush1.msra.mxu0 0.0
        %10525 = vmatprep.subr.mxu0 0.0
        %10526 = vmatpush1.msra.mxu0 0.0
        %10527 = vmatprep.subr.mxu0 0.0
        %10528 = vmatpush1.msra.mxu0 0.0
        %10529 = vmatprep.subr.mxu0 0.0
        %10530 = vmatpush1.msra.mxu0 0.0
        %10531 = vmatprep.subr.mxu0 0.0
        %10532 = vmatpush1.msra.mxu0 0.0
        %10533 = vmatprep.subr.mxu0 0.0
        %10534 = vmatpush1.msra.mxu0 0.0
        %10535 = vmatprep.subr.mxu0 0.0
        %10536 = vmatpush1.msra.mxu0 0.0
        %10537 = vmatprep.subr.mxu0 0.0
        %10538 = vmatpush1.msra.mxu0 0.0
        %10539 = vmatprep.subr.mxu0 0.0
        %10540 = vmatpush1.msra.mxu0 0.0
        %10541 = vmatprep.subr.mxu0 0.0
        %10542 = vmatpush1.msra.mxu0 0.0
        %10543 = vmatprep.subr.mxu0 0.0
        %10544 = vmatpush1.msra.mxu0 0.0
        %10545 = vmatprep.subr.mxu0 0.0
        %10546 = vmatpush1.msra.mxu0 0.0
        %10547 = vmatprep.subr.mxu0 0.0
        %10548 = vmatpush1.msra.mxu0 0.0
        %10549 = vmatprep.mubr.f32.mxu0 0.0
        %10550 = vmatmul.mubr.f32.gmra.mrb[0].mxu0 %v10348
        %v10551 = vpop.f32.mrb[0].mxu0
        %v10552 = vadd.f32 0.0, %v10551
        %v10553 = vpop.f32.mrb[0].mxu0
        %v10554 = vadd.f32 0.0, %v10553
        %10555 = vdwg.mxu0
        %10556 = vmatprep.subr.mxu0 %v10360
        %10557 = vmatpush1.msra.mxu0 %v10358
        %10558 = vmatprep.subr.mxu0 0.0
        %10559 = vmatpush1.msra.mxu0 0.0
        %10560 = vmatprep.subr.mxu0 0.0
        %10561 = vmatpush1.msra.mxu0 0.0
        %10562 = vmatprep.subr.mxu0 0.0
        %10563 = vmatpush1.msra.mxu0 0.0
        %10564 = vmatprep.subr.mxu0 0.0
        %10565 = vmatpush1.msra.mxu0 0.0
        %10566 = vmatprep.subr.mxu0 0.0
        %10567 = vmatpush1.msra.mxu0 0.0
        %10568 = vmatprep.subr.mxu0 0.0
        %10569 = vmatpush1.msra.mxu0 0.0
        %10570 = vmatprep.subr.mxu0 0.0
        %10571 = vmatpush1.msra.mxu0 0.0
        %10572 = vmatprep.subr.mxu0 0.0
        %10573 = vmatpush1.msra.mxu0 0.0
        %10574 = vmatprep.subr.mxu0 0.0
        %10575 = vmatpush1.msra.mxu0 0.0
        %10576 = vmatprep.subr.mxu0 0.0
        %10577 = vmatpush1.msra.mxu0 0.0
        %10578 = vmatprep.subr.mxu0 0.0
        %10579 = vmatpush1.msra.mxu0 0.0
        %10580 = vmatprep.subr.mxu0 0.0
        %10581 = vmatpush1.msra.mxu0 0.0
        %10582 = vmatprep.subr.mxu0 0.0
        %10583 = vmatpush1.msra.mxu0 0.0
        %10584 = vmatprep.subr.mxu0 0.0
        %10585 = vmatpush1.msra.mxu0 0.0
        %10586 = vmatprep.subr.mxu0 0.0
        %10587 = vmatpush1.msra.mxu0 0.0
        %10588 = vmatprep.subr.mxu0 0.0
        %10589 = vmatpush1.msra.mxu0 0.0
        %10590 = vmatprep.subr.mxu0 0.0
        %10591 = vmatpush1.msra.mxu0 0.0
        %10592 = vmatprep.subr.mxu0 0.0
        %10593 = vmatpush1.msra.mxu0 0.0
        %10594 = vmatprep.subr.mxu0 0.0
        %10595 = vmatpush1.msra.mxu0 0.0
        %10596 = vmatprep.subr.mxu0 0.0
        %10597 = vmatpush1.msra.mxu0 0.0
        %10598 = vmatprep.subr.mxu0 0.0
        %10599 = vmatpush1.msra.mxu0 0.0
        %10600 = vmatprep.subr.mxu0 0.0
        %10601 = vmatpush1.msra.mxu0 0.0
        %10602 = vmatprep.subr.mxu0 0.0
        %10603 = vmatpush1.msra.mxu0 0.0
        %10604 = vmatprep.subr.mxu0 0.0
        %10605 = vmatpush1.msra.mxu0 0.0
        %10606 = vmatprep.subr.mxu0 0.0
        %10607 = vmatpush1.msra.mxu0 0.0
        %10608 = vmatprep.subr.mxu0 0.0
        %10609 = vmatpush1.msra.mxu0 0.0
        %10610 = vmatprep.subr.mxu0 0.0
        %10611 = vmatpush1.msra.mxu0 0.0
        %10612 = vmatprep.subr.mxu0 0.0
        %10613 = vmatpush1.msra.mxu0 0.0
        %10614 = vmatprep.subr.mxu0 0.0
        %10615 = vmatpush1.msra.mxu0 0.0
        %10616 = vmatprep.subr.mxu0 0.0
        %10617 = vmatpush1.msra.mxu0 0.0
        %10618 = vmatprep.subr.mxu0 0.0
        %10619 = vmatpush1.msra.mxu0 0.0
        %10620 = vmatprep.mubr.f32.mxu0 0.0
        %10621 = vmatmul.mubr.f32.gmra.mrb[0].mxu0 %v10348
        %v10622 = vpop.f32.mrb[0].mxu0
        %v10623 = vadd.f32 0.0, %v10622
        %v10624 = vpop.f32.mrb[0].mxu0
        %v10625 = vadd.f32 0.0, %v10624
        %10626 = vdwg.mxu0
        %10627 = vmatprep.subr.mxu0 %v10364
        %10628 = vmatpush1.msra.mxu0 %v10362
        %10629 = vmatprep.subr.mxu0 0.0
        %10630 = vmatpush1.msra.mxu0 0.0
        %10631 = vmatprep.subr.mxu0 0.0
        %10632 = vmatpush1.msra.mxu0 0.0
        %10633 = vmatprep.subr.mxu0 0.0
        %10634 = vmatpush1.msra.mxu0 0.0
        %10635 = vmatprep.subr.mxu0 0.0
        %10636 = vmatpush1.msra.mxu0 0.0
        %10637 = vmatprep.subr.mxu0 0.0
        %10638 = vmatpush1.msra.mxu0 0.0
        %10639 = vmatprep.subr.mxu0 0.0
        %10640 = vmatpush1.msra.mxu0 0.0
        %10641 = vmatprep.subr.mxu0 0.0
        %10642 = vmatpush1.msra.mxu0 0.0
        %10643 = vmatprep.subr.mxu0 0.0
        %10644 = vmatpush1.msra.mxu0 0.0
        %10645 = vmatprep.subr.mxu0 0.0
        %10646 = vmatpush1.msra.mxu0 0.0
        %10647 = vmatprep.subr.mxu0 0.0
        %10648 = vmatpush1.msra.mxu0 0.0
        %10649 = vmatprep.subr.mxu0 0.0
        %10650 = vmatpush1.msra.mxu0 0.0
        %10651 = vmatprep.subr.mxu0 0.0
        %10652 = vmatpush1.msra.mxu0 0.0
        %10653 = vmatprep.subr.mxu0 0.0
        %10654 = vmatpush1.msra.mxu0 0.0
        %10655 = vmatprep.subr.mxu0 0.0
        %10656 = vmatpush1.msra.mxu0 0.0
        %10657 = vmatprep.subr.mxu0 0.0
        %10658 = vmatpush1.msra.mxu0 0.0
        %10659 = vmatprep.subr.mxu0 0.0
        %10660 = vmatpush1.msra.mxu0 0.0
        %10661 = vmatprep.subr.mxu0 0.0
        %10662 = vmatpush1.msra.mxu0 0.0
        %10663 = vmatprep.subr.mxu0 0.0
        %10664 = vmatpush1.msra.mxu0 0.0
        %10665 = vmatprep.subr.mxu0 0.0
        %10666 = vmatpush1.msra.mxu0 0.0
        %10667 = vmatprep.subr.mxu0 0.0
        %10668 = vmatpush1.msra.mxu0 0.0
        %10669 = vmatprep.subr.mxu0 0.0
        %10670 = vmatpush1.msra.mxu0 0.0
        %10671 = vmatprep.subr.mxu0 0.0
        %10672 = vmatpush1.msra.mxu0 0.0
        %10673 = vmatprep.subr.mxu0 0.0
        %10674 = vmatpush1.msra.mxu0 0.0
        %10675 = vmatprep.subr.mxu0 0.0
        %10676 = vmatpush1.msra.mxu0 0.0
        %10677 = vmatprep.subr.mxu0 0.0
        %10678 = vmatpush1.msra.mxu0 0.0
        %10679 = vmatprep.subr.mxu0 0.0
        %10680 = vmatpush1.msra.mxu0 0.0
        %10681 = vmatprep.subr.mxu0 0.0
        %10682 = vmatpush1.msra.mxu0 0.0
        %10683 = vmatprep.subr.mxu0 0.0
        %10684 = vmatpush1.msra.mxu0 0.0
        %10685 = vmatprep.subr.mxu0 0.0
        %10686 = vmatpush1.msra.mxu0 0.0
        %10687 = vmatprep.subr.mxu0 0.0
        %10688 = vmatpush1.msra.mxu0 0.0
        %10689 = vmatprep.subr.mxu0 0.0
        %10690 = vmatpush1.msra.mxu0 0.0
        %10691 = vmatprep.mubr.f32.mxu0 0.0
        %10692 = vmatmul.mubr.f32.gmra.mrb[0].mxu0 %v10348
        %v10693 = vpop.f32.mrb[0].mxu0
        %v10694 = vadd.f32 0.0, %v10693
        %v10695 = vpop.f32.mrb[0].mxu0
        %v10696 = vadd.f32 0.0, %v10695
        %10697 = vdwg.mxu0
        %10698 = vmatprep.subr.mxu0 %v10368
        %10699 = vmatpush1.msra.mxu0 %v10366
        %10700 = vmatprep.subr.mxu0 0.0
        %10701 = vmatpush1.msra.mxu0 0.0
        %10702 = vmatprep.subr.mxu0 0.0
        %10703 = vmatpush1.msra.mxu0 0.0
        %10704 = vmatprep.subr.mxu0 0.0
        %10705 = vmatpush1.msra.mxu0 0.0
        %10706 = vmatprep.subr.mxu0 0.0
        %10707 = vmatpush1.msra.mxu0 0.0
        %10708 = vmatprep.subr.mxu0 0.0
        %10709 = vmatpush1.msra.mxu0 0.0
        %10710 = vmatprep.subr.mxu0 0.0
        %10711 = vmatpush1.msra.mxu0 0.0
        %10712 = vmatprep.subr.mxu0 0.0
        %10713 = vmatpush1.msra.mxu0 0.0
        %10714 = vmatprep.subr.mxu0 0.0
        %10715 = vmatpush1.msra.mxu0 0.0
        %10716 = vmatprep.subr.mxu0 0.0
        %10717 = vmatpush1.msra.mxu0 0.0
        %10718 = vmatprep.subr.mxu0 0.0
        %10719 = vmatpush1.msra.mxu0 0.0
        %10720 = vmatprep.subr.mxu0 0.0
        %10721 = vmatpush1.msra.mxu0 0.0
        %10722 = vmatprep.subr.mxu0 0.0
        %10723 = vmatpush1.msra.mxu0 0.0
        %10724 = vmatprep.subr.mxu0 0.0
        %10725 = vmatpush1.msra.mxu0 0.0
        %10726 = vmatprep.subr.mxu0 0.0
        %10727 = vmatpush1.msra.mxu0 0.0
        %10728 = vmatprep.subr.mxu0 0.0
        %10729 = vmatpush1.msra.mxu0 0.0
        %10730 = vmatprep.subr.mxu0 0.0
        %10731 = vmatpush1.msra.mxu0 0.0
        %10732 = vmatprep.subr.mxu0 0.0
        %10733 = vmatpush1.msra.mxu0 0.0
        %10734 = vmatprep.subr.mxu0 0.0
        %10735 = vmatpush1.msra.mxu0 0.0
        %10736 = vmatprep.subr.mxu0 0.0
        %10737 = vmatpush1.msra.mxu0 0.0
        %10738 = vmatprep.subr.mxu0 0.0
        %10739 = vmatpush1.msra.mxu0 0.0
        %10740 = vmatprep.subr.mxu0 0.0
        %10741 = vmatpush1.msra.mxu0 0.0
        %10742 = vmatprep.subr.mxu0 0.0
        %10743 = vmatpush1.msra.mxu0 0.0
        %10744 = vmatprep.subr.mxu0 0.0
        %10745 = vmatpush1.msra.mxu0 0.0
        %10746 = vmatprep.subr.mxu0 0.0
        %10747 = vmatpush1.msra.mxu0 0.0
        %10748 = vmatprep.subr.mxu0 0.0
        %10749 = vmatpush1.msra.mxu0 0.0
        %10750 = vmatprep.subr.mxu0 0.0
        %10751 = vmatpush1.msra.mxu0 0.0
        %10752 = vmatprep.subr.mxu0 0.0
        %10753 = vmatpush1.msra.mxu0 0.0
        %10754 = vmatprep.subr.mxu0 0.0
        %10755 = vmatpush1.msra.mxu0 0.0
        %10756 = vmatprep.subr.mxu0 0.0
        %10757 = vmatpush1.msra.mxu0 0.0
        %10758 = vmatprep.subr.mxu0 0.0
        %10759 = vmatpush1.msra.mxu0 0.0
        %10760 = vmatprep.subr.mxu0 0.0
        %10761 = vmatpush1.msra.mxu0 0.0
        %10762 = vmatprep.mubr.f32.mxu0 0.0
        %10763 = vmatmul.mubr.f32.gmra.mrb[0].mxu0 %v10348
        %v10764 = vpop.f32.mrb[0].mxu0
        %v10765 = vadd.f32 0.0, %v10764
        %v10766 = vpop.f32.mrb[0].mxu0
        %v10767 = vadd.f32 0.0, %v10766
        %10768 = vdwg.mxu0
        %10769 = vmatprep.subr.mxu0 %v10372
        %10770 = vmatpush1.msra.mxu0 %v10370
        %10771 = vmatprep.subr.mxu0 0.0
        %10772 = vmatpush1.msra.mxu0 0.0
        %10773 = vmatprep.subr.mxu0 0.0
        %10774 = vmatpush1.msra.mxu0 0.0
        %10775 = vmatprep.subr.mxu0 0.0
        %10776 = vmatpush1.msra.mxu0 0.0
        %10777 = vmatprep.subr.mxu0 0.0
        %10778 = vmatpush1.msra.mxu0 0.0
        %10779 = vmatprep.subr.mxu0 0.0
        %10780 = vmatpush1.msra.mxu0 0.0
        %10781 = vmatprep.subr.mxu0 0.0
        %10782 = vmatpush1.msra.mxu0 0.0
        %10783 = vmatprep.subr.mxu0 0.0
        %10784 = vmatpush1.msra.mxu0 0.0
        %10785 = vmatprep.subr.mxu0 0.0
        %10786 = vmatpush1.msra.mxu0 0.0
        %10787 = vmatprep.subr.mxu0 0.0
        %10788 = vmatpush1.msra.mxu0 0.0
        %10789 = vmatprep.subr.mxu0 0.0
        %10790 = vmatpush1.msra.mxu0 0.0
        %10791 = vmatprep.subr.mxu0 0.0
        %10792 = vmatpush1.msra.mxu0 0.0
        %10793 = vmatprep.subr.mxu0 0.0
        %10794 = vmatpush1.msra.mxu0 0.0
        %10795 = vmatprep.subr.mxu0 0.0
        %10796 = vmatpush1.msra.mxu0 0.0
        %10797 = vmatprep.subr.mxu0 0.0
        %10798 = vmatpush1.msra.mxu0 0.0
        %10799 = vmatprep.subr.mxu0 0.0
        %10800 = vmatpush1.msra.mxu0 0.0
        %10801 = vmatprep.subr.mxu0 0.0
        %10802 = vmatpush1.msra.mxu0 0.0
        %10803 = vmatprep.subr.mxu0 0.0
        %10804 = vmatpush1.msra.mxu0 0.0
        %10805 = vmatprep.subr.mxu0 0.0
        %10806 = vmatpush1.msra.mxu0 0.0
        %10807 = vmatprep.subr.mxu0 0.0
        %10808 = vmatpush1.msra.mxu0 0.0
        %10809 = vmatprep.subr.mxu0 0.0
        %10810 = vmatpush1.msra.mxu0 0.0
        %10811 = vmatprep.subr.mxu0 0.0
        %10812 = vmatpush1.msra.mxu0 0.0
        %10813 = vmatprep.subr.mxu0 0.0
        %10814 = vmatpush1.msra.mxu0 0.0
        %10815 = vmatprep.subr.mxu0 0.0
        %10816 = vmatpush1.msra.mxu0 0.0
        %10817 = vmatprep.subr.mxu0 0.0
        %10818 = vmatpush1.msra.mxu0 0.0
        %10819 = vmatprep.subr.mxu0 0.0
        %10820 = vmatpush1.msra.mxu0 0.0
        %10821 = vmatprep.subr.mxu0 0.0
        %10822 = vmatpush1.msra.mxu0 0.0
        %10823 = vmatprep.subr.mxu0 0.0
        %10824 = vmatpush1.msra.mxu0 0.0
        %10825 = vmatprep.subr.mxu0 0.0
        %10826 = vmatpush1.msra.mxu0 0.0
        %10827 = vmatprep.subr.mxu0 0.0
        %10828 = vmatpush1.msra.mxu0 0.0
        %10829 = vmatprep.subr.mxu0 0.0
        %10830 = vmatpush1.msra.mxu0 0.0
        %10831 = vmatprep.subr.mxu0 0.0
        %10832 = vmatpush1.msra.mxu0 0.0
        %10833 = vmatprep.mubr.f32.mxu0 0.0
        %10834 = vmatmul.mubr.f32.gmra.mrb[0].mxu0 %v10348
        %v10835 = vpop.f32.mrb[0].mxu0
        %v10836 = vadd.f32 0.0, %v10835
        %v10837 = vpop.f32.mrb[0].mxu0
        %v10838 = vadd.f32 0.0, %v10837
        %10839 = vdwg.mxu0
        %10840 = vmatprep.subr.mxu0 %v10376
        %10841 = vmatpush1.msra.mxu0 %v10374
        %10842 = vmatprep.subr.mxu0 0.0
        %10843 = vmatpush1.msra.mxu0 0.0
        %10844 = vmatprep.subr.mxu0 0.0
        %10845 = vmatpush1.msra.mxu0 0.0
        %10846 = vmatprep.subr.mxu0 0.0
        %10847 = vmatpush1.msra.mxu0 0.0
        %10848 = vmatprep.subr.mxu0 0.0
        %10849 = vmatpush1.msra.mxu0 0.0
        %10850 = vmatprep.subr.mxu0 0.0
        %10851 = vmatpush1.msra.mxu0 0.0
        %10852 = vmatprep.subr.mxu0 0.0
        %10853 = vmatpush1.msra.mxu0 0.0
        %10854 = vmatprep.subr.mxu0 0.0
        %10855 = vmatpush1.msra.mxu0 0.0
        %10856 = vmatprep.subr.mxu0 0.0
        %10857 = vmatpush1.msra.mxu0 0.0
        %10858 = vmatprep.subr.mxu0 0.0
        %10859 = vmatpush1.msra.mxu0 0.0
        %10860 = vmatprep.subr.mxu0 0.0
        %10861 = vmatpush1.msra.mxu0 0.0
        %10862 = vmatprep.subr.mxu0 0.0
        %10863 = vmatpush1.msra.mxu0 0.0
        %10864 = vmatprep.subr.mxu0 0.0
        %10865 = vmatpush1.msra.mxu0 0.0
        %10866 = vmatprep.subr.mxu0 0.0
        %10867 = vmatpush1.msra.mxu0 0.0
        %10868 = vmatprep.subr.mxu0 0.0
        %10869 = vmatpush1.msra.mxu0 0.0
        %10870 = vmatprep.subr.mxu0 0.0
        %10871 = vmatpush1.msra.mxu0 0.0
        %10872 = vmatprep.subr.mxu0 0.0
        %10873 = vmatpush1.msra.mxu0 0.0
        %10874 = vmatprep.subr.mxu0 0.0
        %10875 = vmatpush1.msra.mxu0 0.0
        %10876 = vmatprep.subr.mxu0 0.0
        %10877 = vmatpush1.msra.mxu0 0.0
        %10878 = vmatprep.subr.mxu0 0.0
        %10879 = vmatpush1.msra.mxu0 0.0
        %10880 = vmatprep.subr.mxu0 0.0
        %10881 = vmatpush1.msra.mxu0 0.0
        %10882 = vmatprep.subr.mxu0 0.0
        %10883 = vmatpush1.msra.mxu0 0.0
        %10884 = vmatprep.subr.mxu0 0.0
        %10885 = vmatpush1.msra.mxu0 0.0
        %10886 = vmatprep.subr.mxu0 0.0
        %10887 = vmatpush1.msra.mxu0 0.0
        %10888 = vmatprep.subr.mxu0 0.0
        %10889 = vmatpush1.msra.mxu0 0.0
        %10890 = vmatprep.subr.mxu0 0.0
        %10891 = vmatpush1.msra.mxu0 0.0
        %10892 = vmatprep.subr.mxu0 0.0
        %10893 = vmatpush1.msra.mxu0 0.0
        %10894 = vmatprep.subr.mxu0 0.0
        %10895 = vmatpush1.msra.mxu0 0.0
        %10896 = vmatprep.subr.mxu0 0.0
        %10897 = vmatpush1.msra.mxu0 0.0
        %10898 = vmatprep.subr.mxu0 0.0
        %10899 = vmatpush1.msra.mxu0 0.0
        %10900 = vmatprep.subr.mxu0 0.0
        %10901 = vmatpush1.msra.mxu0 0.0
        %10902 = vmatprep.subr.mxu0 0.0
        %10903 = vmatpush1.msra.mxu0 0.0
        %10904 = vmatprep.mubr.f32.mxu0 0.0
        %10905 = vmatmul.mubr.f32.gmra.mrb[0].mxu0 %v10348
        %v10906 = vpop.f32.mrb[0].mxu0
        %v10907 = vadd.f32 0.0, %v10906
        %v10908 = vpop.f32.mrb[0].mxu0
        %v10909 = vadd.f32 0.0, %v10908
        %10910 = vdwg.mxu0
        %10911 = vmatprep.subr.mxu0 %v10380
        %10912 = vmatpush1.msra.mxu0 %v10378
        %10913 = vmatprep.subr.mxu0 0.0
        %10914 = vmatpush1.msra.mxu0 0.0
        %10915 = vmatprep.subr.mxu0 0.0
        %10916 = vmatpush1.msra.mxu0 0.0
        %10917 = vmatprep.subr.mxu0 0.0
        %10918 = vmatpush1.msra.mxu0 0.0
        %10919 = vmatprep.subr.mxu0 0.0
        %10920 = vmatpush1.msra.mxu0 0.0
        %10921 = vmatprep.subr.mxu0 0.0
        %10922 = vmatpush1.msra.mxu0 0.0
        %10923 = vmatprep.subr.mxu0 0.0
        %10924 = vmatpush1.msra.mxu0 0.0
        %10925 = vmatprep.subr.mxu0 0.0
        %10926 = vmatpush1.msra.mxu0 0.0
        %10927 = vmatprep.subr.mxu0 0.0
        %10928 = vmatpush1.msra.mxu0 0.0
        %10929 = vmatprep.subr.mxu0 0.0
        %10930 = vmatpush1.msra.mxu0 0.0
        %10931 = vmatprep.subr.mxu0 0.0
        %10932 = vmatpush1.msra.mxu0 0.0
        %10933 = vmatprep.subr.mxu0 0.0
        %10934 = vmatpush1.msra.mxu0 0.0
        %10935 = vmatprep.subr.mxu0 0.0
        %10936 = vmatpush1.msra.mxu0 0.0
        %10937 = vmatprep.subr.mxu0 0.0
        %10938 = vmatpush1.msra.mxu0 0.0
        %10939 = vmatprep.subr.mxu0 0.0
        %10940 = vmatpush1.msra.mxu0 0.0
        %10941 = vmatprep.subr.mxu0 0.0
        %10942 = vmatpush1.msra.mxu0 0.0
        %10943 = vmatprep.subr.mxu0 0.0
        %10944 = vmatpush1.msra.mxu0 0.0
        %10945 = vmatprep.subr.mxu0 0.0
        %10946 = vmatpush1.msra.mxu0 0.0
        %10947 = vmatprep.subr.mxu0 0.0
        %10948 = vmatpush1.msra.mxu0 0.0
        %10949 = vmatprep.subr.mxu0 0.0
        %10950 = vmatpush1.msra.mxu0 0.0
        %10951 = vmatprep.subr.mxu0 0.0
        %10952 = vmatpush1.msra.mxu0 0.0
        %10953 = vmatprep.subr.mxu0 0.0
        %10954 = vmatpush1.msra.mxu0 0.0
        %10955 = vmatprep.subr.mxu0 0.0
        %10956 = vmatpush1.msra.mxu0 0.0
        %10957 = vmatprep.subr.mxu0 0.0
        %10958 = vmatpush1.msra.mxu0 0.0
        %10959 = vmatprep.subr.mxu0 0.0
        %10960 = vmatpush1.msra.mxu0 0.0
        %10961 = vmatprep.subr.mxu0 0.0
        %10962 = vmatpush1.msra.mxu0 0.0
        %10963 = vmatprep.subr.mxu0 0.0
        %10964 = vmatpush1.msra.mxu0 0.0
        %10965 = vmatprep.subr.mxu0 0.0
        %10966 = vmatpush1.msra.mxu0 0.0
        %10967 = vmatprep.subr.mxu0 0.0
        %10968 = vmatpush1.msra.mxu0 0.0
        %10969 = vmatprep.subr.mxu0 0.0
        %10970 = vmatpush1.msra.mxu0 0.0
        %10971 = vmatprep.subr.mxu0 0.0
        %10972 = vmatpush1.msra.mxu0 0.0
        %10973 = vmatprep.subr.mxu0 0.0
        %10974 = vmatpush1.msra.mxu0 0.0
        %10975 = vmatprep.mubr.f32.mxu0 0.0
        %10976 = vmatmul.mubr.f32.gmra.mrb[0].mxu0 %v10348
        %v10977 = vpop.f32.mrb[0].mxu0
        %v10978 = vadd.f32 0.0, %v10977
        %v10979 = vpop.f32.mrb[0].mxu0
        %v10980 = vadd.f32 0.0, %v10979
        %10981 = vdwg.mxu0
        %10982 = vmatprep.subr.mxu0 %v10384
        %10983 = vmatpush1.msra.mxu0 %v10382
        %10984 = vmatprep.subr.mxu0 0.0
        %10985 = vmatpush1.msra.mxu0 0.0
        %10986 = vmatprep.subr.mxu0 0.0
        %10987 = vmatpush1.msra.mxu0 0.0
        %10988 = vmatprep.subr.mxu0 0.0
        %10989 = vmatpush1.msra.mxu0 0.0
        %10990 = vmatprep.subr.mxu0 0.0
        %10991 = vmatpush1.msra.mxu0 0.0
        %10992 = vmatprep.subr.mxu0 0.0
        %10993 = vmatpush1.msra.mxu0 0.0
        %10994 = vmatprep.subr.mxu0 0.0
        %10995 = vmatpush1.msra.mxu0 0.0
        %10996 = vmatprep.subr.mxu0 0.0
        %10997 = vmatpush1.msra.mxu0 0.0
        %10998 = vmatprep.subr.mxu0 0.0
        %10999 = vmatpush1.msra.mxu0 0.0
        %11000 = vmatprep.subr.mxu0 0.0
        %11001 = vmatpush1.msra.mxu0 0.0
        %11002 = vmatprep.subr.mxu0 0.0
        %11003 = vmatpush1.msra.mxu0 0.0
        %11004 = vmatprep.subr.mxu0 0.0
        %11005 = vmatpush1.msra.mxu0 0.0
        %11006 = vmatprep.subr.mxu0 0.0
        %11007 = vmatpush1.msra.mxu0 0.0
        %11008 = vmatprep.subr.mxu0 0.0
        %11009 = vmatpush1.msra.mxu0 0.0
        %11010 = vmatprep.subr.mxu0 0.0
        %11011 = vmatpush1.msra.mxu0 0.0
        %11012 = vmatprep.subr.mxu0 0.0
        %11013 = vmatpush1.msra.mxu0 0.0
        %11014 = vmatprep.subr.mxu0 0.0
        %11015 = vmatpush1.msra.mxu0 0.0
        %11016 = vmatprep.subr.mxu0 0.0
        %11017 = vmatpush1.msra.mxu0 0.0
        %11018 = vmatprep.subr.mxu0 0.0
        %11019 = vmatpush1.msra.mxu0 0.0
        %11020 = vmatprep.subr.mxu0 0.0
        %11021 = vmatpush1.msra.mxu0 0.0
        %11022 = vmatprep.subr.mxu0 0.0
        %11023 = vmatpush1.msra.mxu0 0.0
        %11024 = vmatprep.subr.mxu0 0.0
        %11025 = vmatpush1.msra.mxu0 0.0
        %11026 = vmatprep.subr.mxu0 0.0
        %11027 = vmatpush1.msra.mxu0 0.0
        %11028 = vmatprep.subr.mxu0 0.0
        %11029 = vmatpush1.msra.mxu0 0.0
        %11030 = vmatprep.subr.mxu0 0.0
        %11031 = vmatpush1.msra.mxu0 0.0
        %11032 = vmatprep.subr.mxu0 0.0
        %11033 = vmatpush1.msra.mxu0 0.0
        %11034 = vmatprep.subr.mxu0 0.0
        %11035 = vmatpush1.msra.mxu0 0.0
        %11036 = vmatprep.subr.mxu0 0.0
        %11037 = vmatpush1.msra.mxu0 0.0
        %11038 = vmatprep.subr.mxu0 0.0
        %11039 = vmatpush1.msra.mxu0 0.0
        %11040 = vmatprep.subr.mxu0 0.0
        %11041 = vmatpush1.msra.mxu0 0.0
        %11042 = vmatprep.subr.mxu0 0.0
        %11043 = vmatpush1.msra.mxu0 0.0
        %11044 = vmatprep.subr.mxu0 0.0
        %11045 = vmatpush1.msra.mxu0 0.0
        %11046 = vmatprep.mubr.f32.mxu0 0.0
        %11047 = vmatmul.mubr.f32.gmra.mrb[0].mxu0 %v10348
        %v11048 = vpop.f32.mrb[0].mxu0
        %v11049 = vadd.f32 0.0, %v11048
        %v11050 = vpop.f32.mrb[0].mxu0
        %v11051 = vadd.f32 0.0, %v11050
        %11052 = vdwg.mxu0
        %11053 = vmatprep.subr.mxu0 %v10388
        %11054 = vmatpush1.msra.mxu0 %v10386
        %11055 = vmatprep.subr.mxu0 0.0
        %11056 = vmatpush1.msra.mxu0 0.0
        %11057 = vmatprep.subr.mxu0 0.0
        %11058 = vmatpush1.msra.mxu0 0.0
        %11059 = vmatprep.subr.mxu0 0.0
        %11060 = vmatpush1.msra.mxu0 0.0
        %11061 = vmatprep.subr.mxu0 0.0
        %11062 = vmatpush1.msra.mxu0 0.0
        %11063 = vmatprep.subr.mxu0 0.0
        %11064 = vmatpush1.msra.mxu0 0.0
        %11065 = vmatprep.subr.mxu0 0.0
        %11066 = vmatpush1.msra.mxu0 0.0
        %11067 = vmatprep.subr.mxu0 0.0
        %11068 = vmatpush1.msra.mxu0 0.0
        %11069 = vmatprep.subr.mxu0 0.0
        %11070 = vmatpush1.msra.mxu0 0.0
        %11071 = vmatprep.subr.mxu0 0.0
        %11072 = vmatpush1.msra.mxu0 0.0
        %11073 = vmatprep.subr.mxu0 0.0
        %11074 = vmatpush1.msra.mxu0 0.0
        %11075 = vmatprep.subr.mxu0 0.0
        %11076 = vmatpush1.msra.mxu0 0.0
        %11077 = vmatprep.subr.mxu0 0.0
        %11078 = vmatpush1.msra.mxu0 0.0
        %11079 = vmatprep.subr.mxu0 0.0
        %11080 = vmatpush1.msra.mxu0 0.0
        %11081 = vmatprep.subr.mxu0 0.0
        %11082 = vmatpush1.msra.mxu0 0.0
        %11083 = vmatprep.subr.mxu0 0.0
        %11084 = vmatpush1.msra.mxu0 0.0
        %11085 = vmatprep.subr.mxu0 0.0
        %11086 = vmatpush1.msra.mxu0 0.0
        %11087 = vmatprep.subr.mxu0 0.0
        %11088 = vmatpush1.msra.mxu0 0.0
        %11089 = vmatprep.subr.mxu0 0.0
        %11090 = vmatpush1.msra.mxu0 0.0
        %11091 = vmatprep.subr.mxu0 0.0
        %11092 = vmatpush1.msra.mxu0 0.0
        %11093 = vmatprep.subr.mxu0 0.0
        %11094 = vmatpush1.msra.mxu0 0.0
        %11095 = vmatprep.subr.mxu0 0.0
        %11096 = vmatpush1.msra.mxu0 0.0
        %11097 = vmatprep.subr.mxu0 0.0
        %11098 = vmatpush1.msra.mxu0 0.0
        %11099 = vmatprep.subr.mxu0 0.0
        %11100 = vmatpush1.msra.mxu0 0.0
        %11101 = vmatprep.subr.mxu0 0.0
        %11102 = vmatpush1.msra.mxu0 0.0
        %11103 = vmatprep.subr.mxu0 0.0
        %11104 = vmatpush1.msra.mxu0 0.0
        %11105 = vmatprep.subr.mxu0 0.0
        %11106 = vmatpush1.msra.mxu0 0.0
        %11107 = vmatprep.subr.mxu0 0.0
        %11108 = vmatpush1.msra.mxu0 0.0
        %11109 = vmatprep.subr.mxu0 0.0
        %11110 = vmatpush1.msra.mxu0 0.0
        %11111 = vmatprep.subr.mxu0 0.0
        %11112 = vmatpush1.msra.mxu0 0.0
        %11113 = vmatprep.subr.mxu0 0.0
        %11114 = vmatpush1.msra.mxu0 0.0
        %11115 = vmatprep.subr.mxu0 0.0
        %11116 = vmatpush1.msra.mxu0 0.0
        %11117 = vmatprep.mubr.f32.mxu0 0.0
        %11118 = vmatmul.mubr.f32.gmra.mrb[0].mxu0 %v10348
        %v11119 = vpop.f32.mrb[0].mxu0
        %v11120 = vadd.f32 0.0, %v11119
        %v11121 = vpop.f32.mrb[0].mxu0
        %v11122 = vadd.f32 0.0, %v11121
        %11123 = vdwg.mxu0
        %11124 = vmatprep.subr.mxu0 %v10392
        %11125 = vmatpush1.msra.mxu0 %v10390
        %11126 = vmatprep.subr.mxu0 0.0
        %11127 = vmatpush1.msra.mxu0 0.0
        %11128 = vmatprep.subr.mxu0 0.0
        %11129 = vmatpush1.msra.mxu0 0.0
        %11130 = vmatprep.subr.mxu0 0.0
        %11131 = vmatpush1.msra.mxu0 0.0
        %11132 = vmatprep.subr.mxu0 0.0
        %11133 = vmatpush1.msra.mxu0 0.0
        %11134 = vmatprep.subr.mxu0 0.0
        %11135 = vmatpush1.msra.mxu0 0.0
        %11136 = vmatprep.subr.mxu0 0.0
        %11137 = vmatpush1.msra.mxu0 0.0
        %11138 = vmatprep.subr.mxu0 0.0
        %11139 = vmatpush1.msra.mxu0 0.0
        %11140 = vmatprep.subr.mxu0 0.0
        %11141 = vmatpush1.msra.mxu0 0.0
        %11142 = vmatprep.subr.mxu0 0.0
        %11143 = vmatpush1.msra.mxu0 0.0
        %11144 = vmatprep.subr.mxu0 0.0
        %11145 = vmatpush1.msra.mxu0 0.0
        %11146 = vmatprep.subr.mxu0 0.0
        %11147 = vmatpush1.msra.mxu0 0.0
        %11148 = vmatprep.subr.mxu0 0.0
        %11149 = vmatpush1.msra.mxu0 0.0
        %11150 = vmatprep.subr.mxu0 0.0
        %11151 = vmatpush1.msra.mxu0 0.0
        %11152 = vmatprep.subr.mxu0 0.0
        %11153 = vmatpush1.msra.mxu0 0.0
        %11154 = vmatprep.subr.mxu0 0.0
        %11155 = vmatpush1.msra.mxu0 0.0
        %11156 = vmatprep.subr.mxu0 0.0
        %11157 = vmatpush1.msra.mxu0 0.0
        %11158 = vmatprep.subr.mxu0 0.0
        %11159 = vmatpush1.msra.mxu0 0.0
        %11160 = vmatprep.subr.mxu0 0.0
        %11161 = vmatpush1.msra.mxu0 0.0
        %11162 = vmatprep.subr.mxu0 0.0
        %11163 = vmatpush1.msra.mxu0 0.0
        %11164 = vmatprep.subr.mxu0 0.0
        %11165 = vmatpush1.msra.mxu0 0.0
        %11166 = vmatprep.subr.mxu0 0.0
        %11167 = vmatpush1.msra.mxu0 0.0
        %11168 = vmatprep.subr.mxu0 0.0
        %11169 = vmatpush1.msra.mxu0 0.0
        %11170 = vmatprep.subr.mxu0 0.0
        %11171 = vmatpush1.msra.mxu0 0.0
        %11172 = vmatprep.subr.mxu0 0.0
        %11173 = vmatpush1.msra.mxu0 0.0
        %11174 = vmatprep.subr.mxu0 0.0
        %11175 = vmatpush1.msra.mxu0 0.0
        %11176 = vmatprep.subr.mxu0 0.0
        %11177 = vmatpush1.msra.mxu0 0.0
        %11178 = vmatprep.subr.mxu0 0.0
        %11179 = vmatpush1.msra.mxu0 0.0
        %11180 = vmatprep.subr.mxu0 0.0
        %11181 = vmatpush1.msra.mxu0 0.0
        %11182 = vmatprep.subr.mxu0 0.0
        %11183 = vmatpush1.msra.mxu0 0.0
        %11184 = vmatprep.subr.mxu0 0.0
        %11185 = vmatpush1.msra.mxu0 0.0
        %11186 = vmatprep.subr.mxu0 0.0
        %11187 = vmatpush1.msra.mxu0 0.0
        %11188 = vmatprep.mubr.f32.mxu0 0.0
        %11189 = vmatmul.mubr.f32.gmra.mrb[0].mxu0 %v10348
        %v11190 = vpop.f32.mrb[0].mxu0
        %v11191 = vadd.f32 0.0, %v11190
        %v11192 = vpop.f32.mrb[0].mxu0
        %v11193 = vadd.f32 0.0, %v11192
        %11194 = vdwg.mxu0
        %11195 = vmatprep.subr.mxu0 %v10396
        %11196 = vmatpush1.msra.mxu0 %v10394
        %11197 = vmatprep.subr.mxu0 0.0
        %11198 = vmatpush1.msra.mxu0 0.0
        %11199 = vmatprep.subr.mxu0 0.0
        %11200 = vmatpush1.msra.mxu0 0.0
        %11201 = vmatprep.subr.mxu0 0.0
        %11202 = vmatpush1.msra.mxu0 0.0
        %11203 = vmatprep.subr.mxu0 0.0
        %11204 = vmatpush1.msra.mxu0 0.0
        %11205 = vmatprep.subr.mxu0 0.0
        %11206 = vmatpush1.msra.mxu0 0.0
        %11207 = vmatprep.subr.mxu0 0.0
        %11208 = vmatpush1.msra.mxu0 0.0
        %11209 = vmatprep.subr.mxu0 0.0
        %11210 = vmatpush1.msra.mxu0 0.0
        %11211 = vmatprep.subr.mxu0 0.0
        %11212 = vmatpush1.msra.mxu0 0.0
        %11213 = vmatprep.subr.mxu0 0.0
        %11214 = vmatpush1.msra.mxu0 0.0
        %11215 = vmatprep.subr.mxu0 0.0
        %11216 = vmatpush1.msra.mxu0 0.0
        %11217 = vmatprep.subr.mxu0 0.0
        %11218 = vmatpush1.msra.mxu0 0.0
        %11219 = vmatprep.subr.mxu0 0.0
        %11220 = vmatpush1.msra.mxu0 0.0
        %11221 = vmatprep.subr.mxu0 0.0
        %11222 = vmatpush1.msra.mxu0 0.0
        %11223 = vmatprep.subr.mxu0 0.0
        %11224 = vmatpush1.msra.mxu0 0.0
        %11225 = vmatprep.subr.mxu0 0.0
        %11226 = vmatpush1.msra.mxu0 0.0
        %11227 = vmatprep.subr.mxu0 0.0
        %11228 = vmatpush1.msra.mxu0 0.0
        %11229 = vmatprep.subr.mxu0 0.0
        %11230 = vmatpush1.msra.mxu0 0.0
        %11231 = vmatprep.subr.mxu0 0.0
        %11232 = vmatpush1.msra.mxu0 0.0
        %11233 = vmatprep.subr.mxu0 0.0
        %11234 = vmatpush1.msra.mxu0 0.0
        %11235 = vmatprep.subr.mxu0 0.0
        %11236 = vmatpush1.msra.mxu0 0.0
        %11237 = vmatprep.subr.mxu0 0.0
        %11238 = vmatpush1.msra.mxu0 0.0
        %11239 = vmatprep.subr.mxu0 0.0
        %11240 = vmatpush1.msra.mxu0 0.0
        %11241 = vmatprep.subr.mxu0 0.0
        %11242 = vmatpush1.msra.mxu0 0.0
        %11243 = vmatprep.subr.mxu0 0.0
        %11244 = vmatpush1.msra.mxu0 0.0
        %11245 = vmatprep.subr.mxu0 0.0
        %11246 = vmatpush1.msra.mxu0 0.0
        %11247 = vmatprep.subr.mxu0 0.0
        %11248 = vmatpush1.msra.mxu0 0.0
        %11249 = vmatprep.subr.mxu0 0.0
        %11250 = vmatpush1.msra.mxu0 0.0
        %11251 = vmatprep.subr.mxu0 0.0
        %11252 = vmatpush1.msra.mxu0 0.0
        %11253 = vmatprep.subr.mxu0 0.0
        %11254 = vmatpush1.msra.mxu0 0.0
        %11255 = vmatprep.subr.mxu0 0.0
        %11256 = vmatpush1.msra.mxu0 0.0
        %11257 = vmatprep.subr.mxu0 0.0
        %11258 = vmatpush1.msra.mxu0 0.0
        %11259 = vmatprep.mubr.f32.mxu0 0.0
        %11260 = vmatmul.mubr.f32.gmra.mrb[0].mxu0 %v10348
        %v11261 = vpop.f32.mrb[0].mxu0
        %v11262 = vadd.f32 0.0, %v11261
        %v11263 = vpop.f32.mrb[0].mxu0
        %v11264 = vadd.f32 0.0, %v11263
        %11265 = vdwg.mxu0
        %11266 = vmatprep.subr.mxu0 %v10400
        %11267 = vmatpush1.msra.mxu0 %v10398
        %11268 = vmatprep.subr.mxu0 0.0
        %11269 = vmatpush1.msra.mxu0 0.0
        %11270 = vmatprep.subr.mxu0 0.0
        %11271 = vmatpush1.msra.mxu0 0.0
        %11272 = vmatprep.subr.mxu0 0.0
        %11273 = vmatpush1.msra.mxu0 0.0
        %11274 = vmatprep.subr.mxu0 0.0
        %11275 = vmatpush1.msra.mxu0 0.0
        %11276 = vmatprep.subr.mxu0 0.0
        %11277 = vmatpush1.msra.mxu0 0.0
        %11278 = vmatprep.subr.mxu0 0.0
        %11279 = vmatpush1.msra.mxu0 0.0
        %11280 = vmatprep.subr.mxu0 0.0
        %11281 = vmatpush1.msra.mxu0 0.0
        %11282 = vmatprep.subr.mxu0 0.0
        %11283 = vmatpush1.msra.mxu0 0.0
        %11284 = vmatprep.subr.mxu0 0.0
        %11285 = vmatpush1.msra.mxu0 0.0
        %11286 = vmatprep.subr.mxu0 0.0
        %11287 = vmatpush1.msra.mxu0 0.0
        %11288 = vmatprep.subr.mxu0 0.0
        %11289 = vmatpush1.msra.mxu0 0.0
        %11290 = vmatprep.subr.mxu0 0.0
        %11291 = vmatpush1.msra.mxu0 0.0
        %11292 = vmatprep.subr.mxu0 0.0
        %11293 = vmatpush1.msra.mxu0 0.0
        %11294 = vmatprep.subr.mxu0 0.0
        %11295 = vmatpush1.msra.mxu0 0.0
        %11296 = vmatprep.subr.mxu0 0.0
        %11297 = vmatpush1.msra.mxu0 0.0
        %11298 = vmatprep.subr.mxu0 0.0
        %11299 = vmatpush1.msra.mxu0 0.0
        %11300 = vmatprep.subr.mxu0 0.0
        %11301 = vmatpush1.msra.mxu0 0.0
        %11302 = vmatprep.subr.mxu0 0.0
        %11303 = vmatpush1.msra.mxu0 0.0
        %11304 = vmatprep.subr.mxu0 0.0
        %11305 = vmatpush1.msra.mxu0 0.0
        %11306 = vmatprep.subr.mxu0 0.0
        %11307 = vmatpush1.msra.mxu0 0.0
        %11308 = vmatprep.subr.mxu0 0.0
        %11309 = vmatpush1.msra.mxu0 0.0
        %11310 = vmatprep.subr.mxu0 0.0
        %11311 = vmatpush1.msra.mxu0 0.0
        %11312 = vmatprep.subr.mxu0 0.0
        %11313 = vmatpush1.msra.mxu0 0.0
        %11314 = vmatprep.subr.mxu0 0.0
        %11315 = vmatpush1.msra.mxu0 0.0
        %11316 = vmatprep.subr.mxu0 0.0
        %11317 = vmatpush1.msra.mxu0 0.0
        %11318 = vmatprep.subr.mxu0 0.0
        %11319 = vmatpush1.msra.mxu0 0.0
        %11320 = vmatprep.subr.mxu0 0.0
        %11321 = vmatpush1.msra.mxu0 0.0
        %11322 = vmatprep.subr.mxu0 0.0
        %11323 = vmatpush1.msra.mxu0 0.0
        %11324 = vmatprep.subr.mxu0 0.0
        %11325 = vmatpush1.msra.mxu0 0.0
        %11326 = vmatprep.subr.mxu0 0.0
        %11327 = vmatpush1.msra.mxu0 0.0
        %11328 = vmatprep.subr.mxu0 0.0
        %11329 = vmatpush1.msra.mxu0 0.0
        %11330 = vmatprep.mubr.f32.mxu0 0.0
        %11331 = vmatmul.mubr.f32.gmra.mrb[0].mxu0 %v10348
        %v11332 = vpop.f32.mrb[0].mxu0
        %v11333 = vadd.f32 0.0, %v11332
        %v11334 = vpop.f32.mrb[0].mxu0
        %v11335 = vadd.f32 0.0, %v11334
        %11336 = vdwg.mxu0
        %11337 = vmatprep.subr.mxu0 %v10404
        %11338 = vmatpush1.msra.mxu0 %v10402
        %11339 = vmatprep.subr.mxu0 0.0
        %11340 = vmatpush1.msra.mxu0 0.0
        %11341 = vmatprep.subr.mxu0 0.0
        %11342 = vmatpush1.msra.mxu0 0.0
        %11343 = vmatprep.subr.mxu0 0.0
        %11344 = vmatpush1.msra.mxu0 0.0
        %11345 = vmatprep.subr.mxu0 0.0
        %11346 = vmatpush1.msra.mxu0 0.0
        %11347 = vmatprep.subr.mxu0 0.0
        %11348 = vmatpush1.msra.mxu0 0.0
        %11349 = vmatprep.subr.mxu0 0.0
        %11350 = vmatpush1.msra.mxu0 0.0
        %11351 = vmatprep.subr.mxu0 0.0
        %11352 = vmatpush1.msra.mxu0 0.0
        %11353 = vmatprep.subr.mxu0 0.0
        %11354 = vmatpush1.msra.mxu0 0.0
        %11355 = vmatprep.subr.mxu0 0.0
        %11356 = vmatpush1.msra.mxu0 0.0
        %11357 = vmatprep.subr.mxu0 0.0
        %11358 = vmatpush1.msra.mxu0 0.0
        %11359 = vmatprep.subr.mxu0 0.0
        %11360 = vmatpush1.msra.mxu0 0.0
        %11361 = vmatprep.subr.mxu0 0.0
        %11362 = vmatpush1.msra.mxu0 0.0
        %11363 = vmatprep.subr.mxu0 0.0
        %11364 = vmatpush1.msra.mxu0 0.0
        %11365 = vmatprep.subr.mxu0 0.0
        %11366 = vmatpush1.msra.mxu0 0.0
        %11367 = vmatprep.subr.mxu0 0.0
        %11368 = vmatpush1.msra.mxu0 0.0
        %11369 = vmatprep.subr.mxu0 0.0
        %11370 = vmatpush1.msra.mxu0 0.0
        %11371 = vmatprep.subr.mxu0 0.0
        %11372 = vmatpush1.msra.mxu0 0.0
        %11373 = vmatprep.subr.mxu0 0.0
        %11374 = vmatpush1.msra.mxu0 0.0
        %11375 = vmatprep.subr.mxu0 0.0
        %11376 = vmatpush1.msra.mxu0 0.0
        %11377 = vmatprep.subr.mxu0 0.0
        %11378 = vmatpush1.msra.mxu0 0.0
        %11379 = vmatprep.subr.mxu0 0.0
        %11380 = vmatpush1.msra.mxu0 0.0
        %11381 = vmatprep.subr.mxu0 0.0
        %11382 = vmatpush1.msra.mxu0 0.0
        %11383 = vmatprep.subr.mxu0 0.0
        %11384 = vmatpush1.msra.mxu0 0.0
        %11385 = vmatprep.subr.mxu0 0.0
        %11386 = vmatpush1.msra.mxu0 0.0
        %11387 = vmatprep.subr.mxu0 0.0
        %11388 = vmatpush1.msra.mxu0 0.0
        %11389 = vmatprep.subr.mxu0 0.0
        %11390 = vmatpush1.msra.mxu0 0.0
        %11391 = vmatprep.subr.mxu0 0.0
        %11392 = vmatpush1.msra.mxu0 0.0
        %11393 = vmatprep.subr.mxu0 0.0
        %11394 = vmatpush1.msra.mxu0 0.0
        %11395 = vmatprep.subr.mxu0 0.0
        %11396 = vmatpush1.msra.mxu0 0.0
        %11397 = vmatprep.subr.mxu0 0.0
        %11398 = vmatpush1.msra.mxu0 0.0
        %11399 = vmatprep.subr.mxu0 0.0
        %11400 = vmatpush1.msra.mxu0 0.0
        %11401 = vmatprep.mubr.f32.mxu0 0.0
        %11402 = vmatmul.mubr.f32.gmra.mrb[0].mxu0 %v10348
        %v11403 = vpop.f32.mrb[0].mxu0
        %v11404 = vadd.f32 0.0, %v11403
        %v11405 = vpop.f32.mrb[0].mxu0
        %v11406 = vadd.f32 0.0, %v11405
        %11407 = vdwg.mxu0
        %11408 = vmatprep.subr.mxu0 %v10408
        %11409 = vmatpush1.msra.mxu0 %v10406
        %11410 = vmatprep.subr.mxu0 0.0
        %11411 = vmatpush1.msra.mxu0 0.0
        %11412 = vmatprep.subr.mxu0 0.0
        %11413 = vmatpush1.msra.mxu0 0.0
        %11414 = vmatprep.subr.mxu0 0.0
        %11415 = vmatpush1.msra.mxu0 0.0
        %11416 = vmatprep.subr.mxu0 0.0
        %11417 = vmatpush1.msra.mxu0 0.0
        %11418 = vmatprep.subr.mxu0 0.0
        %11419 = vmatpush1.msra.mxu0 0.0
        %11420 = vmatprep.subr.mxu0 0.0
        %11421 = vmatpush1.msra.mxu0 0.0
        %11422 = vmatprep.subr.mxu0 0.0
        %11423 = vmatpush1.msra.mxu0 0.0
        %11424 = vmatprep.subr.mxu0 0.0
        %11425 = vmatpush1.msra.mxu0 0.0
        %11426 = vmatprep.subr.mxu0 0.0
        %11427 = vmatpush1.msra.mxu0 0.0
        %11428 = vmatprep.subr.mxu0 0.0
        %11429 = vmatpush1.msra.mxu0 0.0
        %11430 = vmatprep.subr.mxu0 0.0
        %11431 = vmatpush1.msra.mxu0 0.0
        %11432 = vmatprep.subr.mxu0 0.0
        %11433 = vmatpush1.msra.mxu0 0.0
        %11434 = vmatprep.subr.mxu0 0.0
        %11435 = vmatpush1.msra.mxu0 0.0
        %11436 = vmatprep.subr.mxu0 0.0
        %11437 = vmatpush1.msra.mxu0 0.0
        %11438 = vmatprep.subr.mxu0 0.0
        %11439 = vmatpush1.msra.mxu0 0.0
        %11440 = vmatprep.subr.mxu0 0.0
        %11441 = vmatpush1.msra.mxu0 0.0
        %11442 = vmatprep.subr.mxu0 0.0
        %11443 = vmatpush1.msra.mxu0 0.0
        %11444 = vmatprep.subr.mxu0 0.0
        %11445 = vmatpush1.msra.mxu0 0.0
        %11446 = vmatprep.subr.mxu0 0.0
        %11447 = vmatpush1.msra.mxu0 0.0
        %11448 = vmatprep.subr.mxu0 0.0
        %11449 = vmatpush1.msra.mxu0 0.0
        %11450 = vmatprep.subr.mxu0 0.0
        %11451 = vmatpush1.msra.mxu0 0.0
        %11452 = vmatprep.subr.mxu0 0.0
        %11453 = vmatpush1.msra.mxu0 0.0
        %11454 = vmatprep.subr.mxu0 0.0
        %11455 = vmatpush1.msra.mxu0 0.0
        %11456 = vmatprep.subr.mxu0 0.0
        %11457 = vmatpush1.msra.mxu0 0.0
        %11458 = vmatprep.subr.mxu0 0.0
        %11459 = vmatpush1.msra.mxu0 0.0
        %11460 = vmatprep.subr.mxu0 0.0
        %11461 = vmatpush1.msra.mxu0 0.0
        %11462 = vmatprep.subr.mxu0 0.0
        %11463 = vmatpush1.msra.mxu0 0.0
        %11464 = vmatprep.subr.mxu0 0.0
        %11465 = vmatpush1.msra.mxu0 0.0
        %11466 = vmatprep.subr.mxu0 0.0
        %11467 = vmatpush1.msra.mxu0 0.0
        %11468 = vmatprep.subr.mxu0 0.0
        %11469 = vmatpush1.msra.mxu0 0.0
        %11470 = vmatprep.subr.mxu0 0.0
        %11471 = vmatpush1.msra.mxu0 0.0
        %11472 = vmatprep.mubr.f32.mxu0 0.0
        %11473 = vmatmul.mubr.f32.gmra.mrb[0].mxu0 %v10348
        %v11474 = vpop.f32.mrb[0].mxu0
        %v11475 = vadd.f32 0.0, %v11474
        %v11476 = vpop.f32.mrb[0].mxu0
        %v11477 = vadd.f32 0.0, %v11476
        %11478 = vdwg.mxu0
        %11479 = vmatprep.subr.mxu0 %v10412
        %11480 = vmatpush1.msra.mxu0 %v10410
        %11481 = vmatprep.subr.mxu0 0.0
        %11482 = vmatpush1.msra.mxu0 0.0
        %11483 = vmatprep.subr.mxu0 0.0
        %11484 = vmatpush1.msra.mxu0 0.0
        %11485 = vmatprep.subr.mxu0 0.0
        %11486 = vmatpush1.msra.mxu0 0.0
        %11487 = vmatprep.subr.mxu0 0.0
        %11488 = vmatpush1.msra.mxu0 0.0
        %11489 = vmatprep.subr.mxu0 0.0
        %11490 = vmatpush1.msra.mxu0 0.0
        %11491 = vmatprep.subr.mxu0 0.0
        %11492 = vmatpush1.msra.mxu0 0.0
        %11493 = vmatprep.subr.mxu0 0.0
        %11494 = vmatpush1.msra.mxu0 0.0
        %11495 = vmatprep.subr.mxu0 0.0
        %11496 = vmatpush1.msra.mxu0 0.0
        %11497 = vmatprep.subr.mxu0 0.0
        %11498 = vmatpush1.msra.mxu0 0.0
        %11499 = vmatprep.subr.mxu0 0.0
        %11500 = vmatpush1.msra.mxu0 0.0
        %11501 = vmatprep.subr.mxu0 0.0
        %11502 = vmatpush1.msra.mxu0 0.0
        %11503 = vmatprep.subr.mxu0 0.0
        %11504 = vmatpush1.msra.mxu0 0.0
        %11505 = vmatprep.subr.mxu0 0.0
        %11506 = vmatpush1.msra.mxu0 0.0
        %11507 = vmatprep.subr.mxu0 0.0
        %11508 = vmatpush1.msra.mxu0 0.0
        %11509 = vmatprep.subr.mxu0 0.0
        %11510 = vmatpush1.msra.mxu0 0.0
        %11511 = vmatprep.subr.mxu0 0.0
        %11512 = vmatpush1.msra.mxu0 0.0
        %11513 = vmatprep.subr.mxu0 0.0
        %11514 = vmatpush1.msra.mxu0 0.0
        %11515 = vmatprep.subr.mxu0 0.0
        %11516 = vmatpush1.msra.mxu0 0.0
        %11517 = vmatprep.subr.mxu0 0.0
        %11518 = vmatpush1.msra.mxu0 0.0
        %11519 = vmatprep.subr.mxu0 0.0
        %11520 = vmatpush1.msra.mxu0 0.0
        %11521 = vmatprep.subr.mxu0 0.0
        %11522 = vmatpush1.msra.mxu0 0.0
        %11523 = vmatprep.subr.mxu0 0.0
        %11524 = vmatpush1.msra.mxu0 0.0
        %11525 = vmatprep.subr.mxu0 0.0
        %11526 = vmatpush1.msra.mxu0 0.0
        %11527 = vmatprep.subr.mxu0 0.0
        %11528 = vmatpush1.msra.mxu0 0.0
        %11529 = vmatprep.subr.mxu0 0.0
        %11530 = vmatpush1.msra.mxu0 0.0
        %11531 = vmatprep.subr.mxu0 0.0
        %11532 = vmatpush1.msra.mxu0 0.0
        %11533 = vmatprep.subr.mxu0 0.0
        %11534 = vmatpush1.msra.mxu0 0.0
        %11535 = vmatprep.subr.mxu0 0.0
        %11536 = vmatpush1.msra.mxu0 0.0
        %11537 = vmatprep.subr.mxu0 0.0
        %11538 = vmatpush1.msra.mxu0 0.0
        %11539 = vmatprep.subr.mxu0 0.0
        %11540 = vmatpush1.msra.mxu0 0.0
        %11541 = vmatprep.subr.mxu0 0.0
        %11542 = vmatpush1.msra.mxu0 0.0
        %11543 = vmatprep.mubr.f32.mxu0 0.0
        %11544 = vmatmul.mubr.f32.gmra.mrb[0].mxu0 %v10348
        %v11545 = vpop.f32.mrb[0].mxu0
        %v11546 = vadd.f32 0.0, %v11545
        %v11547 = vpop.f32.mrb[0].mxu0
        %v11548 = vadd.f32 0.0, %v11547
        %11549 = vdwg.mxu0
        %v11550 = vadd.f32 %v7254, %v10481
        %v11551 = vadd.f32 %v7256, %v10483
        %v11552 = vadd.f32 %v7325, %v10552
        %v11553 = vadd.f32 %v7327, %v10554
        %v11554 = vadd.f32 %v7396, %v10623
        %v11555 = vadd.f32 %v7398, %v10625
        %v11556 = vadd.f32 %v7467, %v10694
        %v11557 = vadd.f32 %v7469, %v10696
        %v11558 = vadd.f32 %v7538, %v10765
        %v11559 = vadd.f32 %v7540, %v10767
        %v11560 = vadd.f32 %v7609, %v10836
        %v11561 = vadd.f32 %v7611, %v10838
        %v11562 = vadd.f32 %v7680, %v10907
        %v11563 = vadd.f32 %v7682, %v10909
        %v11564 = vadd.f32 %v7751, %v10978
        %v11565 = vadd.f32 %v7753, %v10980
        %v11566 = vadd.f32 %v7822, %v11049
        %v11567 = vadd.f32 %v7824, %v11051
        %v11568 = vadd.f32 %v7893, %v11120
        %v11569 = vadd.f32 %v7895, %v11122
        %v11570 = vadd.f32 %v7964, %v11191
        %v11571 = vadd.f32 %v7966, %v11193
        %v11572 = vadd.f32 %v8035, %v11262
        %v11573 = vadd.f32 %v8037, %v11264
        %v11574 = vadd.f32 %v8106, %v11333
        %v11575 = vadd.f32 %v8108, %v11335
        %v11576 = vadd.f32 %v8177, %v11404
        %v11577 = vadd.f32 %v8179, %v11406
        %v11578 = vadd.f32 %v8248, %v11475
        %v11579 = vadd.f32 %v8250, %v11477
        %v11580 = vadd.f32 %v8319, %v11546
        %v11581 = vadd.f32 %v8321, %v11548
        %v11582 = vld [vmem:[%s5] sm:$0xff]
        %11584 = vset.pattern.permute.xlu0 0
        %11585 = vperm.xlu0 %11584, %v11582
        %v11586 = vpop.permute.xlu0 %11585
        %v11588 = vadd.f32 %v11550, %v11586
        %v11589 = vadd.f32 %v11551, %v11586
        %v11590 = vadd.f32 %v11552, %v11586
        %v11591 = vadd.f32 %v11553, %v11586
        %v11592 = vadd.f32 %v11554, %v11586
        %v11593 = vadd.f32 %v11555, %v11586
        %v11594 = vadd.f32 %v11556, %v11586
        %v11595 = vadd.f32 %v11557, %v11586
        %v11596 = vadd.f32 %v11558, %v11586
        %v11597 = vadd.f32 %v11559, %v11586
        %v11598 = vadd.f32 %v11560, %v11586
        %v11599 = vadd.f32 %v11561, %v11586
        %v11600 = vadd.f32 %v11562, %v11586
        %v11601 = vadd.f32 %v11563, %v11586
        %v11602 = vadd.f32 %v11564, %v11586
        %v11603 = vadd.f32 %v11565, %v11586
        %v11604 = vadd.f32 %v11566, %v11586
        %v11605 = vadd.f32 %v11567, %v11586
        %v11606 = vadd.f32 %v11568, %v11586
        %v11607 = vadd.f32 %v11569, %v11586
        %v11608 = vadd.f32 %v11570, %v11586
        %v11609 = vadd.f32 %v11571, %v11586
        %v11610 = vadd.f32 %v11572, %v11586
        %v11611 = vadd.f32 %v11573, %v11586
        %v11612 = vadd.f32 %v11574, %v11586
        %v11613 = vadd.f32 %v11575, %v11586
        %v11614 = vadd.f32 %v11576, %v11586
        %v11615 = vadd.f32 %v11577, %v11586
        %v11616 = vadd.f32 %v11578, %v11586
        %v11617 = vadd.f32 %v11579, %v11586
        %v11618 = vadd.f32 %v11580, %v11586
        %v11619 = vadd.f32 %v11581, %v11586
        %v11620 = vcombine.low %v11588, %v11596
        %v11621 = vcombine.high %v11588, %v11596
        %v11623 = vunpack.c.l.s4 1983009808
        %v11624 = vunpack.c.0.s8 %v11623
        %v11625 = vlaneseq
        %v11626 = vshrl.u32 %v11625, 7
        %v11627 = vsub.s32 %v11624, %v11626
        %v11628 = vrot.slane %v11620, %v11627
        %v11630 = vunpack.c.l.s4 1983009808
        %v11631 = vunpack.c.0.s8 %v11630
        %v11632 = vlaneseq
        %v11633 = vshrl.u32 %v11632, 7
        %v11634 = vsub.s32 %v11631, %v11633
        %v11635 = vrot.slane %v11621, %v11634
        %v11636 = vcombine.low %v11592, %v11600
        %v11637 = vcombine.high %v11592, %v11600
        %v11639 = vunpack.c.l.s4 1983009808
        %v11640 = vunpack.c.0.s8 %v11639
        %v11641 = vlaneseq
        %v11642 = vshrl.u32 %v11641, 7
        %v11643 = vsub.s32 %v11640, %v11642
        %v11644 = vrot.slane %v11636, %v11643
        %v11646 = vunpack.c.l.s4 1983009808
        %v11647 = vunpack.c.0.s8 %v11646
        %v11648 = vlaneseq
        %v11649 = vshrl.u32 %v11648, 7
        %v11650 = vsub.s32 %v11647, %v11649
        %v11651 = vrot.slane %v11637, %v11650
        %v11652 = vcombine.low %v11604, %v11612
        %v11653 = vcombine.high %v11604, %v11612
        %v11655 = vunpack.c.l.s4 1983009808
        %v11656 = vunpack.c.0.s8 %v11655
        %v11657 = vlaneseq
        %v11658 = vshrl.u32 %v11657, 7
        %v11659 = vsub.s32 %v11656, %v11658
        %v11660 = vrot.slane %v11652, %v11659
        %v11662 = vunpack.c.l.s4 1983009808
        %v11663 = vunpack.c.0.s8 %v11662
        %v11664 = vlaneseq
        %v11665 = vshrl.u32 %v11664, 7
        %v11666 = vsub.s32 %v11663, %v11665
        %v11667 = vrot.slane %v11653, %v11666
        %v11668 = vcombine.low %v11608, %v11616
        %v11669 = vcombine.high %v11608, %v11616
        %v11671 = vunpack.c.l.s4 1983009808
        %v11672 = vunpack.c.0.s8 %v11671
        %v11673 = vlaneseq
        %v11674 = vshrl.u32 %v11673, 7
        %v11675 = vsub.s32 %v11672, %v11674
        %v11676 = vrot.slane %v11668, %v11675
        %v11678 = vunpack.c.l.s4 1983009808
        %v11679 = vunpack.c.0.s8 %v11678
        %v11680 = vlaneseq
        %v11681 = vshrl.u32 %v11680, 7
        %v11682 = vsub.s32 %v11679, %v11681
        %v11683 = vrot.slane %v11669, %v11682
        %v11684 = vcombine.low %v11628, %v11644
        %v11685 = vcombine.high %v11628, %v11644
        %v11687 = vunpack.c.l.s4 1934713408
        %v11688 = vunpack.c.0.s8 %v11687
        %v11689 = vlaneseq
        %v11690 = vshrl.u32 %v11689, 7
        %v11691 = vsub.s32 %v11688, %v11690
        %v11692 = vrot.slane %v11684, %v11691
        %v11694 = vunpack.c.l.s4 1934713408
        %v11695 = vunpack.c.0.s8 %v11694
        %v11696 = vlaneseq
        %v11697 = vshrl.u32 %v11696, 7
        %v11698 = vsub.s32 %v11695, %v11697
        %v11699 = vrot.slane %v11685, %v11698
        %v11700 = vcombine.low %v11635, %v11651
        %v11701 = vcombine.high %v11635, %v11651
        %v11703 = vunpack.c.l.s4 1934713408
        %v11704 = vunpack.c.0.s8 %v11703
        %v11705 = vlaneseq
        %v11706 = vshrl.u32 %v11705, 7
        %v11707 = vsub.s32 %v11704, %v11706
        %v11708 = vrot.slane %v11700, %v11707
        %v11710 = vunpack.c.l.s4 1934713408
        %v11711 = vunpack.c.0.s8 %v11710
        %v11712 = vlaneseq
        %v11713 = vshrl.u32 %v11712, 7
        %v11714 = vsub.s32 %v11711, %v11713
        %v11715 = vrot.slane %v11701, %v11714
        %v11716 = vcombine.low %v11660, %v11676
        %v11717 = vcombine.high %v11660, %v11676
        %v11719 = vunpack.c.l.s4 1934713408
        %v11720 = vunpack.c.0.s8 %v11719
        %v11721 = vlaneseq
        %v11722 = vshrl.u32 %v11721, 7
        %v11723 = vsub.s32 %v11720, %v11722
        %v11724 = vrot.slane %v11716, %v11723
        %v11726 = vunpack.c.l.s4 1934713408
        %v11727 = vunpack.c.0.s8 %v11726
        %v11728 = vlaneseq
        %v11729 = vshrl.u32 %v11728, 7
        %v11730 = vsub.s32 %v11727, %v11729
        %v11731 = vrot.slane %v11717, %v11730
        %v11732 = vcombine.low %v11667, %v11683
        %v11733 = vcombine.high %v11667, %v11683
        %v11735 = vunpack.c.l.s4 1934713408
        %v11736 = vunpack.c.0.s8 %v11735
        %v11737 = vlaneseq
        %v11738 = vshrl.u32 %v11737, 7
        %v11739 = vsub.s32 %v11736, %v11738
        %v11740 = vrot.slane %v11732, %v11739
        %v11742 = vunpack.c.l.s4 1934713408
        %v11743 = vunpack.c.0.s8 %v11742
        %v11744 = vlaneseq
        %v11745 = vshrl.u32 %v11744, 7
        %v11746 = vsub.s32 %v11743, %v11745
        %v11747 = vrot.slane %v11733, %v11746
        %v11748 = vcombine.low %v11692, %v11724
        %v11749 = vcombine.high %v11692, %v11724
        %v11750 = vcombine.low %v11699, %v11731
        %v11751 = vcombine.high %v11699, %v11731
        %v11752 = vcombine.low %v11708, %v11740
        %v11753 = vcombine.high %v11708, %v11740
        %v11754 = vcombine.low %v11715, %v11747
        %v11755 = vcombine.high %v11715, %v11747
        %v11756 = vcombine.low %v11589, %v11597
        %v11757 = vcombine.high %v11589, %v11597
        %v11759 = vunpack.c.l.s4 1983009808
        %v11760 = vunpack.c.0.s8 %v11759
        %v11761 = vlaneseq
        %v11762 = vshrl.u32 %v11761, 7
        %v11763 = vsub.s32 %v11760, %v11762
        %v11764 = vrot.slane %v11756, %v11763
        %v11766 = vunpack.c.l.s4 1983009808
        %v11767 = vunpack.c.0.s8 %v11766
        %v11768 = vlaneseq
        %v11769 = vshrl.u32 %v11768, 7
        %v11770 = vsub.s32 %v11767, %v11769
        %v11771 = vrot.slane %v11757, %v11770
        %v11772 = vcombine.low %v11593, %v11601
        %v11773 = vcombine.high %v11593, %v11601
        %v11775 = vunpack.c.l.s4 1983009808
        %v11776 = vunpack.c.0.s8 %v11775
        %v11777 = vlaneseq
        %v11778 = vshrl.u32 %v11777, 7
        %v11779 = vsub.s32 %v11776, %v11778
        %v11780 = vrot.slane %v11772, %v11779
        %v11782 = vunpack.c.l.s4 1983009808
        %v11783 = vunpack.c.0.s8 %v11782
        %v11784 = vlaneseq
        %v11785 = vshrl.u32 %v11784, 7
        %v11786 = vsub.s32 %v11783, %v11785
        %v11787 = vrot.slane %v11773, %v11786
        %v11788 = vcombine.low %v11605, %v11613
        %v11789 = vcombine.high %v11605, %v11613
        %v11791 = vunpack.c.l.s4 1983009808
        %v11792 = vunpack.c.0.s8 %v11791
        %v11793 = vlaneseq
        %v11794 = vshrl.u32 %v11793, 7
        %v11795 = vsub.s32 %v11792, %v11794
        %v11796 = vrot.slane %v11788, %v11795
        %v11798 = vunpack.c.l.s4 1983009808
        %v11799 = vunpack.c.0.s8 %v11798
        %v11800 = vlaneseq
        %v11801 = vshrl.u32 %v11800, 7
        %v11802 = vsub.s32 %v11799, %v11801
        %v11803 = vrot.slane %v11789, %v11802
        %v11804 = vcombine.low %v11609, %v11617
        %v11805 = vcombine.high %v11609, %v11617
        %v11807 = vunpack.c.l.s4 1983009808
        %v11808 = vunpack.c.0.s8 %v11807
        %v11809 = vlaneseq
        %v11810 = vshrl.u32 %v11809, 7
        %v11811 = vsub.s32 %v11808, %v11810
        %v11812 = vrot.slane %v11804, %v11811
        %v11814 = vunpack.c.l.s4 1983009808
        %v11815 = vunpack.c.0.s8 %v11814
        %v11816 = vlaneseq
        %v11817 = vshrl.u32 %v11816, 7
        %v11818 = vsub.s32 %v11815, %v11817
        %v11819 = vrot.slane %v11805, %v11818
        %v11820 = vcombine.low %v11764, %v11780
        %v11821 = vcombine.high %v11764, %v11780
        %v11823 = vunpack.c.l.s4 1934713408
        %v11824 = vunpack.c.0.s8 %v11823
        %v11825 = vlaneseq
        %v11826 = vshrl.u32 %v11825, 7
        %v11827 = vsub.s32 %v11824, %v11826
        %v11828 = vrot.slane %v11820, %v11827
        %v11830 = vunpack.c.l.s4 1934713408
        %v11831 = vunpack.c.0.s8 %v11830
        %v11832 = vlaneseq
        %v11833 = vshrl.u32 %v11832, 7
        %v11834 = vsub.s32 %v11831, %v11833
        %v11835 = vrot.slane %v11821, %v11834
        %v11836 = vcombine.low %v11771, %v11787
        %v11837 = vcombine.high %v11771, %v11787
        %v11839 = vunpack.c.l.s4 1934713408
        %v11840 = vunpack.c.0.s8 %v11839
        %v11841 = vlaneseq
        %v11842 = vshrl.u32 %v11841, 7
        %v11843 = vsub.s32 %v11840, %v11842
        %v11844 = vrot.slane %v11836, %v11843
        %v11846 = vunpack.c.l.s4 1934713408
        %v11847 = vunpack.c.0.s8 %v11846
        %v11848 = vlaneseq
        %v11849 = vshrl.u32 %v11848, 7
        %v11850 = vsub.s32 %v11847, %v11849
        %v11851 = vrot.slane %v11837, %v11850
        %v11852 = vcombine.low %v11796, %v11812
        %v11853 = vcombine.high %v11796, %v11812
        %v11855 = vunpack.c.l.s4 1934713408
        %v11856 = vunpack.c.0.s8 %v11855
        %v11857 = vlaneseq
        %v11858 = vshrl.u32 %v11857, 7
        %v11859 = vsub.s32 %v11856, %v11858
        %v11860 = vrot.slane %v11852, %v11859
        %v11862 = vunpack.c.l.s4 1934713408
        %v11863 = vunpack.c.0.s8 %v11862
        %v11864 = vlaneseq
        %v11865 = vshrl.u32 %v11864, 7
        %v11866 = vsub.s32 %v11863, %v11865
        %v11867 = vrot.slane %v11853, %v11866
        %v11868 = vcombine.low %v11803, %v11819
        %v11869 = vcombine.high %v11803, %v11819
        %v11871 = vunpack.c.l.s4 1934713408
        %v11872 = vunpack.c.0.s8 %v11871
        %v11873 = vlaneseq
        %v11874 = vshrl.u32 %v11873, 7
        %v11875 = vsub.s32 %v11872, %v11874
        %v11876 = vrot.slane %v11868, %v11875
        %v11878 = vunpack.c.l.s4 1934713408
        %v11879 = vunpack.c.0.s8 %v11878
        %v11880 = vlaneseq
        %v11881 = vshrl.u32 %v11880, 7
        %v11882 = vsub.s32 %v11879, %v11881
        %v11883 = vrot.slane %v11869, %v11882
        %v11884 = vcombine.low %v11828, %v11860
        %v11885 = vcombine.high %v11828, %v11860
        %v11886 = vcombine.low %v11835, %v11867
        %v11887 = vcombine.high %v11835, %v11867
        %v11888 = vcombine.low %v11844, %v11876
        %v11889 = vcombine.high %v11844, %v11876
        %v11890 = vcombine.low %v11851, %v11883
        %v11891 = vcombine.high %v11851, %v11883
        %v11892 = vcombine.low %v11590, %v11598
        %v11893 = vcombine.high %v11590, %v11598
        %v11895 = vunpack.c.l.s4 1983009808
        %v11896 = vunpack.c.0.s8 %v11895
        %v11897 = vlaneseq
        %v11898 = vshrl.u32 %v11897, 7
        %v11899 = vsub.s32 %v11896, %v11898
        %v11900 = vrot.slane %v11892, %v11899
        %v11902 = vunpack.c.l.s4 1983009808
        %v11903 = vunpack.c.0.s8 %v11902
        %v11904 = vlaneseq
        %v11905 = vshrl.u32 %v11904, 7
        %v11906 = vsub.s32 %v11903, %v11905
        %v11907 = vrot.slane %v11893, %v11906
        %v11908 = vcombine.low %v11594, %v11602
        %v11909 = vcombine.high %v11594, %v11602
        %v11911 = vunpack.c.l.s4 1983009808
        %v11912 = vunpack.c.0.s8 %v11911
        %v11913 = vlaneseq
        %v11914 = vshrl.u32 %v11913, 7
        %v11915 = vsub.s32 %v11912, %v11914
        %v11916 = vrot.slane %v11908, %v11915
        %v11918 = vunpack.c.l.s4 1983009808
        %v11919 = vunpack.c.0.s8 %v11918
        %v11920 = vlaneseq
        %v11921 = vshrl.u32 %v11920, 7
        %v11922 = vsub.s32 %v11919, %v11921
        %v11923 = vrot.slane %v11909, %v11922
        %v11924 = vcombine.low %v11606, %v11614
        %v11925 = vcombine.high %v11606, %v11614
        %v11927 = vunpack.c.l.s4 1983009808
        %v11928 = vunpack.c.0.s8 %v11927
        %v11929 = vlaneseq
        %v11930 = vshrl.u32 %v11929, 7
        %v11931 = vsub.s32 %v11928, %v11930
        %v11932 = vrot.slane %v11924, %v11931
        %v11934 = vunpack.c.l.s4 1983009808
        %v11935 = vunpack.c.0.s8 %v11934
        %v11936 = vlaneseq
        %v11937 = vshrl.u32 %v11936, 7
        %v11938 = vsub.s32 %v11935, %v11937
        %v11939 = vrot.slane %v11925, %v11938
        %v11940 = vcombine.low %v11610, %v11618
        %v11941 = vcombine.high %v11610, %v11618
        %v11943 = vunpack.c.l.s4 1983009808
        %v11944 = vunpack.c.0.s8 %v11943
        %v11945 = vlaneseq
        %v11946 = vshrl.u32 %v11945, 7
        %v11947 = vsub.s32 %v11944, %v11946
        %v11948 = vrot.slane %v11940, %v11947
        %v11950 = vunpack.c.l.s4 1983009808
        %v11951 = vunpack.c.0.s8 %v11950
        %v11952 = vlaneseq
        %v11953 = vshrl.u32 %v11952, 7
        %v11954 = vsub.s32 %v11951, %v11953
        %v11955 = vrot.slane %v11941, %v11954
        %v11956 = vcombine.low %v11900, %v11916
        %v11957 = vcombine.high %v11900, %v11916
        %v11959 = vunpack.c.l.s4 1934713408
        %v11960 = vunpack.c.0.s8 %v11959
        %v11961 = vlaneseq
        %v11962 = vshrl.u32 %v11961, 7
        %v11963 = vsub.s32 %v11960, %v11962
        %v11964 = vrot.slane %v11956, %v11963
        %v11966 = vunpack.c.l.s4 1934713408
        %v11967 = vunpack.c.0.s8 %v11966
        %v11968 = vlaneseq
        %v11969 = vshrl.u32 %v11968, 7
        %v11970 = vsub.s32 %v11967, %v11969
        %v11971 = vrot.slane %v11957, %v11970
        %v11972 = vcombine.low %v11907, %v11923
        %v11973 = vcombine.high %v11907, %v11923
        %v11975 = vunpack.c.l.s4 1934713408
        %v11976 = vunpack.c.0.s8 %v11975
        %v11977 = vlaneseq
        %v11978 = vshrl.u32 %v11977, 7
        %v11979 = vsub.s32 %v11976, %v11978
        %v11980 = vrot.slane %v11972, %v11979
        %v11982 = vunpack.c.l.s4 1934713408
        %v11983 = vunpack.c.0.s8 %v11982
        %v11984 = vlaneseq
        %v11985 = vshrl.u32 %v11984, 7
        %v11986 = vsub.s32 %v11983, %v11985
        %v11987 = vrot.slane %v11973, %v11986
        %v11988 = vcombine.low %v11932, %v11948
        %v11989 = vcombine.high %v11932, %v11948
        %v11991 = vunpack.c.l.s4 1934713408
        %v11992 = vunpack.c.0.s8 %v11991
        %v11993 = vlaneseq
        %v11994 = vshrl.u32 %v11993, 7
        %v11995 = vsub.s32 %v11992, %v11994
        %v11996 = vrot.slane %v11988, %v11995
        %v11998 = vunpack.c.l.s4 1934713408
        %v11999 = vunpack.c.0.s8 %v11998
        %v12000 = vlaneseq
        %v12001 = vshrl.u32 %v12000, 7
        %v12002 = vsub.s32 %v11999, %v12001
        %v12003 = vrot.slane %v11989, %v12002
        %v12004 = vcombine.low %v11939, %v11955
        %v12005 = vcombine.high %v11939, %v11955
        %v12007 = vunpack.c.l.s4 1934713408
        %v12008 = vunpack.c.0.s8 %v12007
        %v12009 = vlaneseq
        %v12010 = vshrl.u32 %v12009, 7
        %v12011 = vsub.s32 %v12008, %v12010
        %v12012 = vrot.slane %v12004, %v12011
        %v12014 = vunpack.c.l.s4 1934713408
        %v12015 = vunpack.c.0.s8 %v12014
        %v12016 = vlaneseq
        %v12017 = vshrl.u32 %v12016, 7
        %v12018 = vsub.s32 %v12015, %v12017
        %v12019 = vrot.slane %v12005, %v12018
        %v12020 = vcombine.low %v11964, %v11996
        %v12021 = vcombine.high %v11964, %v11996
        %v12022 = vcombine.low %v11971, %v12003
        %v12023 = vcombine.high %v11971, %v12003
        %v12024 = vcombine.low %v11980, %v12012
        %v12025 = vcombine.high %v11980, %v12012
        %v12026 = vcombine.low %v11987, %v12019
        %v12027 = vcombine.high %v11987, %v12019
        %v12028 = vcombine.low %v11591, %v11599
        %v12029 = vcombine.high %v11591, %v11599
        %v12031 = vunpack.c.l.s4 1983009808
        %v12032 = vunpack.c.0.s8 %v12031
        %v12033 = vlaneseq
        %v12034 = vshrl.u32 %v12033, 7
        %v12035 = vsub.s32 %v12032, %v12034
        %v12036 = vrot.slane %v12028, %v12035
        %v12038 = vunpack.c.l.s4 1983009808
        %v12039 = vunpack.c.0.s8 %v12038
        %v12040 = vlaneseq
        %v12041 = vshrl.u32 %v12040, 7
        %v12042 = vsub.s32 %v12039, %v12041
        %v12043 = vrot.slane %v12029, %v12042
        %v12044 = vcombine.low %v11595, %v11603
        %v12045 = vcombine.high %v11595, %v11603
        %v12047 = vunpack.c.l.s4 1983009808
        %v12048 = vunpack.c.0.s8 %v12047
        %v12049 = vlaneseq
        %v12050 = vshrl.u32 %v12049, 7
        %v12051 = vsub.s32 %v12048, %v12050
        %v12052 = vrot.slane %v12044, %v12051
        %v12054 = vunpack.c.l.s4 1983009808
        %v12055 = vunpack.c.0.s8 %v12054
        %v12056 = vlaneseq
        %v12057 = vshrl.u32 %v12056, 7
        %v12058 = vsub.s32 %v12055, %v12057
        %v12059 = vrot.slane %v12045, %v12058
        %v12060 = vcombine.low %v11607, %v11615
        %v12061 = vcombine.high %v11607, %v11615
        %v12063 = vunpack.c.l.s4 1983009808
        %v12064 = vunpack.c.0.s8 %v12063
        %v12065 = vlaneseq
        %v12066 = vshrl.u32 %v12065, 7
        %v12067 = vsub.s32 %v12064, %v12066
        %v12068 = vrot.slane %v12060, %v12067
        %v12070 = vunpack.c.l.s4 1983009808
        %v12071 = vunpack.c.0.s8 %v12070
        %v12072 = vlaneseq
        %v12073 = vshrl.u32 %v12072, 7
        %v12074 = vsub.s32 %v12071, %v12073
        %v12075 = vrot.slane %v12061, %v12074
        %v12076 = vcombine.low %v11611, %v11619
        %v12077 = vcombine.high %v11611, %v11619
        %v12079 = vunpack.c.l.s4 1983009808
        %v12080 = vunpack.c.0.s8 %v12079
        %v12081 = vlaneseq
        %v12082 = vshrl.u32 %v12081, 7
        %v12083 = vsub.s32 %v12080, %v12082
        %v12084 = vrot.slane %v12076, %v12083
        %v12086 = vunpack.c.l.s4 1983009808
        %v12087 = vunpack.c.0.s8 %v12086
        %v12088 = vlaneseq
        %v12089 = vshrl.u32 %v12088, 7
        %v12090 = vsub.s32 %v12087, %v12089
        %v12091 = vrot.slane %v12077, %v12090
        %v12092 = vcombine.low %v12036, %v12052
        %v12093 = vcombine.high %v12036, %v12052
        %v12095 = vunpack.c.l.s4 1934713408
        %v12096 = vunpack.c.0.s8 %v12095
        %v12097 = vlaneseq
        %v12098 = vshrl.u32 %v12097, 7
        %v12099 = vsub.s32 %v12096, %v12098
        %v12100 = vrot.slane %v12092, %v12099
        %v12102 = vunpack.c.l.s4 1934713408
        %v12103 = vunpack.c.0.s8 %v12102
        %v12104 = vlaneseq
        %v12105 = vshrl.u32 %v12104, 7
        %v12106 = vsub.s32 %v12103, %v12105
        %v12107 = vrot.slane %v12093, %v12106
        %v12108 = vcombine.low %v12043, %v12059
        %v12109 = vcombine.high %v12043, %v12059
        %v12111 = vunpack.c.l.s4 1934713408
        %v12112 = vunpack.c.0.s8 %v12111
        %v12113 = vlaneseq
        %v12114 = vshrl.u32 %v12113, 7
        %v12115 = vsub.s32 %v12112, %v12114
        %v12116 = vrot.slane %v12108, %v12115
        %v12118 = vunpack.c.l.s4 1934713408
        %v12119 = vunpack.c.0.s8 %v12118
        %v12120 = vlaneseq
        %v12121 = vshrl.u32 %v12120, 7
        %v12122 = vsub.s32 %v12119, %v12121
        %v12123 = vrot.slane %v12109, %v12122
        %v12124 = vcombine.low %v12068, %v12084
        %v12125 = vcombine.high %v12068, %v12084
        %v12127 = vunpack.c.l.s4 1934713408
        %v12128 = vunpack.c.0.s8 %v12127
        %v12129 = vlaneseq
        %v12130 = vshrl.u32 %v12129, 7
        %v12131 = vsub.s32 %v12128, %v12130
        %v12132 = vrot.slane %v12124, %v12131
        %v12134 = vunpack.c.l.s4 1934713408
        %v12135 = vunpack.c.0.s8 %v12134
        %v12136 = vlaneseq
        %v12137 = vshrl.u32 %v12136, 7
        %v12138 = vsub.s32 %v12135, %v12137
        %v12139 = vrot.slane %v12125, %v12138
        %v12140 = vcombine.low %v12075, %v12091
        %v12141 = vcombine.high %v12075, %v12091
        %v12143 = vunpack.c.l.s4 1934713408
        %v12144 = vunpack.c.0.s8 %v12143
        %v12145 = vlaneseq
        %v12146 = vshrl.u32 %v12145, 7
        %v12147 = vsub.s32 %v12144, %v12146
        %v12148 = vrot.slane %v12140, %v12147
        %v12150 = vunpack.c.l.s4 1934713408
        %v12151 = vunpack.c.0.s8 %v12150
        %v12152 = vlaneseq
        %v12153 = vshrl.u32 %v12152, 7
        %v12154 = vsub.s32 %v12151, %v12153
        %v12155 = vrot.slane %v12141, %v12154
        %v12156 = vcombine.low %v12100, %v12132
        %v12157 = vcombine.high %v12100, %v12132
        %v12158 = vcombine.low %v12107, %v12139
        %v12159 = vcombine.high %v12107, %v12139
        %v12160 = vcombine.low %v12116, %v12148
        %v12161 = vcombine.high %v12116, %v12148
        %v12162 = vcombine.low %v12123, %v12155
        %v12163 = vcombine.high %v12123, %v12155
        %12164 = vst [vmem:[%s331] sm:$0xff] %v11748
        %12165 = vst [vmem:[%s331 + $0x8] sm:$0xff] %v11884
        %12166 = vst [vmem:[%s331 + $0x10] sm:$0xff] %v12020
        %12167 = vst [vmem:[%s331 + $0x18] sm:$0xff] %v12156
        %12168 = vst [vmem:[%s331 + $0x20] sm:$0xff] %v11749
        %12169 = vst [vmem:[%s331 + $0x28] sm:$0xff] %v11885
        %12170 = vst [vmem:[%s331 + $0x30] sm:$0xff] %v12021
        %12171 = vst [vmem:[%s331 + $0x38] sm:$0xff] %v12157
        %12172 = vst [vmem:[%s331 + $0x40] sm:$0xff] %v11750
        %12173 = vst [vmem:[%s331 + $0x48] sm:$0xff] %v11886
        %12174 = vst [vmem:[%s331 + $0x50] sm:$0xff] %v12022
        %12175 = vst [vmem:[%s331 + $0x58] sm:$0xff] %v12158
        %12176 = vst [vmem:[%s331 + $0x60] sm:$0xff] %v11751
        %12177 = vst [vmem:[%s331 + $0x68] sm:$0xff] %v11887
        %12178 = vst [vmem:[%s331 + $0x70] sm:$0xff] %v12023
        %12179 = vst [vmem:[%s331 + $0x78] sm:$0xff] %v12159
        %12180 = vst [vmem:[%s331 + $0x80] sm:$0xff] %v11752
        %12181 = vst [vmem:[%s331 + $0x88] sm:$0xff] %v11888
        %12182 = vst [vmem:[%s331 + $0x90] sm:$0xff] %v12024
        %12183 = vst [vmem:[%s331 + $0x98] sm:$0xff] %v12160
        %12184 = vst [vmem:[%s331 + $0xa0] sm:$0xff] %v11753
        %12185 = vst [vmem:[%s331 + $0xa8] sm:$0xff] %v11889
        %12186 = vst [vmem:[%s331 + $0xb0] sm:$0xff] %v12025
        %12187 = vst [vmem:[%s331 + $0xb8] sm:$0xff] %v12161
        %12188 = vst [vmem:[%s331 + $0xc0] sm:$0xff] %v11754
        %12189 = vst [vmem:[%s331 + $0xc8] sm:$0xff] %v11890
        %12190 = vst [vmem:[%s331 + $0xd0] sm:$0xff] %v12026
        %12191 = vst [vmem:[%s331 + $0xd8] sm:$0xff] %v12162
        %12192 = vst [vmem:[%s331 + $0xe0] sm:$0xff] %v11755
        %12193 = vst [vmem:[%s331 + $0xe8] sm:$0xff] %v11891
        %12194 = vst [vmem:[%s331 + $0xf0] sm:$0xff] %v12027
        %12195 = vst [vmem:[%s331 + $0xf8] sm:$0xff] %v12163
        %s12196 = sand.u32 %s188, 1
        %s12197 = scalar_lea.sflag [#allocation4], %s12196
        %s12198 = sand.u32 %s188, 1
        %s12199 = smul.addr %s12198, 256
        %s12200 = scalar_lea.vmem [#allocation7], %s12199
        // Predicated region
        $region53: #{tpu_custom_call.1} parent=43 // pred_check
          %p12201 = pneg %p198
        $region54: #{tpu_custom_call.1} parent=43 // pred_check_branch
          %12203 = sbr.rel (%p12201) target = $region56
        $region55: #{tpu_custom_call.1} parent=43 // pred_region
          %s12204 = smul.u32 4, %s31
          %s12206 = ssub.s32 4096, 4096
          %12207 = vsyncadd %s12197, %s12206
          %s12208 = smul.addr %s30, 32
          %s12209 = sadd.s32 %s12204, %s12208
          %s12210 = smul.addr %s12209, 128
          %s12211 = scalar_lea.hbm %s6, %s12210
          %s12212 = sshll.u32 %s12200, 4
          %s12213 = int_to_ptr.vmem [resolvable:$true] %s12212
          %12218 = dma.vmem_to_hbm [thread:$0]  %s12213, 4096, %s12211, %s12197, 512, 512, 32
        $region56: #{tpu_custom_call.1} parent=43 // pred_fallthru
          _
      $region44: #{tpu_custom_call.1} parent=5 // pred_fallthru
        _
      %p12219 = scmp.le.s32.totalorder 2, %s21
      // Predicated region
      $region57: #{tpu_custom_call.1} parent=5 // pred_check
        %p12220 = pneg %p12219
      $region58: #{tpu_custom_call.1} parent=5 // pred_check_branch
        %12222 = sbr.rel (%p12220) target = $region60
      $region59: #{tpu_custom_call.1} parent=5 // pred_region
        %s12223 = ssub.s32 %s21, 2
        // Predicated region
        $region61: #{tpu_custom_call.1} parent=59 // pred_check
          %p12224 = pneg %p204
        $region62: #{tpu_custom_call.1} parent=59 // pred_check_branch
          %12226 = sbr.rel (%p12224) target = $region64
        $region63: #{tpu_custom_call.1} parent=59 // pred_region
          %s12227 = sand.u32 %s189, 1
          %s12228 = scalar_lea.sflag [#allocation4], %s12227
          %s12229 = sand.u32 %s189, 1
          %s12230 = smul.addr %s12229, 256
          %s12231 = scalar_lea.vmem [#allocation7], %s12230
          %12232 = dma.done %s12228, 4096
        $region64: #{tpu_custom_call.1} parent=59 // pred_fallthru
          _
      $region60: #{tpu_custom_call.1} parent=5 // pred_fallthru
        _
    $region6: #{tpu_custom_call.1} parent=1 // loop_footer
      %s25 = sadd.s32 1, %s21
    $region7: #{tpu_custom_call.1} parent=1 // loop_footer_branch
      %20 = sbr.rel target = $region3
    $region8: #{tpu_custom_call.1} parent=1 // loop_exit
      _
    %12233 = vsyncpa [#allocation3], 1
    %s12234 = scalar_lea.sflag [#allocation3], 1
    %12235 = vsyncpa %s12234, 1
    %12236 = vsyncpa [#allocation6], 1
    %s12237 = scalar_lea.sflag [#allocation6], 1
    %12238 = vsyncpa %s12237, 1
    %12239 = vsyncpa [#allocation4], 1
    %s12240 = scalar_lea.sflag [#allocation4], 1
    %12241 = vsyncpa %s12240, 1

</llo_original>
